<compile_context>
chip_gen: v7x
topology: tpu7x:2x2x1
jax: 0.10.0
libtpu: 0.0.40
codegen_flags: <defaults>
</compile_context>

<pallas_src>
import functools
import math

import jax
import jax.numpy as jnp
from jax import lax
from jax.experimental import pallas as pl
from jax.experimental.pallas import tpu as pltpu


_MXU_DTYPE = jnp.bfloat16   # MXU operand dtype (accumulation stays f32)
_NEG = -1e30                # Python float: "excluded" fill for max / softmax
_EPS2 = 1e-24               # Python float: clamp on squared L2 norm (1e-12 norm)


# ----------------------------------------------------------------------------
# Kernel A: cosine similarity between unlabeled descriptors and ALL support
# descriptors in one lane-dense matmul; normalization applied post-matmul on
# the f32 accumulator (InnerproductSimilarity hot path).
# ----------------------------------------------------------------------------
def _cosine_sim_kernel(u_ref, s_ref, o_ref):
    # u_ref: (1, M_u, C) f32   s_ref: (1, C, n_way*M_s) f32   o_ref: (1, M_u, n_way*M_s)
    u = u_ref[0]
    s = s_ref[0]
    raw = jnp.dot(u.astype(_MXU_DTYPE), s.astype(_MXU_DTYPE),
                  preferred_element_type=jnp.float32)
    u_inv = lax.rsqrt(jnp.maximum(jnp.sum(u * u, axis=1, keepdims=True), _EPS2))
    s_inv = lax.rsqrt(jnp.maximum(jnp.sum(s * s, axis=0, keepdims=True), _EPS2))
    o_ref[0] = raw * u_inv * s_inv


def cosine_similarity_pallas(u_desc, s_flat):
    # u_desc: (b, M_u, C)   s_flat: (b, C, n_way*M_s)  ->  (b, M_u, n_way*M_s)
    b, M_u, C = u_desc.shape
    NMs = s_flat.shape[-1]
    return pl.pallas_call(
        _cosine_sim_kernel,
        out_shape=jax.ShapeDtypeStruct((b, M_u, NMs), jnp.float32),
        grid=(b,),
        in_specs=[
            pl.BlockSpec((1, M_u, C), lambda i: (i, 0, 0)),
            pl.BlockSpec((1, C, NMs), lambda i: (i, 0, 0)),
        ],
        out_specs=pl.BlockSpec((1, M_u, NMs), lambda i: (i, 0, 0)),
        compiler_params=pltpu.CompilerParams(dimension_semantics=("parallel",)),
    )(u_desc, s_flat)


# ----------------------------------------------------------------------------
# Kernel B: fused 1x1 projection heads + scaled QK + mutual-NN mask +
# per-class segmented softmax + alignment + per-class reduction, one grid step
# per batch (all q query images processed in the block).
# ----------------------------------------------------------------------------
def _st_attn_kernel(vl_ref, wq_ref, wk_ref, wv_ref, xq_ref, s_ref, o_ref,
                    *, n_way, L_pad, M_q, M_qp, n_q, proj_dim):
    f32 = jnp.float32
    scale = 1.0 / math.sqrt(proj_dim)        # exact power of two for D=64
    QM = n_q * M_qp
    NL = n_way * L_pad
    valid_len = vl_ref[0]                    # == M_s + umask_length (dynamic)

    wq = wq_ref[...]                         # (D, C) bf16
    wk = wk_ref[...]
    wv = wv_ref[...]
    xq = xq_ref[0]                           # (QM, C)  bf16 (q folded, rows padded)
    sf = s_ref[0]                            # (C, NL)  bf16

    # --- 1x1 projection heads (f32 accumulation); Kf/Vf computed once/batch ---
    Qs = lax.dot_general(xq, wq, (((1,), (1,)), ((), ())),
                         preferred_element_type=f32) * scale        # (QM, D)
    Vq = lax.dot_general(xq, wv, (((1,), (1,)), ((), ())),
                         preferred_element_type=f32)                # (QM, D)
    Kf = jnp.dot(wk, sf, preferred_element_type=f32)                # (D, NL)
    Vf = jnp.dot(wv, sf, preferred_element_type=f32)                # (D, NL)

    # --- scaled attention scores, all classes fused on the lane axis ---------
    S2 = jnp.dot(Qs.astype(_MXU_DTYPE), Kf.astype(_MXU_DTYPE),
                 preferred_element_type=f32)                        # (QM, NL)
    S = S2.reshape(n_q, M_qp, NL)                                   # free split

    col_l = lax.broadcasted_iota(jnp.int32, (1, 1, L_pad), 2)       # local column id
    row_i = lax.broadcasted_iota(jnp.int32, (1, M_qp, 1), 1)        # query position id
    col_m = lax.broadcasted_iota(jnp.int32, (1, 1, M_qp), 2)
    col_valid = col_l < valid_len                                   # (1, 1, L_pad)
    row_valid = row_i < M_q                                         # (1, M_qp, 1)
    colm_valid = col_m < M_q                                        # (1, 1, M_qp)
    BIGC = L_pad + 7
    BIGR = M_qp + 7

    # --- merged first-occurrence argmax over valid columns (query_nearest) ---
    # TODO(synk): only first-occurrence argmax tie-breaking is modeled (matches
    # documented torch.max behavior); exotic CUDA tie orders are not.
    best_val = best_cls = best_col = None
    for n in range(n_way):
        Sn = jnp.where(col_valid, S[:, :, n * L_pad:(n + 1) * L_pad], _NEG)
        vmax = jnp.max(Sn, axis=2, keepdims=True)                   # (q, M_qp, 1)
        lmin = jnp.min(jnp.where(Sn == vmax, col_l, BIGC), axis=2, keepdims=True)
        if best_val is None:
            best_val, best_col = vmax, lmin
            best_cls = lmin * 0
        else:
            upd = vmax > best_val            # strict ">" keeps earlier class on ties
            best_cls = jnp.where(upd, n, best_cls)
            best_col = jnp.where(upd, lmin, best_col)
            best_val = jnp.where(upd, vmax, best_val)

    # --- per-class support_nearest (column argmax over real rows) + MNN hit ---
    q_mask = None
    for n in range(n_way):
        Sn = jnp.where(row_valid, S[:, :, n * L_pad:(n + 1) * L_pad], _NEG)
        cmax = jnp.max(Sn, axis=1, keepdims=True)                   # (q, 1, L_pad)
        sn = jnp.min(jnp.where(Sn == cmax, row_i, BIGR), axis=1, keepdims=True)
        hit = jnp.logical_and(
            jnp.logical_and(col_l == best_col, best_cls == n), sn == row_i)
        h = jnp.sum(hit.astype(f32), axis=2, keepdims=True)         # (q, M_qp, 1)
        q_mask = h if q_mask is None else q_mask + h                # in {0, 1}

    # --- L2-normalized query values -------------------------------------------
    Vq3 = Vq.reshape(n_q, M_qp, proj_dim)
    Vq3 = Vq3 * lax.rsqrt(
        jnp.maximum(jnp.sum(Vq3 * Vq3, axis=2, keepdims=True), _EPS2))
    Vq3b = Vq3.astype(_MXU_DTYPE)

    # --- per-class segmented softmax + alignment + class score ----------------
    outs = []
    for n in range(n_way):
        Sn = S[:, :, n * L_pad:(n + 1) * L_pad] * q_mask            # (q, M_qp, L_pad)
        logits = jnp.where(col_valid, Sn, _NEG)
        rmax = jnp.max(logits, axis=2, keepdims=True)
        e = jnp.exp(logits - rmax)                                  # invalid cols -> 0
        att = e * pl.reciprocal(jnp.sum(e, axis=2, keepdims=True), approx=True)
        att2 = att.reshape(QM, L_pad)                               # free merge
        Vfn = Vf[:, n * L_pad:(n + 1) * L_pad]                      # (D, L_pad)
        aligned = lax.dot_general(att2.astype(_MXU_DTYPE), Vfn.astype(_MXU_DTYPE),
                                  (((1,), (1,)), ((), ())),
                                  preferred_element_type=f32)       # (QM, D)
        aligned = aligned * lax.rsqrt(
            jnp.maximum(jnp.sum(aligned * aligned, axis=1, keepdims=True), _EPS2))
        al3 = aligned.reshape(n_q, M_qp, proj_dim).astype(_MXU_DTYPE)
        # sim[q, a, m] = <aligned[q, a, :], Vq_norm[q, m, :]>  (batched NT matmul)
        sim = lax.dot_general(al3, Vq3b, (((2,), (2,)), ((0,), (0,))),
                              preferred_element_type=f32)           # (q, M_qp, M_qp)
        sim = (sim + 1.0) * 0.5                                     # FourLayer_64F rescale
        # topk(1, -2) over aligned positions (mask padded rows), sum over queries.
        colmax = jnp.max(jnp.where(row_valid, sim, _NEG), axis=1, keepdims=True)
        outs.append(jnp.sum(jnp.where(colm_valid, colmax, 0.0), axis=2))  # (q, 1)

    o_ref[0] = jnp.concatenate(outs, axis=1)                        # (q, n_way)


def st_attention_pallas(valid_len, w_query, w_key, w_value, qx, s_flat,
                        *, n_way, L_pad, M_q, M_qp, n_q):
    # qx: (b, n_q*M_qp, C)   s_flat: (b, C, n_way*L_pad)   weights: (D, C)
    b = qx.shape[0]
    D, C = w_query.shape
    QM = n_q * M_qp
    NL = n_way * L_pad
    kern = functools.partial(_st_attn_kernel, n_way=n_way, L_pad=L_pad,
                             M_q=M_q, M_qp=M_qp, n_q=n_q, proj_dim=D)
    return pl.pallas_call(
        kern,
        out_shape=jax.ShapeDtypeStruct((b, n_q, n_way), jnp.float32),
        grid_spec=pltpu.PrefetchScalarGridSpec(
            num_scalar_prefetch=1,
            grid=(b,),
            in_specs=[
                pl.BlockSpec((D, C), lambda i, vl: (0, 0)),             # w_query
                pl.BlockSpec((D, C), lambda i, vl: (0, 0)),             # w_key
                pl.BlockSpec((D, C), lambda i, vl: (0, 0)),             # w_value
                pl.BlockSpec((1, QM, C), lambda i, vl: (i, 0, 0)),      # queries
                pl.BlockSpec((1, C, NL), lambda i, vl: (i, 0, 0)),      # support cols
            ],
            out_specs=pl.BlockSpec((1, n_q, n_way), lambda i, vl: (i, 0, 0)),
        ),
        compiler_params=pltpu.CompilerParams(dimension_semantics=("parallel",)),
    )(valid_len, w_query, w_key, w_value, qx, s_flat)


# ----------------------------------------------------------------------------
# Full ST forward (eval path).  All glue stays on device; fully jittable.
# ----------------------------------------------------------------------------
def st_forward(support_xf, support_y, query_xf, query_y, unlabeled_xf,
               w_key, w_query, w_value, *, n_way, k_shot, temperature=2.0):
    del support_y  # unused (as in the torch module)
    f32 = jnp.float32
    b, q, c, h, w = query_xf.shape
    hw = h * w
    u = unlabeled_xf.shape[1]
    M_u = u * hw
    M_s = k_shot * hw
    L_real = M_s + M_u
    L_pad = ((L_real + 127) // 128) * 128   # lane-dense per-class column count
    M_qp = ((hw + 7) // 8) * 8              # sublane-aligned query positions

    # unlabeled pool descriptors (b, M_u, c) -- same flatten order as torch.
    u_desc = jnp.transpose(
        jnp.transpose(unlabeled_xf, (0, 2, 1, 3, 4)).reshape(b, c, M_u),
        (0, 2, 1)).astype(f32)
    # support descriptors (b, n_way, c, M_s)
    s_desc = jnp.transpose(
        support_xf.reshape(b, n_way, k_shot, c, h, w), (0, 1, 3, 2, 4, 5)
    ).reshape(b, n_way, c, M_s).astype(f32)

    # --- Kernel A: unlabeled-vs-support cosine similarity ---------------------
    s_flat_cs = jnp.transpose(s_desc, (0, 2, 1, 3)).reshape(b, c, n_way * M_s)
    u2s_pool = cosine_similarity_pallas(u_desc, s_flat_cs)   # (b, M_u, n_way*M_s)

    # mutual-NN filtering + class assignment of unlabeled descriptors (XLA glue)
    s_nearest = jnp.argmax(u2s_pool, axis=1)                 # (b, n_way*M_s)
    u_nearest = jnp.argmax(u2s_pool, axis=2)                 # (b, M_u)
    picked = jnp.take_along_axis(s_nearest, u_nearest, axis=1)
    u2s_mask = (picked == jnp.arange(M_u)[None, :]).astype(f32)        # (b, M_u)
    umax = jnp.max(u2s_pool.reshape(b, M_u, n_way, M_s), axis=-1)      # (b, M_u, n_way)
    cls = jnp.argmax(umax, axis=-1)                                    # (b, M_u)
    umask = (jnp.transpose(jax.nn.one_hot(cls, n_way, dtype=f32), (0, 2, 1))
             * u2s_mask[:, None, :])                                   # (b, n_way, M_u)

    # Device-side compaction of the selected unlabeled descriptors (selected
    # rows first, zeros after), matching the torch zero-padded buffer exactly;
    # the data-dependent umask_length becomes a scalar-prefetched valid count.
    order = jnp.argsort(-umask, axis=-1, stable=True)                  # (b, n_way, M_u)
    u_rep = jnp.broadcast_to(u_desc[:, None, :, :], (b, n_way, M_u, c))
    gathered = jnp.take_along_axis(u_rep, order[..., None], axis=2)
    msel = jnp.take_along_axis(umask, order, axis=-1)
    dual = jnp.transpose(gathered * msel[..., None], (0, 1, 3, 2))     # (b, n_way, c, M_u)

    umask_len = jnp.max(jnp.sum(umask, axis=-1)).astype(jnp.int32)
    valid_len = jnp.reshape(umask_len + M_s, (1,)).astype(jnp.int32)

    s_cat_u = jnp.concatenate([s_desc, dual], axis=-1)                 # (b, n_way, c, L_real)
    s_cat_u = jnp.pad(s_cat_u, ((0, 0), (0, 0), (0, 0), (0, L_pad - L_real)))
    s_flat_att = jnp.transpose(s_cat_u, (0, 2, 1, 3)).reshape(b, c, n_way * L_pad)

    # --- Kernel B: fused projections + attention + MNN + reduction -----------
    qx = jnp.transpose(query_xf.reshape(b, q, c, hw), (0, 1, 3, 2))    # (b, q, hw, c)
    qx = jnp.pad(qx, ((0, 0), (0, 0), (0, M_qp - hw), (0, 0)))
    qx = qx.reshape(b, q * M_qp, c)
    cls_sim = st_attention_pallas(
        valid_len,
        w_query.astype(_MXU_DTYPE), w_key.astype(_MXU_DTYPE),
        w_value.astype(_MXU_DTYPE),
        qx.astype(_MXU_DTYPE), s_flat_att.astype(_MXU_DTYPE),
        n_way=n_way, L_pad=L_pad, M_q=hw, M_qp=M_qp, n_q=q)            # (b, q, n_way)
    similarity = cls_sim.reshape(b * q, n_way)

    # training-path loss (glue, for completeness) and eval-path rewards.
    qy = query_y.reshape(b * q)
    logp = jax.nn.log_softmax(similarity / temperature, axis=-1)
    loss = -jnp.mean(jnp.take_along_axis(logp, qy[:, None], axis=1))
    preds = jnp.argmax(similarity, axis=1)
    rewards = (preds == qy).astype(jnp.int32)
    return similarity, loss, rewards


if __name__ == "__main__":
    key = jax.random.PRNGKey(0)
    b, q, c, h, w = 2, 3, 64, 5, 5      # c must equal feat_dim=64 from the module
    n_way, k_shot = 5, 1
    u = 4                               # unlabeled images per episode
    s = n_way * k_shot

    k1, k2, k3, k4, k5, k6, k7 = jax.random.split(key, 7)
    support_xf = jax.random.normal(k1, (b, s, c, h, w), dtype=jnp.float32)
    query_xf = jax.random.normal(k2, (b, q, c, h, w), dtype=jnp.float32)
    unlabeled_xf = jax.random.normal(k3, (b, u, c, h, w), dtype=jnp.float32)
    support_y = jnp.tile(jnp.arange(n_way), (b, k_shot))
    query_y = jax.random.randint(k4, (b, q), 0, n_way)

    # deterministic head init: Conv2d(64,64,1,bias=False), normal(0, sqrt(2/64))
    std = math.sqrt(2.0 / (1 * 1 * 64))
    w_key_p = std * jax.random.normal(k5, (64, 64), dtype=jnp.float32)
    w_query_p = std * jax.random.normal(k6, (64, 64), dtype=jnp.float32)
    w_value_p = std * jax.random.normal(k7, (64, 64), dtype=jnp.float32)

    fwd = jax.jit(functools.partial(st_forward, n_way=n_way, k_shot=k_shot,
                                    temperature=2.0))
    similarity, loss, rewards = fwd(support_xf, support_y, query_xf, query_y,
                                    unlabeled_xf, w_key_p, w_query_p, w_value_p)
    jax.block_until_ready((similarity, loss, rewards))
    print("KERNEL_OK")
</pallas_src>

<mosaic_0001>
module attributes {stable_mosaic.version = 11 : i64} {
  func.func @_cosine_sim_kernel(%arg0: i32, %arg1: memref<1x100x64xf32, #tpu.memory_space<vmem>>, %arg2: memref<1x64x125xf32, #tpu.memory_space<vmem>>, %arg3: memref<1x100x125xf32, #tpu.memory_space<vmem>>) attributes {dimension_semantics = [#tpu.dimension_semantics<parallel>], iteration_bounds = array<i64: 2>, scalar_prefetch = 0 : i64, scratch_operands = 0 : i64, tpu.core_type = #tpu.core_type<tc>, window_params = [{transform_indices = @transform_0, window_bounds = array<i64: 1, 100, 64>}, {transform_indices = @transform_1, window_bounds = array<i64: 1, 64, 125>}, {transform_indices = @transform_2, window_bounds = array<i64: 1, 100, 125>}]} {
    %c0 = arith.constant 0 : index
    %c0_0 = arith.constant 0 : index
    %c0_1 = arith.constant 0 : index
    %0 = vector.load %arg1[%c0, %c0_0, %c0_1] : memref<1x100x64xf32, #tpu.memory_space<vmem>>, vector<1x100x64xf32>
    %1 = vector.shape_cast %0 : vector<1x100x64xf32> to vector<100x64xf32>
    %c0_2 = arith.constant 0 : index
    %c0_3 = arith.constant 0 : index
    %c0_4 = arith.constant 0 : index
    %2 = vector.load %arg2[%c0_2, %c0_3, %c0_4] : memref<1x64x125xf32, #tpu.memory_space<vmem>>, vector<1x64x125xf32>
    %3 = vector.shape_cast %2 : vector<1x64x125xf32> to vector<64x125xf32>
    %4 = arith.truncf %1 : vector<100x64xf32> to vector<100x64xbf16>
    %5 = arith.truncf %3 : vector<64x125xf32> to vector<64x125xbf16>
    %cst = arith.constant dense<0.000000e+00> : vector<100x125xf32>
    %6 = tpu.matmul %4, %5, %cst {dimension_numbers = #tpu.dot_dimension_numbers<[1], [0], [0], [1], [0, 0, 1, 1], [], []>} : vector<100x64xbf16>, vector<64x125xbf16>, vector<100x125xf32> -> vector<100x125xf32>
    %7 = arith.mulf %1, %1 : vector<100x64xf32>
    %cst_5 = arith.constant dense<0.000000e+00> : vector<100xf32>
    %8 = vector.multi_reduction <add>, %7, %cst_5 [1] : vector<100x64xf32> to vector<100xf32>
    %9 = vector.shape_cast %8 : vector<100xf32> to vector<100x1xf32>
    %cst_6 = arith.constant 1.000000e-24 : f32
    %10 = vector.broadcast %cst_6 : f32 to vector<100x1xf32>
    %11 = arith.maximumf %9, %10 : vector<100x1xf32>
    %12 = math.rsqrt %11 : vector<100x1xf32>
    %13 = arith.mulf %3, %3 : vector<64x125xf32>
    %cst_7 = arith.constant dense<0.000000e+00> : vector<125xf32>
    %14 = vector.multi_reduction <add>, %13, %cst_7 [0] : vector<64x125xf32> to vector<125xf32>
    %15 = vector.shape_cast %14 : vector<125xf32> to vector<1x125xf32>
    %cst_8 = arith.constant 1.000000e-24 : f32
    %16 = vector.broadcast %cst_8 : f32 to vector<1x125xf32>
    %17 = arith.maximumf %15, %16 : vector<1x125xf32>
    %18 = math.rsqrt %17 : vector<1x125xf32>
    %19 = vector.broadcast %12 : vector<100x1xf32> to vector<100x125xf32>
    %20 = arith.mulf %6, %19 : vector<100x125xf32>
    %21 = vector.broadcast %18 : vector<1x125xf32> to vector<100x125xf32>
    %22 = arith.mulf %20, %21 : vector<100x125xf32>
    %c0_9 = arith.constant 0 : index
    %c0_10 = arith.constant 0 : index
    %c0_11 = arith.constant 0 : index
    %23 = vector.load %arg3[%c0_9, %c0_10, %c0_11] : memref<1x100x125xf32, #tpu.memory_space<vmem>>, vector<1x100x125xf32>
    %24 = vector.shape_cast %23 : vector<1x100x125xf32> to vector<100x125xf32>
    %25 = vector.shape_cast %22 : vector<100x125xf32> to vector<1x100x125xf32>
    tpu.vector_store %arg3[%c0_9, %c0_10, %c0_11], %25 {strides = array<i32>} : memref<1x100x125xf32, #tpu.memory_space<vmem>>, vector<1x100x125xf32>,
    return
  }
  func.func @transform_0(%arg0: i32) -> (i32, i32, i32) {
    %c0_i32 = arith.constant 0 : i32
    %c0_i32_0 = arith.constant 0 : i32
    %c0_i32_1 = arith.constant 0 : i32
    return %arg0, %c0_i32, %c0_i32_0 : i32, i32, i32
  }
  func.func @transform_1(%arg0: i32) -> (i32, i32, i32) {
    %c0_i32 = arith.constant 0 : i32
    %c0_i32_0 = arith.constant 0 : i32
    %c0_i32_1 = arith.constant 0 : i32
    return %arg0, %c0_i32, %c0_i32_0 : i32, i32, i32
  }
  func.func @transform_2(%arg0: i32) -> (i32, i32, i32) {
    %c0_i32 = arith.constant 0 : i32
    %c0_i32_0 = arith.constant 0 : i32
    %c0_i32_1 = arith.constant 0 : i32
    return %arg0, %c0_i32, %c0_i32_0 : i32, i32, i32
  }
}

module attributes {stable_mosaic.version = 11 : i64} {
  func.func @_st_attn_kernel(%arg0: i32, %arg1: memref<1xi32, #tpu.memory_space<smem>>, %arg2: memref<64x64xbf16, #tpu.memory_space<vmem>>, %arg3: memref<64x64xbf16, #tpu.memory_space<vmem>>, %arg4: memref<64x64xbf16, #tpu.memory_space<vmem>>, %arg5: memref<1x96x64xbf16, #tpu.memory_space<vmem>>, %arg6: memref<1x64x640xbf16, #tpu.memory_space<vmem>>, %arg7: memref<1x3x5xf32, #tpu.memory_space<vmem>>) attributes {dimension_semantics = [#tpu.dimension_semantics<parallel>], iteration_bounds = array<i64: 2>, scalar_prefetch = 1 : i64, scratch_operands = 0 : i64, tpu.core_type = #tpu.core_type<tc>, window_params = [{pipeline_mode = #tpu.pipeline_mode<synchronous>, transform_indices = @transform_0, window_bounds = array<i64: 64, 64>}, {pipeline_mode = #tpu.pipeline_mode<synchronous>, transform_indices = @transform_1, window_bounds = array<i64: 64, 64>}, {pipeline_mode = #tpu.pipeline_mode<synchronous>, transform_indices = @transform_2, window_bounds = array<i64: 64, 64>}, {transform_indices = @transform_3, window_bounds = array<i64: 1, 96, 64>}, {transform_indices = @transform_4, window_bounds = array<i64: 1, 64, 640>}, {transform_indices = @transform_5, window_bounds = array<i64: 1, 3, 5>}]} {
    %c0 = arith.constant 0 : index
    %0 = memref.load %arg1[%c0] : memref<1xi32, #tpu.memory_space<smem>>
    %c0_0 = arith.constant 0 : index
    %c0_1 = arith.constant 0 : index
    %1 = vector.load %arg2[%c0_0, %c0_1] : memref<64x64xbf16, #tpu.memory_space<vmem>>, vector<64x64xbf16>
    %c0_2 = arith.constant 0 : index
    %c0_3 = arith.constant 0 : index
    %2 = vector.load %arg3[%c0_2, %c0_3] : memref<64x64xbf16, #tpu.memory_space<vmem>>, vector<64x64xbf16>
    %c0_4 = arith.constant 0 : index
    %c0_5 = arith.constant 0 : index
    %3 = vector.load %arg4[%c0_4, %c0_5] : memref<64x64xbf16, #tpu.memory_space<vmem>>, vector<64x64xbf16>
    %c0_6 = arith.constant 0 : index
    %c0_7 = arith.constant 0 : index
    %c0_8 = arith.constant 0 : index
    %4 = vector.load %arg5[%c0_6, %c0_7, %c0_8] : memref<1x96x64xbf16, #tpu.memory_space<vmem>>, vector<1x96x64xbf16>
    %5 = vector.shape_cast %4 : vector<1x96x64xbf16> to vector<96x64xbf16>
    %c0_9 = arith.constant 0 : index
    %c0_10 = arith.constant 0 : index
    %c0_11 = arith.constant 0 : index
    %6 = vector.load %arg6[%c0_9, %c0_10, %c0_11] : memref<1x64x640xbf16, #tpu.memory_space<vmem>>, vector<1x64x640xbf16>
    %7 = vector.shape_cast %6 : vector<1x64x640xbf16> to vector<64x640xbf16>
    %cst = arith.constant dense<0.000000e+00> : vector<96x64xf32>
    %8 = tpu.matmul %5, %1, %cst {dimension_numbers = #tpu.dot_dimension_numbers<[1], [1], [0], [0], [0, 0, 1, 0], [], []>} : vector<96x64xbf16>, vector<64x64xbf16>, vector<96x64xf32> -> vector<96x64xf32>
    %cst_12 = arith.constant 1.250000e-01 : f32
    %9 = vector.broadcast %cst_12 : f32 to vector<96x64xf32>
    %10 = arith.mulf %8, %9 : vector<96x64xf32>
    %cst_13 = arith.constant dense<0.000000e+00> : vector<96x64xf32>
    %11 = tpu.matmul %5, %3, %cst_13 {dimension_numbers = #tpu.dot_dimension_numbers<[1], [1], [0], [0], [0, 0, 1, 0], [], []>} : vector<96x64xbf16>, vector<64x64xbf16>, vector<96x64xf32> -> vector<96x64xf32>
    %cst_14 = arith.constant dense<0.000000e+00> : vector<64x640xf32>
    %12 = tpu.matmul %2, %7, %cst_14 {dimension_numbers = #tpu.dot_dimension_numbers<[1], [0], [0], [1], [0, 0, 1, 1], [], []>} : vector<64x64xbf16>, vector<64x640xbf16>, vector<64x640xf32> -> vector<64x640xf32>
    %cst_15 = arith.constant dense<0.000000e+00> : vector<64x640xf32>
    %13 = tpu.matmul %3, %7, %cst_15 {dimension_numbers = #tpu.dot_dimension_numbers<[1], [0], [0], [1], [0, 0, 1, 1], [], []>} : vector<64x64xbf16>, vector<64x640xbf16>, vector<64x640xf32> -> vector<64x640xf32>
    %14 = arith.truncf %10 : vector<96x64xf32> to vector<96x64xbf16>
    %15 = arith.truncf %12 : vector<64x640xf32> to vector<64x640xbf16>
    %cst_16 = arith.constant dense<0.000000e+00> : vector<96x640xf32>
    %16 = tpu.matmul %14, %15, %cst_16 {dimension_numbers = #tpu.dot_dimension_numbers<[1], [0], [0], [1], [0, 0, 1, 1], [], []>} : vector<96x64xbf16>, vector<64x640xbf16>, vector<96x640xf32> -> vector<96x640xf32>
    %17 = vector.shape_cast %16 : vector<96x640xf32> to vector<3x32x640xf32>
    %18 = tpu.iota {dimensions = array<i32: 2>} : vector<1x1x128xi32>
    %19 = tpu.iota {dimensions = array<i32: 1>} : vector<1x32x1xi32>
    %20 = tpu.iota {dimensions = array<i32: 2>} : vector<1x1x32xi32>
    %21 = vector.broadcast %0 : i32 to vector<1x1x128xi32>
    %22 = arith.cmpi slt, %18, %21 : vector<1x1x128xi32>
    %c25_i32 = arith.constant 25 : i32
    %23 = vector.broadcast %c25_i32 : i32 to vector<1x32x1xi32>
    %24 = arith.cmpi slt, %19, %23 : vector<1x32x1xi32>
    %c25_i32_17 = arith.constant 25 : i32
    %25 = vector.broadcast %c25_i32_17 : i32 to vector<1x1x32xi32>
    %26 = arith.cmpi slt, %20, %25 : vector<1x1x32xi32>
    %27 = vector.extract_strided_slice %17 {offsets = [0, 0, 0], sizes = [3, 32, 128], strides = [1, 1, 1]} : vector<3x32x640xf32> to vector<3x32x128xf32>
    %cst_18 = arith.constant -1.000000e+30 : f32
    %28 = vector.shape_cast %22 : vector<1x1x128xi1> to vector<1x1x128xi1>
    %29 = vector.broadcast %28 : vector<1x1x128xi1> to vector<3x32x128xi1>
    %30 = vector.broadcast %cst_18 : f32 to vector<3x32x128xf32>
    %31 = arith.select %29, %27, %30 : vector<3x32x128xi1>, vector<3x32x128xf32>
    %cst_19 = arith.constant dense<0xFF800000> : vector<3x32xf32>
    %32 = vector.multi_reduction <maximumf>, %31, %cst_19 [2] : vector<3x32x128xf32> to vector<3x32xf32>
    %33 = vector.shape_cast %32 : vector<3x32xf32> to vector<3x32x1xf32>
    %34 = vector.broadcast %33 : vector<3x32x1xf32> to vector<3x32x128xf32>
    %35 = arith.cmpf oeq, %31, %34 : vector<3x32x128xf32>
    %c135_i32 = arith.constant 135 : i32
    %36 = vector.shape_cast %18 : vector<1x1x128xi32> to vector<1x1x128xi32>
    %37 = vector.broadcast %36 : vector<1x1x128xi32> to vector<3x32x128xi32>
    %38 = vector.broadcast %c135_i32 : i32 to vector<3x32x128xi32>
    %39 = arith.select %35, %37, %38 : vector<3x32x128xi1>, vector<3x32x128xi32>
    %cst_20 = arith.constant dense<2147483647> : vector<3x32xi32>
    %40 = vector.multi_reduction <minsi>, %39, %cst_20 [2] : vector<3x32x128xi32> to vector<3x32xi32>
    %41 = vector.shape_cast %40 : vector<3x32xi32> to vector<3x32x1xi32>
    %c0_i32 = arith.constant 0 : i32
    %42 = vector.broadcast %c0_i32 : i32 to vector<3x32x1xi32>
    %43 = arith.muli %41, %42 : vector<3x32x1xi32>
    %44 = vector.extract_strided_slice %17 {offsets = [0, 0, 128], sizes = [3, 32, 128], strides = [1, 1, 1]} : vector<3x32x640xf32> to vector<3x32x128xf32>
    %cst_21 = arith.constant -1.000000e+30 : f32
    %45 = vector.shape_cast %22 : vector<1x1x128xi1> to vector<1x1x128xi1>
    %46 = vector.broadcast %45 : vector<1x1x128xi1> to vector<3x32x128xi1>
    %47 = vector.broadcast %cst_21 : f32 to vector<3x32x128xf32>
    %48 = arith.select %46, %44, %47 : vector<3x32x128xi1>, vector<3x32x128xf32>
    %cst_22 = arith.constant dense<0xFF800000> : vector<3x32xf32>
    %49 = vector.multi_reduction <maximumf>, %48, %cst_22 [2] : vector<3x32x128xf32> to vector<3x32xf32>
    %50 = vector.shape_cast %49 : vector<3x32xf32> to vector<3x32x1xf32>
    %51 = vector.broadcast %50 : vector<3x32x1xf32> to vector<3x32x128xf32>
    %52 = arith.cmpf oeq, %48, %51 : vector<3x32x128xf32>
    %c135_i32_23 = arith.constant 135 : i32
    %53 = vector.shape_cast %18 : vector<1x1x128xi32> to vector<1x1x128xi32>
    %54 = vector.broadcast %53 : vector<1x1x128xi32> to vector<3x32x128xi32>
    %55 = vector.broadcast %c135_i32_23 : i32 to vector<3x32x128xi32>
    %56 = arith.select %52, %54, %55 : vector<3x32x128xi1>, vector<3x32x128xi32>
    %cst_24 = arith.constant dense<2147483647> : vector<3x32xi32>
    %57 = vector.multi_reduction <minsi>, %56, %cst_24 [2] : vector<3x32x128xi32> to vector<3x32xi32>
    %58 = vector.shape_cast %57 : vector<3x32xi32> to vector<3x32x1xi32>
    %59 = arith.cmpf ogt, %50, %33 : vector<3x32x1xf32>
    %c1_i32 = arith.constant 1 : i32
    %60 = vector.broadcast %c1_i32 : i32 to vector<3x32x1xi32>
    %61 = arith.select %59, %60, %43 : vector<3x32x1xi1>, vector<3x32x1xi32>
    %62 = arith.select %59, %58, %41 : vector<3x32x1xi1>, vector<3x32x1xi32>
    %63 = arith.select %59, %50, %33 : vector<3x32x1xi1>, vector<3x32x1xf32>
    %64 = vector.extract_strided_slice %17 {offsets = [0, 0, 256], sizes = [3, 32, 128], strides = [1, 1, 1]} : vector<3x32x640xf32> to vector<3x32x128xf32>
    %cst_25 = arith.constant -1.000000e+30 : f32
    %65 = vector.shape_cast %22 : vector<1x1x128xi1> to vector<1x1x128xi1>
    %66 = vector.broadcast %65 : vector<1x1x128xi1> to vector<3x32x128xi1>
    %67 = vector.broadcast %cst_25 : f32 to vector<3x32x128xf32>
    %68 = arith.select %66, %64, %67 : vector<3x32x128xi1>, vector<3x32x128xf32>
    %cst_26 = arith.constant dense<0xFF800000> : vector<3x32xf32>
    %69 = vector.multi_reduction <maximumf>, %68, %cst_26 [2] : vector<3x32x128xf32> to vector<3x32xf32>
    %70 = vector.shape_cast %69 : vector<3x32xf32> to vector<3x32x1xf32>
    %71 = vector.broadcast %70 : vector<3x32x1xf32> to vector<3x32x128xf32>
    %72 = arith.cmpf oeq, %68, %71 : vector<3x32x128xf32>
    %c135_i32_27 = arith.constant 135 : i32
    %73 = vector.shape_cast %18 : vector<1x1x128xi32> to vector<1x1x128xi32>
    %74 = vector.broadcast %73 : vector<1x1x128xi32> to vector<3x32x128xi32>
    %75 = vector.broadcast %c135_i32_27 : i32 to vector<3x32x128xi32>
    %76 = arith.select %72, %74, %75 : vector<3x32x128xi1>, vector<3x32x128xi32>
    %cst_28 = arith.constant dense<2147483647> : vector<3x32xi32>
    %77 = vector.multi_reduction <minsi>, %76, %cst_28 [2] : vector<3x32x128xi32> to vector<3x32xi32>
    %78 = vector.shape_cast %77 : vector<3x32xi32> to vector<3x32x1xi32>
    %79 = arith.cmpf ogt, %70, %63 : vector<3x32x1xf32>
    %c2_i32 = arith.constant 2 : i32
    %80 = vector.broadcast %c2_i32 : i32 to vector<3x32x1xi32>
    %81 = arith.select %79, %80, %61 : vector<3x32x1xi1>, vector<3x32x1xi32>
    %82 = arith.select %79, %78, %62 : vector<3x32x1xi1>, vector<3x32x1xi32>
    %83 = arith.select %79, %70, %63 : vector<3x32x1xi1>, vector<3x32x1xf32>
    %84 = vector.extract_strided_slice %17 {offsets = [0, 0, 384], sizes = [3, 32, 128], strides = [1, 1, 1]} : vector<3x32x640xf32> to vector<3x32x128xf32>
    %cst_29 = arith.constant -1.000000e+30 : f32
    %85 = vector.shape_cast %22 : vector<1x1x128xi1> to vector<1x1x128xi1>
    %86 = vector.broadcast %85 : vector<1x1x128xi1> to vector<3x32x128xi1>
    %87 = vector.broadcast %cst_29 : f32 to vector<3x32x128xf32>
    %88 = arith.select %86, %84, %87 : vector<3x32x128xi1>, vector<3x32x128xf32>
    %cst_30 = arith.constant dense<0xFF800000> : vector<3x32xf32>
    %89 = vector.multi_reduction <maximumf>, %88, %cst_30 [2] : vector<3x32x128xf32> to vector<3x32xf32>
    %90 = vector.shape_cast %89 : vector<3x32xf32> to vector<3x32x1xf32>
    %91 = vector.broadcast %90 : vector<3x32x1xf32> to vector<3x32x128xf32>
    %92 = arith.cmpf oeq, %88, %91 : vector<3x32x128xf32>
    %c135_i32_31 = arith.constant 135 : i32
    %93 = vector.shape_cast %18 : vector<1x1x128xi32> to vector<1x1x128xi32>
    %94 = vector.broadcast %93 : vector<1x1x128xi32> to vector<3x32x128xi32>
    %95 = vector.broadcast %c135_i32_31 : i32 to vector<3x32x128xi32>
    %96 = arith.select %92, %94, %95 : vector<3x32x128xi1>, vector<3x32x128xi32>
    %cst_32 = arith.constant dense<2147483647> : vector<3x32xi32>
    %97 = vector.multi_reduction <minsi>, %96, %cst_32 [2] : vector<3x32x128xi32> to vector<3x32xi32>
    %98 = vector.shape_cast %97 : vector<3x32xi32> to vector<3x32x1xi32>
    %99 = arith.cmpf ogt, %90, %83 : vector<3x32x1xf32>
    %c3_i32 = arith.constant 3 : i32
    %100 = vector.broadcast %c3_i32 : i32 to vector<3x32x1xi32>
    %101 = arith.select %99, %100, %81 : vector<3x32x1xi1>, vector<3x32x1xi32>
    %102 = arith.select %99, %98, %82 : vector<3x32x1xi1>, vector<3x32x1xi32>
    %103 = arith.select %99, %90, %83 : vector<3x32x1xi1>, vector<3x32x1xf32>
    %104 = vector.extract_strided_slice %17 {offsets = [0, 0, 512], sizes = [3, 32, 128], strides = [1, 1, 1]} : vector<3x32x640xf32> to vector<3x32x128xf32>
    %cst_33 = arith.constant -1.000000e+30 : f32
    %105 = vector.shape_cast %22 : vector<1x1x128xi1> to vector<1x1x128xi1>
    %106 = vector.broadcast %105 : vector<1x1x128xi1> to vector<3x32x128xi1>
    %107 = vector.broadcast %cst_33 : f32 to vector<3x32x128xf32>
    %108 = arith.select %106, %104, %107 : vector<3x32x128xi1>, vector<3x32x128xf32>
    %cst_34 = arith.constant dense<0xFF800000> : vector<3x32xf32>
    %109 = vector.multi_reduction <maximumf>, %108, %cst_34 [2] : vector<3x32x128xf32> to vector<3x32xf32>
    %110 = vector.shape_cast %109 : vector<3x32xf32> to vector<3x32x1xf32>
    %111 = vector.broadcast %110 : vector<3x32x1xf32> to vector<3x32x128xf32>
    %112 = arith.cmpf oeq, %108, %111 : vector<3x32x128xf32>
    %c135_i32_35 = arith.constant 135 : i32
    %113 = vector.shape_cast %18 : vector<1x1x128xi32> to vector<1x1x128xi32>
    %114 = vector.broadcast %113 : vector<1x1x128xi32> to vector<3x32x128xi32>
    %115 = vector.broadcast %c135_i32_35 : i32 to vector<3x32x128xi32>
    %116 = arith.select %112, %114, %115 : vector<3x32x128xi1>, vector<3x32x128xi32>
    %cst_36 = arith.constant dense<2147483647> : vector<3x32xi32>
    %117 = vector.multi_reduction <minsi>, %116, %cst_36 [2] : vector<3x32x128xi32> to vector<3x32xi32>
    %118 = vector.shape_cast %117 : vector<3x32xi32> to vector<3x32x1xi32>
    %119 = arith.cmpf ogt, %110, %103 : vector<3x32x1xf32>
    %c4_i32 = arith.constant 4 : i32
    %120 = vector.broadcast %c4_i32 : i32 to vector<3x32x1xi32>
    %121 = arith.select %119, %120, %101 : vector<3x32x1xi1>, vector<3x32x1xi32>
    %122 = arith.select %119, %118, %102 : vector<3x32x1xi1>, vector<3x32x1xi32>
    %123 = vector.extract_strided_slice %17 {offsets = [0, 0, 0], sizes = [3, 32, 128], strides = [1, 1, 1]} : vector<3x32x640xf32> to vector<3x32x128xf32>
    %cst_37 = arith.constant -1.000000e+30 : f32
    %124 = vector.shape_cast %24 : vector<1x32x1xi1> to vector<1x32x1xi1>
    %125 = vector.broadcast %124 : vector<1x32x1xi1> to vector<3x32x128xi1>
    %126 = vector.broadcast %cst_37 : f32 to vector<3x32x128xf32>
    %127 = arith.select %125, %123, %126 : vector<3x32x128xi1>, vector<3x32x128xf32>
    %cst_38 = arith.constant dense<0xFF800000> : vector<3x128xf32>
    %128 = vector.multi_reduction <maximumf>, %127, %cst_38 [1] : vector<3x32x128xf32> to vector<3x128xf32>
    %129 = vector.shape_cast %128 : vector<3x128xf32> to vector<3x1x128xf32>
    %130 = vector.broadcast %129 : vector<3x1x128xf32> to vector<3x32x128xf32>
    %131 = arith.cmpf oeq, %127, %130 : vector<3x32x128xf32>
    %c39_i32 = arith.constant 39 : i32
    %132 = vector.shape_cast %19 : vector<1x32x1xi32> to vector<1x32x1xi32>
    %133 = vector.broadcast %132 : vector<1x32x1xi32> to vector<3x32x128xi32>
    %134 = vector.broadcast %c39_i32 : i32 to vector<3x32x128xi32>
    %135 = arith.select %131, %133, %134 : vector<3x32x128xi1>, vector<3x32x128xi32>
    %cst_39 = arith.constant dense<2147483647> : vector<3x128xi32>
    %136 = vector.multi_reduction <minsi>, %135, %cst_39 [1] : vector<3x32x128xi32> to vector<3x128xi32>
    %137 = vector.shape_cast %136 : vector<3x128xi32> to vector<3x1x128xi32>
    %138 = vector.broadcast %18 : vector<1x1x128xi32> to vector<3x32x128xi32>
    %139 = vector.broadcast %122 : vector<3x32x1xi32> to vector<3x32x128xi32>
    %140 = arith.cmpi eq, %138, %139 : vector<3x32x128xi32>
    %c0_i32_40 = arith.constant 0 : i32
    %141 = vector.broadcast %c0_i32_40 : i32 to vector<3x32x1xi32>
    %142 = arith.cmpi eq, %121, %141 : vector<3x32x1xi32>
    %143 = vector.broadcast %142 : vector<3x32x1xi1> to vector<3x32x128xi1>
    %144 = arith.andi %140, %143 : vector<3x32x128xi1>
    %145 = vector.broadcast %137 : vector<3x1x128xi32> to vector<3x32x128xi32>
    %146 = vector.broadcast %19 : vector<1x32x1xi32> to vector<3x32x128xi32>
    %147 = arith.cmpi eq, %145, %146 : vector<3x32x128xi32>
    %148 = arith.andi %144, %147 : vector<3x32x128xi1>
    %149 = arith.extui %148 : vector<3x32x128xi1> to vector<3x32x128xi32>
    %150 = arith.sitofp %149 : vector<3x32x128xi32> to vector<3x32x128xf32>
    %cst_41 = arith.constant dense<0.000000e+00> : vector<3x32xf32>
    %151 = vector.multi_reduction <add>, %150, %cst_41 [2] : vector<3x32x128xf32> to vector<3x32xf32>
    %152 = vector.shape_cast %151 : vector<3x32xf32> to vector<3x32x1xf32>
    %153 = vector.extract_strided_slice %17 {offsets = [0, 0, 128], sizes = [3, 32, 128], strides = [1, 1, 1]} : vector<3x32x640xf32> to vector<3x32x128xf32>
    %cst_42 = arith.constant -1.000000e+30 : f32
    %154 = vector.shape_cast %24 : vector<1x32x1xi1> to vector<1x32x1xi1>
    %155 = vector.broadcast %154 : vector<1x32x1xi1> to vector<3x32x128xi1>
    %156 = vector.broadcast %cst_42 : f32 to vector<3x32x128xf32>
    %157 = arith.select %155, %153, %156 : vector<3x32x128xi1>, vector<3x32x128xf32>
    %cst_43 = arith.constant dense<0xFF800000> : vector<3x128xf32>
    %158 = vector.multi_reduction <maximumf>, %157, %cst_43 [1] : vector<3x32x128xf32> to vector<3x128xf32>
    %159 = vector.shape_cast %158 : vector<3x128xf32> to vector<3x1x128xf32>
    %160 = vector.broadcast %159 : vector<3x1x128xf32> to vector<3x32x128xf32>
    %161 = arith.cmpf oeq, %157, %160 : vector<3x32x128xf32>
    %c39_i32_44 = arith.constant 39 : i32
    %162 = vector.shape_cast %19 : vector<1x32x1xi32> to vector<1x32x1xi32>
    %163 = vector.broadcast %162 : vector<1x32x1xi32> to vector<3x32x128xi32>
    %164 = vector.broadcast %c39_i32_44 : i32 to vector<3x32x128xi32>
    %165 = arith.select %161, %163, %164 : vector<3x32x128xi1>, vector<3x32x128xi32>
    %cst_45 = arith.constant dense<2147483647> : vector<3x128xi32>
    %166 = vector.multi_reduction <minsi>, %165, %cst_45 [1] : vector<3x32x128xi32> to vector<3x128xi32>
    %167 = vector.shape_cast %166 : vector<3x128xi32> to vector<3x1x128xi32>
    %168 = vector.broadcast %18 : vector<1x1x128xi32> to vector<3x32x128xi32>
    %169 = vector.broadcast %122 : vector<3x32x1xi32> to vector<3x32x128xi32>
    %170 = arith.cmpi eq, %168, %169 : vector<3x32x128xi32>
    %c1_i32_46 = arith.constant 1 : i32
    %171 = vector.broadcast %c1_i32_46 : i32 to vector<3x32x1xi32>
    %172 = arith.cmpi eq, %121, %171 : vector<3x32x1xi32>
    %173 = vector.broadcast %172 : vector<3x32x1xi1> to vector<3x32x128xi1>
    %174 = arith.andi %170, %173 : vector<3x32x128xi1>
    %175 = vector.broadcast %167 : vector<3x1x128xi32> to vector<3x32x128xi32>
    %176 = vector.broadcast %19 : vector<1x32x1xi32> to vector<3x32x128xi32>
    %177 = arith.cmpi eq, %175, %176 : vector<3x32x128xi32>
    %178 = arith.andi %174, %177 : vector<3x32x128xi1>
    %179 = arith.extui %178 : vector<3x32x128xi1> to vector<3x32x128xi32>
    %180 = arith.sitofp %179 : vector<3x32x128xi32> to vector<3x32x128xf32>
    %cst_47 = arith.constant dense<0.000000e+00> : vector<3x32xf32>
    %181 = vector.multi_reduction <add>, %180, %cst_47 [2] : vector<3x32x128xf32> to vector<3x32xf32>
    %182 = vector.shape_cast %181 : vector<3x32xf32> to vector<3x32x1xf32>
    %183 = arith.addf %152, %182 : vector<3x32x1xf32>
    %184 = vector.extract_strided_slice %17 {offsets = [0, 0, 256], sizes = [3, 32, 128], strides = [1, 1, 1]} : vector<3x32x640xf32> to vector<3x32x128xf32>
    %cst_48 = arith.constant -1.000000e+30 : f32
    %185 = vector.shape_cast %24 : vector<1x32x1xi1> to vector<1x32x1xi1>
    %186 = vector.broadcast %185 : vector<1x32x1xi1> to vector<3x32x128xi1>
    %187 = vector.broadcast %cst_48 : f32 to vector<3x32x128xf32>
    %188 = arith.select %186, %184, %187 : vector<3x32x128xi1>, vector<3x32x128xf32>
    %cst_49 = arith.constant dense<0xFF800000> : vector<3x128xf32>
    %189 = vector.multi_reduction <maximumf>, %188, %cst_49 [1] : vector<3x32x128xf32> to vector<3x128xf32>
    %190 = vector.shape_cast %189 : vector<3x128xf32> to vector<3x1x128xf32>
    %191 = vector.broadcast %190 : vector<3x1x128xf32> to vector<3x32x128xf32>
    %192 = arith.cmpf oeq, %188, %191 : vector<3x32x128xf32>
    %c39_i32_50 = arith.constant 39 : i32
    %193 = vector.shape_cast %19 : vector<1x32x1xi32> to vector<1x32x1xi32>
    %194 = vector.broadcast %193 : vector<1x32x1xi32> to vector<3x32x128xi32>
    %195 = vector.broadcast %c39_i32_50 : i32 to vector<3x32x128xi32>
    %196 = arith.select %192, %194, %195 : vector<3x32x128xi1>, vector<3x32x128xi32>
    %cst_51 = arith.constant dense<2147483647> : vector<3x128xi32>
    %197 = vector.multi_reduction <minsi>, %196, %cst_51 [1] : vector<3x32x128xi32> to vector<3x128xi32>
    %198 = vector.shape_cast %197 : vector<3x128xi32> to vector<3x1x128xi32>
    %199 = vector.broadcast %18 : vector<1x1x128xi32> to vector<3x32x128xi32>
    %200 = vector.broadcast %122 : vector<3x32x1xi32> to vector<3x32x128xi32>
    %201 = arith.cmpi eq, %199, %200 : vector<3x32x128xi32>
    %c2_i32_52 = arith.constant 2 : i32
    %202 = vector.broadcast %c2_i32_52 : i32 to vector<3x32x1xi32>
    %203 = arith.cmpi eq, %121, %202 : vector<3x32x1xi32>
    %204 = vector.broadcast %203 : vector<3x32x1xi1> to vector<3x32x128xi1>
    %205 = arith.andi %201, %204 : vector<3x32x128xi1>
    %206 = vector.broadcast %198 : vector<3x1x128xi32> to vector<3x32x128xi32>
    %207 = vector.broadcast %19 : vector<1x32x1xi32> to vector<3x32x128xi32>
    %208 = arith.cmpi eq, %206, %207 : vector<3x32x128xi32>
    %209 = arith.andi %205, %208 : vector<3x32x128xi1>
    %210 = arith.extui %209 : vector<3x32x128xi1> to vector<3x32x128xi32>
    %211 = arith.sitofp %210 : vector<3x32x128xi32> to vector<3x32x128xf32>
    %cst_53 = arith.constant dense<0.000000e+00> : vector<3x32xf32>
    %212 = vector.multi_reduction <add>, %211, %cst_53 [2] : vector<3x32x128xf32> to vector<3x32xf32>
    %213 = vector.shape_cast %212 : vector<3x32xf32> to vector<3x32x1xf32>
    %214 = arith.addf %183, %213 : vector<3x32x1xf32>
    %215 = vector.extract_strided_slice %17 {offsets = [0, 0, 384], sizes = [3, 32, 128], strides = [1, 1, 1]} : vector<3x32x640xf32> to vector<3x32x128xf32>
    %cst_54 = arith.constant -1.000000e+30 : f32
    %216 = vector.shape_cast %24 : vector<1x32x1xi1> to vector<1x32x1xi1>
    %217 = vector.broadcast %216 : vector<1x32x1xi1> to vector<3x32x128xi1>
    %218 = vector.broadcast %cst_54 : f32 to vector<3x32x128xf32>
    %219 = arith.select %217, %215, %218 : vector<3x32x128xi1>, vector<3x32x128xf32>
    %cst_55 = arith.constant dense<0xFF800000> : vector<3x128xf32>
    %220 = vector.multi_reduction <maximumf>, %219, %cst_55 [1] : vector<3x32x128xf32> to vector<3x128xf32>
    %221 = vector.shape_cast %220 : vector<3x128xf32> to vector<3x1x128xf32>
    %222 = vector.broadcast %221 : vector<3x1x128xf32> to vector<3x32x128xf32>
    %223 = arith.cmpf oeq, %219, %222 : vector<3x32x128xf32>
    %c39_i32_56 = arith.constant 39 : i32
    %224 = vector.shape_cast %19 : vector<1x32x1xi32> to vector<1x32x1xi32>
    %225 = vector.broadcast %224 : vector<1x32x1xi32> to vector<3x32x128xi32>
    %226 = vector.broadcast %c39_i32_56 : i32 to vector<3x32x128xi32>
    %227 = arith.select %223, %225, %226 : vector<3x32x128xi1>, vector<3x32x128xi32>
    %cst_57 = arith.constant dense<2147483647> : vector<3x128xi32>
    %228 = vector.multi_reduction <minsi>, %227, %cst_57 [1] : vector<3x32x128xi32> to vector<3x128xi32>
    %229 = vector.shape_cast %228 : vector<3x128xi32> to vector<3x1x128xi32>
    %230 = vector.broadcast %18 : vector<1x1x128xi32> to vector<3x32x128xi32>
    %231 = vector.broadcast %122 : vector<3x32x1xi32> to vector<3x32x128xi32>
    %232 = arith.cmpi eq, %230, %231 : vector<3x32x128xi32>
    %c3_i32_58 = arith.constant 3 : i32
    %233 = vector.broadcast %c3_i32_58 : i32 to vector<3x32x1xi32>
    %234 = arith.cmpi eq, %121, %233 : vector<3x32x1xi32>
    %235 = vector.broadcast %234 : vector<3x32x1xi1> to vector<3x32x128xi1>
    %236 = arith.andi %232, %235 : vector<3x32x128xi1>
    %237 = vector.broadcast %229 : vector<3x1x128xi32> to vector<3x32x128xi32>
    %238 = vector.broadcast %19 : vector<1x32x1xi32> to vector<3x32x128xi32>
    %239 = arith.cmpi eq, %237, %238 : vector<3x32x128xi32>
    %240 = arith.andi %236, %239 : vector<3x32x128xi1>
    %241 = arith.extui %240 : vector<3x32x128xi1> to vector<3x32x128xi32>
    %242 = arith.sitofp %241 : vector<3x32x128xi32> to vector<3x32x128xf32>
    %cst_59 = arith.constant dense<0.000000e+00> : vector<3x32xf32>
    %243 = vector.multi_reduction <add>, %242, %cst_59 [2] : vector<3x32x128xf32> to vector<3x32xf32>
    %244 = vector.shape_cast %243 : vector<3x32xf32> to vector<3x32x1xf32>
    %245 = arith.addf %214, %244 : vector<3x32x1xf32>
    %246 = vector.extract_strided_slice %17 {offsets = [0, 0, 512], sizes = [3, 32, 128], strides = [1, 1, 1]} : vector<3x32x640xf32> to vector<3x32x128xf32>
    %cst_60 = arith.constant -1.000000e+30 : f32
    %247 = vector.shape_cast %24 : vector<1x32x1xi1> to vector<1x32x1xi1>
    %248 = vector.broadcast %247 : vector<1x32x1xi1> to vector<3x32x128xi1>
    %249 = vector.broadcast %cst_60 : f32 to vector<3x32x128xf32>
    %250 = arith.select %248, %246, %249 : vector<3x32x128xi1>, vector<3x32x128xf32>
    %cst_61 = arith.constant dense<0xFF800000> : vector<3x128xf32>
    %251 = vector.multi_reduction <maximumf>, %250, %cst_61 [1] : vector<3x32x128xf32> to vector<3x128xf32>
    %252 = vector.shape_cast %251 : vector<3x128xf32> to vector<3x1x128xf32>
    %253 = vector.broadcast %252 : vector<3x1x128xf32> to vector<3x32x128xf32>
    %254 = arith.cmpf oeq, %250, %253 : vector<3x32x128xf32>
    %c39_i32_62 = arith.constant 39 : i32
    %255 = vector.shape_cast %19 : vector<1x32x1xi32> to vector<1x32x1xi32>
    %256 = vector.broadcast %255 : vector<1x32x1xi32> to vector<3x32x128xi32>
    %257 = vector.broadcast %c39_i32_62 : i32 to vector<3x32x128xi32>
    %258 = arith.select %254, %256, %257 : vector<3x32x128xi1>, vector<3x32x128xi32>
    %cst_63 = arith.constant dense<2147483647> : vector<3x128xi32>
    %259 = vector.multi_reduction <minsi>, %258, %cst_63 [1] : vector<3x32x128xi32> to vector<3x128xi32>
    %260 = vector.shape_cast %259 : vector<3x128xi32> to vector<3x1x128xi32>
    %261 = vector.broadcast %18 : vector<1x1x128xi32> to vector<3x32x128xi32>
    %262 = vector.broadcast %122 : vector<3x32x1xi32> to vector<3x32x128xi32>
    %263 = arith.cmpi eq, %261, %262 : vector<3x32x128xi32>
    %c4_i32_64 = arith.constant 4 : i32
    %264 = vector.broadcast %c4_i32_64 : i32 to vector<3x32x1xi32>
    %265 = arith.cmpi eq, %121, %264 : vector<3x32x1xi32>
    %266 = vector.broadcast %265 : vector<3x32x1xi1> to vector<3x32x128xi1>
    %267 = arith.andi %263, %266 : vector<3x32x128xi1>
    %268 = vector.broadcast %260 : vector<3x1x128xi32> to vector<3x32x128xi32>
    %269 = vector.broadcast %19 : vector<1x32x1xi32> to vector<3x32x128xi32>
    %270 = arith.cmpi eq, %268, %269 : vector<3x32x128xi32>
    %271 = arith.andi %267, %270 : vector<3x32x128xi1>
    %272 = arith.extui %271 : vector<3x32x128xi1> to vector<3x32x128xi32>
    %273 = arith.sitofp %272 : vector<3x32x128xi32> to vector<3x32x128xf32>
    %cst_65 = arith.constant dense<0.000000e+00> : vector<3x32xf32>
    %274 = vector.multi_reduction <add>, %273, %cst_65 [2] : vector<3x32x128xf32> to vector<3x32xf32>
    %275 = vector.shape_cast %274 : vector<3x32xf32> to vector<3x32x1xf32>
    %276 = arith.addf %245, %275 : vector<3x32x1xf32>
    %277 = vector.shape_cast %11 : vector<96x64xf32> to vector<3x32x64xf32>
    %278 = arith.mulf %277, %277 : vector<3x32x64xf32>
    %cst_66 = arith.constant dense<0.000000e+00> : vector<3x32xf32>
    %279 = vector.multi_reduction <add>, %278, %cst_66 [2] : vector<3x32x64xf32> to vector<3x32xf32>
    %280 = vector.shape_cast %279 : vector<3x32xf32> to vector<3x32x1xf32>
    %cst_67 = arith.constant 1.000000e-24 : f32
    %281 = vector.broadcast %cst_67 : f32 to vector<3x32x1xf32>
    %282 = arith.maximumf %280, %281 : vector<3x32x1xf32>
    %283 = math.rsqrt %282 : vector<3x32x1xf32>
    %284 = vector.broadcast %283 : vector<3x32x1xf32> to vector<3x32x64xf32>
    %285 = arith.mulf %277, %284 : vector<3x32x64xf32>
    %286 = arith.truncf %285 : vector<3x32x64xf32> to vector<3x32x64xbf16>
    %287 = vector.extract_strided_slice %17 {offsets = [0, 0, 0], sizes = [3, 32, 128], strides = [1, 1, 1]} : vector<3x32x640xf32> to vector<3x32x128xf32>
    %288 = vector.broadcast %276 : vector<3x32x1xf32> to vector<3x32x128xf32>
    %289 = arith.mulf %287, %288 : vector<3x32x128xf32>
    %cst_68 = arith.constant -1.000000e+30 : f32
    %290 = vector.shape_cast %22 : vector<1x1x128xi1> to vector<1x1x128xi1>
    %291 = vector.broadcast %290 : vector<1x1x128xi1> to vector<3x32x128xi1>
    %292 = vector.broadcast %cst_68 : f32 to vector<3x32x128xf32>
    %293 = arith.select %291, %289, %292 : vector<3x32x128xi1>, vector<3x32x128xf32>
    %cst_69 = arith.constant dense<0xFF800000> : vector<3x32xf32>
    %294 = vector.multi_reduction <maximumf>, %293, %cst_69 [2] : vector<3x32x128xf32> to vector<3x32xf32>
    %295 = vector.shape_cast %294 : vector<3x32xf32> to vector<3x32x1xf32>
    %296 = vector.broadcast %295 : vector<3x32x1xf32> to vector<3x32x128xf32>
    %297 = arith.subf %293, %296 : vector<3x32x128xf32>
    %298 = math.exp %297 : vector<3x32x128xf32>
    %cst_70 = arith.constant dense<0.000000e+00> : vector<3x32xf32>
    %299 = vector.multi_reduction <add>, %298, %cst_70 [2] : vector<3x32x128xf32> to vector<3x32xf32>
    %300 = vector.shape_cast %299 : vector<3x32xf32> to vector<3x32x1xf32>
    %301 = tpu.reciprocal %300 {approx = true} : vector<3x32x1xf32> -> vector<3x32x1xf32>
    %302 = vector.broadcast %301 : vector<3x32x1xf32> to vector<3x32x128xf32>
    %303 = arith.mulf %298, %302 : vector<3x32x128xf32>
    %304 = vector.shape_cast %303 : vector<3x32x128xf32> to vector<96x128xf32>
    %305 = vector.extract_strided_slice %13 {offsets = [0, 0], sizes = [64, 128], strides = [1, 1]} : vector<64x640xf32> to vector<64x128xf32>
    %306 = arith.truncf %304 : vector<96x128xf32> to vector<96x128xbf16>
    %307 = arith.truncf %305 : vector<64x128xf32> to vector<64x128xbf16>
    %cst_71 = arith.constant dense<0.000000e+00> : vector<96x64xf32>
    %308 = tpu.matmul %306, %307, %cst_71 {dimension_numbers = #tpu.dot_dimension_numbers<[1], [1], [0], [0], [0, 0, 1, 0], [], []>} : vector<96x128xbf16>, vector<64x128xbf16>, vector<96x64xf32> -> vector<96x64xf32>
    %309 = arith.mulf %308, %308 : vector<96x64xf32>
    %cst_72 = arith.constant dense<0.000000e+00> : vector<96xf32>
    %310 = vector.multi_reduction <add>, %309, %cst_72 [1] : vector<96x64xf32> to vector<96xf32>
    %311 = vector.shape_cast %310 : vector<96xf32> to vector<96x1xf32>
    %cst_73 = arith.constant 1.000000e-24 : f32
    %312 = vector.broadcast %cst_73 : f32 to vector<96x1xf32>
    %313 = arith.maximumf %311, %312 : vector<96x1xf32>
    %314 = math.rsqrt %313 : vector<96x1xf32>
    %315 = vector.broadcast %314 : vector<96x1xf32> to vector<96x64xf32>
    %316 = arith.mulf %308, %315 : vector<96x64xf32>
    %317 = vector.shape_cast %316 : vector<96x64xf32> to vector<3x32x64xf32>
    %318 = arith.truncf %317 : vector<3x32x64xf32> to vector<3x32x64xbf16>
    %cst_74 = arith.constant dense<0.000000e+00> : vector<3x32x32xf32>
    %319 = tpu.matmul %318, %286, %cst_74 {dimension_numbers = #tpu.dot_dimension_numbers<[2], [2], [1], [1], [0, 0, 0, 1, 1, 1], [0], [0]>} : vector<3x32x64xbf16>, vector<3x32x64xbf16>, vector<3x32x32xf32> -> vector<3x32x32xf32>
    %cst_75 = arith.constant 1.000000e+00 : f32
    %320 = vector.broadcast %cst_75 : f32 to vector<3x32x32xf32>
    %321 = arith.addf %319, %320 : vector<3x32x32xf32>
    %cst_76 = arith.constant 5.000000e-01 : f32
    %322 = vector.broadcast %cst_76 : f32 to vector<3x32x32xf32>
    %323 = arith.mulf %321, %322 : vector<3x32x32xf32>
    %cst_77 = arith.constant -1.000000e+30 : f32
    %324 = vector.shape_cast %24 : vector<1x32x1xi1> to vector<1x32x1xi1>
    %325 = vector.broadcast %324 : vector<1x32x1xi1> to vector<3x32x32xi1>
    %326 = vector.broadcast %cst_77 : f32 to vector<3x32x32xf32>
    %327 = arith.select %325, %323, %326 : vector<3x32x32xi1>, vector<3x32x32xf32>
    %cst_78 = arith.constant dense<0xFF800000> : vector<3x32xf32>
    %328 = vector.multi_reduction <maximumf>, %327, %cst_78 [1] : vector<3x32x32xf32> to vector<3x32xf32>
    %329 = vector.shape_cast %328 : vector<3x32xf32> to vector<3x1x32xf32>
    %cst_79 = arith.constant 0.000000e+00 : f32
    %330 = vector.shape_cast %26 : vector<1x1x32xi1> to vector<1x1x32xi1>
    %331 = vector.broadcast %330 : vector<1x1x32xi1> to vector<3x1x32xi1>
    %332 = vector.broadcast %cst_79 : f32 to vector<3x1x32xf32>
    %333 = arith.select %331, %329, %332 : vector<3x1x32xi1>, vector<3x1x32xf32>
    %cst_80 = arith.constant dense<0.000000e+00> : vector<3x1xf32>
    %334 = vector.multi_reduction <add>, %333, %cst_80 [2] : vector<3x1x32xf32> to vector<3x1xf32>
    %335 = vector.extract_strided_slice %17 {offsets = [0, 0, 128], sizes = [3, 32, 128], strides = [1, 1, 1]} : vector<3x32x640xf32> to vector<3x32x128xf32>
    %336 = vector.broadcast %276 : vector<3x32x1xf32> to vector<3x32x128xf32>
    %337 = arith.mulf %335, %336 : vector<3x32x128xf32>
    %cst_81 = arith.constant -1.000000e+30 : f32
    %338 = vector.shape_cast %22 : vector<1x1x128xi1> to vector<1x1x128xi1>
    %339 = vector.broadcast %338 : vector<1x1x128xi1> to vector<3x32x128xi1>
    %340 = vector.broadcast %cst_81 : f32 to vector<3x32x128xf32>
    %341 = arith.select %339, %337, %340 : vector<3x32x128xi1>, vector<3x32x128xf32>
    %cst_82 = arith.constant dense<0xFF800000> : vector<3x32xf32>
    %342 = vector.multi_reduction <maximumf>, %341, %cst_82 [2] : vector<3x32x128xf32> to vector<3x32xf32>
    %343 = vector.shape_cast %342 : vector<3x32xf32> to vector<3x32x1xf32>
    %344 = vector.broadcast %343 : vector<3x32x1xf32> to vector<3x32x128xf32>
    %345 = arith.subf %341, %344 : vector<3x32x128xf32>
    %346 = math.exp %345 : vector<3x32x128xf32>
    %cst_83 = arith.constant dense<0.000000e+00> : vector<3x32xf32>
    %347 = vector.multi_reduction <add>, %346, %cst_83 [2] : vector<3x32x128xf32> to vector<3x32xf32>
    %348 = vector.shape_cast %347 : vector<3x32xf32> to vector<3x32x1xf32>
    %349 = tpu.reciprocal %348 {approx = true} : vector<3x32x1xf32> -> vector<3x32x1xf32>
    %350 = vector.broadcast %349 : vector<3x32x1xf32> to vector<3x32x128xf32>
    %351 = arith.mulf %346, %350 : vector<3x32x128xf32>
    %352 = vector.shape_cast %351 : vector<3x32x128xf32> to vector<96x128xf32>
    %353 = vector.extract_strided_slice %13 {offsets = [0, 128], sizes = [64, 128], strides = [1, 1]} : vector<64x640xf32> to vector<64x128xf32>
    %354 = arith.truncf %352 : vector<96x128xf32> to vector<96x128xbf16>
    %355 = arith.truncf %353 : vector<64x128xf32> to vector<64x128xbf16>
    %cst_84 = arith.constant dense<0.000000e+00> : vector<96x64xf32>
    %356 = tpu.matmul %354, %355, %cst_84 {dimension_numbers = #tpu.dot_dimension_numbers<[1], [1], [0], [0], [0, 0, 1, 0], [], []>} : vector<96x128xbf16>, vector<64x128xbf16>, vector<96x64xf32> -> vector<96x64xf32>
    %357 = arith.mulf %356, %356 : vector<96x64xf32>
    %cst_85 = arith.constant dense<0.000000e+00> : vector<96xf32>
    %358 = vector.multi_reduction <add>, %357, %cst_85 [1] : vector<96x64xf32> to vector<96xf32>
    %359 = vector.shape_cast %358 : vector<96xf32> to vector<96x1xf32>
    %cst_86 = arith.constant 1.000000e-24 : f32
    %360 = vector.broadcast %cst_86 : f32 to vector<96x1xf32>
    %361 = arith.maximumf %359, %360 : vector<96x1xf32>
    %362 = math.rsqrt %361 : vector<96x1xf32>
    %363 = vector.broadcast %362 : vector<96x1xf32> to vector<96x64xf32>
    %364 = arith.mulf %356, %363 : vector<96x64xf32>
    %365 = vector.shape_cast %364 : vector<96x64xf32> to vector<3x32x64xf32>
    %366 = arith.truncf %365 : vector<3x32x64xf32> to vector<3x32x64xbf16>
    %cst_87 = arith.constant dense<0.000000e+00> : vector<3x32x32xf32>
    %367 = tpu.matmul %366, %286, %cst_87 {dimension_numbers = #tpu.dot_dimension_numbers<[2], [2], [1], [1], [0, 0, 0, 1, 1, 1], [0], [0]>} : vector<3x32x64xbf16>, vector<3x32x64xbf16>, vector<3x32x32xf32> -> vector<3x32x32xf32>
    %cst_88 = arith.constant 1.000000e+00 : f32
    %368 = vector.broadcast %cst_88 : f32 to vector<3x32x32xf32>
    %369 = arith.addf %367, %368 : vector<3x32x32xf32>
    %cst_89 = arith.constant 5.000000e-01 : f32
    %370 = vector.broadcast %cst_89 : f32 to vector<3x32x32xf32>
    %371 = arith.mulf %369, %370 : vector<3x32x32xf32>
    %cst_90 = arith.constant -1.000000e+30 : f32
    %372 = vector.shape_cast %24 : vector<1x32x1xi1> to vector<1x32x1xi1>
    %373 = vector.broadcast %372 : vector<1x32x1xi1> to vector<3x32x32xi1>
    %374 = vector.broadcast %cst_90 : f32 to vector<3x32x32xf32>
    %375 = arith.select %373, %371, %374 : vector<3x32x32xi1>, vector<3x32x32xf32>
    %cst_91 = arith.constant dense<0xFF800000> : vector<3x32xf32>
    %376 = vector.multi_reduction <maximumf>, %375, %cst_91 [1] : vector<3x32x32xf32> to vector<3x32xf32>
    %377 = vector.shape_cast %376 : vector<3x32xf32> to vector<3x1x32xf32>
    %cst_92 = arith.constant 0.000000e+00 : f32
    %378 = vector.shape_cast %26 : vector<1x1x32xi1> to vector<1x1x32xi1>
    %379 = vector.broadcast %378 : vector<1x1x32xi1> to vector<3x1x32xi1>
    %380 = vector.broadcast %cst_92 : f32 to vector<3x1x32xf32>
    %381 = arith.select %379, %377, %380 : vector<3x1x32xi1>, vector<3x1x32xf32>
    %cst_93 = arith.constant dense<0.000000e+00> : vector<3x1xf32>
    %382 = vector.multi_reduction <add>, %381, %cst_93 [2] : vector<3x1x32xf32> to vector<3x1xf32>
    %383 = vector.extract_strided_slice %17 {offsets = [0, 0, 256], sizes = [3, 32, 128], strides = [1, 1, 1]} : vector<3x32x640xf32> to vector<3x32x128xf32>
    %384 = vector.broadcast %276 : vector<3x32x1xf32> to vector<3x32x128xf32>
    %385 = arith.mulf %383, %384 : vector<3x32x128xf32>
    %cst_94 = arith.constant -1.000000e+30 : f32
    %386 = vector.shape_cast %22 : vector<1x1x128xi1> to vector<1x1x128xi1>
    %387 = vector.broadcast %386 : vector<1x1x128xi1> to vector<3x32x128xi1>
    %388 = vector.broadcast %cst_94 : f32 to vector<3x32x128xf32>
    %389 = arith.select %387, %385, %388 : vector<3x32x128xi1>, vector<3x32x128xf32>
    %cst_95 = arith.constant dense<0xFF800000> : vector<3x32xf32>
    %390 = vector.multi_reduction <maximumf>, %389, %cst_95 [2] : vector<3x32x128xf32> to vector<3x32xf32>
    %391 = vector.shape_cast %390 : vector<3x32xf32> to vector<3x32x1xf32>
    %392 = vector.broadcast %391 : vector<3x32x1xf32> to vector<3x32x128xf32>
    %393 = arith.subf %389, %392 : vector<3x32x128xf32>
    %394 = math.exp %393 : vector<3x32x128xf32>
    %cst_96 = arith.constant dense<0.000000e+00> : vector<3x32xf32>
    %395 = vector.multi_reduction <add>, %394, %cst_96 [2] : vector<3x32x128xf32> to vector<3x32xf32>
    %396 = vector.shape_cast %395 : vector<3x32xf32> to vector<3x32x1xf32>
    %397 = tpu.reciprocal %396 {approx = true} : vector<3x32x1xf32> -> vector<3x32x1xf32>
    %398 = vector.broadcast %397 : vector<3x32x1xf32> to vector<3x32x128xf32>
    %399 = arith.mulf %394, %398 : vector<3x32x128xf32>
    %400 = vector.shape_cast %399 : vector<3x32x128xf32> to vector<96x128xf32>
    %401 = vector.extract_strided_slice %13 {offsets = [0, 256], sizes = [64, 128], strides = [1, 1]} : vector<64x640xf32> to vector<64x128xf32>
    %402 = arith.truncf %400 : vector<96x128xf32> to vector<96x128xbf16>
    %403 = arith.truncf %401 : vector<64x128xf32> to vector<64x128xbf16>
    %cst_97 = arith.constant dense<0.000000e+00> : vector<96x64xf32>
    %404 = tpu.matmul %402, %403, %cst_97 {dimension_numbers = #tpu.dot_dimension_numbers<[1], [1], [0], [0], [0, 0, 1, 0], [], []>} : vector<96x128xbf16>, vector<64x128xbf16>, vector<96x64xf32> -> vector<96x64xf32>
    %405 = arith.mulf %404, %404 : vector<96x64xf32>
    %cst_98 = arith.constant dense<0.000000e+00> : vector<96xf32>
    %406 = vector.multi_reduction <add>, %405, %cst_98 [1] : vector<96x64xf32> to vector<96xf32>
    %407 = vector.shape_cast %406 : vector<96xf32> to vector<96x1xf32>
    %cst_99 = arith.constant 1.000000e-24 : f32
    %408 = vector.broadcast %cst_99 : f32 to vector<96x1xf32>
    %409 = arith.maximumf %407, %408 : vector<96x1xf32>
    %410 = math.rsqrt %409 : vector<96x1xf32>
    %411 = vector.broadcast %410 : vector<96x1xf32> to vector<96x64xf32>
    %412 = arith.mulf %404, %411 : vector<96x64xf32>
    %413 = vector.shape_cast %412 : vector<96x64xf32> to vector<3x32x64xf32>
    %414 = arith.truncf %413 : vector<3x32x64xf32> to vector<3x32x64xbf16>
    %cst_100 = arith.constant dense<0.000000e+00> : vector<3x32x32xf32>
    %415 = tpu.matmul %414, %286, %cst_100 {dimension_numbers = #tpu.dot_dimension_numbers<[2], [2], [1], [1], [0, 0, 0, 1, 1, 1], [0], [0]>} : vector<3x32x64xbf16>, vector<3x32x64xbf16>, vector<3x32x32xf32> -> vector<3x32x32xf32>
    %cst_101 = arith.constant 1.000000e+00 : f32
    %416 = vector.broadcast %cst_101 : f32 to vector<3x32x32xf32>
    %417 = arith.addf %415, %416 : vector<3x32x32xf32>
    %cst_102 = arith.constant 5.000000e-01 : f32
    %418 = vector.broadcast %cst_102 : f32 to vector<3x32x32xf32>
    %419 = arith.mulf %417, %418 : vector<3x32x32xf32>
    %cst_103 = arith.constant -1.000000e+30 : f32
    %420 = vector.shape_cast %24 : vector<1x32x1xi1> to vector<1x32x1xi1>
    %421 = vector.broadcast %420 : vector<1x32x1xi1> to vector<3x32x32xi1>
    %422 = vector.broadcast %cst_103 : f32 to vector<3x32x32xf32>
    %423 = arith.select %421, %419, %422 : vector<3x32x32xi1>, vector<3x32x32xf32>
    %cst_104 = arith.constant dense<0xFF800000> : vector<3x32xf32>
    %424 = vector.multi_reduction <maximumf>, %423, %cst_104 [1] : vector<3x32x32xf32> to vector<3x32xf32>
    %425 = vector.shape_cast %424 : vector<3x32xf32> to vector<3x1x32xf32>
    %cst_105 = arith.constant 0.000000e+00 : f32
    %426 = vector.shape_cast %26 : vector<1x1x32xi1> to vector<1x1x32xi1>
    %427 = vector.broadcast %426 : vector<1x1x32xi1> to vector<3x1x32xi1>
    %428 = vector.broadcast %cst_105 : f32 to vector<3x1x32xf32>
    %429 = arith.select %427, %425, %428 : vector<3x1x32xi1>, vector<3x1x32xf32>
    %cst_106 = arith.constant dense<0.000000e+00> : vector<3x1xf32>
    %430 = vector.multi_reduction <add>, %429, %cst_106 [2] : vector<3x1x32xf32> to vector<3x1xf32>
    %431 = vector.extract_strided_slice %17 {offsets = [0, 0, 384], sizes = [3, 32, 128], strides = [1, 1, 1]} : vector<3x32x640xf32> to vector<3x32x128xf32>
    %432 = vector.broadcast %276 : vector<3x32x1xf32> to vector<3x32x128xf32>
    %433 = arith.mulf %431, %432 : vector<3x32x128xf32>
    %cst_107 = arith.constant -1.000000e+30 : f32
    %434 = vector.shape_cast %22 : vector<1x1x128xi1> to vector<1x1x128xi1>
    %435 = vector.broadcast %434 : vector<1x1x128xi1> to vector<3x32x128xi1>
    %436 = vector.broadcast %cst_107 : f32 to vector<3x32x128xf32>
    %437 = arith.select %435, %433, %436 : vector<3x32x128xi1>, vector<3x32x128xf32>
    %cst_108 = arith.constant dense<0xFF800000> : vector<3x32xf32>
    %438 = vector.multi_reduction <maximumf>, %437, %cst_108 [2] : vector<3x32x128xf32> to vector<3x32xf32>
    %439 = vector.shape_cast %438 : vector<3x32xf32> to vector<3x32x1xf32>
    %440 = vector.broadcast %439 : vector<3x32x1xf32> to vector<3x32x128xf32>
    %441 = arith.subf %437, %440 : vector<3x32x128xf32>
    %442 = math.exp %441 : vector<3x32x128xf32>
    %cst_109 = arith.constant dense<0.000000e+00> : vector<3x32xf32>
    %443 = vector.multi_reduction <add>, %442, %cst_109 [2] : vector<3x32x128xf32> to vector<3x32xf32>
    %444 = vector.shape_cast %443 : vector<3x32xf32> to vector<3x32x1xf32>
    %445 = tpu.reciprocal %444 {approx = true} : vector<3x32x1xf32> -> vector<3x32x1xf32>
    %446 = vector.broadcast %445 : vector<3x32x1xf32> to vector<3x32x128xf32>
    %447 = arith.mulf %442, %446 : vector<3x32x128xf32>
    %448 = vector.shape_cast %447 : vector<3x32x128xf32> to vector<96x128xf32>
    %449 = vector.extract_strided_slice %13 {offsets = [0, 384], sizes = [64, 128], strides = [1, 1]} : vector<64x640xf32> to vector<64x128xf32>
    %450 = arith.truncf %448 : vector<96x128xf32> to vector<96x128xbf16>
    %451 = arith.truncf %449 : vector<64x128xf32> to vector<64x128xbf16>
    %cst_110 = arith.constant dense<0.000000e+00> : vector<96x64xf32>
    %452 = tpu.matmul %450, %451, %cst_110 {dimension_numbers = #tpu.dot_dimension_numbers<[1], [1], [0], [0], [0, 0, 1, 0], [], []>} : vector<96x128xbf16>, vector<64x128xbf16>, vector<96x64xf32> -> vector<96x64xf32>
    %453 = arith.mulf %452, %452 : vector<96x64xf32>
    %cst_111 = arith.constant dense<0.000000e+00> : vector<96xf32>
    %454 = vector.multi_reduction <add>, %453, %cst_111 [1] : vector<96x64xf32> to vector<96xf32>
    %455 = vector.shape_cast %454 : vector<96xf32> to vector<96x1xf32>
    %cst_112 = arith.constant 1.000000e-24 : f32
    %456 = vector.broadcast %cst_112 : f32 to vector<96x1xf32>
    %457 = arith.maximumf %455, %456 : vector<96x1xf32>
    %458 = math.rsqrt %457 : vector<96x1xf32>
    %459 = vector.broadcast %458 : vector<96x1xf32> to vector<96x64xf32>
    %460 = arith.mulf %452, %459 : vector<96x64xf32>
    %461 = vector.shape_cast %460 : vector<96x64xf32> to vector<3x32x64xf32>
    %462 = arith.truncf %461 : vector<3x32x64xf32> to vector<3x32x64xbf16>
    %cst_113 = arith.constant dense<0.000000e+00> : vector<3x32x32xf32>
    %463 = tpu.matmul %462, %286, %cst_113 {dimension_numbers = #tpu.dot_dimension_numbers<[2], [2], [1], [1], [0, 0, 0, 1, 1, 1], [0], [0]>} : vector<3x32x64xbf16>, vector<3x32x64xbf16>, vector<3x32x32xf32> -> vector<3x32x32xf32>
    %cst_114 = arith.constant 1.000000e+00 : f32
    %464 = vector.broadcast %cst_114 : f32 to vector<3x32x32xf32>
    %465 = arith.addf %463, %464 : vector<3x32x32xf32>
    %cst_115 = arith.constant 5.000000e-01 : f32
    %466 = vector.broadcast %cst_115 : f32 to vector<3x32x32xf32>
    %467 = arith.mulf %465, %466 : vector<3x32x32xf32>
    %cst_116 = arith.constant -1.000000e+30 : f32
    %468 = vector.shape_cast %24 : vector<1x32x1xi1> to vector<1x32x1xi1>
    %469 = vector.broadcast %468 : vector<1x32x1xi1> to vector<3x32x32xi1>
    %470 = vector.broadcast %cst_116 : f32 to vector<3x32x32xf32>
    %471 = arith.select %469, %467, %470 : vector<3x32x32xi1>, vector<3x32x32xf32>
    %cst_117 = arith.constant dense<0xFF800000> : vector<3x32xf32>
    %472 = vector.multi_reduction <maximumf>, %471, %cst_117 [1] : vector<3x32x32xf32> to vector<3x32xf32>
    %473 = vector.shape_cast %472 : vector<3x32xf32> to vector<3x1x32xf32>
    %cst_118 = arith.constant 0.000000e+00 : f32
    %474 = vector.shape_cast %26 : vector<1x1x32xi1> to vector<1x1x32xi1>
    %475 = vector.broadcast %474 : vector<1x1x32xi1> to vector<3x1x32xi1>
    %476 = vector.broadcast %cst_118 : f32 to vector<3x1x32xf32>
    %477 = arith.select %475, %473, %476 : vector<3x1x32xi1>, vector<3x1x32xf32>
    %cst_119 = arith.constant dense<0.000000e+00> : vector<3x1xf32>
    %478 = vector.multi_reduction <add>, %477, %cst_119 [2] : vector<3x1x32xf32> to vector<3x1xf32>
    %479 = vector.extract_strided_slice %17 {offsets = [0, 0, 512], sizes = [3, 32, 128], strides = [1, 1, 1]} : vector<3x32x640xf32> to vector<3x32x128xf32>
    %480 = vector.broadcast %276 : vector<3x32x1xf32> to vector<3x32x128xf32>
    %481 = arith.mulf %479, %480 : vector<3x32x128xf32>
    %cst_120 = arith.constant -1.000000e+30 : f32
    %482 = vector.shape_cast %22 : vector<1x1x128xi1> to vector<1x1x128xi1>
    %483 = vector.broadcast %482 : vector<1x1x128xi1> to vector<3x32x128xi1>
    %484 = vector.broadcast %cst_120 : f32 to vector<3x32x128xf32>
    %485 = arith.select %483, %481, %484 : vector<3x32x128xi1>, vector<3x32x128xf32>
    %cst_121 = arith.constant dense<0xFF800000> : vector<3x32xf32>
    %486 = vector.multi_reduction <maximumf>, %485, %cst_121 [2] : vector<3x32x128xf32> to vector<3x32xf32>
    %487 = vector.shape_cast %486 : vector<3x32xf32> to vector<3x32x1xf32>
    %488 = vector.broadcast %487 : vector<3x32x1xf32> to vector<3x32x128xf32>
    %489 = arith.subf %485, %488 : vector<3x32x128xf32>
    %490 = math.exp %489 : vector<3x32x128xf32>
    %cst_122 = arith.constant dense<0.000000e+00> : vector<3x32xf32>
    %491 = vector.multi_reduction <add>, %490, %cst_122 [2] : vector<3x32x128xf32> to vector<3x32xf32>
    %492 = vector.shape_cast %491 : vector<3x32xf32> to vector<3x32x1xf32>
    %493 = tpu.reciprocal %492 {approx = true} : vector<3x32x1xf32> -> vector<3x32x1xf32>
    %494 = vector.broadcast %493 : vector<3x32x1xf32> to vector<3x32x128xf32>
    %495 = arith.mulf %490, %494 : vector<3x32x128xf32>
    %496 = vector.shape_cast %495 : vector<3x32x128xf32> to vector<96x128xf32>
    %497 = vector.extract_strided_slice %13 {offsets = [0, 512], sizes = [64, 128], strides = [1, 1]} : vector<64x640xf32> to vector<64x128xf32>
    %498 = arith.truncf %496 : vector<96x128xf32> to vector<96x128xbf16>
    %499 = arith.truncf %497 : vector<64x128xf32> to vector<64x128xbf16>
    %cst_123 = arith.constant dense<0.000000e+00> : vector<96x64xf32>
    %500 = tpu.matmul %498, %499, %cst_123 {dimension_numbers = #tpu.dot_dimension_numbers<[1], [1], [0], [0], [0, 0, 1, 0], [], []>} : vector<96x128xbf16>, vector<64x128xbf16>, vector<96x64xf32> -> vector<96x64xf32>
    %501 = arith.mulf %500, %500 : vector<96x64xf32>
    %cst_124 = arith.constant dense<0.000000e+00> : vector<96xf32>
    %502 = vector.multi_reduction <add>, %501, %cst_124 [1] : vector<96x64xf32> to vector<96xf32>
    %503 = vector.shape_cast %502 : vector<96xf32> to vector<96x1xf32>
    %cst_125 = arith.constant 1.000000e-24 : f32
    %504 = vector.broadcast %cst_125 : f32 to vector<96x1xf32>
    %505 = arith.maximumf %503, %504 : vector<96x1xf32>
    %506 = math.rsqrt %505 : vector<96x1xf32>
    %507 = vector.broadcast %506 : vector<96x1xf32> to vector<96x64xf32>
    %508 = arith.mulf %500, %507 : vector<96x64xf32>
    %509 = vector.shape_cast %508 : vector<96x64xf32> to vector<3x32x64xf32>
    %510 = arith.truncf %509 : vector<3x32x64xf32> to vector<3x32x64xbf16>
    %cst_126 = arith.constant dense<0.000000e+00> : vector<3x32x32xf32>
    %511 = tpu.matmul %510, %286, %cst_126 {dimension_numbers = #tpu.dot_dimension_numbers<[2], [2], [1], [1], [0, 0, 0, 1, 1, 1], [0], [0]>} : vector<3x32x64xbf16>, vector<3x32x64xbf16>, vector<3x32x32xf32> -> vector<3x32x32xf32>
    %cst_127 = arith.constant 1.000000e+00 : f32
    %512 = vector.broadcast %cst_127 : f32 to vector<3x32x32xf32>
    %513 = arith.addf %511, %512 : vector<3x32x32xf32>
    %cst_128 = arith.constant 5.000000e-01 : f32
    %514 = vector.broadcast %cst_128 : f32 to vector<3x32x32xf32>
    %515 = arith.mulf %513, %514 : vector<3x32x32xf32>
    %cst_129 = arith.constant -1.000000e+30 : f32
    %516 = vector.shape_cast %24 : vector<1x32x1xi1> to vector<1x32x1xi1>
    %517 = vector.broadcast %516 : vector<1x32x1xi1> to vector<3x32x32xi1>
    %518 = vector.broadcast %cst_129 : f32 to vector<3x32x32xf32>
    %519 = arith.select %517, %515, %518 : vector<3x32x32xi1>, vector<3x32x32xf32>
    %cst_130 = arith.constant dense<0xFF800000> : vector<3x32xf32>
    %520 = vector.multi_reduction <maximumf>, %519, %cst_130 [1] : vector<3x32x32xf32> to vector<3x32xf32>
    %521 = vector.shape_cast %520 : vector<3x32xf32> to vector<3x1x32xf32>
    %cst_131 = arith.constant 0.000000e+00 : f32
    %522 = vector.shape_cast %26 : vector<1x1x32xi1> to vector<1x1x32xi1>
    %523 = vector.broadcast %522 : vector<1x1x32xi1> to vector<3x1x32xi1>
    %524 = vector.broadcast %cst_131 : f32 to vector<3x1x32xf32>
    %525 = arith.select %523, %521, %524 : vector<3x1x32xi1>, vector<3x1x32xf32>
    %cst_132 = arith.constant dense<0.000000e+00> : vector<3x1xf32>
    %526 = vector.multi_reduction <add>, %525, %cst_132 [2] : vector<3x1x32xf32> to vector<3x1xf32>
    %527 = tpu.concatenate %334, %382, %430, %478, %526 in 1 : vector<3x1xf32>, vector<3x1xf32>, vector<3x1xf32>, vector<3x1xf32>, vector<3x1xf32> -> vector<3x5xf32>
    %c0_133 = arith.constant 0 : index
    %c0_134 = arith.constant 0 : index
    %c0_135 = arith.constant 0 : index
    %528 = vector.load %arg7[%c0_133, %c0_134, %c0_135] : memref<1x3x5xf32, #tpu.memory_space<vmem>>, vector<1x3x5xf32>
    %529 = vector.shape_cast %528 : vector<1x3x5xf32> to vector<3x5xf32>
    %530 = vector.shape_cast %527 : vector<3x5xf32> to vector<1x3x5xf32>
    tpu.vector_store %arg7[%c0_133, %c0_134, %c0_135], %530 {strides = array<i32>} : memref<1x3x5xf32, #tpu.memory_space<vmem>>, vector<1x3x5xf32>,
    return
  }
  func.func @transform_0(%arg0: i32, %arg1: memref<1xi32, #tpu.memory_space<smem>>) -> (i32, i32) {
    %c0_i32 = arith.constant 0 : i32
    %c0_i32_0 = arith.constant 0 : i32
    %c0_i32_1 = arith.constant 0 : i32
    return %c0_i32, %c0_i32_0 : i32, i32
  }
  func.func @transform_1(%arg0: i32, %arg1: memref<1xi32, #tpu.memory_space<smem>>) -> (i32, i32) {
    %c0_i32 = arith.constant 0 : i32
    %c0_i32_0 = arith.constant 0 : i32
    %c0_i32_1 = arith.constant 0 : i32
    return %c0_i32, %c0_i32_0 : i32, i32
  }
  func.func @transform_2(%arg0: i32, %arg1: memref<1xi32, #tpu.memory_space<smem>>) -> (i32, i32) {
    %c0_i32 = arith.constant 0 : i32
    %c0_i32_0 = arith.constant 0 : i32
    %c0_i32_1 = arith.constant 0 : i32
    return %c0_i32, %c0_i32_0 : i32, i32
  }
  func.func @transform_3(%arg0: i32, %arg1: memref<1xi32, #tpu.memory_space<smem>>) -> (i32, i32, i32) {
    %c0_i32 = arith.constant 0 : i32
    %c0_i32_0 = arith.constant 0 : i32
    %c0_i32_1 = arith.constant 0 : i32
    return %arg0, %c0_i32, %c0_i32_0 : i32, i32, i32
  }
  func.func @transform_4(%arg0: i32, %arg1: memref<1xi32, #tpu.memory_space<smem>>) -> (i32, i32, i32) {
    %c0_i32 = arith.constant 0 : i32
    %c0_i32_0 = arith.constant 0 : i32
    %c0_i32_1 = arith.constant 0 : i32
    return %arg0, %c0_i32, %c0_i32_0 : i32, i32, i32
  }
  func.func @transform_5(%arg0: i32, %arg1: memref<1xi32, #tpu.memory_space<smem>>) -> (i32, i32, i32) {
    %c0_i32 = arith.constant 0 : i32
    %c0_i32_0 = arith.constant 0 : i32
    %c0_i32_1 = arith.constant 0 : i32
    return %arg0, %c0_i32, %c0_i32_0 : i32, i32, i32
  }
}

</mosaic_0001>

<llo_original>
// kernel: st_forward.2
$region0: #{st_forward.2}
  #allocation0 [shape = 'u32[]', space=smem, size = 0x4, offset = 0x4, fixed_abs, tag = 'smem constant byte address 0x4 - core index']
  #allocation1 [shape = 'u32[144,128]{1,0:T(1,128)}', space=vmem, size = 0x12000, scoped, tag = 'internal scratch']
  %s0 = inlined_call_operand.vmem [shape: f32[2,100,64], index: 0, kind: input, shape index: {}]
  %s1 = inlined_call_operand.vmem [shape: f32[2,64,125], index: 1, kind: input, shape index: {}]
  %s2 = inlined_call_operand.vmem [shape: f32[2,100,125], index: 2, kind: output, shape index: {}]
  %s3 = sld [smem:[#allocation0]]
  $region41: #{st_forward.2} parent=0
    _
  %s5 = ssub.s32 1, %s3
  %s6 = scalar_select 0, %s5, %s3
  loop: start=0, step=1, limit=4
  $region2: #{st_forward.2} parent=0 // loop_pre_header
    _
  $region3: #{st_forward.2} parent=0 // loop_header
    %s8 = sphi 0, %s12
    %p9 = scmp.ge.s32.totalorder %s8, 4
    %s18 = sphi 0, %s20
    %s21 = sphi 0, %s18
    %s22 = sphi 0, %s21
    %s38 = sphi 0, %s22
    %s44 = sphi 0, %s46
    %s47 = sphi 0, %s44
    %s48 = sphi 0, %s47
    %s64 = sphi 0, %s48
    %s70 = sphi 0, %s72
    %s73 = sphi 0, %s70
    %s74 = sphi 0, %s73
    %s90 = sphi 0, %s74
  $region4: #{st_forward.2} parent=0 // loop_header_branch
    %11 = sbr.rel (%p9) target = $region8
  $region5: #{st_forward.2} parent=0 // loop_body
    %s13 = ssub.s32 %s8, 1
    %s14 = ssub.s32 %s8, 2
    %s15 = sadd.s32 %s8, 1
    %s16 = ssub.s32 %s8, %s15
    %p17 = scmp.eq.s32.totalorder %s16, 0
    %s19 = sadd.s32 %s18, 1
    %s20 = scalar_select %p17, %s18, %s19
    %p23 = pneg %p17
    %p24 = scmp.eq.s32.totalorder %s8, 1
    %p25 = por %p23, %p24
    %p26 = scmp.ne.s32.totalorder %s18, %s21
    %p27 = scmp.eq.s32.totalorder %s8, 0
    %p28 = por %p26, %p27
    %p29 = scmp.ne.s32.totalorder %s18, %s21
    %p30 = scmp.eq.s32.totalorder %s13, 1
    %p31 = por %p29, %p30
    %p32 = scmp.ne.s32.totalorder %s21, %s22
    %p33 = scmp.eq.s32.totalorder %s13, 0
    %p34 = por %p32, %p33
    %p35 = scmp.ne.s32.totalorder %s21, %s22
    %p36 = scmp.eq.s32.totalorder %s14, 1
    %p37 = por %p35, %p36
    %p39 = scmp.ne.s32.totalorder %s22, %s38
    %p40 = scmp.eq.s32.totalorder %s14, 0
    %p41 = por %p39, %p40
    %s42 = ssub.s32 %s8, %s15
    %p43 = scmp.eq.s32.totalorder %s42, 0
    %s45 = sadd.s32 %s44, 1
    %s46 = scalar_select %p43, %s44, %s45
    %p49 = pneg %p43
    %p50 = scmp.eq.s32.totalorder %s8, 1
    %p51 = por %p49, %p50
    %p52 = scmp.ne.s32.totalorder %s44, %s47
    %p53 = scmp.eq.s32.totalorder %s8, 0
    %p54 = por %p52, %p53
    %p55 = scmp.ne.s32.totalorder %s44, %s47
    %p56 = scmp.eq.s32.totalorder %s13, 1
    %p57 = por %p55, %p56
    %p58 = scmp.ne.s32.totalorder %s47, %s48
    %p59 = scmp.eq.s32.totalorder %s13, 0
    %p60 = por %p58, %p59
    %p61 = scmp.ne.s32.totalorder %s47, %s48
    %p62 = scmp.eq.s32.totalorder %s14, 1
    %p63 = por %p61, %p62
    %p65 = scmp.ne.s32.totalorder %s48, %s64
    %p66 = scmp.eq.s32.totalorder %s14, 0
    %p67 = por %p65, %p66
    %s68 = ssub.s32 %s8, %s15
    %p69 = scmp.eq.s32.totalorder %s68, 0
    %s71 = sadd.s32 %s70, 1
    %s72 = scalar_select %p69, %s70, %s71
    %p75 = pneg %p69
    %p76 = scmp.eq.s32.totalorder %s8, 1
    %p77 = por %p75, %p76
    %p78 = scmp.ne.s32.totalorder %s70, %s73
    %p79 = scmp.eq.s32.totalorder %s8, 0
    %p80 = por %p78, %p79
    %p81 = scmp.ne.s32.totalorder %s70, %s73
    %p82 = scmp.eq.s32.totalorder %s13, 1
    %p83 = por %p81, %p82
    %p84 = scmp.ne.s32.totalorder %s73, %s74
    %p85 = scmp.eq.s32.totalorder %s13, 0
    %p86 = por %p84, %p85
    %p87 = scmp.ne.s32.totalorder %s73, %s74
    %p88 = scmp.eq.s32.totalorder %s14, 1
    %p89 = por %p87, %p88
    %p91 = scmp.ne.s32.totalorder %s74, %s90
    %p92 = scmp.eq.s32.totalorder %s14, 0
    %p93 = por %p91, %p92
    %p94 = scmp.le.s32.totalorder 1, %s8
    %p95 = scmp.lt.s32.totalorder %s8, 3
    %p96 = pnand %p94, %p95
    %p97 = pneg %p96
    // Predicated region
    $region9: #{st_forward.2} parent=5 // pred_check
      _
    $region10: #{st_forward.2} parent=5 // pred_check_branch
      %99 = sbr.rel (%p96) target = $region12
    $region11: #{st_forward.2} parent=5 // pred_region
      %s100 = ssub.s32 %s8, 1
    $region12: #{st_forward.2} parent=5 // pred_fallthru
      _
    %p101 = scmp.lt.s32.totalorder %s8, 2
    // Predicated region
    $region13: #{st_forward.2} parent=5 // pred_check
      %p102 = pneg %p101
    $region14: #{st_forward.2} parent=5 // pred_check_branch
      %104 = sbr.rel (%p102) target = $region16
    $region15: #{st_forward.2} parent=5 // pred_region
      // Predicated region
      $region17: #{st_forward.2} parent=15 // pred_check
        %p105 = pneg %p28
      $region18: #{st_forward.2} parent=15 // pred_check_branch
        %107 = sbr.rel (%p105) target = $region20
      $region19: #{st_forward.2} parent=15 // pred_region
        %p108 = scmp.lt.s32.totalorder %s8, 1
        %s109 = scalar_select %p108, %s8, 1
        %s110 = smul.addr %s109, 13
        %s111 = smul.addr %s110, 8
        %s112 = scalar_lea.vmem %s0, %s111
      $region20: #{st_forward.2} parent=15 // pred_fallthru
        _
      // Predicated region
      $region21: #{st_forward.2} parent=15 // pred_check
        %p113 = pneg %p54
      $region22: #{st_forward.2} parent=15 // pred_check_branch
        %115 = sbr.rel (%p113) target = $region24
      $region23: #{st_forward.2} parent=15 // pred_region
        %p116 = scmp.lt.s32.totalorder %s8, 1
        %s117 = scalar_select %p116, %s8, 1
        %s118 = smul.addr %s117, 8
        %s119 = smul.addr %s118, 8
        %s120 = scalar_lea.vmem %s1, %s119
      $region24: #{st_forward.2} parent=15 // pred_fallthru
        _
    $region16: #{st_forward.2} parent=5 // pred_fallthru
      _
    %p121 = scmp.le.s32.totalorder 1, %s8
    %p122 = scmp.lt.s32.totalorder %s8, 3
    %p123 = pnand %p121, %p122
    %p124 = pneg %p123
    // Predicated region
    $region25: #{st_forward.2} parent=5 // pred_check
      _
    $region26: #{st_forward.2} parent=5 // pred_check_branch
      %126 = sbr.rel (%p123) target = $region28
    $region27: #{st_forward.2} parent=5 // pred_region
      %s127 = ssub.s32 %s8, 1
      %p128 = scmp.lt.s32.totalorder %s13, 1
      %s129 = scalar_select %p128, %s13, 1
      %s130 = smul.addr %s129, 13
      %s131 = smul.addr %s130, 8
      %s132 = scalar_lea.vmem %s0, %s131
      %p133 = pneg %p34
      %p134 = pneg %p31
      %p135 = scmp.lt.s32.totalorder %s13, 1
      %s136 = scalar_select %p135, %s13, 1
      %s137 = smul.addr %s136, 8
      %s138 = smul.addr %s137, 8
      %s139 = scalar_lea.vmem %s1, %s138
      %p140 = pneg %p60
      %p141 = pneg %p57
      %p142 = pneg %p86
      %p143 = pneg %p83
      %p144 = scmp.lt.s32.totalorder %s13, 1
      %s145 = scalar_select %p144, %s13, 1
      %s146 = smul.addr %s145, 13
      %s147 = smul.addr %s146, 8
      %s148 = scalar_lea.vmem %s2, %s147
      %p149 = scmp.lt.s32.totalorder %s13, 1
      %s150 = scalar_select %p149, %s13, 1
      %s151 = smul.addr %s150, 13
      %s152 = smul.addr %s151, 8
      %s153 = scalar_lea.vmem %s0, %s152
      %p154 = scmp.lt.s32.totalorder %s13, 1
      %s155 = scalar_select %p154, %s13, 1
      %s156 = smul.addr %s155, 8
      %s157 = smul.addr %s156, 8
      %s158 = scalar_lea.vmem %s1, %s157
      %p159 = scmp.lt.s32.totalorder %s13, 1
      %s160 = scalar_select %p159, %s13, 1
      %s161 = smul.addr %s160, 13
      %s162 = smul.addr %s161, 8
      %s163 = scalar_lea.vmem %s2, %s162
      %v165 = vld [vmem:[%s153] sm:$0xff]
      %v166 = vld [vmem:[%s153 + $0x8] sm:$0xff]
      %v167 = vld [vmem:[%s153 + $0x10] sm:$0xff]
      %v168 = vld [vmem:[%s153 + $0x18] sm:$0xff]
      %v169 = vld [vmem:[%s153 + $0x20] sm:$0xff]
      %v170 = vld [vmem:[%s153 + $0x28] sm:$0xff]
      %v171 = vld [vmem:[%s153 + $0x30] sm:$0xff]
      %v172 = vld [vmem:[%s153 + $0x38] sm:$0xff]
      %v173 = vld [vmem:[%s153 + $0x40] sm:$0xff]
      %v174 = vld [vmem:[%s153 + $0x48] sm:$0xff]
      %v175 = vld [vmem:[%s153 + $0x50] sm:$0xff]
      %v176 = vld [vmem:[%s153 + $0x58] sm:$0xff]
      %v177 = vld [vmem:[%s153 + $0x60] sm:$0xf]
      %v178 = vld [vmem:[%s158] sm:$0xff]
      %v179 = vld [vmem:[%s158 + $0x8] sm:$0xff]
      %v180 = vld [vmem:[%s158 + $0x10] sm:$0xff]
      %v181 = vld [vmem:[%s158 + $0x18] sm:$0xff]
      %v182 = vld [vmem:[%s158 + $0x20] sm:$0xff]
      %v183 = vld [vmem:[%s158 + $0x28] sm:$0xff]
      %v184 = vld [vmem:[%s158 + $0x30] sm:$0xff]
      %v185 = vld [vmem:[%s158 + $0x38] sm:$0xff]
      %v186 = vpack.c.bf16 %v166, %v165
      %v187 = vpack.c.bf16 %v168, %v167
      %v188 = vpack.c.bf16 %v170, %v169
      %v189 = vpack.c.bf16 %v172, %v171
      %v190 = vpack.c.bf16 %v174, %v173
      %v191 = vpack.c.bf16 %v176, %v175
      %v192 = vpack.c.bf16 %v177, %v177
      %v193 = vpack.c.bf16 %v179, %v178
      %v194 = vpack.c.bf16 %v181, %v180
      %v195 = vpack.c.bf16 %v183, %v182
      %v196 = vpack.c.bf16 %v185, %v184
      %vm197 = vcmask 523264
      %v199 = vsel %vm197, %v186, 0
      %v202 = vsel %vm197, %v187, 0
      %v205 = vsel %vm197, %v188, 0
      %v208 = vsel %vm197, %v189, 0
      %v211 = vsel %vm197, %v190, 0
      %v214 = vsel %vm197, %v191, 0
      %v217 = vsel %vm197, %v192, 0
      %219 = vmatprep.subr.bf16.mxu0 0
      %220 = vmatpush1.bf16.msra.mxu0 %v193
      %221 = vmatprep.subr.bf16.mxu0 0
      %222 = vmatpush1.bf16.msra.mxu0 %v194
      %223 = vmatprep.subr.bf16.mxu0 0
      %224 = vmatpush1.bf16.msra.mxu0 %v195
      %225 = vmatprep.subr.bf16.mxu0 0
      %226 = vmatpush1.bf16.msra.mxu0 %v196
      %227 = vmatprep.subr.bf16.mxu0 0
      %228 = vmatpush1.bf16.msra.mxu0 0
      %229 = vmatprep.subr.bf16.mxu0 0
      %230 = vmatpush1.bf16.msra.mxu0 0
      %231 = vmatprep.subr.bf16.mxu0 0
      %232 = vmatpush1.bf16.msra.mxu0 0
      %233 = vmatprep.subr.bf16.mxu0 0
      %234 = vmatpush1.bf16.msra.mxu0 0
      %235 = vmatprep.subr.bf16.mxu0 0
      %236 = vmatpush1.bf16.msra.mxu0 0
      %237 = vmatprep.subr.bf16.mxu0 0
      %238 = vmatpush1.bf16.msra.mxu0 0
      %239 = vmatprep.subr.bf16.mxu0 0
      %240 = vmatpush1.bf16.msra.mxu0 0
      %241 = vmatprep.subr.bf16.mxu0 0
      %242 = vmatpush1.bf16.msra.mxu0 0
      %243 = vmatprep.subr.bf16.mxu0 0
      %244 = vmatpush1.bf16.msra.mxu0 0
      %245 = vmatprep.subr.bf16.mxu0 0
      %246 = vmatpush1.bf16.msra.mxu0 0
      %247 = vmatprep.subr.bf16.mxu0 0
      %248 = vmatpush1.bf16.msra.mxu0 0
      %249 = vmatprep.subr.bf16.mxu0 0
      %250 = vmatpush1.bf16.msra.mxu0 0
      %251 = vmatprep.mubr.bf16.mxu0 0
      %252 = vmatmul.mubr.bf16.gmra.mrb[0].mxu0 %v199
      %v253 = vpop.f32.mrb[0].mxu0
      %v254 = vadd.f32 0.0, %v253
      %v255 = vpop.f32.mrb[0].mxu0
      %v256 = vpop.f32.mrb[0].mxu0
      %v257 = vadd.f32 0.0, %v256
      %v258 = vpop.f32.mrb[0].mxu0
      %259 = vmatprep.mubr.bf16.mxu0 0
      %260 = vmatmul.mubr.bf16.gmra.mrb[0].mxu0 %v202
      %v261 = vpop.f32.mrb[0].mxu0
      %v262 = vadd.f32 0.0, %v261
      %v263 = vpop.f32.mrb[0].mxu0
      %v264 = vpop.f32.mrb[0].mxu0
      %v265 = vadd.f32 0.0, %v264
      %v266 = vpop.f32.mrb[0].mxu0
      %267 = vmatprep.mubr.bf16.mxu0 0
      %268 = vmatmul.mubr.bf16.gmra.mrb[0].mxu0 %v205
      %v269 = vpop.f32.mrb[0].mxu0
      %v270 = vadd.f32 0.0, %v269
      %v271 = vpop.f32.mrb[0].mxu0
      %v272 = vpop.f32.mrb[0].mxu0
      %v273 = vadd.f32 0.0, %v272
      %v274 = vpop.f32.mrb[0].mxu0
      %275 = vmatprep.mubr.bf16.mxu0 0
      %276 = vmatmul.mubr.bf16.gmra.mrb[0].mxu0 %v208
      %v277 = vpop.f32.mrb[0].mxu0
      %v278 = vadd.f32 0.0, %v277
      %v279 = vpop.f32.mrb[0].mxu0
      %v280 = vpop.f32.mrb[0].mxu0
      %v281 = vadd.f32 0.0, %v280
      %v282 = vpop.f32.mrb[0].mxu0
      %283 = vmatprep.mubr.bf16.mxu0 0
      %284 = vmatmul.mubr.bf16.gmra.mrb[0].mxu0 %v211
      %v285 = vpop.f32.mrb[0].mxu0
      %v286 = vadd.f32 0.0, %v285
      %v287 = vpop.f32.mrb[0].mxu0
      %v288 = vpop.f32.mrb[0].mxu0
      %v289 = vadd.f32 0.0, %v288
      %v290 = vpop.f32.mrb[0].mxu0
      %291 = vmatprep.mubr.bf16.mxu0 0
      %292 = vmatmul.mubr.bf16.gmra.mrb[0].mxu0 %v214
      %v293 = vpop.f32.mrb[0].mxu0
      %v294 = vadd.f32 0.0, %v293
      %v295 = vpop.f32.mrb[0].mxu0
      %v296 = vpop.f32.mrb[0].mxu0
      %v297 = vadd.f32 0.0, %v296
      %v298 = vpop.f32.mrb[0].mxu0
      %299 = vmatprep.mubr.bf16.mxu0 0
      %300 = vmatmul.mubr.bf16.gmra.mrb[0].mxu0 %v217
      %v301 = vpop.f32.mrb[0].mxu0
      %v302 = vadd.f32 0.0, %v301
      %v303 = vpop.f32.mrb[0].mxu0
      %v304 = vpop.f32.mrb[0].mxu0
      %v305 = vpop.f32.mrb[0].mxu0
      %306 = vdwg.mxu0
      %v307 = vmul.f32 %v165, %v165
      %v308 = vmul.f32 %v166, %v166
      %v309 = vmul.f32 %v167, %v167
      %v310 = vmul.f32 %v168, %v168
      %v311 = vmul.f32 %v169, %v169
      %v312 = vmul.f32 %v170, %v170
      %v313 = vmul.f32 %v171, %v171
      %v314 = vmul.f32 %v172, %v172
      %v315 = vmul.f32 %v173, %v173
      %v316 = vmul.f32 %v174, %v174
      %v317 = vmul.f32 %v175, %v175
      %v318 = vmul.f32 %v176, %v176
      %v319 = vmul.f32 %v177, %v177
      %v320 = vsel %vm197, %v307, 0.0
      %321 = vadd.xlane.f32.xlu0 %v320
      %v322 = vpop.xlane.xlu0 %321
      %v323 = vsel %vm197, %v308, 0.0
      %324 = vadd.xlane.f32.xlu0 %v323
      %v325 = vpop.xlane.xlu0 %324
      %v326 = vsel %vm197, %v309, 0.0
      %327 = vadd.xlane.f32.xlu0 %v326
      %v328 = vpop.xlane.xlu0 %327
      %v329 = vsel %vm197, %v310, 0.0
      %330 = vadd.xlane.f32.xlu0 %v329
      %v331 = vpop.xlane.xlu0 %330
      %v332 = vsel %vm197, %v311, 0.0
      %333 = vadd.xlane.f32.xlu0 %v332
      %v334 = vpop.xlane.xlu0 %333
      %v335 = vsel %vm197, %v312, 0.0
      %336 = vadd.xlane.f32.xlu0 %v335
      %v337 = vpop.xlane.xlu0 %336
      %v338 = vsel %vm197, %v313, 0.0
      %339 = vadd.xlane.f32.xlu0 %v338
      %v340 = vpop.xlane.xlu0 %339
      %v341 = vsel %vm197, %v314, 0.0
      %342 = vadd.xlane.f32.xlu0 %v341
      %v343 = vpop.xlane.xlu0 %342
      %v344 = vsel %vm197, %v315, 0.0
      %345 = vadd.xlane.f32.xlu0 %v344
      %v346 = vpop.xlane.xlu0 %345
      %v347 = vsel %vm197, %v316, 0.0
      %348 = vadd.xlane.f32.xlu0 %v347
      %v349 = vpop.xlane.xlu0 %348
      %v350 = vsel %vm197, %v317, 0.0
      %351 = vadd.xlane.f32.xlu0 %v350
      %v352 = vpop.xlane.xlu0 %351
      %v353 = vsel %vm197, %v318, 0.0
      %354 = vadd.xlane.f32.xlu0 %v353
      %v355 = vpop.xlane.xlu0 %354
      %vm356 = vcmask 519168
      %v357 = vsel %vm356, %v319, 0.0
      %358 = vadd.xlane.f32.xlu0 %v357
      %v359 = vpop.xlane.xlu0 %358
      %v360 = vmax.f32 %v322, 1e-24
      %v361 = vmax.f32 %v325, 1e-24
      %v362 = vmax.f32 %v328, 1e-24
      %v363 = vmax.f32 %v331, 1e-24
      %v364 = vmax.f32 %v334, 1e-24
      %v365 = vmax.f32 %v337, 1e-24
      %v366 = vmax.f32 %v340, 1e-24
      %v367 = vmax.f32 %v343, 1e-24
      %v368 = vmax.f32 %v346, 1e-24
      %v369 = vmax.f32 %v349, 1e-24
      %v370 = vmax.f32 %v352, 1e-24
      %v371 = vmax.f32 %v355, 1e-24
      %v372 = vmax.f32 %v359, 1e-24
      %v373 = vrsqrt.pop %v360
      %v374 = vrsqrt.pop %v361
      %v375 = vrsqrt.pop %v362
      %v376 = vrsqrt.pop %v363
      %v377 = vrsqrt.pop %v364
      %v378 = vrsqrt.pop %v365
      %v379 = vrsqrt.pop %v366
      %v380 = vrsqrt.pop %v367
      %v381 = vrsqrt.pop %v368
      %v382 = vrsqrt.pop %v369
      %v383 = vrsqrt.pop %v370
      %v384 = vrsqrt.pop %v371
      %v385 = vrsqrt.pop %v372
      %v386 = vmul.f32 %v178, %v178
      %v387 = vmul.f32 %v179, %v179
      %v388 = vmul.f32 %v180, %v180
      %v389 = vmul.f32 %v181, %v181
      %v390 = vmul.f32 %v182, %v182
      %v391 = vmul.f32 %v183, %v183
      %v392 = vmul.f32 %v184, %v184
      %v393 = vmul.f32 %v185, %v185
      %vm394 = vcmask 1022976
      %v395 = vsel %vm394, %v386, 0.0
      %v396 = vsel %vm394, %v387, 0.0
      %v397 = vadd.f32 %v395, %v396
      %v398 = vsel %vm394, %v388, 0.0
      %v399 = vadd.f32 %v397, %v398
      %v400 = vsel %vm394, %v389, 0.0
      %v401 = vadd.f32 %v399, %v400
      %v402 = vsel %vm394, %v390, 0.0
      %v403 = vadd.f32 %v401, %v402
      %v404 = vsel %vm394, %v391, 0.0
      %v405 = vadd.f32 %v403, %v404
      %v406 = vsel %vm394, %v392, 0.0
      %v407 = vadd.f32 %v405, %v406
      %v408 = vsel %vm394, %v393, 0.0
      %v409 = vadd.f32 %v407, %v408
      %v410 = vrot.slane %v409, 4
      %v411 = vadd.f32 %v409, %v410
      %v412 = vrot.slane %v411, 2
      %v413 = vadd.f32 %v411, %v412
      %v414 = vrot.slane %v413, 1
      %v415 = vadd.f32 %v413, %v414
      %v416 = vmax.f32 %v415, 1e-24
      %v417 = vrsqrt.pop %v416
      %v418 = vmul.f32 %v254, %v373
      %v419 = vmul.f32 %v257, %v374
      %v420 = vmul.f32 %v262, %v375
      %v421 = vmul.f32 %v265, %v376
      %v422 = vmul.f32 %v270, %v377
      %v423 = vmul.f32 %v273, %v378
      %v424 = vmul.f32 %v278, %v379
      %v425 = vmul.f32 %v281, %v380
      %v426 = vmul.f32 %v286, %v381
      %v427 = vmul.f32 %v289, %v382
      %v428 = vmul.f32 %v294, %v383
      %v429 = vmul.f32 %v297, %v384
      %v430 = vmul.f32 %v302, %v385
      %v431 = vmul.f32 %v418, %v417
      %v432 = vmul.f32 %v419, %v417
      %v433 = vmul.f32 %v420, %v417
      %v434 = vmul.f32 %v421, %v417
      %v435 = vmul.f32 %v422, %v417
      %v436 = vmul.f32 %v423, %v417
      %v437 = vmul.f32 %v424, %v417
      %v438 = vmul.f32 %v425, %v417
      %v439 = vmul.f32 %v426, %v417
      %v440 = vmul.f32 %v427, %v417
      %v441 = vmul.f32 %v428, %v417
      %v442 = vmul.f32 %v429, %v417
      %v443 = vmul.f32 %v430, %v417
      %444 = vst.msk [vmem:[%s163] sm:$0xff] %vm394, %v431
      %445 = vst.msk [vmem:[%s163 + $0x8] sm:$0xff] %vm394, %v432
      %446 = vst.msk [vmem:[%s163 + $0x10] sm:$0xff] %vm394, %v433
      %447 = vst.msk [vmem:[%s163 + $0x18] sm:$0xff] %vm394, %v434
      %448 = vst.msk [vmem:[%s163 + $0x20] sm:$0xff] %vm394, %v435
      %449 = vst.msk [vmem:[%s163 + $0x28] sm:$0xff] %vm394, %v436
      %450 = vst.msk [vmem:[%s163 + $0x30] sm:$0xff] %vm394, %v437
      %451 = vst.msk [vmem:[%s163 + $0x38] sm:$0xff] %vm394, %v438
      %452 = vst.msk [vmem:[%s163 + $0x40] sm:$0xff] %vm394, %v439
      %453 = vst.msk [vmem:[%s163 + $0x48] sm:$0xff] %vm394, %v440
      %454 = vst.msk [vmem:[%s163 + $0x50] sm:$0xff] %vm394, %v441
      %455 = vst.msk [vmem:[%s163 + $0x58] sm:$0xff] %vm394, %v442
      %vm456 = vcmask 1018880
      %457 = vst.msk [vmem:[%s163 + $0x60] sm:$0xf] %vm456, %v443
      %p458 = scmp.lt.s32.totalorder %s13, 1
      %s459 = scalar_select %p458, %s13, 1
      %s460 = smul.addr %s459, 13
      %s461 = smul.addr %s460, 8
      %s462 = scalar_lea.vmem %s2, %s461
      // Predicated region
      $region29: #{st_forward.2} parent=27 // pred_check
        %p463 = pneg %p83
      $region30: #{st_forward.2} parent=27 // pred_check_branch
        %465 = sbr.rel (%p463) target = $region32
      $region31: #{st_forward.2} parent=27 // pred_region
        _
      $region32: #{st_forward.2} parent=27 // pred_fallthru
        _
    $region28: #{st_forward.2} parent=5 // pred_fallthru
      _
    %p466 = scmp.le.s32.totalorder 2, %s8
    // Predicated region
    $region33: #{st_forward.2} parent=5 // pred_check
      %p467 = pneg %p466
    $region34: #{st_forward.2} parent=5 // pred_check_branch
      %469 = sbr.rel (%p467) target = $region36
    $region35: #{st_forward.2} parent=5 // pred_region
      %s470 = ssub.s32 %s8, 2
      // Predicated region
      $region37: #{st_forward.2} parent=35 // pred_check
        %p471 = pneg %p89
      $region38: #{st_forward.2} parent=35 // pred_check_branch
        %473 = sbr.rel (%p471) target = $region40
      $region39: #{st_forward.2} parent=35 // pred_region
        %p474 = scmp.lt.s32.totalorder %s14, 1
        %s475 = scalar_select %p474, %s14, 1
        %s476 = smul.addr %s475, 13
        %s477 = smul.addr %s476, 8
        %s478 = scalar_lea.vmem %s2, %s477
      $region40: #{st_forward.2} parent=35 // pred_fallthru
        _
    $region36: #{st_forward.2} parent=5 // pred_fallthru
      _
  $region6: #{st_forward.2} parent=0 // loop_footer
    %s12 = sadd.s32 1, %s8
  $region7: #{st_forward.2} parent=0 // loop_footer_branch
    %7 = sbr.rel target = $region3
  $region8: #{st_forward.2} parent=0 // loop_exit
    _

// kernel: st_forward.3
$region0: #{st_forward.3}
  #allocation0 [shape = 'u32[]', space=smem, size = 0x4, offset = 0x4, fixed_abs, tag = 'smem constant byte address 0x4 - core index']
  #allocation1 [shape = 'u32[144,128]{1,0:T(1,128)}', space=vmem, size = 0x12000, scoped, tag = 'internal scratch']
  #allocation2 [shape = 's32[1]{0}', space=sflag, size = 0x4, scoped, tag = 'scoped memory for st_forward.3']
  #allocation3 [shape = 's32[1]{0:T(128)S(6)}', space=smem, size = 0x200, scoped, tag = 'prefetched SMEM operand 0']
  %s0 = inlined_call_operand.<no memory space> [shape: s32[1], index: 0, kind: input, shape index: {}]
  %s1 = inlined_call_operand.vmem [shape: bf16[64,64], index: 1, kind: input, shape index: {}]
  %s2 = inlined_call_operand.vmem [shape: bf16[64,64], index: 2, kind: input, shape index: {}]
  %s3 = inlined_call_operand.vmem [shape: bf16[64,64], index: 3, kind: input, shape index: {}]
  %s4 = inlined_call_operand.vmem [shape: bf16[2,96,64], index: 4, kind: input, shape index: {}]
  %s5 = inlined_call_operand.vmem [shape: bf16[2,64,640], index: 5, kind: input, shape index: {}]
  %s6 = inlined_call_operand.vmem [shape: f32[2,3,5], index: 6, kind: output, shape index: {}]
  %s7 = sld [smem:[#allocation0]]
  $region53: #{st_forward.3} parent=0
    _
  %s9 = ssub.s32 1, %s7
  %s10 = scalar_select 0, %s9, %s7
  %11 = sst [smem:[#allocation3]] %s0
  loop: start=0, step=1, limit=4
  $region2: #{st_forward.3} parent=0 // loop_pre_header
    _
  $region3: #{st_forward.3} parent=0 // loop_header
    %s13 = sphi 0, %s17
    %p14 = scmp.ge.s32.totalorder %s13, 4
    %s21 = sphi 0, %s21
    %s23 = sphi 0, %s21
    %s24 = sphi 0, %s23
    %s38 = sphi 0, %s24
    %s42 = sphi 0, %s42
    %s44 = sphi 0, %s42
    %s45 = sphi 0, %s44
    %s59 = sphi 0, %s45
    %s63 = sphi 0, %s63
    %s65 = sphi 0, %s63
    %s66 = sphi 0, %s65
    %s80 = sphi 0, %s66
    %s86 = sphi 0, %s88
    %s89 = sphi 0, %s86
    %s90 = sphi 0, %s89
    %s106 = sphi 0, %s90
    %s112 = sphi 0, %s114
    %s115 = sphi 0, %s112
    %s116 = sphi 0, %s115
    %s132 = sphi 0, %s116
    %s138 = sphi 0, %s140
    %s141 = sphi 0, %s138
    %s142 = sphi 0, %s141
    %s158 = sphi 0, %s142
  $region4: #{st_forward.3} parent=0 // loop_header_branch
    %16 = sbr.rel (%p14) target = $region8
  $region5: #{st_forward.3} parent=0 // loop_body
    %s18 = ssub.s32 %s13, 1
    %s19 = ssub.s32 %s13, 2
    %s20 = sadd.s32 %s13, 1
    %s22 = sadd.s32 %s21, 1
    %p25 = scmp.eq.s32.totalorder %s13, 1
    %p26 = scmp.ne.s32.totalorder %s21, %s23
    %p27 = scmp.eq.s32.totalorder %s13, 0
    %p28 = por %p26, %p27
    %p29 = scmp.ne.s32.totalorder %s21, %s23
    %p30 = scmp.eq.s32.totalorder %s18, 1
    %p31 = por %p29, %p30
    %p32 = scmp.ne.s32.totalorder %s23, %s24
    %p33 = scmp.eq.s32.totalorder %s18, 0
    %p34 = por %p32, %p33
    %p35 = scmp.ne.s32.totalorder %s23, %s24
    %p36 = scmp.eq.s32.totalorder %s19, 1
    %p37 = por %p35, %p36
    %p39 = scmp.ne.s32.totalorder %s24, %s38
    %p40 = scmp.eq.s32.totalorder %s19, 0
    %p41 = por %p39, %p40
    %s43 = sadd.s32 %s42, 1
    %p46 = scmp.eq.s32.totalorder %s13, 1
    %p47 = scmp.ne.s32.totalorder %s42, %s44
    %p48 = scmp.eq.s32.totalorder %s13, 0
    %p49 = por %p47, %p48
    %p50 = scmp.ne.s32.totalorder %s42, %s44
    %p51 = scmp.eq.s32.totalorder %s18, 1
    %p52 = por %p50, %p51
    %p53 = scmp.ne.s32.totalorder %s44, %s45
    %p54 = scmp.eq.s32.totalorder %s18, 0
    %p55 = por %p53, %p54
    %p56 = scmp.ne.s32.totalorder %s44, %s45
    %p57 = scmp.eq.s32.totalorder %s19, 1
    %p58 = por %p56, %p57
    %p60 = scmp.ne.s32.totalorder %s45, %s59
    %p61 = scmp.eq.s32.totalorder %s19, 0
    %p62 = por %p60, %p61
    %s64 = sadd.s32 %s63, 1
    %p67 = scmp.eq.s32.totalorder %s13, 1
    %p68 = scmp.ne.s32.totalorder %s63, %s65
    %p69 = scmp.eq.s32.totalorder %s13, 0
    %p70 = por %p68, %p69
    %p71 = scmp.ne.s32.totalorder %s63, %s65
    %p72 = scmp.eq.s32.totalorder %s18, 1
    %p73 = por %p71, %p72
    %p74 = scmp.ne.s32.totalorder %s65, %s66
    %p75 = scmp.eq.s32.totalorder %s18, 0
    %p76 = por %p74, %p75
    %p77 = scmp.ne.s32.totalorder %s65, %s66
    %p78 = scmp.eq.s32.totalorder %s19, 1
    %p79 = por %p77, %p78
    %p81 = scmp.ne.s32.totalorder %s66, %s80
    %p82 = scmp.eq.s32.totalorder %s19, 0
    %p83 = por %p81, %p82
    %s84 = ssub.s32 %s13, %s20
    %p85 = scmp.eq.s32.totalorder %s84, 0
    %s87 = sadd.s32 %s86, 1
    %s88 = scalar_select %p85, %s86, %s87
    %p91 = pneg %p85
    %p92 = scmp.eq.s32.totalorder %s13, 1
    %p93 = por %p91, %p92
    %p94 = scmp.ne.s32.totalorder %s86, %s89
    %p95 = scmp.eq.s32.totalorder %s13, 0
    %p96 = por %p94, %p95
    %p97 = scmp.ne.s32.totalorder %s86, %s89
    %p98 = scmp.eq.s32.totalorder %s18, 1
    %p99 = por %p97, %p98
    %p100 = scmp.ne.s32.totalorder %s89, %s90
    %p101 = scmp.eq.s32.totalorder %s18, 0
    %p102 = por %p100, %p101
    %p103 = scmp.ne.s32.totalorder %s89, %s90
    %p104 = scmp.eq.s32.totalorder %s19, 1
    %p105 = por %p103, %p104
    %p107 = scmp.ne.s32.totalorder %s90, %s106
    %p108 = scmp.eq.s32.totalorder %s19, 0
    %p109 = por %p107, %p108
    %s110 = ssub.s32 %s13, %s20
    %p111 = scmp.eq.s32.totalorder %s110, 0
    %s113 = sadd.s32 %s112, 1
    %s114 = scalar_select %p111, %s112, %s113
    %p117 = pneg %p111
    %p118 = scmp.eq.s32.totalorder %s13, 1
    %p119 = por %p117, %p118
    %p120 = scmp.ne.s32.totalorder %s112, %s115
    %p121 = scmp.eq.s32.totalorder %s13, 0
    %p122 = por %p120, %p121
    %p123 = scmp.ne.s32.totalorder %s112, %s115
    %p124 = scmp.eq.s32.totalorder %s18, 1
    %p125 = por %p123, %p124
    %p126 = scmp.ne.s32.totalorder %s115, %s116
    %p127 = scmp.eq.s32.totalorder %s18, 0
    %p128 = por %p126, %p127
    %p129 = scmp.ne.s32.totalorder %s115, %s116
    %p130 = scmp.eq.s32.totalorder %s19, 1
    %p131 = por %p129, %p130
    %p133 = scmp.ne.s32.totalorder %s116, %s132
    %p134 = scmp.eq.s32.totalorder %s19, 0
    %p135 = por %p133, %p134
    %s136 = ssub.s32 %s13, %s20
    %p137 = scmp.eq.s32.totalorder %s136, 0
    %s139 = sadd.s32 %s138, 1
    %s140 = scalar_select %p137, %s138, %s139
    %p143 = pneg %p137
    %p144 = scmp.eq.s32.totalorder %s13, 1
    %p145 = por %p143, %p144
    %p146 = scmp.ne.s32.totalorder %s138, %s141
    %p147 = scmp.eq.s32.totalorder %s13, 0
    %p148 = por %p146, %p147
    %p149 = scmp.ne.s32.totalorder %s138, %s141
    %p150 = scmp.eq.s32.totalorder %s18, 1
    %p151 = por %p149, %p150
    %p152 = scmp.ne.s32.totalorder %s141, %s142
    %p153 = scmp.eq.s32.totalorder %s18, 0
    %p154 = por %p152, %p153
    %p155 = scmp.ne.s32.totalorder %s141, %s142
    %p156 = scmp.eq.s32.totalorder %s19, 1
    %p157 = por %p155, %p156
    %p159 = scmp.ne.s32.totalorder %s142, %s158
    %p160 = scmp.eq.s32.totalorder %s19, 0
    %p161 = por %p159, %p160
    %p162 = scmp.le.s32.totalorder 1, %s13
    %p163 = scmp.lt.s32.totalorder %s13, 3
    %p164 = pnand %p162, %p163
    %p165 = pneg %p164
    // Predicated region
    $region9: #{st_forward.3} parent=5 // pred_check
      _
    $region10: #{st_forward.3} parent=5 // pred_check_branch
      %167 = sbr.rel (%p164) target = $region12
    $region11: #{st_forward.3} parent=5 // pred_region
      %s168 = ssub.s32 %s13, 1
      // Predicated region
      $region13: #{st_forward.3} parent=11 // pred_check
        %p169 = pneg %p34
      $region14: #{st_forward.3} parent=11 // pred_check_branch
        %171 = sbr.rel (%p169) target = $region16
      $region15: #{st_forward.3} parent=11 // pred_region
        _
      $region16: #{st_forward.3} parent=11 // pred_fallthru
        _
      // Predicated region
      $region17: #{st_forward.3} parent=11 // pred_check
        %p172 = pneg %p55
      $region18: #{st_forward.3} parent=11 // pred_check_branch
        %174 = sbr.rel (%p172) target = $region20
      $region19: #{st_forward.3} parent=11 // pred_region
        _
      $region20: #{st_forward.3} parent=11 // pred_fallthru
        _
      // Predicated region
      $region21: #{st_forward.3} parent=11 // pred_check
        %p175 = pneg %p76
      $region22: #{st_forward.3} parent=11 // pred_check_branch
        %177 = sbr.rel (%p175) target = $region24
      $region23: #{st_forward.3} parent=11 // pred_region
        _
      $region24: #{st_forward.3} parent=11 // pred_fallthru
        _
    $region12: #{st_forward.3} parent=5 // pred_fallthru
      _
    %p178 = scmp.lt.s32.totalorder %s13, 2
    // Predicated region
    $region25: #{st_forward.3} parent=5 // pred_check
      %p179 = pneg %p178
    $region26: #{st_forward.3} parent=5 // pred_check_branch
      %181 = sbr.rel (%p179) target = $region28
    $region27: #{st_forward.3} parent=5 // pred_region
      // Predicated region
      $region29: #{st_forward.3} parent=27 // pred_check
        %p182 = pneg %p96
      $region30: #{st_forward.3} parent=27 // pred_check_branch
        %184 = sbr.rel (%p182) target = $region32
      $region31: #{st_forward.3} parent=27 // pred_region
        %p185 = scmp.lt.s32.totalorder %s13, 1
        %s186 = scalar_select %p185, %s13, 1
        %s187 = smul.addr %s186, 12
        %s188 = smul.addr %s187, 4
        %s189 = scalar_lea.vmem %s4, %s188
      $region32: #{st_forward.3} parent=27 // pred_fallthru
        _
      // Predicated region
      $region33: #{st_forward.3} parent=27 // pred_check
        %p190 = pneg %p122
      $region34: #{st_forward.3} parent=27 // pred_check_branch
        %192 = sbr.rel (%p190) target = $region36
      $region35: #{st_forward.3} parent=27 // pred_region
        %p193 = scmp.lt.s32.totalorder %s13, 1
        %s194 = scalar_select %p193, %s13, 1
        %s195 = smul.addr %s194, 40
        %s196 = smul.addr %s195, 4
        %s197 = scalar_lea.vmem %s5, %s196
      $region36: #{st_forward.3} parent=27 // pred_fallthru
        _
    $region28: #{st_forward.3} parent=5 // pred_fallthru
      _
    %p198 = scmp.le.s32.totalorder 1, %s13
    %p199 = scmp.lt.s32.totalorder %s13, 3
    %p200 = pnand %p198, %p199
    %p201 = pneg %p200
    // Predicated region
    $region37: #{st_forward.3} parent=5 // pred_check
      _
    $region38: #{st_forward.3} parent=5 // pred_check_branch
      %203 = sbr.rel (%p200) target = $region40
    $region39: #{st_forward.3} parent=5 // pred_region
      %s204 = ssub.s32 %s13, 1
      %p205 = pneg %p34
      %p206 = pneg %p31
      %p207 = pneg %p55
      %p208 = pneg %p52
      %p209 = pneg %p76
      %p210 = pneg %p73
      %p211 = scmp.lt.s32.totalorder %s18, 1
      %s212 = scalar_select %p211, %s18, 1
      %s213 = smul.addr %s212, 12
      %s214 = smul.addr %s213, 4
      %s215 = scalar_lea.vmem %s4, %s214
      %p216 = pneg %p102
      %p217 = pneg %p99
      %p218 = scmp.lt.s32.totalorder %s18, 1
      %s219 = scalar_select %p218, %s18, 1
      %s220 = smul.addr %s219, 40
      %s221 = smul.addr %s220, 4
      %s222 = scalar_lea.vmem %s5, %s221
      %p223 = pneg %p128
      %p224 = pneg %p125
      %p225 = pneg %p154
      %p226 = pneg %p151
      %p227 = scmp.lt.s32.totalorder %s18, 1
      %s228 = scalar_select %p227, %s18, 1
      %s229 = smul.addr %s228, 4
      %s230 = scalar_lea.vmem %s6, %s229
      %p231 = scmp.lt.s32.totalorder %s18, 1
      %s232 = scalar_select %p231, %s18, 1
      %s233 = smul.addr %s232, 12
      %s234 = smul.addr %s233, 4
      %s235 = scalar_lea.vmem %s4, %s234
      %p236 = scmp.lt.s32.totalorder %s18, 1
      %s237 = scalar_select %p236, %s18, 1
      %s238 = smul.addr %s237, 40
      %s239 = smul.addr %s238, 4
      %s240 = scalar_lea.vmem %s5, %s239
      %p241 = scmp.lt.s32.totalorder %s18, 1
      %s242 = scalar_select %p241, %s18, 1
      %s243 = smul.addr %s242, 4
      %s244 = scalar_lea.vmem %s6, %s243
      %s246 = sld [smem:[#allocation3]]
      %v247 = vld [vmem:[%s1] sm:$0xf]
      %v248 = vld [vmem:[%s1 + $0x4] sm:$0xf]
      %v249 = vld [vmem:[%s1 + $0x8] sm:$0xf]
      %v250 = vld [vmem:[%s1 + $0xc] sm:$0xf]
      %v251 = vld [vmem:[%s1 + $0x10] sm:$0xf]
      %v252 = vld [vmem:[%s1 + $0x14] sm:$0xf]
      %v253 = vld [vmem:[%s1 + $0x18] sm:$0xf]
      %v254 = vld [vmem:[%s1 + $0x1c] sm:$0xf]
      %v255 = vld [vmem:[%s2] sm:$0xf]
      %v256 = vld [vmem:[%s2 + $0x4] sm:$0xf]
      %v257 = vld [vmem:[%s2 + $0x8] sm:$0xf]
      %v258 = vld [vmem:[%s2 + $0xc] sm:$0xf]
      %v259 = vld [vmem:[%s2 + $0x10] sm:$0xf]
      %v260 = vld [vmem:[%s2 + $0x14] sm:$0xf]
      %v261 = vld [vmem:[%s2 + $0x18] sm:$0xf]
      %v262 = vld [vmem:[%s2 + $0x1c] sm:$0xf]
      %v263 = vld [vmem:[%s3] sm:$0xf]
      %v264 = vld [vmem:[%s3 + $0x4] sm:$0xf]
      %v265 = vld [vmem:[%s3 + $0x8] sm:$0xf]
      %v266 = vld [vmem:[%s3 + $0xc] sm:$0xf]
      %v267 = vld [vmem:[%s3 + $0x10] sm:$0xf]
      %v268 = vld [vmem:[%s3 + $0x14] sm:$0xf]
      %v269 = vld [vmem:[%s3 + $0x18] sm:$0xf]
      %v270 = vld [vmem:[%s3 + $0x1c] sm:$0xf]
      %v271 = vld [vmem:[%s235] sm:$0xf]
      %v272 = vld [vmem:[%s235 + $0x4] sm:$0xf]
      %v273 = vld [vmem:[%s235 + $0x8] sm:$0xf]
      %v274 = vld [vmem:[%s235 + $0xc] sm:$0xf]
      %v275 = vld [vmem:[%s235 + $0x10] sm:$0xf]
      %v276 = vld [vmem:[%s235 + $0x14] sm:$0xf]
      %v277 = vld [vmem:[%s235 + $0x18] sm:$0xf]
      %v278 = vld [vmem:[%s235 + $0x1c] sm:$0xf]
      %v279 = vld [vmem:[%s235 + $0x20] sm:$0xf]
      %v280 = vld [vmem:[%s235 + $0x24] sm:$0xf]
      %v281 = vld [vmem:[%s235 + $0x28] sm:$0xf]
      %v282 = vld [vmem:[%s235 + $0x2c] sm:$0xf]
      %v283 = vld [vmem:[%s240] sm:$0xff]
      %v284 = vld [vmem:[%s240 + $0x8] sm:$0xff]
      %v285 = vld [vmem:[%s240 + $0x10] sm:$0xf]
      %v286 = vld [vmem:[%s240 + $0x14] sm:$0xff]
      %v287 = vld [vmem:[%s240 + $0x1c] sm:$0xff]
      %v288 = vld [vmem:[%s240 + $0x24] sm:$0xf]
      %v289 = vld [vmem:[%s240 + $0x28] sm:$0xff]
      %v290 = vld [vmem:[%s240 + $0x30] sm:$0xff]
      %v291 = vld [vmem:[%s240 + $0x38] sm:$0xf]
      %v292 = vld [vmem:[%s240 + $0x3c] sm:$0xff]
      %v293 = vld [vmem:[%s240 + $0x44] sm:$0xff]
      %v294 = vld [vmem:[%s240 + $0x4c] sm:$0xf]
      %v295 = vld [vmem:[%s240 + $0x50] sm:$0xff]
      %v296 = vld [vmem:[%s240 + $0x58] sm:$0xff]
      %v297 = vld [vmem:[%s240 + $0x60] sm:$0xf]
      %v298 = vld [vmem:[%s240 + $0x64] sm:$0xff]
      %v299 = vld [vmem:[%s240 + $0x6c] sm:$0xff]
      %v300 = vld [vmem:[%s240 + $0x74] sm:$0xf]
      %v301 = vld [vmem:[%s240 + $0x78] sm:$0xff]
      %v302 = vld [vmem:[%s240 + $0x80] sm:$0xff]
      %v303 = vld [vmem:[%s240 + $0x88] sm:$0xf]
      %v304 = vld [vmem:[%s240 + $0x8c] sm:$0xff]
      %v305 = vld [vmem:[%s240 + $0x94] sm:$0xff]
      %v306 = vld [vmem:[%s240 + $0x9c] sm:$0xf]
      %v319 = vunpack.c.l.b16 %v271
      %v320 = vunpack.c.l.b16 %v272
      %v321 = vunpack.c.l.b16 %v273
      %v322 = vunpack.c.l.b16 %v274
      %v323 = vunpack.c.l.b16 %v275
      %v324 = vunpack.c.l.b16 %v276
      %v325 = vunpack.c.l.b16 %v277
      %v326 = vunpack.c.l.b16 %v278
      %v327 = vunpack.c.l.b16 %v279
      %v328 = vunpack.c.l.b16 %v280
      %v329 = vunpack.c.l.b16 %v281
      %v330 = vunpack.c.l.b16 %v282
      %v331 = vpack.c.b16 %v320, %v319
      %v332 = vpack.c.b16 %v322, %v321
      %v333 = vpack.c.b16 %v324, %v323
      %v334 = vpack.c.b16 %v326, %v325
      %v335 = vpack.c.b16 %v328, %v327
      %v336 = vpack.c.b16 %v330, %v329
      %v345 = vunpack.c.l.b16 %v247
      %v346 = vunpack.c.l.b16 %v248
      %v347 = vunpack.c.l.b16 %v249
      %v348 = vunpack.c.l.b16 %v250
      %v349 = vunpack.c.l.b16 %v251
      %v350 = vunpack.c.l.b16 %v252
      %v351 = vunpack.c.l.b16 %v253
      %v352 = vunpack.c.l.b16 %v254
      %v353 = vpack.c.b16 %v346, %v345
      %v354 = vpack.c.b16 %v348, %v347
      %v355 = vpack.c.b16 %v350, %v349
      %v356 = vpack.c.b16 %v352, %v351
      %vm357 = vcmask 523264
      %v359 = vsel %vm357, %v331, 0
      %v362 = vsel %vm357, %v332, 0
      %v365 = vsel %vm357, %v333, 0
      %v368 = vsel %vm357, %v334, 0
      %v371 = vsel %vm357, %v335, 0
      %v374 = vsel %vm357, %v336, 0
      %v377 = vsel %vm357, %v353, 0
      %v380 = vsel %vm357, %v354, 0
      %v383 = vsel %vm357, %v355, 0
      %v386 = vsel %vm357, %v356, 0
      %388 = vmatprep.subr.bf16.mxu0 0
      %389 = vmatpush1.bf16.xpose.msra.mxu0 %v377
      %390 = vmatprep.subr.bf16.mxu0 0
      %391 = vmatpush1.bf16.xpose.msra.mxu0 %v380
      %392 = vmatprep.subr.bf16.mxu0 0
      %393 = vmatpush1.bf16.xpose.msra.mxu0 %v383
      %394 = vmatprep.subr.bf16.mxu0 0
      %395 = vmatpush1.bf16.xpose.msra.mxu0 %v386
      %396 = vmatprep.subr.bf16.mxu0 0
      %397 = vmatpush1.bf16.xpose.msra.mxu0 0
      %398 = vmatprep.subr.bf16.mxu0 0
      %399 = vmatpush1.bf16.xpose.msra.mxu0 0
      %400 = vmatprep.subr.bf16.mxu0 0
      %401 = vmatpush1.bf16.xpose.msra.mxu0 0
      %402 = vmatprep.subr.bf16.mxu0 0
      %403 = vmatpush1.bf16.xpose.msra.mxu0 0
      %404 = vmatprep.subr.bf16.mxu0 0
      %405 = vmatpush1.bf16.xpose.msra.mxu0 0
      %406 = vmatprep.subr.bf16.mxu0 0
      %407 = vmatpush1.bf16.xpose.msra.mxu0 0
      %408 = vmatprep.subr.bf16.mxu0 0
      %409 = vmatpush1.bf16.xpose.msra.mxu0 0
      %410 = vmatprep.subr.bf16.mxu0 0
      %411 = vmatpush1.bf16.xpose.msra.mxu0 0
      %412 = vmatprep.subr.bf16.mxu0 0
      %413 = vmatpush1.bf16.xpose.msra.mxu0 0
      %414 = vmatprep.subr.bf16.mxu0 0
      %415 = vmatpush1.bf16.xpose.msra.mxu0 0
      %416 = vmatprep.subr.bf16.mxu0 0
      %417 = vmatpush1.bf16.xpose.msra.mxu0 0
      %418 = vmatprep.subr.bf16.mxu0 0
      %419 = vmatpush1.bf16.xpose.msra.mxu0 0
      %420 = vmatprep.mubr.bf16.mxu0 0
      %421 = vmatmul.mubr.bf16.gmra.mrb[0].mxu0 %v359
      %v422 = vpop.f32.mrb[0].mxu0
      %v423 = vadd.f32 0.0, %v422
      %v424 = vpop.f32.mrb[0].mxu0
      %v425 = vpop.f32.mrb[0].mxu0
      %v426 = vadd.f32 0.0, %v425
      %v427 = vpop.f32.mrb[0].mxu0
      %428 = vmatprep.mubr.bf16.mxu0 0
      %429 = vmatmul.mubr.bf16.gmra.mrb[0].mxu0 %v362
      %v430 = vpop.f32.mrb[0].mxu0
      %v431 = vadd.f32 0.0, %v430
      %v432 = vpop.f32.mrb[0].mxu0
      %v433 = vpop.f32.mrb[0].mxu0
      %v434 = vadd.f32 0.0, %v433
      %v435 = vpop.f32.mrb[0].mxu0
      %436 = vmatprep.mubr.bf16.mxu0 0
      %437 = vmatmul.mubr.bf16.gmra.mrb[0].mxu0 %v365
      %v438 = vpop.f32.mrb[0].mxu0
      %v439 = vadd.f32 0.0, %v438
      %v440 = vpop.f32.mrb[0].mxu0
      %v441 = vpop.f32.mrb[0].mxu0
      %v442 = vadd.f32 0.0, %v441
      %v443 = vpop.f32.mrb[0].mxu0
      %444 = vmatprep.mubr.bf16.mxu0 0
      %445 = vmatmul.mubr.bf16.gmra.mrb[0].mxu0 %v368
      %v446 = vpop.f32.mrb[0].mxu0
      %v447 = vadd.f32 0.0, %v446
      %v448 = vpop.f32.mrb[0].mxu0
      %v449 = vpop.f32.mrb[0].mxu0
      %v450 = vadd.f32 0.0, %v449
      %v451 = vpop.f32.mrb[0].mxu0
      %452 = vmatprep.mubr.bf16.mxu0 0
      %453 = vmatmul.mubr.bf16.gmra.mrb[0].mxu0 %v371
      %v454 = vpop.f32.mrb[0].mxu0
      %v455 = vadd.f32 0.0, %v454
      %v456 = vpop.f32.mrb[0].mxu0
      %v457 = vpop.f32.mrb[0].mxu0
      %v458 = vadd.f32 0.0, %v457
      %v459 = vpop.f32.mrb[0].mxu0
      %460 = vmatprep.mubr.bf16.mxu0 0
      %461 = vmatmul.mubr.bf16.gmra.mrb[0].mxu0 %v374
      %v462 = vpop.f32.mrb[0].mxu0
      %v463 = vadd.f32 0.0, %v462
      %v464 = vpop.f32.mrb[0].mxu0
      %v465 = vpop.f32.mrb[0].mxu0
      %v466 = vadd.f32 0.0, %v465
      %v467 = vpop.f32.mrb[0].mxu0
      %468 = vdwg.mxu0
      %v469 = vmul.f32 %v423, 0.125
      %v470 = vmul.f32 %v426, 0.125
      %v471 = vmul.f32 %v431, 0.125
      %v472 = vmul.f32 %v434, 0.125
      %v473 = vmul.f32 %v439, 0.125
      %v474 = vmul.f32 %v442, 0.125
      %v475 = vmul.f32 %v447, 0.125
      %v476 = vmul.f32 %v450, 0.125
      %v477 = vmul.f32 %v455, 0.125
      %v478 = vmul.f32 %v458, 0.125
      %v479 = vmul.f32 %v463, 0.125
      %v480 = vmul.f32 %v466, 0.125
      %v489 = vunpack.c.l.b16 %v263
      %v490 = vunpack.c.l.b16 %v264
      %v491 = vunpack.c.l.b16 %v265
      %v492 = vunpack.c.l.b16 %v266
      %v493 = vunpack.c.l.b16 %v267
      %v494 = vunpack.c.l.b16 %v268
      %v495 = vunpack.c.l.b16 %v269
      %v496 = vunpack.c.l.b16 %v270
      %v497 = vpack.c.b16 %v490, %v489
      %v498 = vpack.c.b16 %v492, %v491
      %v499 = vpack.c.b16 %v494, %v493
      %v500 = vpack.c.b16 %v496, %v495
      %v502 = vsel %vm357, %v497, 0
      %v505 = vsel %vm357, %v498, 0
      %v508 = vsel %vm357, %v499, 0
      %v511 = vsel %vm357, %v500, 0
      %513 = vmatprep.subr.bf16.mxu0 0
      %514 = vmatpush1.bf16.xpose.msra.mxu0 %v502
      %515 = vmatprep.subr.bf16.mxu0 0
      %516 = vmatpush1.bf16.xpose.msra.mxu0 %v505
      %517 = vmatprep.subr.bf16.mxu0 0
      %518 = vmatpush1.bf16.xpose.msra.mxu0 %v508
      %519 = vmatprep.subr.bf16.mxu0 0
      %520 = vmatpush1.bf16.xpose.msra.mxu0 %v511
      %521 = vmatprep.subr.bf16.mxu0 0
      %522 = vmatpush1.bf16.xpose.msra.mxu0 0
      %523 = vmatprep.subr.bf16.mxu0 0
      %524 = vmatpush1.bf16.xpose.msra.mxu0 0
      %525 = vmatprep.subr.bf16.mxu0 0
      %526 = vmatpush1.bf16.xpose.msra.mxu0 0
      %527 = vmatprep.subr.bf16.mxu0 0
      %528 = vmatpush1.bf16.xpose.msra.mxu0 0
      %529 = vmatprep.subr.bf16.mxu0 0
      %530 = vmatpush1.bf16.xpose.msra.mxu0 0
      %531 = vmatprep.subr.bf16.mxu0 0
      %532 = vmatpush1.bf16.xpose.msra.mxu0 0
      %533 = vmatprep.subr.bf16.mxu0 0
      %534 = vmatpush1.bf16.xpose.msra.mxu0 0
      %535 = vmatprep.subr.bf16.mxu0 0
      %536 = vmatpush1.bf16.xpose.msra.mxu0 0
      %537 = vmatprep.subr.bf16.mxu0 0
      %538 = vmatpush1.bf16.xpose.msra.mxu0 0
      %539 = vmatprep.subr.bf16.mxu0 0
      %540 = vmatpush1.bf16.xpose.msra.mxu0 0
      %541 = vmatprep.subr.bf16.mxu0 0
      %542 = vmatpush1.bf16.xpose.msra.mxu0 0
      %543 = vmatprep.subr.bf16.mxu0 0
      %544 = vmatpush1.bf16.xpose.msra.mxu0 0
      %545 = vmatprep.mubr.bf16.mxu0 0
      %546 = vmatmul.mubr.bf16.gmra.mrb[0].mxu0 %v359
      %v547 = vpop.f32.mrb[0].mxu0
      %v548 = vadd.f32 0.0, %v547
      %v549 = vpop.f32.mrb[0].mxu0
      %v550 = vpop.f32.mrb[0].mxu0
      %v551 = vadd.f32 0.0, %v550
      %v552 = vpop.f32.mrb[0].mxu0
      %553 = vmatprep.mubr.bf16.mxu0 0
      %554 = vmatmul.mubr.bf16.gmra.mrb[0].mxu0 %v362
      %v555 = vpop.f32.mrb[0].mxu0
      %v556 = vadd.f32 0.0, %v555
      %v557 = vpop.f32.mrb[0].mxu0
      %v558 = vpop.f32.mrb[0].mxu0
      %v559 = vadd.f32 0.0, %v558
      %v560 = vpop.f32.mrb[0].mxu0
      %561 = vmatprep.mubr.bf16.mxu0 0
      %562 = vmatmul.mubr.bf16.gmra.mrb[0].mxu0 %v365
      %v563 = vpop.f32.mrb[0].mxu0
      %v564 = vadd.f32 0.0, %v563
      %v565 = vpop.f32.mrb[0].mxu0
      %v566 = vpop.f32.mrb[0].mxu0
      %v567 = vadd.f32 0.0, %v566
      %v568 = vpop.f32.mrb[0].mxu0
      %569 = vmatprep.mubr.bf16.mxu0 0
      %570 = vmatmul.mubr.bf16.gmra.mrb[0].mxu0 %v368
      %v571 = vpop.f32.mrb[0].mxu0
      %v572 = vadd.f32 0.0, %v571
      %v573 = vpop.f32.mrb[0].mxu0
      %v574 = vpop.f32.mrb[0].mxu0
      %v575 = vadd.f32 0.0, %v574
      %v576 = vpop.f32.mrb[0].mxu0
      %577 = vmatprep.mubr.bf16.mxu0 0
      %578 = vmatmul.mubr.bf16.gmra.mrb[0].mxu0 %v371
      %v579 = vpop.f32.mrb[0].mxu0
      %v580 = vadd.f32 0.0, %v579
      %v581 = vpop.f32.mrb[0].mxu0
      %v582 = vpop.f32.mrb[0].mxu0
      %v583 = vadd.f32 0.0, %v582
      %v584 = vpop.f32.mrb[0].mxu0
      %585 = vmatprep.mubr.bf16.mxu0 0
      %586 = vmatmul.mubr.bf16.gmra.mrb[0].mxu0 %v374
      %v587 = vpop.f32.mrb[0].mxu0
      %v588 = vadd.f32 0.0, %v587
      %v589 = vpop.f32.mrb[0].mxu0
      %v590 = vpop.f32.mrb[0].mxu0
      %v591 = vadd.f32 0.0, %v590
      %v592 = vpop.f32.mrb[0].mxu0
      %593 = vdwg.mxu0
      %v602 = vunpack.c.l.b16 %v255
      %v603 = vunpack.c.l.b16 %v256
      %v604 = vunpack.c.l.b16 %v257
      %v605 = vunpack.c.l.b16 %v258
      %v606 = vunpack.c.l.b16 %v259
      %v607 = vunpack.c.l.b16 %v260
      %v608 = vunpack.c.l.b16 %v261
      %v609 = vunpack.c.l.b16 %v262
      %v610 = vpack.c.b16 %v603, %v602
      %v611 = vpack.c.b16 %v605, %v604
      %v612 = vpack.c.b16 %v607, %v606
      %v613 = vpack.c.b16 %v609, %v608
      %v638 = vunpack.c.l.b16 %v283
      %v639 = vunpack.c.h.b16 %v283
      %v640 = vunpack.c.l.b16 %v284
      %v641 = vunpack.c.h.b16 %v284
      %v642 = vunpack.c.l.b16 %v285
      %v643 = vunpack.c.l.b16 %v286
      %v644 = vunpack.c.h.b16 %v286
      %v645 = vunpack.c.l.b16 %v287
      %v646 = vunpack.c.h.b16 %v287
      %v647 = vunpack.c.l.b16 %v288
      %v648 = vunpack.c.l.b16 %v289
      %v649 = vunpack.c.h.b16 %v289
      %v650 = vunpack.c.l.b16 %v290
      %v651 = vunpack.c.h.b16 %v290
      %v652 = vunpack.c.l.b16 %v291
      %v653 = vunpack.c.l.b16 %v292
      %v654 = vunpack.c.h.b16 %v292
      %v655 = vunpack.c.l.b16 %v293
      %v656 = vunpack.c.h.b16 %v293
      %v657 = vunpack.c.l.b16 %v294
      %v658 = vunpack.c.l.b16 %v295
      %v659 = vunpack.c.h.b16 %v295
      %v660 = vunpack.c.l.b16 %v296
      %v661 = vunpack.c.h.b16 %v296
      %v662 = vunpack.c.l.b16 %v297
      %v663 = vunpack.c.l.b16 %v298
      %v664 = vunpack.c.h.b16 %v298
      %v665 = vunpack.c.l.b16 %v299
      %v666 = vunpack.c.h.b16 %v299
      %v667 = vunpack.c.l.b16 %v300
      %v668 = vunpack.c.l.b16 %v301
      %v669 = vunpack.c.h.b16 %v301
      %v670 = vunpack.c.l.b16 %v302
      %v671 = vunpack.c.h.b16 %v302
      %v672 = vunpack.c.l.b16 %v303
      %v673 = vunpack.c.l.b16 %v304
      %v674 = vunpack.c.h.b16 %v304
      %v675 = vunpack.c.l.b16 %v305
      %v676 = vunpack.c.h.b16 %v305
      %v677 = vunpack.c.l.b16 %v306
      %v678 = vpack.c.b16 %v643, %v638
      %v679 = vpack.c.b16 %v644, %v639
      %v680 = vpack.c.b16 %v645, %v640
      %v681 = vpack.c.b16 %v646, %v641
      %v682 = vpack.c.b16 %v647, %v642
      %v683 = vpack.c.b16 %v653, %v648
      %v684 = vpack.c.b16 %v654, %v649
      %v685 = vpack.c.b16 %v655, %v650
      %v686 = vpack.c.b16 %v656, %v651
      %v687 = vpack.c.b16 %v657, %v652
      %v688 = vpack.c.b16 %v663, %v658
      %v689 = vpack.c.b16 %v664, %v659
      %v690 = vpack.c.b16 %v665, %v660
      %v691 = vpack.c.b16 %v666, %v661
      %v692 = vpack.c.b16 %v667, %v662
      %v693 = vpack.c.b16 %v673, %v668
      %v694 = vpack.c.b16 %v674, %v669
      %v695 = vpack.c.b16 %v675, %v670
      %v696 = vpack.c.b16 %v676, %v671
      %v697 = vpack.c.b16 %v677, %v672
      %v719 = vsel %vm357, %v610, 0
      %v722 = vsel %vm357, %v611, 0
      %v725 = vsel %vm357, %v612, 0
      %v728 = vsel %vm357, %v613, 0
      %730 = vmatprep.subr.bf16.mxu0 %v679
      %731 = vmatpush1.bf16.msra.mxu0 %v678
      %732 = vmatprep.subr.bf16.mxu0 %v684
      %733 = vmatpush1.bf16.msra.mxu0 %v683
      %734 = vmatprep.subr.bf16.mxu0 %v689
      %735 = vmatpush1.bf16.msra.mxu0 %v688
      %736 = vmatprep.subr.bf16.mxu0 %v694
      %737 = vmatpush1.bf16.msra.mxu0 %v693
      %738 = vmatprep.subr.bf16.mxu0 0
      %739 = vmatpush1.bf16.msra.mxu0 0
      %740 = vmatprep.subr.bf16.mxu0 0
      %741 = vmatpush1.bf16.msra.mxu0 0
      %742 = vmatprep.subr.bf16.mxu0 0
      %743 = vmatpush1.bf16.msra.mxu0 0
      %744 = vmatprep.subr.bf16.mxu0 0
      %745 = vmatpush1.bf16.msra.mxu0 0
      %746 = vmatprep.subr.bf16.mxu0 0
      %747 = vmatpush1.bf16.msra.mxu0 0
      %748 = vmatprep.subr.bf16.mxu0 0
      %749 = vmatpush1.bf16.msra.mxu0 0
      %750 = vmatprep.subr.bf16.mxu0 0
      %751 = vmatpush1.bf16.msra.mxu0 0
      %752 = vmatprep.subr.bf16.mxu0 0
      %753 = vmatpush1.bf16.msra.mxu0 0
      %754 = vmatprep.subr.bf16.mxu0 0
      %755 = vmatpush1.bf16.msra.mxu0 0
      %756 = vmatprep.subr.bf16.mxu0 0
      %757 = vmatpush1.bf16.msra.mxu0 0
      %758 = vmatprep.subr.bf16.mxu0 0
      %759 = vmatpush1.bf16.msra.mxu0 0
      %760 = vmatprep.subr.bf16.mxu0 0
      %761 = vmatpush1.bf16.msra.mxu0 0
      %762 = vmatprep.mubr.bf16.mxu0 0
      %763 = vmatmul.mubr.bf16.gmra.mrb[0].mxu0 %v719
      %v764 = vpop.f32.mrb[0].mxu0
      %v765 = vadd.f32 0.0, %v764
      %v766 = vpop.f32.mrb[0].mxu0
      %v767 = vadd.f32 0.0, %v766
      %v768 = vpop.f32.mrb[0].mxu0
      %v769 = vadd.f32 0.0, %v768
      %v770 = vpop.f32.mrb[0].mxu0
      %v771 = vadd.f32 0.0, %v770
      %772 = vmatprep.mubr.bf16.mxu0 0
      %773 = vmatmul.mubr.bf16.gmra.mrb[0].mxu0 %v722
      %v774 = vpop.f32.mrb[0].mxu0
      %v775 = vadd.f32 0.0, %v774
      %v776 = vpop.f32.mrb[0].mxu0
      %v777 = vadd.f32 0.0, %v776
      %v778 = vpop.f32.mrb[0].mxu0
      %v779 = vadd.f32 0.0, %v778
      %v780 = vpop.f32.mrb[0].mxu0
      %v781 = vadd.f32 0.0, %v780
      %782 = vmatprep.mubr.bf16.mxu0 0
      %783 = vmatmul.mubr.bf16.gmra.mrb[0].mxu0 %v725
      %v784 = vpop.f32.mrb[0].mxu0
      %v785 = vadd.f32 0.0, %v784
      %v786 = vpop.f32.mrb[0].mxu0
      %v787 = vadd.f32 0.0, %v786
      %v788 = vpop.f32.mrb[0].mxu0
      %v789 = vadd.f32 0.0, %v788
      %v790 = vpop.f32.mrb[0].mxu0
      %v791 = vadd.f32 0.0, %v790
      %792 = vmatprep.mubr.bf16.mxu0 0
      %793 = vmatmul.mubr.bf16.gmra.mrb[0].mxu0 %v728
      %v794 = vpop.f32.mrb[0].mxu0
      %v795 = vadd.f32 0.0, %v794
      %v796 = vpop.f32.mrb[0].mxu0
      %v797 = vadd.f32 0.0, %v796
      %v798 = vpop.f32.mrb[0].mxu0
      %v799 = vadd.f32 0.0, %v798
      %v800 = vpop.f32.mrb[0].mxu0
      %v801 = vadd.f32 0.0, %v800
      %802 = vdwg.mxu0
      %803 = vmatprep.subr.bf16.mxu0 %v681
      %804 = vmatpush1.bf16.msra.mxu0 %v680
      %805 = vmatprep.subr.bf16.mxu0 %v686
      %806 = vmatpush1.bf16.msra.mxu0 %v685
      %807 = vmatprep.subr.bf16.mxu0 %v691
      %808 = vmatpush1.bf16.msra.mxu0 %v690
      %809 = vmatprep.subr.bf16.mxu0 %v696
      %810 = vmatpush1.bf16.msra.mxu0 %v695
      %811 = vmatprep.subr.bf16.mxu0 0
      %812 = vmatpush1.bf16.msra.mxu0 0
      %813 = vmatprep.subr.bf16.mxu0 0
      %814 = vmatpush1.bf16.msra.mxu0 0
      %815 = vmatprep.subr.bf16.mxu0 0
      %816 = vmatpush1.bf16.msra.mxu0 0
      %817 = vmatprep.subr.bf16.mxu0 0
      %818 = vmatpush1.bf16.msra.mxu0 0
      %819 = vmatprep.subr.bf16.mxu0 0
      %820 = vmatpush1.bf16.msra.mxu0 0
      %821 = vmatprep.subr.bf16.mxu0 0
      %822 = vmatpush1.bf16.msra.mxu0 0
      %823 = vmatprep.subr.bf16.mxu0 0
      %824 = vmatpush1.bf16.msra.mxu0 0
      %825 = vmatprep.subr.bf16.mxu0 0
      %826 = vmatpush1.bf16.msra.mxu0 0
      %827 = vmatprep.subr.bf16.mxu0 0
      %828 = vmatpush1.bf16.msra.mxu0 0
      %829 = vmatprep.subr.bf16.mxu0 0
      %830 = vmatpush1.bf16.msra.mxu0 0
      %831 = vmatprep.subr.bf16.mxu0 0
      %832 = vmatpush1.bf16.msra.mxu0 0
      %833 = vmatprep.subr.bf16.mxu0 0
      %834 = vmatpush1.bf16.msra.mxu0 0
      %835 = vmatprep.mubr.bf16.mxu0 0
      %836 = vmatmul.mubr.bf16.gmra.mrb[0].mxu0 %v719
      %v837 = vpop.f32.mrb[0].mxu0
      %v838 = vadd.f32 0.0, %v837
      %v839 = vpop.f32.mrb[0].mxu0
      %v840 = vadd.f32 0.0, %v839
      %v841 = vpop.f32.mrb[0].mxu0
      %v842 = vadd.f32 0.0, %v841
      %v843 = vpop.f32.mrb[0].mxu0
      %v844 = vadd.f32 0.0, %v843
      %845 = vmatprep.mubr.bf16.mxu0 0
      %846 = vmatmul.mubr.bf16.gmra.mrb[0].mxu0 %v722
      %v847 = vpop.f32.mrb[0].mxu0
      %v848 = vadd.f32 0.0, %v847
      %v849 = vpop.f32.mrb[0].mxu0
      %v850 = vadd.f32 0.0, %v849
      %v851 = vpop.f32.mrb[0].mxu0
      %v852 = vadd.f32 0.0, %v851
      %v853 = vpop.f32.mrb[0].mxu0
      %v854 = vadd.f32 0.0, %v853
      %855 = vmatprep.mubr.bf16.mxu0 0
      %856 = vmatmul.mubr.bf16.gmra.mrb[0].mxu0 %v725
      %v857 = vpop.f32.mrb[0].mxu0
      %v858 = vadd.f32 0.0, %v857
      %v859 = vpop.f32.mrb[0].mxu0
      %v860 = vadd.f32 0.0, %v859
      %v861 = vpop.f32.mrb[0].mxu0
      %v862 = vadd.f32 0.0, %v861
      %v863 = vpop.f32.mrb[0].mxu0
      %v864 = vadd.f32 0.0, %v863
      %865 = vmatprep.mubr.bf16.mxu0 0
      %866 = vmatmul.mubr.bf16.gmra.mrb[0].mxu0 %v728
      %v867 = vpop.f32.mrb[0].mxu0
      %v868 = vadd.f32 0.0, %v867
      %v869 = vpop.f32.mrb[0].mxu0
      %v870 = vadd.f32 0.0, %v869
      %v871 = vpop.f32.mrb[0].mxu0
      %v872 = vadd.f32 0.0, %v871
      %v873 = vpop.f32.mrb[0].mxu0
      %v874 = vadd.f32 0.0, %v873
      %875 = vdwg.mxu0
      %876 = vmatprep.subr.bf16.mxu0 0
      %877 = vmatpush1.bf16.msra.mxu0 %v682
      %878 = vmatprep.subr.bf16.mxu0 0
      %879 = vmatpush1.bf16.msra.mxu0 %v687
      %880 = vmatprep.subr.bf16.mxu0 0
      %881 = vmatpush1.bf16.msra.mxu0 %v692
      %882 = vmatprep.subr.bf16.mxu0 0
      %883 = vmatpush1.bf16.msra.mxu0 %v697
      %884 = vmatprep.subr.bf16.mxu0 0
      %885 = vmatpush1.bf16.msra.mxu0 0
      %886 = vmatprep.subr.bf16.mxu0 0
      %887 = vmatpush1.bf16.msra.mxu0 0
      %888 = vmatprep.subr.bf16.mxu0 0
      %889 = vmatpush1.bf16.msra.mxu0 0
      %890 = vmatprep.subr.bf16.mxu0 0
      %891 = vmatpush1.bf16.msra.mxu0 0
      %892 = vmatprep.subr.bf16.mxu0 0
      %893 = vmatpush1.bf16.msra.mxu0 0
      %894 = vmatprep.subr.bf16.mxu0 0
      %895 = vmatpush1.bf16.msra.mxu0 0
      %896 = vmatprep.subr.bf16.mxu0 0
      %897 = vmatpush1.bf16.msra.mxu0 0
      %898 = vmatprep.subr.bf16.mxu0 0
      %899 = vmatpush1.bf16.msra.mxu0 0
      %900 = vmatprep.subr.bf16.mxu0 0
      %901 = vmatpush1.bf16.msra.mxu0 0
      %902 = vmatprep.subr.bf16.mxu0 0
      %903 = vmatpush1.bf16.msra.mxu0 0
      %904 = vmatprep.subr.bf16.mxu0 0
      %905 = vmatpush1.bf16.msra.mxu0 0
      %906 = vmatprep.subr.bf16.mxu0 0
      %907 = vmatpush1.bf16.msra.mxu0 0
      %908 = vmatprep.mubr.bf16.mxu0 0
      %909 = vmatmul.mubr.bf16.gmra.mrb[0].mxu0 %v719
      %v910 = vpop.f32.mrb[0].mxu0
      %v911 = vadd.f32 0.0, %v910
      %v912 = vpop.f32.mrb[0].mxu0
      %v913 = vpop.f32.mrb[0].mxu0
      %v914 = vadd.f32 0.0, %v913
      %v915 = vpop.f32.mrb[0].mxu0
      %916 = vmatprep.mubr.bf16.mxu0 0
      %917 = vmatmul.mubr.bf16.gmra.mrb[0].mxu0 %v722
      %v918 = vpop.f32.mrb[0].mxu0
      %v919 = vadd.f32 0.0, %v918
      %v920 = vpop.f32.mrb[0].mxu0
      %v921 = vpop.f32.mrb[0].mxu0
      %v922 = vadd.f32 0.0, %v921
      %v923 = vpop.f32.mrb[0].mxu0
      %924 = vmatprep.mubr.bf16.mxu0 0
      %925 = vmatmul.mubr.bf16.gmra.mrb[0].mxu0 %v725
      %v926 = vpop.f32.mrb[0].mxu0
      %v927 = vadd.f32 0.0, %v926
      %v928 = vpop.f32.mrb[0].mxu0
      %v929 = vpop.f32.mrb[0].mxu0
      %v930 = vadd.f32 0.0, %v929
      %v931 = vpop.f32.mrb[0].mxu0
      %932 = vmatprep.mubr.bf16.mxu0 0
      %933 = vmatmul.mubr.bf16.gmra.mrb[0].mxu0 %v728
      %v934 = vpop.f32.mrb[0].mxu0
      %v935 = vadd.f32 0.0, %v934
      %v936 = vpop.f32.mrb[0].mxu0
      %v937 = vpop.f32.mrb[0].mxu0
      %v938 = vadd.f32 0.0, %v937
      %v939 = vpop.f32.mrb[0].mxu0
      %940 = vdwg.mxu0
      %941 = vmatprep.subr.bf16.mxu0 %v679
      %942 = vmatpush1.bf16.msra.mxu0 %v678
      %943 = vmatprep.subr.bf16.mxu0 %v684
      %944 = vmatpush1.bf16.msra.mxu0 %v683
      %945 = vmatprep.subr.bf16.mxu0 %v689
      %946 = vmatpush1.bf16.msra.mxu0 %v688
      %947 = vmatprep.subr.bf16.mxu0 %v694
      %948 = vmatpush1.bf16.msra.mxu0 %v693
      %949 = vmatprep.subr.bf16.mxu0 0
      %950 = vmatpush1.bf16.msra.mxu0 0
      %951 = vmatprep.subr.bf16.mxu0 0
      %952 = vmatpush1.bf16.msra.mxu0 0
      %953 = vmatprep.subr.bf16.mxu0 0
      %954 = vmatpush1.bf16.msra.mxu0 0
      %955 = vmatprep.subr.bf16.mxu0 0
      %956 = vmatpush1.bf16.msra.mxu0 0
      %957 = vmatprep.subr.bf16.mxu0 0
      %958 = vmatpush1.bf16.msra.mxu0 0
      %959 = vmatprep.subr.bf16.mxu0 0
      %960 = vmatpush1.bf16.msra.mxu0 0
      %961 = vmatprep.subr.bf16.mxu0 0
      %962 = vmatpush1.bf16.msra.mxu0 0
      %963 = vmatprep.subr.bf16.mxu0 0
      %964 = vmatpush1.bf16.msra.mxu0 0
      %965 = vmatprep.subr.bf16.mxu0 0
      %966 = vmatpush1.bf16.msra.mxu0 0
      %967 = vmatprep.subr.bf16.mxu0 0
      %968 = vmatpush1.bf16.msra.mxu0 0
      %969 = vmatprep.subr.bf16.mxu0 0
      %970 = vmatpush1.bf16.msra.mxu0 0
      %971 = vmatprep.subr.bf16.mxu0 0
      %972 = vmatpush1.bf16.msra.mxu0 0
      %973 = vmatprep.mubr.bf16.mxu0 0
      %974 = vmatmul.mubr.bf16.gmra.mrb[0].mxu0 %v502
      %v975 = vpop.f32.mrb[0].mxu0
      %v976 = vadd.f32 0.0, %v975
      %v977 = vpop.f32.mrb[0].mxu0
      %v978 = vadd.f32 0.0, %v977
      %v979 = vpop.f32.mrb[0].mxu0
      %v980 = vadd.f32 0.0, %v979
      %v981 = vpop.f32.mrb[0].mxu0
      %v982 = vadd.f32 0.0, %v981
      %983 = vmatprep.mubr.bf16.mxu0 0
      %984 = vmatmul.mubr.bf16.gmra.mrb[0].mxu0 %v505
      %v985 = vpop.f32.mrb[0].mxu0
      %v986 = vadd.f32 0.0, %v985
      %v987 = vpop.f32.mrb[0].mxu0
      %v988 = vadd.f32 0.0, %v987
      %v989 = vpop.f32.mrb[0].mxu0
      %v990 = vadd.f32 0.0, %v989
      %v991 = vpop.f32.mrb[0].mxu0
      %v992 = vadd.f32 0.0, %v991
      %993 = vmatprep.mubr.bf16.mxu0 0
      %994 = vmatmul.mubr.bf16.gmra.mrb[0].mxu0 %v508
      %v995 = vpop.f32.mrb[0].mxu0
      %v996 = vadd.f32 0.0, %v995
      %v997 = vpop.f32.mrb[0].mxu0
      %v998 = vadd.f32 0.0, %v997
      %v999 = vpop.f32.mrb[0].mxu0
      %v1000 = vadd.f32 0.0, %v999
      %v1001 = vpop.f32.mrb[0].mxu0
      %v1002 = vadd.f32 0.0, %v1001
      %1003 = vmatprep.mubr.bf16.mxu0 0
      %1004 = vmatmul.mubr.bf16.gmra.mrb[0].mxu0 %v511
      %v1005 = vpop.f32.mrb[0].mxu0
      %v1006 = vadd.f32 0.0, %v1005
      %v1007 = vpop.f32.mrb[0].mxu0
      %v1008 = vadd.f32 0.0, %v1007
      %v1009 = vpop.f32.mrb[0].mxu0
      %v1010 = vadd.f32 0.0, %v1009
      %v1011 = vpop.f32.mrb[0].mxu0
      %v1012 = vadd.f32 0.0, %v1011
      %1013 = vdwg.mxu0
      %1014 = vmatprep.subr.bf16.mxu0 %v681
      %1015 = vmatpush1.bf16.msra.mxu0 %v680
      %1016 = vmatprep.subr.bf16.mxu0 %v686
      %1017 = vmatpush1.bf16.msra.mxu0 %v685
      %1018 = vmatprep.subr.bf16.mxu0 %v691
      %1019 = vmatpush1.bf16.msra.mxu0 %v690
      %1020 = vmatprep.subr.bf16.mxu0 %v696
      %1021 = vmatpush1.bf16.msra.mxu0 %v695
      %1022 = vmatprep.subr.bf16.mxu0 0
      %1023 = vmatpush1.bf16.msra.mxu0 0
      %1024 = vmatprep.subr.bf16.mxu0 0
      %1025 = vmatpush1.bf16.msra.mxu0 0
      %1026 = vmatprep.subr.bf16.mxu0 0
      %1027 = vmatpush1.bf16.msra.mxu0 0
      %1028 = vmatprep.subr.bf16.mxu0 0
      %1029 = vmatpush1.bf16.msra.mxu0 0
      %1030 = vmatprep.subr.bf16.mxu0 0
      %1031 = vmatpush1.bf16.msra.mxu0 0
      %1032 = vmatprep.subr.bf16.mxu0 0
      %1033 = vmatpush1.bf16.msra.mxu0 0
      %1034 = vmatprep.subr.bf16.mxu0 0
      %1035 = vmatpush1.bf16.msra.mxu0 0
      %1036 = vmatprep.subr.bf16.mxu0 0
      %1037 = vmatpush1.bf16.msra.mxu0 0
      %1038 = vmatprep.subr.bf16.mxu0 0
      %1039 = vmatpush1.bf16.msra.mxu0 0
      %1040 = vmatprep.subr.bf16.mxu0 0
      %1041 = vmatpush1.bf16.msra.mxu0 0
      %1042 = vmatprep.subr.bf16.mxu0 0
      %1043 = vmatpush1.bf16.msra.mxu0 0
      %1044 = vmatprep.subr.bf16.mxu0 0
      %1045 = vmatpush1.bf16.msra.mxu0 0
      %1046 = vmatprep.mubr.bf16.mxu0 0
      %1047 = vmatmul.mubr.bf16.gmra.mrb[0].mxu0 %v502
      %v1048 = vpop.f32.mrb[0].mxu0
      %v1049 = vadd.f32 0.0, %v1048
      %v1050 = vpop.f32.mrb[0].mxu0
      %v1051 = vadd.f32 0.0, %v1050
      %v1052 = vpop.f32.mrb[0].mxu0
      %v1053 = vadd.f32 0.0, %v1052
      %v1054 = vpop.f32.mrb[0].mxu0
      %v1055 = vadd.f32 0.0, %v1054
      %1056 = vmatprep.mubr.bf16.mxu0 0
      %1057 = vmatmul.mubr.bf16.gmra.mrb[0].mxu0 %v505
      %v1058 = vpop.f32.mrb[0].mxu0
      %v1059 = vadd.f32 0.0, %v1058
      %v1060 = vpop.f32.mrb[0].mxu0
      %v1061 = vadd.f32 0.0, %v1060
      %v1062 = vpop.f32.mrb[0].mxu0
      %v1063 = vadd.f32 0.0, %v1062
      %v1064 = vpop.f32.mrb[0].mxu0
      %v1065 = vadd.f32 0.0, %v1064
      %1066 = vmatprep.mubr.bf16.mxu0 0
      %1067 = vmatmul.mubr.bf16.gmra.mrb[0].mxu0 %v508
      %v1068 = vpop.f32.mrb[0].mxu0
      %v1069 = vadd.f32 0.0, %v1068
      %v1070 = vpop.f32.mrb[0].mxu0
      %v1071 = vadd.f32 0.0, %v1070
      %v1072 = vpop.f32.mrb[0].mxu0
      %v1073 = vadd.f32 0.0, %v1072
      %v1074 = vpop.f32.mrb[0].mxu0
      %v1075 = vadd.f32 0.0, %v1074
      %1076 = vmatprep.mubr.bf16.mxu0 0
      %1077 = vmatmul.mubr.bf16.gmra.mrb[0].mxu0 %v511
      %v1078 = vpop.f32.mrb[0].mxu0
      %v1079 = vadd.f32 0.0, %v1078
      %v1080 = vpop.f32.mrb[0].mxu0
      %v1081 = vadd.f32 0.0, %v1080
      %v1082 = vpop.f32.mrb[0].mxu0
      %v1083 = vadd.f32 0.0, %v1082
      %v1084 = vpop.f32.mrb[0].mxu0
      %v1085 = vadd.f32 0.0, %v1084
      %1086 = vdwg.mxu0
      %1087 = vmatprep.subr.bf16.mxu0 0
      %1088 = vmatpush1.bf16.msra.mxu0 %v682
      %1089 = vmatprep.subr.bf16.mxu0 0
      %1090 = vmatpush1.bf16.msra.mxu0 %v687
      %1091 = vmatprep.subr.bf16.mxu0 0
      %1092 = vmatpush1.bf16.msra.mxu0 %v692
      %1093 = vmatprep.subr.bf16.mxu0 0
      %1094 = vmatpush1.bf16.msra.mxu0 %v697
      %1095 = vmatprep.subr.bf16.mxu0 0
      %1096 = vmatpush1.bf16.msra.mxu0 0
      %1097 = vmatprep.subr.bf16.mxu0 0
      %1098 = vmatpush1.bf16.msra.mxu0 0
      %1099 = vmatprep.subr.bf16.mxu0 0
      %1100 = vmatpush1.bf16.msra.mxu0 0
      %1101 = vmatprep.subr.bf16.mxu0 0
      %1102 = vmatpush1.bf16.msra.mxu0 0
      %1103 = vmatprep.subr.bf16.mxu0 0
      %1104 = vmatpush1.bf16.msra.mxu0 0
      %1105 = vmatprep.subr.bf16.mxu0 0
      %1106 = vmatpush1.bf16.msra.mxu0 0
      %1107 = vmatprep.subr.bf16.mxu0 0
      %1108 = vmatpush1.bf16.msra.mxu0 0
      %1109 = vmatprep.subr.bf16.mxu0 0
      %1110 = vmatpush1.bf16.msra.mxu0 0
      %1111 = vmatprep.subr.bf16.mxu0 0
      %1112 = vmatpush1.bf16.msra.mxu0 0
      %1113 = vmatprep.subr.bf16.mxu0 0
      %1114 = vmatpush1.bf16.msra.mxu0 0
      %1115 = vmatprep.subr.bf16.mxu0 0
      %1116 = vmatpush1.bf16.msra.mxu0 0
      %1117 = vmatprep.subr.bf16.mxu0 0
      %1118 = vmatpush1.bf16.msra.mxu0 0
      %1119 = vmatprep.mubr.bf16.mxu0 0
      %1120 = vmatmul.mubr.bf16.gmra.mrb[0].mxu0 %v502
      %v1121 = vpop.f32.mrb[0].mxu0
      %v1122 = vadd.f32 0.0, %v1121
      %v1123 = vpop.f32.mrb[0].mxu0
      %v1124 = vpop.f32.mrb[0].mxu0
      %v1125 = vadd.f32 0.0, %v1124
      %v1126 = vpop.f32.mrb[0].mxu0
      %1127 = vmatprep.mubr.bf16.mxu0 0
      %1128 = vmatmul.mubr.bf16.gmra.mrb[0].mxu0 %v505
      %v1129 = vpop.f32.mrb[0].mxu0
      %v1130 = vadd.f32 0.0, %v1129
      %v1131 = vpop.f32.mrb[0].mxu0
      %v1132 = vpop.f32.mrb[0].mxu0
      %v1133 = vadd.f32 0.0, %v1132
      %v1134 = vpop.f32.mrb[0].mxu0
      %1135 = vmatprep.mubr.bf16.mxu0 0
      %1136 = vmatmul.mubr.bf16.gmra.mrb[0].mxu0 %v508
      %v1137 = vpop.f32.mrb[0].mxu0
      %v1138 = vadd.f32 0.0, %v1137
      %v1139 = vpop.f32.mrb[0].mxu0
      %v1140 = vpop.f32.mrb[0].mxu0
      %v1141 = vadd.f32 0.0, %v1140
      %v1142 = vpop.f32.mrb[0].mxu0
      %1143 = vmatprep.mubr.bf16.mxu0 0
      %1144 = vmatmul.mubr.bf16.gmra.mrb[0].mxu0 %v511
      %v1145 = vpop.f32.mrb[0].mxu0
      %v1146 = vadd.f32 0.0, %v1145
      %v1147 = vpop.f32.mrb[0].mxu0
      %v1148 = vpop.f32.mrb[0].mxu0
      %v1149 = vadd.f32 0.0, %v1148
      %v1150 = vpop.f32.mrb[0].mxu0
      %1151 = vdwg.mxu0
      %v1152 = vpack.c.bf16 %v470, %v469
      %v1153 = vpack.c.bf16 %v472, %v471
      %v1154 = vpack.c.bf16 %v474, %v473
      %v1155 = vpack.c.bf16 %v476, %v475
      %v1156 = vpack.c.bf16 %v478, %v477
      %v1157 = vpack.c.bf16 %v480, %v479
      %v1158 = vpack.c.bf16 %v769, %v765
      %v1159 = vpack.c.bf16 %v771, %v767
      %v1160 = vpack.c.bf16 %v842, %v838
      %v1161 = vpack.c.bf16 %v844, %v840
      %v1162 = vpack.c.bf16 %v914, %v911
      %v1163 = vpack.c.bf16 %v779, %v775
      %v1164 = vpack.c.bf16 %v781, %v777
      %v1165 = vpack.c.bf16 %v852, %v848
      %v1166 = vpack.c.bf16 %v854, %v850
      %v1167 = vpack.c.bf16 %v922, %v919
      %v1168 = vpack.c.bf16 %v789, %v785
      %v1169 = vpack.c.bf16 %v791, %v787
      %v1170 = vpack.c.bf16 %v862, %v858
      %v1171 = vpack.c.bf16 %v864, %v860
      %v1172 = vpack.c.bf16 %v930, %v927
      %v1173 = vpack.c.bf16 %v799, %v795
      %v1174 = vpack.c.bf16 %v801, %v797
      %v1175 = vpack.c.bf16 %v872, %v868
      %v1176 = vpack.c.bf16 %v874, %v870
      %v1177 = vpack.c.bf16 %v938, %v935
      %v1179 = vsel %vm357, %v1152, 0
      %v1182 = vsel %vm357, %v1153, 0
      %v1185 = vsel %vm357, %v1154, 0
      %v1188 = vsel %vm357, %v1155, 0
      %v1191 = vsel %vm357, %v1156, 0
      %v1194 = vsel %vm357, %v1157, 0
      %1196 = vmatprep.subr.bf16.mxu0 %v1159
      %1197 = vmatpush1.bf16.msra.mxu0 %v1158
      %1198 = vmatprep.subr.bf16.mxu0 %v1164
      %1199 = vmatpush1.bf16.msra.mxu0 %v1163
      %1200 = vmatprep.subr.bf16.mxu0 %v1169
      %1201 = vmatpush1.bf16.msra.mxu0 %v1168
      %1202 = vmatprep.subr.bf16.mxu0 %v1174
      %1203 = vmatpush1.bf16.msra.mxu0 %v1173
      %1204 = vmatprep.subr.bf16.mxu0 0
      %1205 = vmatpush1.bf16.msra.mxu0 0
      %1206 = vmatprep.subr.bf16.mxu0 0
      %1207 = vmatpush1.bf16.msra.mxu0 0
      %1208 = vmatprep.subr.bf16.mxu0 0
      %1209 = vmatpush1.bf16.msra.mxu0 0
      %1210 = vmatprep.subr.bf16.mxu0 0
      %1211 = vmatpush1.bf16.msra.mxu0 0
      %1212 = vmatprep.subr.bf16.mxu0 0
      %1213 = vmatpush1.bf16.msra.mxu0 0
      %1214 = vmatprep.subr.bf16.mxu0 0
      %1215 = vmatpush1.bf16.msra.mxu0 0
      %1216 = vmatprep.subr.bf16.mxu0 0
      %1217 = vmatpush1.bf16.msra.mxu0 0
      %1218 = vmatprep.subr.bf16.mxu0 0
      %1219 = vmatpush1.bf16.msra.mxu0 0
      %1220 = vmatprep.subr.bf16.mxu0 0
      %1221 = vmatpush1.bf16.msra.mxu0 0
      %1222 = vmatprep.subr.bf16.mxu0 0
      %1223 = vmatpush1.bf16.msra.mxu0 0
      %1224 = vmatprep.subr.bf16.mxu0 0
      %1225 = vmatpush1.bf16.msra.mxu0 0
      %1226 = vmatprep.subr.bf16.mxu0 0
      %1227 = vmatpush1.bf16.msra.mxu0 0
      %1228 = vmatprep.mubr.bf16.mxu0 0
      %1229 = vmatmul.mubr.bf16.gmra.mrb[0].mxu0 %v1179
      %v1230 = vpop.f32.mrb[0].mxu0
      %v1231 = vadd.f32 0.0, %v1230
      %v1232 = vpop.f32.mrb[0].mxu0
      %v1233 = vadd.f32 0.0, %v1232
      %v1234 = vpop.f32.mrb[0].mxu0
      %v1235 = vadd.f32 0.0, %v1234
      %v1236 = vpop.f32.mrb[0].mxu0
      %v1237 = vadd.f32 0.0, %v1236
      %1238 = vmatprep.mubr.bf16.mxu0 0
      %1239 = vmatmul.mubr.bf16.gmra.mrb[0].mxu0 %v1182
      %v1240 = vpop.f32.mrb[0].mxu0
      %v1241 = vadd.f32 0.0, %v1240
      %v1242 = vpop.f32.mrb[0].mxu0
      %v1243 = vadd.f32 0.0, %v1242
      %v1244 = vpop.f32.mrb[0].mxu0
      %v1245 = vadd.f32 0.0, %v1244
      %v1246 = vpop.f32.mrb[0].mxu0
      %v1247 = vadd.f32 0.0, %v1246
      %1248 = vmatprep.mubr.bf16.mxu0 0
      %1249 = vmatmul.mubr.bf16.gmra.mrb[0].mxu0 %v1185
      %v1250 = vpop.f32.mrb[0].mxu0
      %v1251 = vadd.f32 0.0, %v1250
      %v1252 = vpop.f32.mrb[0].mxu0
      %v1253 = vadd.f32 0.0, %v1252
      %v1254 = vpop.f32.mrb[0].mxu0
      %v1255 = vadd.f32 0.0, %v1254
      %v1256 = vpop.f32.mrb[0].mxu0
      %v1257 = vadd.f32 0.0, %v1256
      %1258 = vmatprep.mubr.bf16.mxu0 0
      %1259 = vmatmul.mubr.bf16.gmra.mrb[0].mxu0 %v1188
      %v1260 = vpop.f32.mrb[0].mxu0
      %v1261 = vadd.f32 0.0, %v1260
      %v1262 = vpop.f32.mrb[0].mxu0
      %v1263 = vadd.f32 0.0, %v1262
      %v1264 = vpop.f32.mrb[0].mxu0
      %v1265 = vadd.f32 0.0, %v1264
      %v1266 = vpop.f32.mrb[0].mxu0
      %v1267 = vadd.f32 0.0, %v1266
      %1268 = vmatprep.mubr.bf16.mxu0 0
      %1269 = vmatmul.mubr.bf16.gmra.mrb[0].mxu0 %v1191
      %v1270 = vpop.f32.mrb[0].mxu0
      %v1271 = vadd.f32 0.0, %v1270
      %v1272 = vpop.f32.mrb[0].mxu0
      %v1273 = vadd.f32 0.0, %v1272
      %v1274 = vpop.f32.mrb[0].mxu0
      %v1275 = vadd.f32 0.0, %v1274
      %v1276 = vpop.f32.mrb[0].mxu0
      %v1277 = vadd.f32 0.0, %v1276
      %1278 = vmatprep.mubr.bf16.mxu0 0
      %1279 = vmatmul.mubr.bf16.gmra.mrb[0].mxu0 %v1194
      %v1280 = vpop.f32.mrb[0].mxu0
      %v1281 = vadd.f32 0.0, %v1280
      %v1282 = vpop.f32.mrb[0].mxu0
      %v1283 = vadd.f32 0.0, %v1282
      %v1284 = vpop.f32.mrb[0].mxu0
      %v1285 = vadd.f32 0.0, %v1284
      %v1286 = vpop.f32.mrb[0].mxu0
      %v1287 = vadd.f32 0.0, %v1286
      %1288 = vdwg.mxu0
      %1289 = vmatprep.subr.bf16.mxu0 %v1161
      %1290 = vmatpush1.bf16.msra.mxu0 %v1160
      %1291 = vmatprep.subr.bf16.mxu0 %v1166
      %1292 = vmatpush1.bf16.msra.mxu0 %v1165
      %1293 = vmatprep.subr.bf16.mxu0 %v1171
      %1294 = vmatpush1.bf16.msra.mxu0 %v1170
      %1295 = vmatprep.subr.bf16.mxu0 %v1176
      %1296 = vmatpush1.bf16.msra.mxu0 %v1175
      %1297 = vmatprep.subr.bf16.mxu0 0
      %1298 = vmatpush1.bf16.msra.mxu0 0
      %1299 = vmatprep.subr.bf16.mxu0 0
      %1300 = vmatpush1.bf16.msra.mxu0 0
      %1301 = vmatprep.subr.bf16.mxu0 0
      %1302 = vmatpush1.bf16.msra.mxu0 0
      %1303 = vmatprep.subr.bf16.mxu0 0
      %1304 = vmatpush1.bf16.msra.mxu0 0
      %1305 = vmatprep.subr.bf16.mxu0 0
      %1306 = vmatpush1.bf16.msra.mxu0 0
      %1307 = vmatprep.subr.bf16.mxu0 0
      %1308 = vmatpush1.bf16.msra.mxu0 0
      %1309 = vmatprep.subr.bf16.mxu0 0
      %1310 = vmatpush1.bf16.msra.mxu0 0
      %1311 = vmatprep.subr.bf16.mxu0 0
      %1312 = vmatpush1.bf16.msra.mxu0 0
      %1313 = vmatprep.subr.bf16.mxu0 0
      %1314 = vmatpush1.bf16.msra.mxu0 0
      %1315 = vmatprep.subr.bf16.mxu0 0
      %1316 = vmatpush1.bf16.msra.mxu0 0
      %1317 = vmatprep.subr.bf16.mxu0 0
      %1318 = vmatpush1.bf16.msra.mxu0 0
      %1319 = vmatprep.subr.bf16.mxu0 0
      %1320 = vmatpush1.bf16.msra.mxu0 0
      %1321 = vmatprep.mubr.bf16.mxu0 0
      %1322 = vmatmul.mubr.bf16.gmra.mrb[0].mxu0 %v1179
      %v1323 = vpop.f32.mrb[0].mxu0
      %v1324 = vadd.f32 0.0, %v1323
      %v1325 = vpop.f32.mrb[0].mxu0
      %v1326 = vadd.f32 0.0, %v1325
      %v1327 = vpop.f32.mrb[0].mxu0
      %v1328 = vadd.f32 0.0, %v1327
      %v1329 = vpop.f32.mrb[0].mxu0
      %v1330 = vadd.f32 0.0, %v1329
      %1331 = vmatprep.mubr.bf16.mxu0 0
      %1332 = vmatmul.mubr.bf16.gmra.mrb[0].mxu0 %v1182
      %v1333 = vpop.f32.mrb[0].mxu0
      %v1334 = vadd.f32 0.0, %v1333
      %v1335 = vpop.f32.mrb[0].mxu0
      %v1336 = vadd.f32 0.0, %v1335
      %v1337 = vpop.f32.mrb[0].mxu0
      %v1338 = vadd.f32 0.0, %v1337
      %v1339 = vpop.f32.mrb[0].mxu0
      %v1340 = vadd.f32 0.0, %v1339
      %1341 = vmatprep.mubr.bf16.mxu0 0
      %1342 = vmatmul.mubr.bf16.gmra.mrb[0].mxu0 %v1185
      %v1343 = vpop.f32.mrb[0].mxu0
      %v1344 = vadd.f32 0.0, %v1343
      %v1345 = vpop.f32.mrb[0].mxu0
      %v1346 = vadd.f32 0.0, %v1345
      %v1347 = vpop.f32.mrb[0].mxu0
      %v1348 = vadd.f32 0.0, %v1347
      %v1349 = vpop.f32.mrb[0].mxu0
      %v1350 = vadd.f32 0.0, %v1349
      %1351 = vmatprep.mubr.bf16.mxu0 0
      %1352 = vmatmul.mubr.bf16.gmra.mrb[0].mxu0 %v1188
      %v1353 = vpop.f32.mrb[0].mxu0
      %v1354 = vadd.f32 0.0, %v1353
      %v1355 = vpop.f32.mrb[0].mxu0
      %v1356 = vadd.f32 0.0, %v1355
      %v1357 = vpop.f32.mrb[0].mxu0
      %v1358 = vadd.f32 0.0, %v1357
      %v1359 = vpop.f32.mrb[0].mxu0
      %v1360 = vadd.f32 0.0, %v1359
      %1361 = vmatprep.mubr.bf16.mxu0 0
      %1362 = vmatmul.mubr.bf16.gmra.mrb[0].mxu0 %v1191
      %v1363 = vpop.f32.mrb[0].mxu0
      %v1364 = vadd.f32 0.0, %v1363
      %v1365 = vpop.f32.mrb[0].mxu0
      %v1366 = vadd.f32 0.0, %v1365
      %v1367 = vpop.f32.mrb[0].mxu0
      %v1368 = vadd.f32 0.0, %v1367
      %v1369 = vpop.f32.mrb[0].mxu0
      %v1370 = vadd.f32 0.0, %v1369
      %1371 = vmatprep.mubr.bf16.mxu0 0
      %1372 = vmatmul.mubr.bf16.gmra.mrb[0].mxu0 %v1194
      %v1373 = vpop.f32.mrb[0].mxu0
      %v1374 = vadd.f32 0.0, %v1373
      %v1375 = vpop.f32.mrb[0].mxu0
      %v1376 = vadd.f32 0.0, %v1375
      %v1377 = vpop.f32.mrb[0].mxu0
      %v1378 = vadd.f32 0.0, %v1377
      %v1379 = vpop.f32.mrb[0].mxu0
      %v1380 = vadd.f32 0.0, %v1379
      %1381 = vdwg.mxu0
      %1382 = vmatprep.subr.bf16.mxu0 0
      %1383 = vmatpush1.bf16.msra.mxu0 %v1162
      %1384 = vmatprep.subr.bf16.mxu0 0
      %1385 = vmatpush1.bf16.msra.mxu0 %v1167
      %1386 = vmatprep.subr.bf16.mxu0 0
      %1387 = vmatpush1.bf16.msra.mxu0 %v1172
      %1388 = vmatprep.subr.bf16.mxu0 0
      %1389 = vmatpush1.bf16.msra.mxu0 %v1177
      %1390 = vmatprep.subr.bf16.mxu0 0
      %1391 = vmatpush1.bf16.msra.mxu0 0
      %1392 = vmatprep.subr.bf16.mxu0 0
      %1393 = vmatpush1.bf16.msra.mxu0 0
      %1394 = vmatprep.subr.bf16.mxu0 0
      %1395 = vmatpush1.bf16.msra.mxu0 0
      %1396 = vmatprep.subr.bf16.mxu0 0
      %1397 = vmatpush1.bf16.msra.mxu0 0
      %1398 = vmatprep.subr.bf16.mxu0 0
      %1399 = vmatpush1.bf16.msra.mxu0 0
      %1400 = vmatprep.subr.bf16.mxu0 0
      %1401 = vmatpush1.bf16.msra.mxu0 0
      %1402 = vmatprep.subr.bf16.mxu0 0
      %1403 = vmatpush1.bf16.msra.mxu0 0
      %1404 = vmatprep.subr.bf16.mxu0 0
      %1405 = vmatpush1.bf16.msra.mxu0 0
      %1406 = vmatprep.subr.bf16.mxu0 0
      %1407 = vmatpush1.bf16.msra.mxu0 0
      %1408 = vmatprep.subr.bf16.mxu0 0
      %1409 = vmatpush1.bf16.msra.mxu0 0
      %1410 = vmatprep.subr.bf16.mxu0 0
      %1411 = vmatpush1.bf16.msra.mxu0 0
      %1412 = vmatprep.subr.bf16.mxu0 0
      %1413 = vmatpush1.bf16.msra.mxu0 0
      %1414 = vmatprep.mubr.bf16.mxu0 0
      %1415 = vmatmul.mubr.bf16.gmra.mrb[0].mxu0 %v1179
      %v1416 = vpop.f32.mrb[0].mxu0
      %v1417 = vadd.f32 0.0, %v1416
      %v1418 = vpop.f32.mrb[0].mxu0
      %v1419 = vpop.f32.mrb[0].mxu0
      %v1420 = vadd.f32 0.0, %v1419
      %v1421 = vpop.f32.mrb[0].mxu0
      %1422 = vmatprep.mubr.bf16.mxu0 0
      %1423 = vmatmul.mubr.bf16.gmra.mrb[0].mxu0 %v1182
      %v1424 = vpop.f32.mrb[0].mxu0
      %v1425 = vadd.f32 0.0, %v1424
      %v1426 = vpop.f32.mrb[0].mxu0
      %v1427 = vpop.f32.mrb[0].mxu0
      %v1428 = vadd.f32 0.0, %v1427
      %v1429 = vpop.f32.mrb[0].mxu0
      %1430 = vmatprep.mubr.bf16.mxu0 0
      %1431 = vmatmul.mubr.bf16.gmra.mrb[0].mxu0 %v1185
      %v1432 = vpop.f32.mrb[0].mxu0
      %v1433 = vadd.f32 0.0, %v1432
      %v1434 = vpop.f32.mrb[0].mxu0
      %v1435 = vpop.f32.mrb[0].mxu0
      %v1436 = vadd.f32 0.0, %v1435
      %v1437 = vpop.f32.mrb[0].mxu0
      %1438 = vmatprep.mubr.bf16.mxu0 0
      %1439 = vmatmul.mubr.bf16.gmra.mrb[0].mxu0 %v1188
      %v1440 = vpop.f32.mrb[0].mxu0
      %v1441 = vadd.f32 0.0, %v1440
      %v1442 = vpop.f32.mrb[0].mxu0
      %v1443 = vpop.f32.mrb[0].mxu0
      %v1444 = vadd.f32 0.0, %v1443
      %v1445 = vpop.f32.mrb[0].mxu0
      %1446 = vmatprep.mubr.bf16.mxu0 0
      %1447 = vmatmul.mubr.bf16.gmra.mrb[0].mxu0 %v1191
      %v1448 = vpop.f32.mrb[0].mxu0
      %v1449 = vadd.f32 0.0, %v1448
      %v1450 = vpop.f32.mrb[0].mxu0
      %v1451 = vpop.f32.mrb[0].mxu0
      %v1452 = vadd.f32 0.0, %v1451
      %v1453 = vpop.f32.mrb[0].mxu0
      %1454 = vmatprep.mubr.bf16.mxu0 0
      %1455 = vmatmul.mubr.bf16.gmra.mrb[0].mxu0 %v1194
      %v1456 = vpop.f32.mrb[0].mxu0
      %v1457 = vadd.f32 0.0, %v1456
      %v1458 = vpop.f32.mrb[0].mxu0
      %v1459 = vpop.f32.mrb[0].mxu0
      %v1460 = vadd.f32 0.0, %v1459
      %v1461 = vpop.f32.mrb[0].mxu0
      %1462 = vdwg.mxu0
      %v1463 = vlaneseq
      %v1464 = vand.u32 %v1463, 127
      %v1465 = vlaneseq
      %v1466 = vshrl.u32 %v1465, 7
      %v1467 = vadd.s32 %v1466, 8
      %v1468 = vadd.s32 %v1466, 16
      %v1469 = vadd.s32 %v1466, 24
      %v1470 = vstv %s246
      %vm1471 = vcmp.lt.s32.totalorder %v1464, %v1470
      %vm1472 = vcmp.lt.s32.totalorder %v1466, 25
      %vm1473 = vcmp.lt.s32.totalorder %v1467, 25
      %vm1474 = vcmp.lt.s32.totalorder %v1468, 25
      %vm1475 = vcmp.lt.s32.totalorder %v1469, 25
      %vm1476 = vcmp.lt.s32.totalorder %v1464, 25
      %v1477 = vsel %vm1471, 1, 0
      %vm1478 = vcmp.eq.s32.totalorder %v1477, 1
      %v1479 = vsel %vm1478, %v1231, -1e+30
      %v1480 = vsel %vm1478, %v1235, -1e+30
      %v1481 = vsel %vm1478, %v1241, -1e+30
      %v1482 = vsel %vm1478, %v1245, -1e+30
      %v1483 = vsel %vm1478, %v1251, -1e+30
      %v1484 = vsel %vm1478, %v1255, -1e+30
      %v1485 = vsel %vm1478, %v1261, -1e+30
      %v1486 = vsel %vm1478, %v1265, -1e+30
      %v1487 = vsel %vm1478, %v1271, -1e+30
      %v1488 = vsel %vm1478, %v1275, -1e+30
      %v1489 = vsel %vm1478, %v1281, -1e+30
      %v1490 = vsel %vm1478, %v1285, -1e+30
      %1491 = vmax.xlane.f32.xlu0 %v1479
      %v1492 = vpop.xlane.xlu0 %1491
      %1493 = vmax.xlane.f32.xlu0 %v1480
      %v1494 = vpop.xlane.xlu0 %1493
      %1495 = vmax.xlane.f32.xlu0 %v1481
      %v1496 = vpop.xlane.xlu0 %1495
      %1497 = vmax.xlane.f32.xlu0 %v1482
      %v1498 = vpop.xlane.xlu0 %1497
      %1499 = vmax.xlane.f32.xlu0 %v1483
      %v1500 = vpop.xlane.xlu0 %1499
      %1501 = vmax.xlane.f32.xlu0 %v1484
      %v1502 = vpop.xlane.xlu0 %1501
      %1503 = vmax.xlane.f32.xlu0 %v1485
      %v1504 = vpop.xlane.xlu0 %1503
      %1505 = vmax.xlane.f32.xlu0 %v1486
      %v1506 = vpop.xlane.xlu0 %1505
      %1507 = vmax.xlane.f32.xlu0 %v1487
      %v1508 = vpop.xlane.xlu0 %1507
      %1509 = vmax.xlane.f32.xlu0 %v1488
      %v1510 = vpop.xlane.xlu0 %1509
      %1511 = vmax.xlane.f32.xlu0 %v1489
      %v1512 = vpop.xlane.xlu0 %1511
      %1513 = vmax.xlane.f32.xlu0 %v1490
      %v1514 = vpop.xlane.xlu0 %1513
      %vm1515 = vcmp.eq.f32.partialorder %v1479, %v1492
      %vm1516 = vcmp.eq.f32.partialorder %v1480, %v1494
      %vm1517 = vcmp.eq.f32.partialorder %v1481, %v1496
      %vm1518 = vcmp.eq.f32.partialorder %v1482, %v1498
      %vm1519 = vcmp.eq.f32.partialorder %v1483, %v1500
      %vm1520 = vcmp.eq.f32.partialorder %v1484, %v1502
      %vm1521 = vcmp.eq.f32.partialorder %v1485, %v1504
      %vm1522 = vcmp.eq.f32.partialorder %v1486, %v1506
      %vm1523 = vcmp.eq.f32.partialorder %v1487, %v1508
      %vm1524 = vcmp.eq.f32.partialorder %v1488, %v1510
      %vm1525 = vcmp.eq.f32.partialorder %v1489, %v1512
      %vm1526 = vcmp.eq.f32.partialorder %v1490, %v1514
      %v1527 = vsel %vm1515, %v1464, 135
      %v1528 = vsel %vm1516, %v1464, 135
      %v1529 = vsel %vm1517, %v1464, 135
      %v1530 = vsel %vm1518, %v1464, 135
      %v1531 = vsel %vm1519, %v1464, 135
      %v1532 = vsel %vm1520, %v1464, 135
      %v1533 = vsel %vm1521, %v1464, 135
      %v1534 = vsel %vm1522, %v1464, 135
      %v1535 = vsel %vm1523, %v1464, 135
      %v1536 = vsel %vm1524, %v1464, 135
      %v1537 = vsel %vm1525, %v1464, 135
      %v1538 = vsel %vm1526, %v1464, 135
      %v1539 = vand.u32 %v1527, 65535
      %v1540 = vshra.s32 %v1527, 16
      %v1541 = vcvt.s32.f32 %v1539
      %v1542 = vcvt.s32.f32 %v1540
      %1543 = vmin.xlane.f32.xlu0 %v1542
      %v1544 = vpop.xlane.xlu0 %1543
      %vm1545 = vcmp.eq.f32.partialorder %v1542, %v1544
      %v1546 = vsel %vm1545, %v1541, inf
      %1547 = vmin.xlane.f32.xlu0 %v1546
      %v1548 = vpop.xlane.xlu0 %1547
      %v1549 = vcvt.f32.s32 %v1548
      %v1550 = vcvt.f32.s32 %v1544
      %v1551 = vshll.u32 %v1550, 16
      %v1552 = vadd.s32 %v1551, %v1549
      %v1553 = vand.u32 %v1528, 65535
      %v1554 = vshra.s32 %v1528, 16
      %v1555 = vcvt.s32.f32 %v1553
      %v1556 = vcvt.s32.f32 %v1554
      %1557 = vmin.xlane.f32.xlu0 %v1556
      %v1558 = vpop.xlane.xlu0 %1557
      %vm1559 = vcmp.eq.f32.partialorder %v1556, %v1558
      %v1560 = vsel %vm1559, %v1555, inf
      %1561 = vmin.xlane.f32.xlu0 %v1560
      %v1562 = vpop.xlane.xlu0 %1561
      %v1563 = vcvt.f32.s32 %v1562
      %v1564 = vcvt.f32.s32 %v1558
      %v1565 = vshll.u32 %v1564, 16
      %v1566 = vadd.s32 %v1565, %v1563
      %v1567 = vand.u32 %v1529, 65535
      %v1568 = vshra.s32 %v1529, 16
      %v1569 = vcvt.s32.f32 %v1567
      %v1570 = vcvt.s32.f32 %v1568
      %1571 = vmin.xlane.f32.xlu0 %v1570
      %v1572 = vpop.xlane.xlu0 %1571
      %vm1573 = vcmp.eq.f32.partialorder %v1570, %v1572
      %v1574 = vsel %vm1573, %v1569, inf
      %1575 = vmin.xlane.f32.xlu0 %v1574
      %v1576 = vpop.xlane.xlu0 %1575
      %v1577 = vcvt.f32.s32 %v1576
      %v1578 = vcvt.f32.s32 %v1572
      %v1579 = vshll.u32 %v1578, 16
      %v1580 = vadd.s32 %v1579, %v1577
      %v1581 = vand.u32 %v1530, 65535
      %v1582 = vshra.s32 %v1530, 16
      %v1583 = vcvt.s32.f32 %v1581
      %v1584 = vcvt.s32.f32 %v1582
      %1585 = vmin.xlane.f32.xlu0 %v1584
      %v1586 = vpop.xlane.xlu0 %1585
      %vm1587 = vcmp.eq.f32.partialorder %v1584, %v1586
      %v1588 = vsel %vm1587, %v1583, inf
      %1589 = vmin.xlane.f32.xlu0 %v1588
      %v1590 = vpop.xlane.xlu0 %1589
      %v1591 = vcvt.f32.s32 %v1590
      %v1592 = vcvt.f32.s32 %v1586
      %v1593 = vshll.u32 %v1592, 16
      %v1594 = vadd.s32 %v1593, %v1591
      %v1595 = vand.u32 %v1531, 65535
      %v1596 = vshra.s32 %v1531, 16
      %v1597 = vcvt.s32.f32 %v1595
      %v1598 = vcvt.s32.f32 %v1596
      %1599 = vmin.xlane.f32.xlu0 %v1598
      %v1600 = vpop.xlane.xlu0 %1599
      %vm1601 = vcmp.eq.f32.partialorder %v1598, %v1600
      %v1602 = vsel %vm1601, %v1597, inf
      %1603 = vmin.xlane.f32.xlu0 %v1602
      %v1604 = vpop.xlane.xlu0 %1603
      %v1605 = vcvt.f32.s32 %v1604
      %v1606 = vcvt.f32.s32 %v1600
      %v1607 = vshll.u32 %v1606, 16
      %v1608 = vadd.s32 %v1607, %v1605
      %v1609 = vand.u32 %v1532, 65535
      %v1610 = vshra.s32 %v1532, 16
      %v1611 = vcvt.s32.f32 %v1609
      %v1612 = vcvt.s32.f32 %v1610
      %1613 = vmin.xlane.f32.xlu0 %v1612
      %v1614 = vpop.xlane.xlu0 %1613
      %vm1615 = vcmp.eq.f32.partialorder %v1612, %v1614
      %v1616 = vsel %vm1615, %v1611, inf
      %1617 = vmin.xlane.f32.xlu0 %v1616
      %v1618 = vpop.xlane.xlu0 %1617
      %v1619 = vcvt.f32.s32 %v1618
      %v1620 = vcvt.f32.s32 %v1614
      %v1621 = vshll.u32 %v1620, 16
      %v1622 = vadd.s32 %v1621, %v1619
      %v1623 = vand.u32 %v1533, 65535
      %v1624 = vshra.s32 %v1533, 16
      %v1625 = vcvt.s32.f32 %v1623
      %v1626 = vcvt.s32.f32 %v1624
      %1627 = vmin.xlane.f32.xlu0 %v1626
      %v1628 = vpop.xlane.xlu0 %1627
      %vm1629 = vcmp.eq.f32.partialorder %v1626, %v1628
      %v1630 = vsel %vm1629, %v1625, inf
      %1631 = vmin.xlane.f32.xlu0 %v1630
      %v1632 = vpop.xlane.xlu0 %1631
      %v1633 = vcvt.f32.s32 %v1632
      %v1634 = vcvt.f32.s32 %v1628
      %v1635 = vshll.u32 %v1634, 16
      %v1636 = vadd.s32 %v1635, %v1633
      %v1637 = vand.u32 %v1534, 65535
      %v1638 = vshra.s32 %v1534, 16
      %v1639 = vcvt.s32.f32 %v1637
      %v1640 = vcvt.s32.f32 %v1638
      %1641 = vmin.xlane.f32.xlu0 %v1640
      %v1642 = vpop.xlane.xlu0 %1641
      %vm1643 = vcmp.eq.f32.partialorder %v1640, %v1642
      %v1644 = vsel %vm1643, %v1639, inf
      %1645 = vmin.xlane.f32.xlu0 %v1644
      %v1646 = vpop.xlane.xlu0 %1645
      %v1647 = vcvt.f32.s32 %v1646
      %v1648 = vcvt.f32.s32 %v1642
      %v1649 = vshll.u32 %v1648, 16
      %v1650 = vadd.s32 %v1649, %v1647
      %v1651 = vand.u32 %v1535, 65535
      %v1652 = vshra.s32 %v1535, 16
      %v1653 = vcvt.s32.f32 %v1651
      %v1654 = vcvt.s32.f32 %v1652
      %1655 = vmin.xlane.f32.xlu0 %v1654
      %v1656 = vpop.xlane.xlu0 %1655
      %vm1657 = vcmp.eq.f32.partialorder %v1654, %v1656
      %v1658 = vsel %vm1657, %v1653, inf
      %1659 = vmin.xlane.f32.xlu0 %v1658
      %v1660 = vpop.xlane.xlu0 %1659
      %v1661 = vcvt.f32.s32 %v1660
      %v1662 = vcvt.f32.s32 %v1656
      %v1663 = vshll.u32 %v1662, 16
      %v1664 = vadd.s32 %v1663, %v1661
      %v1665 = vand.u32 %v1536, 65535
      %v1666 = vshra.s32 %v1536, 16
      %v1667 = vcvt.s32.f32 %v1665
      %v1668 = vcvt.s32.f32 %v1666
      %1669 = vmin.xlane.f32.xlu0 %v1668
      %v1670 = vpop.xlane.xlu0 %1669
      %vm1671 = vcmp.eq.f32.partialorder %v1668, %v1670
      %v1672 = vsel %vm1671, %v1667, inf
      %1673 = vmin.xlane.f32.xlu0 %v1672
      %v1674 = vpop.xlane.xlu0 %1673
      %v1675 = vcvt.f32.s32 %v1674
      %v1676 = vcvt.f32.s32 %v1670
      %v1677 = vshll.u32 %v1676, 16
      %v1678 = vadd.s32 %v1677, %v1675
      %v1679 = vand.u32 %v1537, 65535
      %v1680 = vshra.s32 %v1537, 16
      %v1681 = vcvt.s32.f32 %v1679
      %v1682 = vcvt.s32.f32 %v1680
      %1683 = vmin.xlane.f32.xlu0 %v1682
      %v1684 = vpop.xlane.xlu0 %1683
      %vm1685 = vcmp.eq.f32.partialorder %v1682, %v1684
      %v1686 = vsel %vm1685, %v1681, inf
      %1687 = vmin.xlane.f32.xlu0 %v1686
      %v1688 = vpop.xlane.xlu0 %1687
      %v1689 = vcvt.f32.s32 %v1688
      %v1690 = vcvt.f32.s32 %v1684
      %v1691 = vshll.u32 %v1690, 16
      %v1692 = vadd.s32 %v1691, %v1689
      %v1693 = vand.u32 %v1538, 65535
      %v1694 = vshra.s32 %v1538, 16
      %v1695 = vcvt.s32.f32 %v1693
      %v1696 = vcvt.s32.f32 %v1694
      %1697 = vmin.xlane.f32.xlu0 %v1696
      %v1698 = vpop.xlane.xlu0 %1697
      %vm1699 = vcmp.eq.f32.partialorder %v1696, %v1698
      %v1700 = vsel %vm1699, %v1695, inf
      %1701 = vmin.xlane.f32.xlu0 %v1700
      %v1702 = vpop.xlane.xlu0 %1701
      %v1703 = vcvt.f32.s32 %v1702
      %v1704 = vcvt.f32.s32 %v1698
      %v1705 = vshll.u32 %v1704, 16
      %v1706 = vadd.s32 %v1705, %v1703
      %v1707 = vsel %vm1478, %v1233, -1e+30
      %v1708 = vsel %vm1478, %v1237, -1e+30
      %v1709 = vsel %vm1478, %v1243, -1e+30
      %v1710 = vsel %vm1478, %v1247, -1e+30
      %v1711 = vsel %vm1478, %v1253, -1e+30
      %v1712 = vsel %vm1478, %v1257, -1e+30
      %v1713 = vsel %vm1478, %v1263, -1e+30
      %v1714 = vsel %vm1478, %v1267, -1e+30
      %v1715 = vsel %vm1478, %v1273, -1e+30
      %v1716 = vsel %vm1478, %v1277, -1e+30
      %v1717 = vsel %vm1478, %v1283, -1e+30
      %v1718 = vsel %vm1478, %v1287, -1e+30
      %1719 = vmax.xlane.f32.xlu0 %v1707
      %v1720 = vpop.xlane.xlu0 %1719
      %1721 = vmax.xlane.f32.xlu0 %v1708
      %v1722 = vpop.xlane.xlu0 %1721
      %1723 = vmax.xlane.f32.xlu0 %v1709
      %v1724 = vpop.xlane.xlu0 %1723
      %1725 = vmax.xlane.f32.xlu0 %v1710
      %v1726 = vpop.xlane.xlu0 %1725
      %1727 = vmax.xlane.f32.xlu0 %v1711
      %v1728 = vpop.xlane.xlu0 %1727
      %1729 = vmax.xlane.f32.xlu0 %v1712
      %v1730 = vpop.xlane.xlu0 %1729
      %1731 = vmax.xlane.f32.xlu0 %v1713
      %v1732 = vpop.xlane.xlu0 %1731
      %1733 = vmax.xlane.f32.xlu0 %v1714
      %v1734 = vpop.xlane.xlu0 %1733
      %1735 = vmax.xlane.f32.xlu0 %v1715
      %v1736 = vpop.xlane.xlu0 %1735
      %1737 = vmax.xlane.f32.xlu0 %v1716
      %v1738 = vpop.xlane.xlu0 %1737
      %1739 = vmax.xlane.f32.xlu0 %v1717
      %v1740 = vpop.xlane.xlu0 %1739
      %1741 = vmax.xlane.f32.xlu0 %v1718
      %v1742 = vpop.xlane.xlu0 %1741
      %vm1743 = vcmp.eq.f32.partialorder %v1707, %v1720
      %vm1744 = vcmp.eq.f32.partialorder %v1708, %v1722
      %vm1745 = vcmp.eq.f32.partialorder %v1709, %v1724
      %vm1746 = vcmp.eq.f32.partialorder %v1710, %v1726
      %vm1747 = vcmp.eq.f32.partialorder %v1711, %v1728
      %vm1748 = vcmp.eq.f32.partialorder %v1712, %v1730
      %vm1749 = vcmp.eq.f32.partialorder %v1713, %v1732
      %vm1750 = vcmp.eq.f32.partialorder %v1714, %v1734
      %vm1751 = vcmp.eq.f32.partialorder %v1715, %v1736
      %vm1752 = vcmp.eq.f32.partialorder %v1716, %v1738
      %vm1753 = vcmp.eq.f32.partialorder %v1717, %v1740
      %vm1754 = vcmp.eq.f32.partialorder %v1718, %v1742
      %v1755 = vsel %vm1743, %v1464, 135
      %v1756 = vsel %vm1744, %v1464, 135
      %v1757 = vsel %vm1745, %v1464, 135
      %v1758 = vsel %vm1746, %v1464, 135
      %v1759 = vsel %vm1747, %v1464, 135
      %v1760 = vsel %vm1748, %v1464, 135
      %v1761 = vsel %vm1749, %v1464, 135
      %v1762 = vsel %vm1750, %v1464, 135
      %v1763 = vsel %vm1751, %v1464, 135
      %v1764 = vsel %vm1752, %v1464, 135
      %v1765 = vsel %vm1753, %v1464, 135
      %v1766 = vsel %vm1754, %v1464, 135
      %v1767 = vand.u32 %v1755, 65535
      %v1768 = vshra.s32 %v1755, 16
      %v1769 = vcvt.s32.f32 %v1767
      %v1770 = vcvt.s32.f32 %v1768
      %1771 = vmin.xlane.f32.xlu0 %v1770
      %v1772 = vpop.xlane.xlu0 %1771
      %vm1773 = vcmp.eq.f32.partialorder %v1770, %v1772
      %v1774 = vsel %vm1773, %v1769, inf
      %1775 = vmin.xlane.f32.xlu0 %v1774
      %v1776 = vpop.xlane.xlu0 %1775
      %v1777 = vcvt.f32.s32 %v1776
      %v1778 = vcvt.f32.s32 %v1772
      %v1779 = vshll.u32 %v1778, 16
      %v1780 = vadd.s32 %v1779, %v1777
      %v1781 = vand.u32 %v1756, 65535
      %v1782 = vshra.s32 %v1756, 16
      %v1783 = vcvt.s32.f32 %v1781
      %v1784 = vcvt.s32.f32 %v1782
      %1785 = vmin.xlane.f32.xlu0 %v1784
      %v1786 = vpop.xlane.xlu0 %1785
      %vm1787 = vcmp.eq.f32.partialorder %v1784, %v1786
      %v1788 = vsel %vm1787, %v1783, inf
      %1789 = vmin.xlane.f32.xlu0 %v1788
      %v1790 = vpop.xlane.xlu0 %1789
      %v1791 = vcvt.f32.s32 %v1790
      %v1792 = vcvt.f32.s32 %v1786
      %v1793 = vshll.u32 %v1792, 16
      %v1794 = vadd.s32 %v1793, %v1791
      %v1795 = vand.u32 %v1757, 65535
      %v1796 = vshra.s32 %v1757, 16
      %v1797 = vcvt.s32.f32 %v1795
      %v1798 = vcvt.s32.f32 %v1796
      %1799 = vmin.xlane.f32.xlu0 %v1798
      %v1800 = vpop.xlane.xlu0 %1799
      %vm1801 = vcmp.eq.f32.partialorder %v1798, %v1800
      %v1802 = vsel %vm1801, %v1797, inf
      %1803 = vmin.xlane.f32.xlu0 %v1802
      %v1804 = vpop.xlane.xlu0 %1803
      %v1805 = vcvt.f32.s32 %v1804
      %v1806 = vcvt.f32.s32 %v1800
      %v1807 = vshll.u32 %v1806, 16
      %v1808 = vadd.s32 %v1807, %v1805
      %v1809 = vand.u32 %v1758, 65535
      %v1810 = vshra.s32 %v1758, 16
      %v1811 = vcvt.s32.f32 %v1809
      %v1812 = vcvt.s32.f32 %v1810
      %1813 = vmin.xlane.f32.xlu0 %v1812
      %v1814 = vpop.xlane.xlu0 %1813
      %vm1815 = vcmp.eq.f32.partialorder %v1812, %v1814
      %v1816 = vsel %vm1815, %v1811, inf
      %1817 = vmin.xlane.f32.xlu0 %v1816
      %v1818 = vpop.xlane.xlu0 %1817
      %v1819 = vcvt.f32.s32 %v1818
      %v1820 = vcvt.f32.s32 %v1814
      %v1821 = vshll.u32 %v1820, 16
      %v1822 = vadd.s32 %v1821, %v1819
      %v1823 = vand.u32 %v1759, 65535
      %v1824 = vshra.s32 %v1759, 16
      %v1825 = vcvt.s32.f32 %v1823
      %v1826 = vcvt.s32.f32 %v1824
      %1827 = vmin.xlane.f32.xlu0 %v1826
      %v1828 = vpop.xlane.xlu0 %1827
      %vm1829 = vcmp.eq.f32.partialorder %v1826, %v1828
      %v1830 = vsel %vm1829, %v1825, inf
      %1831 = vmin.xlane.f32.xlu0 %v1830
      %v1832 = vpop.xlane.xlu0 %1831
      %v1833 = vcvt.f32.s32 %v1832
      %v1834 = vcvt.f32.s32 %v1828
      %v1835 = vshll.u32 %v1834, 16
      %v1836 = vadd.s32 %v1835, %v1833
      %v1837 = vand.u32 %v1760, 65535
      %v1838 = vshra.s32 %v1760, 16
      %v1839 = vcvt.s32.f32 %v1837
      %v1840 = vcvt.s32.f32 %v1838
      %1841 = vmin.xlane.f32.xlu0 %v1840
      %v1842 = vpop.xlane.xlu0 %1841
      %vm1843 = vcmp.eq.f32.partialorder %v1840, %v1842
      %v1844 = vsel %vm1843, %v1839, inf
      %1845 = vmin.xlane.f32.xlu0 %v1844
      %v1846 = vpop.xlane.xlu0 %1845
      %v1847 = vcvt.f32.s32 %v1846
      %v1848 = vcvt.f32.s32 %v1842
      %v1849 = vshll.u32 %v1848, 16
      %v1850 = vadd.s32 %v1849, %v1847
      %v1851 = vand.u32 %v1761, 65535
      %v1852 = vshra.s32 %v1761, 16
      %v1853 = vcvt.s32.f32 %v1851
      %v1854 = vcvt.s32.f32 %v1852
      %1855 = vmin.xlane.f32.xlu0 %v1854
      %v1856 = vpop.xlane.xlu0 %1855
      %vm1857 = vcmp.eq.f32.partialorder %v1854, %v1856
      %v1858 = vsel %vm1857, %v1853, inf
      %1859 = vmin.xlane.f32.xlu0 %v1858
      %v1860 = vpop.xlane.xlu0 %1859
      %v1861 = vcvt.f32.s32 %v1860
      %v1862 = vcvt.f32.s32 %v1856
      %v1863 = vshll.u32 %v1862, 16
      %v1864 = vadd.s32 %v1863, %v1861
      %v1865 = vand.u32 %v1762, 65535
      %v1866 = vshra.s32 %v1762, 16
      %v1867 = vcvt.s32.f32 %v1865
      %v1868 = vcvt.s32.f32 %v1866
      %1869 = vmin.xlane.f32.xlu0 %v1868
      %v1870 = vpop.xlane.xlu0 %1869
      %vm1871 = vcmp.eq.f32.partialorder %v1868, %v1870
      %v1872 = vsel %vm1871, %v1867, inf
      %1873 = vmin.xlane.f32.xlu0 %v1872
      %v1874 = vpop.xlane.xlu0 %1873
      %v1875 = vcvt.f32.s32 %v1874
      %v1876 = vcvt.f32.s32 %v1870
      %v1877 = vshll.u32 %v1876, 16
      %v1878 = vadd.s32 %v1877, %v1875
      %v1879 = vand.u32 %v1763, 65535
      %v1880 = vshra.s32 %v1763, 16
      %v1881 = vcvt.s32.f32 %v1879
      %v1882 = vcvt.s32.f32 %v1880
      %1883 = vmin.xlane.f32.xlu0 %v1882
      %v1884 = vpop.xlane.xlu0 %1883
      %vm1885 = vcmp.eq.f32.partialorder %v1882, %v1884
      %v1886 = vsel %vm1885, %v1881, inf
      %1887 = vmin.xlane.f32.xlu0 %v1886
      %v1888 = vpop.xlane.xlu0 %1887
      %v1889 = vcvt.f32.s32 %v1888
      %v1890 = vcvt.f32.s32 %v1884
      %v1891 = vshll.u32 %v1890, 16
      %v1892 = vadd.s32 %v1891, %v1889
      %v1893 = vand.u32 %v1764, 65535
      %v1894 = vshra.s32 %v1764, 16
      %v1895 = vcvt.s32.f32 %v1893
      %v1896 = vcvt.s32.f32 %v1894
      %1897 = vmin.xlane.f32.xlu0 %v1896
      %v1898 = vpop.xlane.xlu0 %1897
      %vm1899 = vcmp.eq.f32.partialorder %v1896, %v1898
      %v1900 = vsel %vm1899, %v1895, inf
      %1901 = vmin.xlane.f32.xlu0 %v1900
      %v1902 = vpop.xlane.xlu0 %1901
      %v1903 = vcvt.f32.s32 %v1902
      %v1904 = vcvt.f32.s32 %v1898
      %v1905 = vshll.u32 %v1904, 16
      %v1906 = vadd.s32 %v1905, %v1903
      %v1907 = vand.u32 %v1765, 65535
      %v1908 = vshra.s32 %v1765, 16
      %v1909 = vcvt.s32.f32 %v1907
      %v1910 = vcvt.s32.f32 %v1908
      %1911 = vmin.xlane.f32.xlu0 %v1910
      %v1912 = vpop.xlane.xlu0 %1911
      %vm1913 = vcmp.eq.f32.partialorder %v1910, %v1912
      %v1914 = vsel %vm1913, %v1909, inf
      %1915 = vmin.xlane.f32.xlu0 %v1914
      %v1916 = vpop.xlane.xlu0 %1915
      %v1917 = vcvt.f32.s32 %v1916
      %v1918 = vcvt.f32.s32 %v1912
      %v1919 = vshll.u32 %v1918, 16
      %v1920 = vadd.s32 %v1919, %v1917
      %v1921 = vand.u32 %v1766, 65535
      %v1922 = vshra.s32 %v1766, 16
      %v1923 = vcvt.s32.f32 %v1921
      %v1924 = vcvt.s32.f32 %v1922
      %1925 = vmin.xlane.f32.xlu0 %v1924
      %v1926 = vpop.xlane.xlu0 %1925
      %vm1927 = vcmp.eq.f32.partialorder %v1924, %v1926
      %v1928 = vsel %vm1927, %v1923, inf
      %1929 = vmin.xlane.f32.xlu0 %v1928
      %v1930 = vpop.xlane.xlu0 %1929
      %v1931 = vcvt.f32.s32 %v1930
      %v1932 = vcvt.f32.s32 %v1926
      %v1933 = vshll.u32 %v1932, 16
      %v1934 = vadd.s32 %v1933, %v1931
      %vm1935 = vcmp.gt.f32.partialorder %v1720, %v1492
      %vm1936 = vcmp.gt.f32.partialorder %v1722, %v1494
      %vm1937 = vcmp.gt.f32.partialorder %v1724, %v1496
      %vm1938 = vcmp.gt.f32.partialorder %v1726, %v1498
      %vm1939 = vcmp.gt.f32.partialorder %v1728, %v1500
      %vm1940 = vcmp.gt.f32.partialorder %v1730, %v1502
      %vm1941 = vcmp.gt.f32.partialorder %v1732, %v1504
      %vm1942 = vcmp.gt.f32.partialorder %v1734, %v1506
      %vm1943 = vcmp.gt.f32.partialorder %v1736, %v1508
      %vm1944 = vcmp.gt.f32.partialorder %v1738, %v1510
      %vm1945 = vcmp.gt.f32.partialorder %v1740, %v1512
      %vm1946 = vcmp.gt.f32.partialorder %v1742, %v1514
      %v1947 = vsel %vm1935, 1, 0
      %v1948 = vsel %vm1936, 1, 0
      %v1949 = vsel %vm1937, 1, 0
      %v1950 = vsel %vm1938, 1, 0
      %v1951 = vsel %vm1939, 1, 0
      %v1952 = vsel %vm1940, 1, 0
      %v1953 = vsel %vm1941, 1, 0
      %v1954 = vsel %vm1942, 1, 0
      %v1955 = vsel %vm1943, 1, 0
      %v1956 = vsel %vm1944, 1, 0
      %v1957 = vsel %vm1945, 1, 0
      %v1958 = vsel %vm1946, 1, 0
      %v1959 = vsel %vm1935, %v1780, %v1552
      %v1960 = vsel %vm1936, %v1794, %v1566
      %v1961 = vsel %vm1937, %v1808, %v1580
      %v1962 = vsel %vm1938, %v1822, %v1594
      %v1963 = vsel %vm1939, %v1836, %v1608
      %v1964 = vsel %vm1940, %v1850, %v1622
      %v1965 = vsel %vm1941, %v1864, %v1636
      %v1966 = vsel %vm1942, %v1878, %v1650
      %v1967 = vsel %vm1943, %v1892, %v1664
      %v1968 = vsel %vm1944, %v1906, %v1678
      %v1969 = vsel %vm1945, %v1920, %v1692
      %v1970 = vsel %vm1946, %v1934, %v1706
      %v1971 = vsel %vm1935, %v1720, %v1492
      %v1972 = vsel %vm1936, %v1722, %v1494
      %v1973 = vsel %vm1937, %v1724, %v1496
      %v1974 = vsel %vm1938, %v1726, %v1498
      %v1975 = vsel %vm1939, %v1728, %v1500
      %v1976 = vsel %vm1940, %v1730, %v1502
      %v1977 = vsel %vm1941, %v1732, %v1504
      %v1978 = vsel %vm1942, %v1734, %v1506
      %v1979 = vsel %vm1943, %v1736, %v1508
      %v1980 = vsel %vm1944, %v1738, %v1510
      %v1981 = vsel %vm1945, %v1740, %v1512
      %v1982 = vsel %vm1946, %v1742, %v1514
      %v1983 = vsel %vm1478, %v1324, -1e+30
      %v1984 = vsel %vm1478, %v1328, -1e+30
      %v1985 = vsel %vm1478, %v1334, -1e+30
      %v1986 = vsel %vm1478, %v1338, -1e+30
      %v1987 = vsel %vm1478, %v1344, -1e+30
      %v1988 = vsel %vm1478, %v1348, -1e+30
      %v1989 = vsel %vm1478, %v1354, -1e+30
      %v1990 = vsel %vm1478, %v1358, -1e+30
      %v1991 = vsel %vm1478, %v1364, -1e+30
      %v1992 = vsel %vm1478, %v1368, -1e+30
      %v1993 = vsel %vm1478, %v1374, -1e+30
      %v1994 = vsel %vm1478, %v1378, -1e+30
      %1995 = vmax.xlane.f32.xlu0 %v1983
      %v1996 = vpop.xlane.xlu0 %1995
      %1997 = vmax.xlane.f32.xlu0 %v1984
      %v1998 = vpop.xlane.xlu0 %1997
      %1999 = vmax.xlane.f32.xlu0 %v1985
      %v2000 = vpop.xlane.xlu0 %1999
      %2001 = vmax.xlane.f32.xlu0 %v1986
      %v2002 = vpop.xlane.xlu0 %2001
      %2003 = vmax.xlane.f32.xlu0 %v1987
      %v2004 = vpop.xlane.xlu0 %2003
      %2005 = vmax.xlane.f32.xlu0 %v1988
      %v2006 = vpop.xlane.xlu0 %2005
      %2007 = vmax.xlane.f32.xlu0 %v1989
      %v2008 = vpop.xlane.xlu0 %2007
      %2009 = vmax.xlane.f32.xlu0 %v1990
      %v2010 = vpop.xlane.xlu0 %2009
      %2011 = vmax.xlane.f32.xlu0 %v1991
      %v2012 = vpop.xlane.xlu0 %2011
      %2013 = vmax.xlane.f32.xlu0 %v1992
      %v2014 = vpop.xlane.xlu0 %2013
      %2015 = vmax.xlane.f32.xlu0 %v1993
      %v2016 = vpop.xlane.xlu0 %2015
      %2017 = vmax.xlane.f32.xlu0 %v1994
      %v2018 = vpop.xlane.xlu0 %2017
      %vm2019 = vcmp.eq.f32.partialorder %v1983, %v1996
      %vm2020 = vcmp.eq.f32.partialorder %v1984, %v1998
      %vm2021 = vcmp.eq.f32.partialorder %v1985, %v2000
      %vm2022 = vcmp.eq.f32.partialorder %v1986, %v2002
      %vm2023 = vcmp.eq.f32.partialorder %v1987, %v2004
      %vm2024 = vcmp.eq.f32.partialorder %v1988, %v2006
      %vm2025 = vcmp.eq.f32.partialorder %v1989, %v2008
      %vm2026 = vcmp.eq.f32.partialorder %v1990, %v2010
      %vm2027 = vcmp.eq.f32.partialorder %v1991, %v2012
      %vm2028 = vcmp.eq.f32.partialorder %v1992, %v2014
      %vm2029 = vcmp.eq.f32.partialorder %v1993, %v2016
      %vm2030 = vcmp.eq.f32.partialorder %v1994, %v2018
      %v2031 = vsel %vm2019, %v1464, 135
      %v2032 = vsel %vm2020, %v1464, 135
      %v2033 = vsel %vm2021, %v1464, 135
      %v2034 = vsel %vm2022, %v1464, 135
      %v2035 = vsel %vm2023, %v1464, 135
      %v2036 = vsel %vm2024, %v1464, 135
      %v2037 = vsel %vm2025, %v1464, 135
      %v2038 = vsel %vm2026, %v1464, 135
      %v2039 = vsel %vm2027, %v1464, 135
      %v2040 = vsel %vm2028, %v1464, 135
      %v2041 = vsel %vm2029, %v1464, 135
      %v2042 = vsel %vm2030, %v1464, 135
      %v2043 = vand.u32 %v2031, 65535
      %v2044 = vshra.s32 %v2031, 16
      %v2045 = vcvt.s32.f32 %v2043
      %v2046 = vcvt.s32.f32 %v2044
      %2047 = vmin.xlane.f32.xlu0 %v2046
      %v2048 = vpop.xlane.xlu0 %2047
      %vm2049 = vcmp.eq.f32.partialorder %v2046, %v2048
      %v2050 = vsel %vm2049, %v2045, inf
      %2051 = vmin.xlane.f32.xlu0 %v2050
      %v2052 = vpop.xlane.xlu0 %2051
      %v2053 = vcvt.f32.s32 %v2052
      %v2054 = vcvt.f32.s32 %v2048
      %v2055 = vshll.u32 %v2054, 16
      %v2056 = vadd.s32 %v2055, %v2053
      %v2057 = vand.u32 %v2032, 65535
      %v2058 = vshra.s32 %v2032, 16
      %v2059 = vcvt.s32.f32 %v2057
      %v2060 = vcvt.s32.f32 %v2058
      %2061 = vmin.xlane.f32.xlu0 %v2060
      %v2062 = vpop.xlane.xlu0 %2061
      %vm2063 = vcmp.eq.f32.partialorder %v2060, %v2062
      %v2064 = vsel %vm2063, %v2059, inf
      %2065 = vmin.xlane.f32.xlu0 %v2064
      %v2066 = vpop.xlane.xlu0 %2065
      %v2067 = vcvt.f32.s32 %v2066
      %v2068 = vcvt.f32.s32 %v2062
      %v2069 = vshll.u32 %v2068, 16
      %v2070 = vadd.s32 %v2069, %v2067
      %v2071 = vand.u32 %v2033, 65535
      %v2072 = vshra.s32 %v2033, 16
      %v2073 = vcvt.s32.f32 %v2071
      %v2074 = vcvt.s32.f32 %v2072
      %2075 = vmin.xlane.f32.xlu0 %v2074
      %v2076 = vpop.xlane.xlu0 %2075
      %vm2077 = vcmp.eq.f32.partialorder %v2074, %v2076
      %v2078 = vsel %vm2077, %v2073, inf
      %2079 = vmin.xlane.f32.xlu0 %v2078
      %v2080 = vpop.xlane.xlu0 %2079
      %v2081 = vcvt.f32.s32 %v2080
      %v2082 = vcvt.f32.s32 %v2076
      %v2083 = vshll.u32 %v2082, 16
      %v2084 = vadd.s32 %v2083, %v2081
      %v2085 = vand.u32 %v2034, 65535
      %v2086 = vshra.s32 %v2034, 16
      %v2087 = vcvt.s32.f32 %v2085
      %v2088 = vcvt.s32.f32 %v2086
      %2089 = vmin.xlane.f32.xlu0 %v2088
      %v2090 = vpop.xlane.xlu0 %2089
      %vm2091 = vcmp.eq.f32.partialorder %v2088, %v2090
      %v2092 = vsel %vm2091, %v2087, inf
      %2093 = vmin.xlane.f32.xlu0 %v2092
      %v2094 = vpop.xlane.xlu0 %2093
      %v2095 = vcvt.f32.s32 %v2094
      %v2096 = vcvt.f32.s32 %v2090
      %v2097 = vshll.u32 %v2096, 16
      %v2098 = vadd.s32 %v2097, %v2095
      %v2099 = vand.u32 %v2035, 65535
      %v2100 = vshra.s32 %v2035, 16
      %v2101 = vcvt.s32.f32 %v2099
      %v2102 = vcvt.s32.f32 %v2100
      %2103 = vmin.xlane.f32.xlu0 %v2102
      %v2104 = vpop.xlane.xlu0 %2103
      %vm2105 = vcmp.eq.f32.partialorder %v2102, %v2104
      %v2106 = vsel %vm2105, %v2101, inf
      %2107 = vmin.xlane.f32.xlu0 %v2106
      %v2108 = vpop.xlane.xlu0 %2107
      %v2109 = vcvt.f32.s32 %v2108
      %v2110 = vcvt.f32.s32 %v2104
      %v2111 = vshll.u32 %v2110, 16
      %v2112 = vadd.s32 %v2111, %v2109
      %v2113 = vand.u32 %v2036, 65535
      %v2114 = vshra.s32 %v2036, 16
      %v2115 = vcvt.s32.f32 %v2113
      %v2116 = vcvt.s32.f32 %v2114
      %2117 = vmin.xlane.f32.xlu0 %v2116
      %v2118 = vpop.xlane.xlu0 %2117
      %vm2119 = vcmp.eq.f32.partialorder %v2116, %v2118
      %v2120 = vsel %vm2119, %v2115, inf
      %2121 = vmin.xlane.f32.xlu0 %v2120
      %v2122 = vpop.xlane.xlu0 %2121
      %v2123 = vcvt.f32.s32 %v2122
      %v2124 = vcvt.f32.s32 %v2118
      %v2125 = vshll.u32 %v2124, 16
      %v2126 = vadd.s32 %v2125, %v2123
      %v2127 = vand.u32 %v2037, 65535
      %v2128 = vshra.s32 %v2037, 16
      %v2129 = vcvt.s32.f32 %v2127
      %v2130 = vcvt.s32.f32 %v2128
      %2131 = vmin.xlane.f32.xlu0 %v2130
      %v2132 = vpop.xlane.xlu0 %2131
      %vm2133 = vcmp.eq.f32.partialorder %v2130, %v2132
      %v2134 = vsel %vm2133, %v2129, inf
      %2135 = vmin.xlane.f32.xlu0 %v2134
      %v2136 = vpop.xlane.xlu0 %2135
      %v2137 = vcvt.f32.s32 %v2136
      %v2138 = vcvt.f32.s32 %v2132
      %v2139 = vshll.u32 %v2138, 16
      %v2140 = vadd.s32 %v2139, %v2137
      %v2141 = vand.u32 %v2038, 65535
      %v2142 = vshra.s32 %v2038, 16
      %v2143 = vcvt.s32.f32 %v2141
      %v2144 = vcvt.s32.f32 %v2142
      %2145 = vmin.xlane.f32.xlu0 %v2144
      %v2146 = vpop.xlane.xlu0 %2145
      %vm2147 = vcmp.eq.f32.partialorder %v2144, %v2146
      %v2148 = vsel %vm2147, %v2143, inf
      %2149 = vmin.xlane.f32.xlu0 %v2148
      %v2150 = vpop.xlane.xlu0 %2149
      %v2151 = vcvt.f32.s32 %v2150
      %v2152 = vcvt.f32.s32 %v2146
      %v2153 = vshll.u32 %v2152, 16
      %v2154 = vadd.s32 %v2153, %v2151
      %v2155 = vand.u32 %v2039, 65535
      %v2156 = vshra.s32 %v2039, 16
      %v2157 = vcvt.s32.f32 %v2155
      %v2158 = vcvt.s32.f32 %v2156
      %2159 = vmin.xlane.f32.xlu0 %v2158
      %v2160 = vpop.xlane.xlu0 %2159
      %vm2161 = vcmp.eq.f32.partialorder %v2158, %v2160
      %v2162 = vsel %vm2161, %v2157, inf
      %2163 = vmin.xlane.f32.xlu0 %v2162
      %v2164 = vpop.xlane.xlu0 %2163
      %v2165 = vcvt.f32.s32 %v2164
      %v2166 = vcvt.f32.s32 %v2160
      %v2167 = vshll.u32 %v2166, 16
      %v2168 = vadd.s32 %v2167, %v2165
      %v2169 = vand.u32 %v2040, 65535
      %v2170 = vshra.s32 %v2040, 16
      %v2171 = vcvt.s32.f32 %v2169
      %v2172 = vcvt.s32.f32 %v2170
      %2173 = vmin.xlane.f32.xlu0 %v2172
      %v2174 = vpop.xlane.xlu0 %2173
      %vm2175 = vcmp.eq.f32.partialorder %v2172, %v2174
      %v2176 = vsel %vm2175, %v2171, inf
      %2177 = vmin.xlane.f32.xlu0 %v2176
      %v2178 = vpop.xlane.xlu0 %2177
      %v2179 = vcvt.f32.s32 %v2178
      %v2180 = vcvt.f32.s32 %v2174
      %v2181 = vshll.u32 %v2180, 16
      %v2182 = vadd.s32 %v2181, %v2179
      %v2183 = vand.u32 %v2041, 65535
      %v2184 = vshra.s32 %v2041, 16
      %v2185 = vcvt.s32.f32 %v2183
      %v2186 = vcvt.s32.f32 %v2184
      %2187 = vmin.xlane.f32.xlu0 %v2186
      %v2188 = vpop.xlane.xlu0 %2187
      %vm2189 = vcmp.eq.f32.partialorder %v2186, %v2188
      %v2190 = vsel %vm2189, %v2185, inf
      %2191 = vmin.xlane.f32.xlu0 %v2190
      %v2192 = vpop.xlane.xlu0 %2191
      %v2193 = vcvt.f32.s32 %v2192
      %v2194 = vcvt.f32.s32 %v2188
      %v2195 = vshll.u32 %v2194, 16
      %v2196 = vadd.s32 %v2195, %v2193
      %v2197 = vand.u32 %v2042, 65535
      %v2198 = vshra.s32 %v2042, 16
      %v2199 = vcvt.s32.f32 %v2197
      %v2200 = vcvt.s32.f32 %v2198
      %2201 = vmin.xlane.f32.xlu0 %v2200
      %v2202 = vpop.xlane.xlu0 %2201
      %vm2203 = vcmp.eq.f32.partialorder %v2200, %v2202
      %v2204 = vsel %vm2203, %v2199, inf
      %2205 = vmin.xlane.f32.xlu0 %v2204
      %v2206 = vpop.xlane.xlu0 %2205
      %v2207 = vcvt.f32.s32 %v2206
      %v2208 = vcvt.f32.s32 %v2202
      %v2209 = vshll.u32 %v2208, 16
      %v2210 = vadd.s32 %v2209, %v2207
      %vm2211 = vcmp.gt.f32.partialorder %v1996, %v1971
      %vm2212 = vcmp.gt.f32.partialorder %v1998, %v1972
      %vm2213 = vcmp.gt.f32.partialorder %v2000, %v1973
      %vm2214 = vcmp.gt.f32.partialorder %v2002, %v1974
      %vm2215 = vcmp.gt.f32.partialorder %v2004, %v1975
      %vm2216 = vcmp.gt.f32.partialorder %v2006, %v1976
      %vm2217 = vcmp.gt.f32.partialorder %v2008, %v1977
      %vm2218 = vcmp.gt.f32.partialorder %v2010, %v1978
      %vm2219 = vcmp.gt.f32.partialorder %v2012, %v1979
      %vm2220 = vcmp.gt.f32.partialorder %v2014, %v1980
      %vm2221 = vcmp.gt.f32.partialorder %v2016, %v1981
      %vm2222 = vcmp.gt.f32.partialorder %v2018, %v1982
      %v2223 = vsel %vm2211, 2, %v1947
      %v2224 = vsel %vm2212, 2, %v1948
      %v2225 = vsel %vm2213, 2, %v1949
      %v2226 = vsel %vm2214, 2, %v1950
      %v2227 = vsel %vm2215, 2, %v1951
      %v2228 = vsel %vm2216, 2, %v1952
      %v2229 = vsel %vm2217, 2, %v1953
      %v2230 = vsel %vm2218, 2, %v1954
      %v2231 = vsel %vm2219, 2, %v1955
      %v2232 = vsel %vm2220, 2, %v1956
      %v2233 = vsel %vm2221, 2, %v1957
      %v2234 = vsel %vm2222, 2, %v1958
      %v2235 = vsel %vm2211, %v2056, %v1959
      %v2236 = vsel %vm2212, %v2070, %v1960
      %v2237 = vsel %vm2213, %v2084, %v1961
      %v2238 = vsel %vm2214, %v2098, %v1962
      %v2239 = vsel %vm2215, %v2112, %v1963
      %v2240 = vsel %vm2216, %v2126, %v1964
      %v2241 = vsel %vm2217, %v2140, %v1965
      %v2242 = vsel %vm2218, %v2154, %v1966
      %v2243 = vsel %vm2219, %v2168, %v1967
      %v2244 = vsel %vm2220, %v2182, %v1968
      %v2245 = vsel %vm2221, %v2196, %v1969
      %v2246 = vsel %vm2222, %v2210, %v1970
      %v2247 = vsel %vm2211, %v1996, %v1971
      %v2248 = vsel %vm2212, %v1998, %v1972
      %v2249 = vsel %vm2213, %v2000, %v1973
      %v2250 = vsel %vm2214, %v2002, %v1974
      %v2251 = vsel %vm2215, %v2004, %v1975
      %v2252 = vsel %vm2216, %v2006, %v1976
      %v2253 = vsel %vm2217, %v2008, %v1977
      %v2254 = vsel %vm2218, %v2010, %v1978
      %v2255 = vsel %vm2219, %v2012, %v1979
      %v2256 = vsel %vm2220, %v2014, %v1980
      %v2257 = vsel %vm2221, %v2016, %v1981
      %v2258 = vsel %vm2222, %v2018, %v1982
      %v2259 = vsel %vm1478, %v1326, -1e+30
      %v2260 = vsel %vm1478, %v1330, -1e+30
      %v2261 = vsel %vm1478, %v1336, -1e+30
      %v2262 = vsel %vm1478, %v1340, -1e+30
      %v2263 = vsel %vm1478, %v1346, -1e+30
      %v2264 = vsel %vm1478, %v1350, -1e+30
      %v2265 = vsel %vm1478, %v1356, -1e+30
      %v2266 = vsel %vm1478, %v1360, -1e+30
      %v2267 = vsel %vm1478, %v1366, -1e+30
      %v2268 = vsel %vm1478, %v1370, -1e+30
      %v2269 = vsel %vm1478, %v1376, -1e+30
      %v2270 = vsel %vm1478, %v1380, -1e+30
      %2271 = vmax.xlane.f32.xlu0 %v2259
      %v2272 = vpop.xlane.xlu0 %2271
      %2273 = vmax.xlane.f32.xlu0 %v2260
      %v2274 = vpop.xlane.xlu0 %2273
      %2275 = vmax.xlane.f32.xlu0 %v2261
      %v2276 = vpop.xlane.xlu0 %2275
      %2277 = vmax.xlane.f32.xlu0 %v2262
      %v2278 = vpop.xlane.xlu0 %2277
      %2279 = vmax.xlane.f32.xlu0 %v2263
      %v2280 = vpop.xlane.xlu0 %2279
      %2281 = vmax.xlane.f32.xlu0 %v2264
      %v2282 = vpop.xlane.xlu0 %2281
      %2283 = vmax.xlane.f32.xlu0 %v2265
      %v2284 = vpop.xlane.xlu0 %2283
      %2285 = vmax.xlane.f32.xlu0 %v2266
      %v2286 = vpop.xlane.xlu0 %2285
      %2287 = vmax.xlane.f32.xlu0 %v2267
      %v2288 = vpop.xlane.xlu0 %2287
      %2289 = vmax.xlane.f32.xlu0 %v2268
      %v2290 = vpop.xlane.xlu0 %2289
      %2291 = vmax.xlane.f32.xlu0 %v2269
      %v2292 = vpop.xlane.xlu0 %2291
      %2293 = vmax.xlane.f32.xlu0 %v2270
      %v2294 = vpop.xlane.xlu0 %2293
      %vm2295 = vcmp.eq.f32.partialorder %v2259, %v2272
      %vm2296 = vcmp.eq.f32.partialorder %v2260, %v2274
      %vm2297 = vcmp.eq.f32.partialorder %v2261, %v2276
      %vm2298 = vcmp.eq.f32.partialorder %v2262, %v2278
      %vm2299 = vcmp.eq.f32.partialorder %v2263, %v2280
      %vm2300 = vcmp.eq.f32.partialorder %v2264, %v2282
      %vm2301 = vcmp.eq.f32.partialorder %v2265, %v2284
      %vm2302 = vcmp.eq.f32.partialorder %v2266, %v2286
      %vm2303 = vcmp.eq.f32.partialorder %v2267, %v2288
      %vm2304 = vcmp.eq.f32.partialorder %v2268, %v2290
      %vm2305 = vcmp.eq.f32.partialorder %v2269, %v2292
      %vm2306 = vcmp.eq.f32.partialorder %v2270, %v2294
      %v2307 = vsel %vm2295, %v1464, 135
      %v2308 = vsel %vm2296, %v1464, 135
      %v2309 = vsel %vm2297, %v1464, 135
      %v2310 = vsel %vm2298, %v1464, 135
      %v2311 = vsel %vm2299, %v1464, 135
      %v2312 = vsel %vm2300, %v1464, 135
      %v2313 = vsel %vm2301, %v1464, 135
      %v2314 = vsel %vm2302, %v1464, 135
      %v2315 = vsel %vm2303, %v1464, 135
      %v2316 = vsel %vm2304, %v1464, 135
      %v2317 = vsel %vm2305, %v1464, 135
      %v2318 = vsel %vm2306, %v1464, 135
      %v2319 = vand.u32 %v2307, 65535
      %v2320 = vshra.s32 %v2307, 16
      %v2321 = vcvt.s32.f32 %v2319
      %v2322 = vcvt.s32.f32 %v2320
      %2323 = vmin.xlane.f32.xlu0 %v2322
      %v2324 = vpop.xlane.xlu0 %2323
      %vm2325 = vcmp.eq.f32.partialorder %v2322, %v2324
      %v2326 = vsel %vm2325, %v2321, inf
      %2327 = vmin.xlane.f32.xlu0 %v2326
      %v2328 = vpop.xlane.xlu0 %2327
      %v2329 = vcvt.f32.s32 %v2328
      %v2330 = vcvt.f32.s32 %v2324
      %v2331 = vshll.u32 %v2330, 16
      %v2332 = vadd.s32 %v2331, %v2329
      %v2333 = vand.u32 %v2308, 65535
      %v2334 = vshra.s32 %v2308, 16
      %v2335 = vcvt.s32.f32 %v2333
      %v2336 = vcvt.s32.f32 %v2334
      %2337 = vmin.xlane.f32.xlu0 %v2336
      %v2338 = vpop.xlane.xlu0 %2337
      %vm2339 = vcmp.eq.f32.partialorder %v2336, %v2338
      %v2340 = vsel %vm2339, %v2335, inf
      %2341 = vmin.xlane.f32.xlu0 %v2340
      %v2342 = vpop.xlane.xlu0 %2341
      %v2343 = vcvt.f32.s32 %v2342
      %v2344 = vcvt.f32.s32 %v2338
      %v2345 = vshll.u32 %v2344, 16
      %v2346 = vadd.s32 %v2345, %v2343
      %v2347 = vand.u32 %v2309, 65535
      %v2348 = vshra.s32 %v2309, 16
      %v2349 = vcvt.s32.f32 %v2347
      %v2350 = vcvt.s32.f32 %v2348
      %2351 = vmin.xlane.f32.xlu0 %v2350
      %v2352 = vpop.xlane.xlu0 %2351
      %vm2353 = vcmp.eq.f32.partialorder %v2350, %v2352
      %v2354 = vsel %vm2353, %v2349, inf
      %2355 = vmin.xlane.f32.xlu0 %v2354
      %v2356 = vpop.xlane.xlu0 %2355
      %v2357 = vcvt.f32.s32 %v2356
      %v2358 = vcvt.f32.s32 %v2352
      %v2359 = vshll.u32 %v2358, 16
      %v2360 = vadd.s32 %v2359, %v2357
      %v2361 = vand.u32 %v2310, 65535
      %v2362 = vshra.s32 %v2310, 16
      %v2363 = vcvt.s32.f32 %v2361
      %v2364 = vcvt.s32.f32 %v2362
      %2365 = vmin.xlane.f32.xlu0 %v2364
      %v2366 = vpop.xlane.xlu0 %2365
      %vm2367 = vcmp.eq.f32.partialorder %v2364, %v2366
      %v2368 = vsel %vm2367, %v2363, inf
      %2369 = vmin.xlane.f32.xlu0 %v2368
      %v2370 = vpop.xlane.xlu0 %2369
      %v2371 = vcvt.f32.s32 %v2370
      %v2372 = vcvt.f32.s32 %v2366
      %v2373 = vshll.u32 %v2372, 16
      %v2374 = vadd.s32 %v2373, %v2371
      %v2375 = vand.u32 %v2311, 65535
      %v2376 = vshra.s32 %v2311, 16
      %v2377 = vcvt.s32.f32 %v2375
      %v2378 = vcvt.s32.f32 %v2376
      %2379 = vmin.xlane.f32.xlu0 %v2378
      %v2380 = vpop.xlane.xlu0 %2379
      %vm2381 = vcmp.eq.f32.partialorder %v2378, %v2380
      %v2382 = vsel %vm2381, %v2377, inf
      %2383 = vmin.xlane.f32.xlu0 %v2382
      %v2384 = vpop.xlane.xlu0 %2383
      %v2385 = vcvt.f32.s32 %v2384
      %v2386 = vcvt.f32.s32 %v2380
      %v2387 = vshll.u32 %v2386, 16
      %v2388 = vadd.s32 %v2387, %v2385
      %v2389 = vand.u32 %v2312, 65535
      %v2390 = vshra.s32 %v2312, 16
      %v2391 = vcvt.s32.f32 %v2389
      %v2392 = vcvt.s32.f32 %v2390
      %2393 = vmin.xlane.f32.xlu0 %v2392
      %v2394 = vpop.xlane.xlu0 %2393
      %vm2395 = vcmp.eq.f32.partialorder %v2392, %v2394
      %v2396 = vsel %vm2395, %v2391, inf
      %2397 = vmin.xlane.f32.xlu0 %v2396
      %v2398 = vpop.xlane.xlu0 %2397
      %v2399 = vcvt.f32.s32 %v2398
      %v2400 = vcvt.f32.s32 %v2394
      %v2401 = vshll.u32 %v2400, 16
      %v2402 = vadd.s32 %v2401, %v2399
      %v2403 = vand.u32 %v2313, 65535
      %v2404 = vshra.s32 %v2313, 16
      %v2405 = vcvt.s32.f32 %v2403
      %v2406 = vcvt.s32.f32 %v2404
      %2407 = vmin.xlane.f32.xlu0 %v2406
      %v2408 = vpop.xlane.xlu0 %2407
      %vm2409 = vcmp.eq.f32.partialorder %v2406, %v2408
      %v2410 = vsel %vm2409, %v2405, inf
      %2411 = vmin.xlane.f32.xlu0 %v2410
      %v2412 = vpop.xlane.xlu0 %2411
      %v2413 = vcvt.f32.s32 %v2412
      %v2414 = vcvt.f32.s32 %v2408
      %v2415 = vshll.u32 %v2414, 16
      %v2416 = vadd.s32 %v2415, %v2413
      %v2417 = vand.u32 %v2314, 65535
      %v2418 = vshra.s32 %v2314, 16
      %v2419 = vcvt.s32.f32 %v2417
      %v2420 = vcvt.s32.f32 %v2418
      %2421 = vmin.xlane.f32.xlu0 %v2420
      %v2422 = vpop.xlane.xlu0 %2421
      %vm2423 = vcmp.eq.f32.partialorder %v2420, %v2422
      %v2424 = vsel %vm2423, %v2419, inf
      %2425 = vmin.xlane.f32.xlu0 %v2424
      %v2426 = vpop.xlane.xlu0 %2425
      %v2427 = vcvt.f32.s32 %v2426
      %v2428 = vcvt.f32.s32 %v2422
      %v2429 = vshll.u32 %v2428, 16
      %v2430 = vadd.s32 %v2429, %v2427
      %v2431 = vand.u32 %v2315, 65535
      %v2432 = vshra.s32 %v2315, 16
      %v2433 = vcvt.s32.f32 %v2431
      %v2434 = vcvt.s32.f32 %v2432
      %2435 = vmin.xlane.f32.xlu0 %v2434
      %v2436 = vpop.xlane.xlu0 %2435
      %vm2437 = vcmp.eq.f32.partialorder %v2434, %v2436
      %v2438 = vsel %vm2437, %v2433, inf
      %2439 = vmin.xlane.f32.xlu0 %v2438
      %v2440 = vpop.xlane.xlu0 %2439
      %v2441 = vcvt.f32.s32 %v2440
      %v2442 = vcvt.f32.s32 %v2436
      %v2443 = vshll.u32 %v2442, 16
      %v2444 = vadd.s32 %v2443, %v2441
      %v2445 = vand.u32 %v2316, 65535
      %v2446 = vshra.s32 %v2316, 16
      %v2447 = vcvt.s32.f32 %v2445
      %v2448 = vcvt.s32.f32 %v2446
      %2449 = vmin.xlane.f32.xlu0 %v2448
      %v2450 = vpop.xlane.xlu0 %2449
      %vm2451 = vcmp.eq.f32.partialorder %v2448, %v2450
      %v2452 = vsel %vm2451, %v2447, inf
      %2453 = vmin.xlane.f32.xlu0 %v2452
      %v2454 = vpop.xlane.xlu0 %2453
      %v2455 = vcvt.f32.s32 %v2454
      %v2456 = vcvt.f32.s32 %v2450
      %v2457 = vshll.u32 %v2456, 16
      %v2458 = vadd.s32 %v2457, %v2455
      %v2459 = vand.u32 %v2317, 65535
      %v2460 = vshra.s32 %v2317, 16
      %v2461 = vcvt.s32.f32 %v2459
      %v2462 = vcvt.s32.f32 %v2460
      %2463 = vmin.xlane.f32.xlu0 %v2462
      %v2464 = vpop.xlane.xlu0 %2463
      %vm2465 = vcmp.eq.f32.partialorder %v2462, %v2464
      %v2466 = vsel %vm2465, %v2461, inf
      %2467 = vmin.xlane.f32.xlu0 %v2466
      %v2468 = vpop.xlane.xlu0 %2467
      %v2469 = vcvt.f32.s32 %v2468
      %v2470 = vcvt.f32.s32 %v2464
      %v2471 = vshll.u32 %v2470, 16
      %v2472 = vadd.s32 %v2471, %v2469
      %v2473 = vand.u32 %v2318, 65535
      %v2474 = vshra.s32 %v2318, 16
      %v2475 = vcvt.s32.f32 %v2473
      %v2476 = vcvt.s32.f32 %v2474
      %2477 = vmin.xlane.f32.xlu0 %v2476
      %v2478 = vpop.xlane.xlu0 %2477
      %vm2479 = vcmp.eq.f32.partialorder %v2476, %v2478
      %v2480 = vsel %vm2479, %v2475, inf
      %2481 = vmin.xlane.f32.xlu0 %v2480
      %v2482 = vpop.xlane.xlu0 %2481
      %v2483 = vcvt.f32.s32 %v2482
      %v2484 = vcvt.f32.s32 %v2478
      %v2485 = vshll.u32 %v2484, 16
      %v2486 = vadd.s32 %v2485, %v2483
      %vm2487 = vcmp.gt.f32.partialorder %v2272, %v2247
      %vm2488 = vcmp.gt.f32.partialorder %v2274, %v2248
      %vm2489 = vcmp.gt.f32.partialorder %v2276, %v2249
      %vm2490 = vcmp.gt.f32.partialorder %v2278, %v2250
      %vm2491 = vcmp.gt.f32.partialorder %v2280, %v2251
      %vm2492 = vcmp.gt.f32.partialorder %v2282, %v2252
      %vm2493 = vcmp.gt.f32.partialorder %v2284, %v2253
      %vm2494 = vcmp.gt.f32.partialorder %v2286, %v2254
      %vm2495 = vcmp.gt.f32.partialorder %v2288, %v2255
      %vm2496 = vcmp.gt.f32.partialorder %v2290, %v2256
      %vm2497 = vcmp.gt.f32.partialorder %v2292, %v2257
      %vm2498 = vcmp.gt.f32.partialorder %v2294, %v2258
      %v2499 = vsel %vm2487, 3, %v2223
      %v2500 = vsel %vm2488, 3, %v2224
      %v2501 = vsel %vm2489, 3, %v2225
      %v2502 = vsel %vm2490, 3, %v2226
      %v2503 = vsel %vm2491, 3, %v2227
      %v2504 = vsel %vm2492, 3, %v2228
      %v2505 = vsel %vm2493, 3, %v2229
      %v2506 = vsel %vm2494, 3, %v2230
      %v2507 = vsel %vm2495, 3, %v2231
      %v2508 = vsel %vm2496, 3, %v2232
      %v2509 = vsel %vm2497, 3, %v2233
      %v2510 = vsel %vm2498, 3, %v2234
      %v2511 = vsel %vm2487, %v2332, %v2235
      %v2512 = vsel %vm2488, %v2346, %v2236
      %v2513 = vsel %vm2489, %v2360, %v2237
      %v2514 = vsel %vm2490, %v2374, %v2238
      %v2515 = vsel %vm2491, %v2388, %v2239
      %v2516 = vsel %vm2492, %v2402, %v2240
      %v2517 = vsel %vm2493, %v2416, %v2241
      %v2518 = vsel %vm2494, %v2430, %v2242
      %v2519 = vsel %vm2495, %v2444, %v2243
      %v2520 = vsel %vm2496, %v2458, %v2244
      %v2521 = vsel %vm2497, %v2472, %v2245
      %v2522 = vsel %vm2498, %v2486, %v2246
      %v2523 = vsel %vm2487, %v2272, %v2247
      %v2524 = vsel %vm2488, %v2274, %v2248
      %v2525 = vsel %vm2489, %v2276, %v2249
      %v2526 = vsel %vm2490, %v2278, %v2250
      %v2527 = vsel %vm2491, %v2280, %v2251
      %v2528 = vsel %vm2492, %v2282, %v2252
      %v2529 = vsel %vm2493, %v2284, %v2253
      %v2530 = vsel %vm2494, %v2286, %v2254
      %v2531 = vsel %vm2495, %v2288, %v2255
      %v2532 = vsel %vm2496, %v2290, %v2256
      %v2533 = vsel %vm2497, %v2292, %v2257
      %v2534 = vsel %vm2498, %v2294, %v2258
      %v2535 = vsel %vm1478, %v1417, -1e+30
      %v2536 = vsel %vm1478, %v1420, -1e+30
      %v2537 = vsel %vm1478, %v1425, -1e+30
      %v2538 = vsel %vm1478, %v1428, -1e+30
      %v2539 = vsel %vm1478, %v1433, -1e+30
      %v2540 = vsel %vm1478, %v1436, -1e+30
      %v2541 = vsel %vm1478, %v1441, -1e+30
      %v2542 = vsel %vm1478, %v1444, -1e+30
      %v2543 = vsel %vm1478, %v1449, -1e+30
      %v2544 = vsel %vm1478, %v1452, -1e+30
      %v2545 = vsel %vm1478, %v1457, -1e+30
      %v2546 = vsel %vm1478, %v1460, -1e+30
      %2547 = vmax.xlane.f32.xlu0 %v2535
      %v2548 = vpop.xlane.xlu0 %2547
      %2549 = vmax.xlane.f32.xlu0 %v2536
      %v2550 = vpop.xlane.xlu0 %2549
      %2551 = vmax.xlane.f32.xlu0 %v2537
      %v2552 = vpop.xlane.xlu0 %2551
      %2553 = vmax.xlane.f32.xlu0 %v2538
      %v2554 = vpop.xlane.xlu0 %2553
      %2555 = vmax.xlane.f32.xlu0 %v2539
      %v2556 = vpop.xlane.xlu0 %2555
      %2557 = vmax.xlane.f32.xlu0 %v2540
      %v2558 = vpop.xlane.xlu0 %2557
      %2559 = vmax.xlane.f32.xlu0 %v2541
      %v2560 = vpop.xlane.xlu0 %2559
      %2561 = vmax.xlane.f32.xlu0 %v2542
      %v2562 = vpop.xlane.xlu0 %2561
      %2563 = vmax.xlane.f32.xlu0 %v2543
      %v2564 = vpop.xlane.xlu0 %2563
      %2565 = vmax.xlane.f32.xlu0 %v2544
      %v2566 = vpop.xlane.xlu0 %2565
      %2567 = vmax.xlane.f32.xlu0 %v2545
      %v2568 = vpop.xlane.xlu0 %2567
      %2569 = vmax.xlane.f32.xlu0 %v2546
      %v2570 = vpop.xlane.xlu0 %2569
      %vm2571 = vcmp.eq.f32.partialorder %v2535, %v2548
      %vm2572 = vcmp.eq.f32.partialorder %v2536, %v2550
      %vm2573 = vcmp.eq.f32.partialorder %v2537, %v2552
      %vm2574 = vcmp.eq.f32.partialorder %v2538, %v2554
      %vm2575 = vcmp.eq.f32.partialorder %v2539, %v2556
      %vm2576 = vcmp.eq.f32.partialorder %v2540, %v2558
      %vm2577 = vcmp.eq.f32.partialorder %v2541, %v2560
      %vm2578 = vcmp.eq.f32.partialorder %v2542, %v2562
      %vm2579 = vcmp.eq.f32.partialorder %v2543, %v2564
      %vm2580 = vcmp.eq.f32.partialorder %v2544, %v2566
      %vm2581 = vcmp.eq.f32.partialorder %v2545, %v2568
      %vm2582 = vcmp.eq.f32.partialorder %v2546, %v2570
      %v2583 = vsel %vm2571, %v1464, 135
      %v2584 = vsel %vm2572, %v1464, 135
      %v2585 = vsel %vm2573, %v1464, 135
      %v2586 = vsel %vm2574, %v1464, 135
      %v2587 = vsel %vm2575, %v1464, 135
      %v2588 = vsel %vm2576, %v1464, 135
      %v2589 = vsel %vm2577, %v1464, 135
      %v2590 = vsel %vm2578, %v1464, 135
      %v2591 = vsel %vm2579, %v1464, 135
      %v2592 = vsel %vm2580, %v1464, 135
      %v2593 = vsel %vm2581, %v1464, 135
      %v2594 = vsel %vm2582, %v1464, 135
      %v2595 = vand.u32 %v2583, 65535
      %v2596 = vshra.s32 %v2583, 16
      %v2597 = vcvt.s32.f32 %v2595
      %v2598 = vcvt.s32.f32 %v2596
      %2599 = vmin.xlane.f32.xlu0 %v2598
      %v2600 = vpop.xlane.xlu0 %2599
      %vm2601 = vcmp.eq.f32.partialorder %v2598, %v2600
      %v2602 = vsel %vm2601, %v2597, inf
      %2603 = vmin.xlane.f32.xlu0 %v2602
      %v2604 = vpop.xlane.xlu0 %2603
      %v2605 = vcvt.f32.s32 %v2604
      %v2606 = vcvt.f32.s32 %v2600
      %v2607 = vshll.u32 %v2606, 16
      %v2608 = vadd.s32 %v2607, %v2605
      %v2609 = vand.u32 %v2584, 65535
      %v2610 = vshra.s32 %v2584, 16
      %v2611 = vcvt.s32.f32 %v2609
      %v2612 = vcvt.s32.f32 %v2610
      %2613 = vmin.xlane.f32.xlu0 %v2612
      %v2614 = vpop.xlane.xlu0 %2613
      %vm2615 = vcmp.eq.f32.partialorder %v2612, %v2614
      %v2616 = vsel %vm2615, %v2611, inf
      %2617 = vmin.xlane.f32.xlu0 %v2616
      %v2618 = vpop.xlane.xlu0 %2617
      %v2619 = vcvt.f32.s32 %v2618
      %v2620 = vcvt.f32.s32 %v2614
      %v2621 = vshll.u32 %v2620, 16
      %v2622 = vadd.s32 %v2621, %v2619
      %v2623 = vand.u32 %v2585, 65535
      %v2624 = vshra.s32 %v2585, 16
      %v2625 = vcvt.s32.f32 %v2623
      %v2626 = vcvt.s32.f32 %v2624
      %2627 = vmin.xlane.f32.xlu0 %v2626
      %v2628 = vpop.xlane.xlu0 %2627
      %vm2629 = vcmp.eq.f32.partialorder %v2626, %v2628
      %v2630 = vsel %vm2629, %v2625, inf
      %2631 = vmin.xlane.f32.xlu0 %v2630
      %v2632 = vpop.xlane.xlu0 %2631
      %v2633 = vcvt.f32.s32 %v2632
      %v2634 = vcvt.f32.s32 %v2628
      %v2635 = vshll.u32 %v2634, 16
      %v2636 = vadd.s32 %v2635, %v2633
      %v2637 = vand.u32 %v2586, 65535
      %v2638 = vshra.s32 %v2586, 16
      %v2639 = vcvt.s32.f32 %v2637
      %v2640 = vcvt.s32.f32 %v2638
      %2641 = vmin.xlane.f32.xlu0 %v2640
      %v2642 = vpop.xlane.xlu0 %2641
      %vm2643 = vcmp.eq.f32.partialorder %v2640, %v2642
      %v2644 = vsel %vm2643, %v2639, inf
      %2645 = vmin.xlane.f32.xlu0 %v2644
      %v2646 = vpop.xlane.xlu0 %2645
      %v2647 = vcvt.f32.s32 %v2646
      %v2648 = vcvt.f32.s32 %v2642
      %v2649 = vshll.u32 %v2648, 16
      %v2650 = vadd.s32 %v2649, %v2647
      %v2651 = vand.u32 %v2587, 65535
      %v2652 = vshra.s32 %v2587, 16
      %v2653 = vcvt.s32.f32 %v2651
      %v2654 = vcvt.s32.f32 %v2652
      %2655 = vmin.xlane.f32.xlu0 %v2654
      %v2656 = vpop.xlane.xlu0 %2655
      %vm2657 = vcmp.eq.f32.partialorder %v2654, %v2656
      %v2658 = vsel %vm2657, %v2653, inf
      %2659 = vmin.xlane.f32.xlu0 %v2658
      %v2660 = vpop.xlane.xlu0 %2659
      %v2661 = vcvt.f32.s32 %v2660
      %v2662 = vcvt.f32.s32 %v2656
      %v2663 = vshll.u32 %v2662, 16
      %v2664 = vadd.s32 %v2663, %v2661
      %v2665 = vand.u32 %v2588, 65535
      %v2666 = vshra.s32 %v2588, 16
      %v2667 = vcvt.s32.f32 %v2665
      %v2668 = vcvt.s32.f32 %v2666
      %2669 = vmin.xlane.f32.xlu0 %v2668
      %v2670 = vpop.xlane.xlu0 %2669
      %vm2671 = vcmp.eq.f32.partialorder %v2668, %v2670
      %v2672 = vsel %vm2671, %v2667, inf
      %2673 = vmin.xlane.f32.xlu0 %v2672
      %v2674 = vpop.xlane.xlu0 %2673
      %v2675 = vcvt.f32.s32 %v2674
      %v2676 = vcvt.f32.s32 %v2670
      %v2677 = vshll.u32 %v2676, 16
      %v2678 = vadd.s32 %v2677, %v2675
      %v2679 = vand.u32 %v2589, 65535
      %v2680 = vshra.s32 %v2589, 16
      %v2681 = vcvt.s32.f32 %v2679
      %v2682 = vcvt.s32.f32 %v2680
      %2683 = vmin.xlane.f32.xlu0 %v2682
      %v2684 = vpop.xlane.xlu0 %2683
      %vm2685 = vcmp.eq.f32.partialorder %v2682, %v2684
      %v2686 = vsel %vm2685, %v2681, inf
      %2687 = vmin.xlane.f32.xlu0 %v2686
      %v2688 = vpop.xlane.xlu0 %2687
      %v2689 = vcvt.f32.s32 %v2688
      %v2690 = vcvt.f32.s32 %v2684
      %v2691 = vshll.u32 %v2690, 16
      %v2692 = vadd.s32 %v2691, %v2689
      %v2693 = vand.u32 %v2590, 65535
      %v2694 = vshra.s32 %v2590, 16
      %v2695 = vcvt.s32.f32 %v2693
      %v2696 = vcvt.s32.f32 %v2694
      %2697 = vmin.xlane.f32.xlu0 %v2696
      %v2698 = vpop.xlane.xlu0 %2697
      %vm2699 = vcmp.eq.f32.partialorder %v2696, %v2698
      %v2700 = vsel %vm2699, %v2695, inf
      %2701 = vmin.xlane.f32.xlu0 %v2700
      %v2702 = vpop.xlane.xlu0 %2701
      %v2703 = vcvt.f32.s32 %v2702
      %v2704 = vcvt.f32.s32 %v2698
      %v2705 = vshll.u32 %v2704, 16
      %v2706 = vadd.s32 %v2705, %v2703
      %v2707 = vand.u32 %v2591, 65535
      %v2708 = vshra.s32 %v2591, 16
      %v2709 = vcvt.s32.f32 %v2707
      %v2710 = vcvt.s32.f32 %v2708
      %2711 = vmin.xlane.f32.xlu0 %v2710
      %v2712 = vpop.xlane.xlu0 %2711
      %vm2713 = vcmp.eq.f32.partialorder %v2710, %v2712
      %v2714 = vsel %vm2713, %v2709, inf
      %2715 = vmin.xlane.f32.xlu0 %v2714
      %v2716 = vpop.xlane.xlu0 %2715
      %v2717 = vcvt.f32.s32 %v2716
      %v2718 = vcvt.f32.s32 %v2712
      %v2719 = vshll.u32 %v2718, 16
      %v2720 = vadd.s32 %v2719, %v2717
      %v2721 = vand.u32 %v2592, 65535
      %v2722 = vshra.s32 %v2592, 16
      %v2723 = vcvt.s32.f32 %v2721
      %v2724 = vcvt.s32.f32 %v2722
      %2725 = vmin.xlane.f32.xlu0 %v2724
      %v2726 = vpop.xlane.xlu0 %2725
      %vm2727 = vcmp.eq.f32.partialorder %v2724, %v2726
      %v2728 = vsel %vm2727, %v2723, inf
      %2729 = vmin.xlane.f32.xlu0 %v2728
      %v2730 = vpop.xlane.xlu0 %2729
      %v2731 = vcvt.f32.s32 %v2730
      %v2732 = vcvt.f32.s32 %v2726
      %v2733 = vshll.u32 %v2732, 16
      %v2734 = vadd.s32 %v2733, %v2731
      %v2735 = vand.u32 %v2593, 65535
      %v2736 = vshra.s32 %v2593, 16
      %v2737 = vcvt.s32.f32 %v2735
      %v2738 = vcvt.s32.f32 %v2736
      %2739 = vmin.xlane.f32.xlu0 %v2738
      %v2740 = vpop.xlane.xlu0 %2739
      %vm2741 = vcmp.eq.f32.partialorder %v2738, %v2740
      %v2742 = vsel %vm2741, %v2737, inf
      %2743 = vmin.xlane.f32.xlu0 %v2742
      %v2744 = vpop.xlane.xlu0 %2743
      %v2745 = vcvt.f32.s32 %v2744
      %v2746 = vcvt.f32.s32 %v2740
      %v2747 = vshll.u32 %v2746, 16
      %v2748 = vadd.s32 %v2747, %v2745
      %v2749 = vand.u32 %v2594, 65535
      %v2750 = vshra.s32 %v2594, 16
      %v2751 = vcvt.s32.f32 %v2749
      %v2752 = vcvt.s32.f32 %v2750
      %2753 = vmin.xlane.f32.xlu0 %v2752
      %v2754 = vpop.xlane.xlu0 %2753
      %vm2755 = vcmp.eq.f32.partialorder %v2752, %v2754
      %v2756 = vsel %vm2755, %v2751, inf
      %2757 = vmin.xlane.f32.xlu0 %v2756
      %v2758 = vpop.xlane.xlu0 %2757
      %v2759 = vcvt.f32.s32 %v2758
      %v2760 = vcvt.f32.s32 %v2754
      %v2761 = vshll.u32 %v2760, 16
      %v2762 = vadd.s32 %v2761, %v2759
      %vm2763 = vcmp.gt.f32.partialorder %v2548, %v2523
      %vm2764 = vcmp.gt.f32.partialorder %v2550, %v2524
      %vm2765 = vcmp.gt.f32.partialorder %v2552, %v2525
      %vm2766 = vcmp.gt.f32.partialorder %v2554, %v2526
      %vm2767 = vcmp.gt.f32.partialorder %v2556, %v2527
      %vm2768 = vcmp.gt.f32.partialorder %v2558, %v2528
      %vm2769 = vcmp.gt.f32.partialorder %v2560, %v2529
      %vm2770 = vcmp.gt.f32.partialorder %v2562, %v2530
      %vm2771 = vcmp.gt.f32.partialorder %v2564, %v2531
      %vm2772 = vcmp.gt.f32.partialorder %v2566, %v2532
      %vm2773 = vcmp.gt.f32.partialorder %v2568, %v2533
      %vm2774 = vcmp.gt.f32.partialorder %v2570, %v2534
      %v2775 = vsel %vm2763, 4, %v2499
      %v2776 = vsel %vm2764, 4, %v2500
      %v2777 = vsel %vm2765, 4, %v2501
      %v2778 = vsel %vm2766, 4, %v2502
      %v2779 = vsel %vm2767, 4, %v2503
      %v2780 = vsel %vm2768, 4, %v2504
      %v2781 = vsel %vm2769, 4, %v2505
      %v2782 = vsel %vm2770, 4, %v2506
      %v2783 = vsel %vm2771, 4, %v2507
      %v2784 = vsel %vm2772, 4, %v2508
      %v2785 = vsel %vm2773, 4, %v2509
      %v2786 = vsel %vm2774, 4, %v2510
      %v2787 = vsel %vm2763, %v2608, %v2511
      %v2788 = vsel %vm2764, %v2622, %v2512
      %v2789 = vsel %vm2765, %v2636, %v2513
      %v2790 = vsel %vm2766, %v2650, %v2514
      %v2791 = vsel %vm2767, %v2664, %v2515
      %v2792 = vsel %vm2768, %v2678, %v2516
      %v2793 = vsel %vm2769, %v2692, %v2517
      %v2794 = vsel %vm2770, %v2706, %v2518
      %v2795 = vsel %vm2771, %v2720, %v2519
      %v2796 = vsel %vm2772, %v2734, %v2520
      %v2797 = vsel %vm2773, %v2748, %v2521
      %v2798 = vsel %vm2774, %v2762, %v2522
      %v2799 = vsel %vm1472, 1, 0
      %v2800 = vsel %vm1473, 1, 0
      %v2801 = vsel %vm1474, 1, 0
      %v2802 = vsel %vm1475, 1, 0
      %vm2803 = vcmp.eq.s32.totalorder %v2799, 1
      %vm2804 = vcmp.eq.s32.totalorder %v2800, 1
      %vm2805 = vcmp.eq.s32.totalorder %v2801, 1
      %vm2806 = vcmp.eq.s32.totalorder %v2802, 1
      %v2807 = vsel %vm2803, %v1231, -1e+30
      %v2808 = vsel %vm2804, %v1235, -1e+30
      %v2809 = vsel %vm2805, %v1241, -1e+30
      %v2810 = vsel %vm2806, %v1245, -1e+30
      %v2811 = vsel %vm2803, %v1251, -1e+30
      %v2812 = vsel %vm2804, %v1255, -1e+30
      %v2813 = vsel %vm2805, %v1261, -1e+30
      %v2814 = vsel %vm2806, %v1265, -1e+30
      %v2815 = vsel %vm2803, %v1271, -1e+30
      %v2816 = vsel %vm2804, %v1275, -1e+30
      %v2817 = vsel %vm2805, %v1281, -1e+30
      %v2818 = vsel %vm2806, %v1285, -1e+30
      %v2819 = vmax.f32 %v2807, %v2809
      %v2820 = vmax.f32 %v2808, %v2810
      %v2821 = vmax.f32 %v2819, %v2820
      %v2822 = vrot.slane %v2821, 4
      %v2823 = vmax.f32 %v2821, %v2822
      %v2824 = vrot.slane %v2823, 2
      %v2825 = vmax.f32 %v2823, %v2824
      %v2826 = vrot.slane %v2825, 1
      %v2827 = vmax.f32 %v2825, %v2826
      %v2828 = vmax.f32 %v2811, %v2813
      %v2829 = vmax.f32 %v2812, %v2814
      %v2830 = vmax.f32 %v2828, %v2829
      %v2831 = vrot.slane %v2830, 4
      %v2832 = vmax.f32 %v2830, %v2831
      %v2833 = vrot.slane %v2832, 2
      %v2834 = vmax.f32 %v2832, %v2833
      %v2835 = vrot.slane %v2834, 1
      %v2836 = vmax.f32 %v2834, %v2835
      %v2837 = vmax.f32 %v2815, %v2817
      %v2838 = vmax.f32 %v2816, %v2818
      %v2839 = vmax.f32 %v2837, %v2838
      %v2840 = vrot.slane %v2839, 4
      %v2841 = vmax.f32 %v2839, %v2840
      %v2842 = vrot.slane %v2841, 2
      %v2843 = vmax.f32 %v2841, %v2842
      %v2844 = vrot.slane %v2843, 1
      %v2845 = vmax.f32 %v2843, %v2844
      %vm2846 = vcmp.eq.f32.partialorder %v2807, %v2827
      %vm2847 = vcmp.eq.f32.partialorder %v2808, %v2827
      %vm2848 = vcmp.eq.f32.partialorder %v2809, %v2827
      %vm2849 = vcmp.eq.f32.partialorder %v2810, %v2827
      %vm2850 = vcmp.eq.f32.partialorder %v2811, %v2836
      %vm2851 = vcmp.eq.f32.partialorder %v2812, %v2836
      %vm2852 = vcmp.eq.f32.partialorder %v2813, %v2836
      %vm2853 = vcmp.eq.f32.partialorder %v2814, %v2836
      %vm2854 = vcmp.eq.f32.partialorder %v2815, %v2845
      %vm2855 = vcmp.eq.f32.partialorder %v2816, %v2845
      %vm2856 = vcmp.eq.f32.partialorder %v2817, %v2845
      %vm2857 = vcmp.eq.f32.partialorder %v2818, %v2845
      %v2858 = vsel %vm2846, %v1466, 39
      %v2859 = vsel %vm2847, %v1467, 39
      %v2860 = vsel %vm2848, %v1468, 39
      %v2861 = vsel %vm2849, %v1469, 39
      %v2862 = vsel %vm2850, %v1466, 39
      %v2863 = vsel %vm2851, %v1467, 39
      %v2864 = vsel %vm2852, %v1468, 39
      %v2865 = vsel %vm2853, %v1469, 39
      %v2866 = vsel %vm2854, %v1466, 39
      %v2867 = vsel %vm2855, %v1467, 39
      %v2868 = vsel %vm2856, %v1468, 39
      %v2869 = vsel %vm2857, %v1469, 39
      %vm2870 = vcmp.lt.s32.totalorder %v2858, %v2860
      %v2871 = vsel %vm2870, %v2858, %v2860
      %vm2872 = vcmp.lt.s32.totalorder %v2859, %v2861
      %v2873 = vsel %vm2872, %v2859, %v2861
      %vm2874 = vcmp.lt.s32.totalorder %v2871, %v2873
      %v2875 = vsel %vm2874, %v2871, %v2873
      %v2876 = vrot.slane %v2875, 4
      %vm2877 = vcmp.lt.s32.totalorder %v2875, %v2876
      %v2878 = vsel %vm2877, %v2875, %v2876
      %v2879 = vrot.slane %v2878, 2
      %vm2880 = vcmp.lt.s32.totalorder %v2878, %v2879
      %v2881 = vsel %vm2880, %v2878, %v2879
      %v2882 = vrot.slane %v2881, 1
      %vm2883 = vcmp.lt.s32.totalorder %v2881, %v2882
      %v2884 = vsel %vm2883, %v2881, %v2882
      %vm2885 = vcmp.lt.s32.totalorder %v2862, %v2864
      %v2886 = vsel %vm2885, %v2862, %v2864
      %vm2887 = vcmp.lt.s32.totalorder %v2863, %v2865
      %v2888 = vsel %vm2887, %v2863, %v2865
      %vm2889 = vcmp.lt.s32.totalorder %v2886, %v2888
      %v2890 = vsel %vm2889, %v2886, %v2888
      %v2891 = vrot.slane %v2890, 4
      %vm2892 = vcmp.lt.s32.totalorder %v2890, %v2891
      %v2893 = vsel %vm2892, %v2890, %v2891
      %v2894 = vrot.slane %v2893, 2
      %vm2895 = vcmp.lt.s32.totalorder %v2893, %v2894
      %v2896 = vsel %vm2895, %v2893, %v2894
      %v2897 = vrot.slane %v2896, 1
      %vm2898 = vcmp.lt.s32.totalorder %v2896, %v2897
      %v2899 = vsel %vm2898, %v2896, %v2897
      %vm2900 = vcmp.lt.s32.totalorder %v2866, %v2868
      %v2901 = vsel %vm2900, %v2866, %v2868
      %vm2902 = vcmp.lt.s32.totalorder %v2867, %v2869
      %v2903 = vsel %vm2902, %v2867, %v2869
      %vm2904 = vcmp.lt.s32.totalorder %v2901, %v2903
      %v2905 = vsel %vm2904, %v2901, %v2903
      %v2906 = vrot.slane %v2905, 4
      %vm2907 = vcmp.lt.s32.totalorder %v2905, %v2906
      %v2908 = vsel %vm2907, %v2905, %v2906
      %v2909 = vrot.slane %v2908, 2
      %vm2910 = vcmp.lt.s32.totalorder %v2908, %v2909
      %v2911 = vsel %vm2910, %v2908, %v2909
      %v2912 = vrot.slane %v2911, 1
      %vm2913 = vcmp.lt.s32.totalorder %v2911, %v2912
      %v2914 = vsel %vm2913, %v2911, %v2912
      %vm2915 = vcmp.eq.s32.totalorder %v1464, %v2787
      %vm2916 = vcmp.eq.s32.totalorder %v1464, %v2788
      %vm2917 = vcmp.eq.s32.totalorder %v1464, %v2789
      %vm2918 = vcmp.eq.s32.totalorder %v1464, %v2790
      %vm2919 = vcmp.eq.s32.totalorder %v1464, %v2791
      %vm2920 = vcmp.eq.s32.totalorder %v1464, %v2792
      %vm2921 = vcmp.eq.s32.totalorder %v1464, %v2793
      %vm2922 = vcmp.eq.s32.totalorder %v1464, %v2794
      %vm2923 = vcmp.eq.s32.totalorder %v1464, %v2795
      %vm2924 = vcmp.eq.s32.totalorder %v1464, %v2796
      %vm2925 = vcmp.eq.s32.totalorder %v1464, %v2797
      %vm2926 = vcmp.eq.s32.totalorder %v1464, %v2798
      %vm2927 = vcmp.eq.s32.totalorder %v2775, 0
      %vm2928 = vcmp.eq.s32.totalorder %v2776, 0
      %vm2929 = vcmp.eq.s32.totalorder %v2777, 0
      %vm2930 = vcmp.eq.s32.totalorder %v2778, 0
      %vm2931 = vcmp.eq.s32.totalorder %v2779, 0
      %vm2932 = vcmp.eq.s32.totalorder %v2780, 0
      %vm2933 = vcmp.eq.s32.totalorder %v2781, 0
      %vm2934 = vcmp.eq.s32.totalorder %v2782, 0
      %vm2935 = vcmp.eq.s32.totalorder %v2783, 0
      %vm2936 = vcmp.eq.s32.totalorder %v2784, 0
      %vm2937 = vcmp.eq.s32.totalorder %v2785, 0
      %vm2938 = vcmp.eq.s32.totalorder %v2786, 0
      %v2939 = vsel %vm2927, 1, 0
      %v2940 = vsel %vm2928, 1, 0
      %v2941 = vsel %vm2929, 1, 0
      %v2942 = vsel %vm2930, 1, 0
      %v2943 = vsel %vm2931, 1, 0
      %v2944 = vsel %vm2932, 1, 0
      %v2945 = vsel %vm2933, 1, 0
      %v2946 = vsel %vm2934, 1, 0
      %v2947 = vsel %vm2935, 1, 0
      %v2948 = vsel %vm2936, 1, 0
      %v2949 = vsel %vm2937, 1, 0
      %v2950 = vsel %vm2938, 1, 0
      %vm2951 = vcmp.eq.s32.totalorder %v2939, 1
      %vm2952 = vcmp.eq.s32.totalorder %v2940, 1
      %vm2953 = vcmp.eq.s32.totalorder %v2941, 1
      %vm2954 = vcmp.eq.s32.totalorder %v2942, 1
      %vm2955 = vcmp.eq.s32.totalorder %v2943, 1
      %vm2956 = vcmp.eq.s32.totalorder %v2944, 1
      %vm2957 = vcmp.eq.s32.totalorder %v2945, 1
      %vm2958 = vcmp.eq.s32.totalorder %v2946, 1
      %vm2959 = vcmp.eq.s32.totalorder %v2947, 1
      %vm2960 = vcmp.eq.s32.totalorder %v2948, 1
      %vm2961 = vcmp.eq.s32.totalorder %v2949, 1
      %vm2962 = vcmp.eq.s32.totalorder %v2950, 1
      %vm2963 = vmand %vm2915, %vm2951
      %vm2964 = vmand %vm2916, %vm2952
      %vm2965 = vmand %vm2917, %vm2953
      %vm2966 = vmand %vm2918, %vm2954
      %vm2967 = vmand %vm2919, %vm2955
      %vm2968 = vmand %vm2920, %vm2956
      %vm2969 = vmand %vm2921, %vm2957
      %vm2970 = vmand %vm2922, %vm2958
      %vm2971 = vmand %vm2923, %vm2959
      %vm2972 = vmand %vm2924, %vm2960
      %vm2973 = vmand %vm2925, %vm2961
      %vm2974 = vmand %vm2926, %vm2962
      %vm2975 = vcmp.eq.s32.totalorder %v2884, %v1466
      %vm2976 = vcmp.eq.s32.totalorder %v2884, %v1467
      %vm2977 = vcmp.eq.s32.totalorder %v2884, %v1468
      %vm2978 = vcmp.eq.s32.totalorder %v2884, %v1469
      %vm2979 = vcmp.eq.s32.totalorder %v2899, %v1466
      %vm2980 = vcmp.eq.s32.totalorder %v2899, %v1467
      %vm2981 = vcmp.eq.s32.totalorder %v2899, %v1468
      %vm2982 = vcmp.eq.s32.totalorder %v2899, %v1469
      %vm2983 = vcmp.eq.s32.totalorder %v2914, %v1466
      %vm2984 = vcmp.eq.s32.totalorder %v2914, %v1467
      %vm2985 = vcmp.eq.s32.totalorder %v2914, %v1468
      %vm2986 = vcmp.eq.s32.totalorder %v2914, %v1469
      %vm2987 = vmand %vm2963, %vm2975
      %vm2988 = vmand %vm2964, %vm2976
      %vm2989 = vmand %vm2965, %vm2977
      %vm2990 = vmand %vm2966, %vm2978
      %vm2991 = vmand %vm2967, %vm2979
      %vm2992 = vmand %vm2968, %vm2980
      %vm2993 = vmand %vm2969, %vm2981
      %vm2994 = vmand %vm2970, %vm2982
      %vm2995 = vmand %vm2971, %vm2983
      %vm2996 = vmand %vm2972, %vm2984
      %vm2997 = vmand %vm2973, %vm2985
      %vm2998 = vmand %vm2974, %vm2986
      %v2999 = vsel %vm2987, 1, 0
      %v3000 = vsel %vm2988, 1, 0
      %v3001 = vsel %vm2989, 1, 0
      %v3002 = vsel %vm2990, 1, 0
      %v3003 = vsel %vm2991, 1, 0
      %v3004 = vsel %vm2992, 1, 0
      %v3005 = vsel %vm2993, 1, 0
      %v3006 = vsel %vm2994, 1, 0
      %v3007 = vsel %vm2995, 1, 0
      %v3008 = vsel %vm2996, 1, 0
      %v3009 = vsel %vm2997, 1, 0
      %v3010 = vsel %vm2998, 1, 0
      %v3011 = vcvt.s32.f32 %v2999
      %v3012 = vcvt.s32.f32 %v3000
      %v3013 = vcvt.s32.f32 %v3001
      %v3014 = vcvt.s32.f32 %v3002
      %v3015 = vcvt.s32.f32 %v3003
      %v3016 = vcvt.s32.f32 %v3004
      %v3017 = vcvt.s32.f32 %v3005
      %v3018 = vcvt.s32.f32 %v3006
      %v3019 = vcvt.s32.f32 %v3007
      %v3020 = vcvt.s32.f32 %v3008
      %v3021 = vcvt.s32.f32 %v3009
      %v3022 = vcvt.s32.f32 %v3010
      %3023 = vadd.xlane.f32.xlu0 %v3011
      %v3024 = vpop.xlane.xlu0 %3023
      %3025 = vadd.xlane.f32.xlu0 %v3012
      %v3026 = vpop.xlane.xlu0 %3025
      %3027 = vadd.xlane.f32.xlu0 %v3013
      %v3028 = vpop.xlane.xlu0 %3027
      %3029 = vadd.xlane.f32.xlu0 %v3014
      %v3030 = vpop.xlane.xlu0 %3029
      %3031 = vadd.xlane.f32.xlu0 %v3015
      %v3032 = vpop.xlane.xlu0 %3031
      %3033 = vadd.xlane.f32.xlu0 %v3016
      %v3034 = vpop.xlane.xlu0 %3033
      %3035 = vadd.xlane.f32.xlu0 %v3017
      %v3036 = vpop.xlane.xlu0 %3035
      %3037 = vadd.xlane.f32.xlu0 %v3018
      %v3038 = vpop.xlane.xlu0 %3037
      %3039 = vadd.xlane.f32.xlu0 %v3019
      %v3040 = vpop.xlane.xlu0 %3039
      %3041 = vadd.xlane.f32.xlu0 %v3020
      %v3042 = vpop.xlane.xlu0 %3041
      %3043 = vadd.xlane.f32.xlu0 %v3021
      %v3044 = vpop.xlane.xlu0 %3043
      %3045 = vadd.xlane.f32.xlu0 %v3022
      %v3046 = vpop.xlane.xlu0 %3045
      %v3047 = vsel %vm2803, %v1233, -1e+30
      %v3048 = vsel %vm2804, %v1237, -1e+30
      %v3049 = vsel %vm2805, %v1243, -1e+30
      %v3050 = vsel %vm2806, %v1247, -1e+30
      %v3051 = vsel %vm2803, %v1253, -1e+30
      %v3052 = vsel %vm2804, %v1257, -1e+30
      %v3053 = vsel %vm2805, %v1263, -1e+30
      %v3054 = vsel %vm2806, %v1267, -1e+30
      %v3055 = vsel %vm2803, %v1273, -1e+30
      %v3056 = vsel %vm2804, %v1277, -1e+30
      %v3057 = vsel %vm2805, %v1283, -1e+30
      %v3058 = vsel %vm2806, %v1287, -1e+30
      %v3059 = vmax.f32 %v3047, %v3049
      %v3060 = vmax.f32 %v3048, %v3050
      %v3061 = vmax.f32 %v3059, %v3060
      %v3062 = vrot.slane %v3061, 4
      %v3063 = vmax.f32 %v3061, %v3062
      %v3064 = vrot.slane %v3063, 2
      %v3065 = vmax.f32 %v3063, %v3064
      %v3066 = vrot.slane %v3065, 1
      %v3067 = vmax.f32 %v3065, %v3066
      %v3068 = vmax.f32 %v3051, %v3053
      %v3069 = vmax.f32 %v3052, %v3054
      %v3070 = vmax.f32 %v3068, %v3069
      %v3071 = vrot.slane %v3070, 4
      %v3072 = vmax.f32 %v3070, %v3071
      %v3073 = vrot.slane %v3072, 2
      %v3074 = vmax.f32 %v3072, %v3073
      %v3075 = vrot.slane %v3074, 1
      %v3076 = vmax.f32 %v3074, %v3075
      %v3077 = vmax.f32 %v3055, %v3057
      %v3078 = vmax.f32 %v3056, %v3058
      %v3079 = vmax.f32 %v3077, %v3078
      %v3080 = vrot.slane %v3079, 4
      %v3081 = vmax.f32 %v3079, %v3080
      %v3082 = vrot.slane %v3081, 2
      %v3083 = vmax.f32 %v3081, %v3082
      %v3084 = vrot.slane %v3083, 1
      %v3085 = vmax.f32 %v3083, %v3084
      %vm3086 = vcmp.eq.f32.partialorder %v3047, %v3067
      %vm3087 = vcmp.eq.f32.partialorder %v3048, %v3067
      %vm3088 = vcmp.eq.f32.partialorder %v3049, %v3067
      %vm3089 = vcmp.eq.f32.partialorder %v3050, %v3067
      %vm3090 = vcmp.eq.f32.partialorder %v3051, %v3076
      %vm3091 = vcmp.eq.f32.partialorder %v3052, %v3076
      %vm3092 = vcmp.eq.f32.partialorder %v3053, %v3076
      %vm3093 = vcmp.eq.f32.partialorder %v3054, %v3076
      %vm3094 = vcmp.eq.f32.partialorder %v3055, %v3085
      %vm3095 = vcmp.eq.f32.partialorder %v3056, %v3085
      %vm3096 = vcmp.eq.f32.partialorder %v3057, %v3085
      %vm3097 = vcmp.eq.f32.partialorder %v3058, %v3085
      %v3098 = vsel %vm3086, %v1466, 39
      %v3099 = vsel %vm3087, %v1467, 39
      %v3100 = vsel %vm3088, %v1468, 39
      %v3101 = vsel %vm3089, %v1469, 39
      %v3102 = vsel %vm3090, %v1466, 39
      %v3103 = vsel %vm3091, %v1467, 39
      %v3104 = vsel %vm3092, %v1468, 39
      %v3105 = vsel %vm3093, %v1469, 39
      %v3106 = vsel %vm3094, %v1466, 39
      %v3107 = vsel %vm3095, %v1467, 39
      %v3108 = vsel %vm3096, %v1468, 39
      %v3109 = vsel %vm3097, %v1469, 39
      %vm3110 = vcmp.lt.s32.totalorder %v3098, %v3100
      %v3111 = vsel %vm3110, %v3098, %v3100
      %vm3112 = vcmp.lt.s32.totalorder %v3099, %v3101
      %v3113 = vsel %vm3112, %v3099, %v3101
      %vm3114 = vcmp.lt.s32.totalorder %v3111, %v3113
      %v3115 = vsel %vm3114, %v3111, %v3113
      %v3116 = vrot.slane %v3115, 4
      %vm3117 = vcmp.lt.s32.totalorder %v3115, %v3116
      %v3118 = vsel %vm3117, %v3115, %v3116
      %v3119 = vrot.slane %v3118, 2
      %vm3120 = vcmp.lt.s32.totalorder %v3118, %v3119
      %v3121 = vsel %vm3120, %v3118, %v3119
      %v3122 = vrot.slane %v3121, 1
      %vm3123 = vcmp.lt.s32.totalorder %v3121, %v3122
      %v3124 = vsel %vm3123, %v3121, %v3122
      %vm3125 = vcmp.lt.s32.totalorder %v3102, %v3104
      %v3126 = vsel %vm3125, %v3102, %v3104
      %vm3127 = vcmp.lt.s32.totalorder %v3103, %v3105
      %v3128 = vsel %vm3127, %v3103, %v3105
      %vm3129 = vcmp.lt.s32.totalorder %v3126, %v3128
      %v3130 = vsel %vm3129, %v3126, %v3128
      %v3131 = vrot.slane %v3130, 4
      %vm3132 = vcmp.lt.s32.totalorder %v3130, %v3131
      %v3133 = vsel %vm3132, %v3130, %v3131
      %v3134 = vrot.slane %v3133, 2
      %vm3135 = vcmp.lt.s32.totalorder %v3133, %v3134
      %v3136 = vsel %vm3135, %v3133, %v3134
      %v3137 = vrot.slane %v3136, 1
      %vm3138 = vcmp.lt.s32.totalorder %v3136, %v3137
      %v3139 = vsel %vm3138, %v3136, %v3137
      %vm3140 = vcmp.lt.s32.totalorder %v3106, %v3108
      %v3141 = vsel %vm3140, %v3106, %v3108
      %vm3142 = vcmp.lt.s32.totalorder %v3107, %v3109
      %v3143 = vsel %vm3142, %v3107, %v3109
      %vm3144 = vcmp.lt.s32.totalorder %v3141, %v3143
      %v3145 = vsel %vm3144, %v3141, %v3143
      %v3146 = vrot.slane %v3145, 4
      %vm3147 = vcmp.lt.s32.totalorder %v3145, %v3146
      %v3148 = vsel %vm3147, %v3145, %v3146
      %v3149 = vrot.slane %v3148, 2
      %vm3150 = vcmp.lt.s32.totalorder %v3148, %v3149
      %v3151 = vsel %vm3150, %v3148, %v3149
      %v3152 = vrot.slane %v3151, 1
      %vm3153 = vcmp.lt.s32.totalorder %v3151, %v3152
      %v3154 = vsel %vm3153, %v3151, %v3152
      %vm3155 = vcmp.eq.s32.totalorder %v2775, 1
      %vm3156 = vcmp.eq.s32.totalorder %v2776, 1
      %vm3157 = vcmp.eq.s32.totalorder %v2777, 1
      %vm3158 = vcmp.eq.s32.totalorder %v2778, 1
      %vm3159 = vcmp.eq.s32.totalorder %v2779, 1
      %vm3160 = vcmp.eq.s32.totalorder %v2780, 1
      %vm3161 = vcmp.eq.s32.totalorder %v2781, 1
      %vm3162 = vcmp.eq.s32.totalorder %v2782, 1
      %vm3163 = vcmp.eq.s32.totalorder %v2783, 1
      %vm3164 = vcmp.eq.s32.totalorder %v2784, 1
      %vm3165 = vcmp.eq.s32.totalorder %v2785, 1
      %vm3166 = vcmp.eq.s32.totalorder %v2786, 1
      %v3167 = vsel %vm3155, 1, 0
      %v3168 = vsel %vm3156, 1, 0
      %v3169 = vsel %vm3157, 1, 0
      %v3170 = vsel %vm3158, 1, 0
      %v3171 = vsel %vm3159, 1, 0
      %v3172 = vsel %vm3160, 1, 0
      %v3173 = vsel %vm3161, 1, 0
      %v3174 = vsel %vm3162, 1, 0
      %v3175 = vsel %vm3163, 1, 0
      %v3176 = vsel %vm3164, 1, 0
      %v3177 = vsel %vm3165, 1, 0
      %v3178 = vsel %vm3166, 1, 0
      %vm3179 = vcmp.eq.s32.totalorder %v3167, 1
      %vm3180 = vcmp.eq.s32.totalorder %v3168, 1
      %vm3181 = vcmp.eq.s32.totalorder %v3169, 1
      %vm3182 = vcmp.eq.s32.totalorder %v3170, 1
      %vm3183 = vcmp.eq.s32.totalorder %v3171, 1
      %vm3184 = vcmp.eq.s32.totalorder %v3172, 1
      %vm3185 = vcmp.eq.s32.totalorder %v3173, 1
      %vm3186 = vcmp.eq.s32.totalorder %v3174, 1
      %vm3187 = vcmp.eq.s32.totalorder %v3175, 1
      %vm3188 = vcmp.eq.s32.totalorder %v3176, 1
      %vm3189 = vcmp.eq.s32.totalorder %v3177, 1
      %vm3190 = vcmp.eq.s32.totalorder %v3178, 1
      %vm3191 = vmand %vm2915, %vm3179
      %vm3192 = vmand %vm2916, %vm3180
      %vm3193 = vmand %vm2917, %vm3181
      %vm3194 = vmand %vm2918, %vm3182
      %vm3195 = vmand %vm2919, %vm3183
      %vm3196 = vmand %vm2920, %vm3184
      %vm3197 = vmand %vm2921, %vm3185
      %vm3198 = vmand %vm2922, %vm3186
      %vm3199 = vmand %vm2923, %vm3187
      %vm3200 = vmand %vm2924, %vm3188
      %vm3201 = vmand %vm2925, %vm3189
      %vm3202 = vmand %vm2926, %vm3190
      %vm3203 = vcmp.eq.s32.totalorder %v3124, %v1466
      %vm3204 = vcmp.eq.s32.totalorder %v3124, %v1467
      %vm3205 = vcmp.eq.s32.totalorder %v3124, %v1468
      %vm3206 = vcmp.eq.s32.totalorder %v3124, %v1469
      %vm3207 = vcmp.eq.s32.totalorder %v3139, %v1466
      %vm3208 = vcmp.eq.s32.totalorder %v3139, %v1467
      %vm3209 = vcmp.eq.s32.totalorder %v3139, %v1468
      %vm3210 = vcmp.eq.s32.totalorder %v3139, %v1469
      %vm3211 = vcmp.eq.s32.totalorder %v3154, %v1466
      %vm3212 = vcmp.eq.s32.totalorder %v3154, %v1467
      %vm3213 = vcmp.eq.s32.totalorder %v3154, %v1468
      %vm3214 = vcmp.eq.s32.totalorder %v3154, %v1469
      %vm3215 = vmand %vm3191, %vm3203
      %vm3216 = vmand %vm3192, %vm3204
      %vm3217 = vmand %vm3193, %vm3205
      %vm3218 = vmand %vm3194, %vm3206
      %vm3219 = vmand %vm3195, %vm3207
      %vm3220 = vmand %vm3196, %vm3208
      %vm3221 = vmand %vm3197, %vm3209
      %vm3222 = vmand %vm3198, %vm3210
      %vm3223 = vmand %vm3199, %vm3211
      %vm3224 = vmand %vm3200, %vm3212
      %vm3225 = vmand %vm3201, %vm3213
      %vm3226 = vmand %vm3202, %vm3214
      %v3227 = vsel %vm3215, 1, 0
      %v3228 = vsel %vm3216, 1, 0
      %v3229 = vsel %vm3217, 1, 0
      %v3230 = vsel %vm3218, 1, 0
      %v3231 = vsel %vm3219, 1, 0
      %v3232 = vsel %vm3220, 1, 0
      %v3233 = vsel %vm3221, 1, 0
      %v3234 = vsel %vm3222, 1, 0
      %v3235 = vsel %vm3223, 1, 0
      %v3236 = vsel %vm3224, 1, 0
      %v3237 = vsel %vm3225, 1, 0
      %v3238 = vsel %vm3226, 1, 0
      %v3239 = vcvt.s32.f32 %v3227
      %v3240 = vcvt.s32.f32 %v3228
      %v3241 = vcvt.s32.f32 %v3229
      %v3242 = vcvt.s32.f32 %v3230
      %v3243 = vcvt.s32.f32 %v3231
      %v3244 = vcvt.s32.f32 %v3232
      %v3245 = vcvt.s32.f32 %v3233
      %v3246 = vcvt.s32.f32 %v3234
      %v3247 = vcvt.s32.f32 %v3235
      %v3248 = vcvt.s32.f32 %v3236
      %v3249 = vcvt.s32.f32 %v3237
      %v3250 = vcvt.s32.f32 %v3238
      %3251 = vadd.xlane.f32.xlu0 %v3239
      %v3252 = vpop.xlane.xlu0 %3251
      %3253 = vadd.xlane.f32.xlu0 %v3240
      %v3254 = vpop.xlane.xlu0 %3253
      %3255 = vadd.xlane.f32.xlu0 %v3241
      %v3256 = vpop.xlane.xlu0 %3255
      %3257 = vadd.xlane.f32.xlu0 %v3242
      %v3258 = vpop.xlane.xlu0 %3257
      %3259 = vadd.xlane.f32.xlu0 %v3243
      %v3260 = vpop.xlane.xlu0 %3259
      %3261 = vadd.xlane.f32.xlu0 %v3244
      %v3262 = vpop.xlane.xlu0 %3261
      %3263 = vadd.xlane.f32.xlu0 %v3245
      %v3264 = vpop.xlane.xlu0 %3263
      %3265 = vadd.xlane.f32.xlu0 %v3246
      %v3266 = vpop.xlane.xlu0 %3265
      %3267 = vadd.xlane.f32.xlu0 %v3247
      %v3268 = vpop.xlane.xlu0 %3267
      %3269 = vadd.xlane.f32.xlu0 %v3248
      %v3270 = vpop.xlane.xlu0 %3269
      %3271 = vadd.xlane.f32.xlu0 %v3249
      %v3272 = vpop.xlane.xlu0 %3271
      %3273 = vadd.xlane.f32.xlu0 %v3250
      %v3274 = vpop.xlane.xlu0 %3273
      %v3275 = vadd.f32 %v3024, %v3252
      %v3276 = vadd.f32 %v3026, %v3254
      %v3277 = vadd.f32 %v3028, %v3256
      %v3278 = vadd.f32 %v3030, %v3258
      %v3279 = vadd.f32 %v3032, %v3260
      %v3280 = vadd.f32 %v3034, %v3262
      %v3281 = vadd.f32 %v3036, %v3264
      %v3282 = vadd.f32 %v3038, %v3266
      %v3283 = vadd.f32 %v3040, %v3268
      %v3284 = vadd.f32 %v3042, %v3270
      %v3285 = vadd.f32 %v3044, %v3272
      %v3286 = vadd.f32 %v3046, %v3274
      %v3287 = vsel %vm2803, %v1324, -1e+30
      %v3288 = vsel %vm2804, %v1328, -1e+30
      %v3289 = vsel %vm2805, %v1334, -1e+30
      %v3290 = vsel %vm2806, %v1338, -1e+30
      %v3291 = vsel %vm2803, %v1344, -1e+30
      %v3292 = vsel %vm2804, %v1348, -1e+30
      %v3293 = vsel %vm2805, %v1354, -1e+30
      %v3294 = vsel %vm2806, %v1358, -1e+30
      %v3295 = vsel %vm2803, %v1364, -1e+30
      %v3296 = vsel %vm2804, %v1368, -1e+30
      %v3297 = vsel %vm2805, %v1374, -1e+30
      %v3298 = vsel %vm2806, %v1378, -1e+30
      %v3299 = vmax.f32 %v3287, %v3289
      %v3300 = vmax.f32 %v3288, %v3290
      %v3301 = vmax.f32 %v3299, %v3300
      %v3302 = vrot.slane %v3301, 4
      %v3303 = vmax.f32 %v3301, %v3302
      %v3304 = vrot.slane %v3303, 2
      %v3305 = vmax.f32 %v3303, %v3304
      %v3306 = vrot.slane %v3305, 1
      %v3307 = vmax.f32 %v3305, %v3306
      %v3308 = vmax.f32 %v3291, %v3293
      %v3309 = vmax.f32 %v3292, %v3294
      %v3310 = vmax.f32 %v3308, %v3309
      %v3311 = vrot.slane %v3310, 4
      %v3312 = vmax.f32 %v3310, %v3311
      %v3313 = vrot.slane %v3312, 2
      %v3314 = vmax.f32 %v3312, %v3313
      %v3315 = vrot.slane %v3314, 1
      %v3316 = vmax.f32 %v3314, %v3315
      %v3317 = vmax.f32 %v3295, %v3297
      %v3318 = vmax.f32 %v3296, %v3298
      %v3319 = vmax.f32 %v3317, %v3318
      %v3320 = vrot.slane %v3319, 4
      %v3321 = vmax.f32 %v3319, %v3320
      %v3322 = vrot.slane %v3321, 2
      %v3323 = vmax.f32 %v3321, %v3322
      %v3324 = vrot.slane %v3323, 1
      %v3325 = vmax.f32 %v3323, %v3324
      %vm3326 = vcmp.eq.f32.partialorder %v3287, %v3307
      %vm3327 = vcmp.eq.f32.partialorder %v3288, %v3307
      %vm3328 = vcmp.eq.f32.partialorder %v3289, %v3307
      %vm3329 = vcmp.eq.f32.partialorder %v3290, %v3307
      %vm3330 = vcmp.eq.f32.partialorder %v3291, %v3316
      %vm3331 = vcmp.eq.f32.partialorder %v3292, %v3316
      %vm3332 = vcmp.eq.f32.partialorder %v3293, %v3316
      %vm3333 = vcmp.eq.f32.partialorder %v3294, %v3316
      %vm3334 = vcmp.eq.f32.partialorder %v3295, %v3325
      %vm3335 = vcmp.eq.f32.partialorder %v3296, %v3325
      %vm3336 = vcmp.eq.f32.partialorder %v3297, %v3325
      %vm3337 = vcmp.eq.f32.partialorder %v3298, %v3325
      %v3338 = vsel %vm3326, %v1466, 39
      %v3339 = vsel %vm3327, %v1467, 39
      %v3340 = vsel %vm3328, %v1468, 39
      %v3341 = vsel %vm3329, %v1469, 39
      %v3342 = vsel %vm3330, %v1466, 39
      %v3343 = vsel %vm3331, %v1467, 39
      %v3344 = vsel %vm3332, %v1468, 39
      %v3345 = vsel %vm3333, %v1469, 39
      %v3346 = vsel %vm3334, %v1466, 39
      %v3347 = vsel %vm3335, %v1467, 39
      %v3348 = vsel %vm3336, %v1468, 39
      %v3349 = vsel %vm3337, %v1469, 39
      %vm3350 = vcmp.lt.s32.totalorder %v3338, %v3340
      %v3351 = vsel %vm3350, %v3338, %v3340
      %vm3352 = vcmp.lt.s32.totalorder %v3339, %v3341
      %v3353 = vsel %vm3352, %v3339, %v3341
      %vm3354 = vcmp.lt.s32.totalorder %v3351, %v3353
      %v3355 = vsel %vm3354, %v3351, %v3353
      %v3356 = vrot.slane %v3355, 4
      %vm3357 = vcmp.lt.s32.totalorder %v3355, %v3356
      %v3358 = vsel %vm3357, %v3355, %v3356
      %v3359 = vrot.slane %v3358, 2
      %vm3360 = vcmp.lt.s32.totalorder %v3358, %v3359
      %v3361 = vsel %vm3360, %v3358, %v3359
      %v3362 = vrot.slane %v3361, 1
      %vm3363 = vcmp.lt.s32.totalorder %v3361, %v3362
      %v3364 = vsel %vm3363, %v3361, %v3362
      %vm3365 = vcmp.lt.s32.totalorder %v3342, %v3344
      %v3366 = vsel %vm3365, %v3342, %v3344
      %vm3367 = vcmp.lt.s32.totalorder %v3343, %v3345
      %v3368 = vsel %vm3367, %v3343, %v3345
      %vm3369 = vcmp.lt.s32.totalorder %v3366, %v3368
      %v3370 = vsel %vm3369, %v3366, %v3368
      %v3371 = vrot.slane %v3370, 4
      %vm3372 = vcmp.lt.s32.totalorder %v3370, %v3371
      %v3373 = vsel %vm3372, %v3370, %v3371
      %v3374 = vrot.slane %v3373, 2
      %vm3375 = vcmp.lt.s32.totalorder %v3373, %v3374
      %v3376 = vsel %vm3375, %v3373, %v3374
      %v3377 = vrot.slane %v3376, 1
      %vm3378 = vcmp.lt.s32.totalorder %v3376, %v3377
      %v3379 = vsel %vm3378, %v3376, %v3377
      %vm3380 = vcmp.lt.s32.totalorder %v3346, %v3348
      %v3381 = vsel %vm3380, %v3346, %v3348
      %vm3382 = vcmp.lt.s32.totalorder %v3347, %v3349
      %v3383 = vsel %vm3382, %v3347, %v3349
      %vm3384 = vcmp.lt.s32.totalorder %v3381, %v3383
      %v3385 = vsel %vm3384, %v3381, %v3383
      %v3386 = vrot.slane %v3385, 4
      %vm3387 = vcmp.lt.s32.totalorder %v3385, %v3386
      %v3388 = vsel %vm3387, %v3385, %v3386
      %v3389 = vrot.slane %v3388, 2
      %vm3390 = vcmp.lt.s32.totalorder %v3388, %v3389
      %v3391 = vsel %vm3390, %v3388, %v3389
      %v3392 = vrot.slane %v3391, 1
      %vm3393 = vcmp.lt.s32.totalorder %v3391, %v3392
      %v3394 = vsel %vm3393, %v3391, %v3392
      %vm3395 = vcmp.eq.s32.totalorder %v2775, 2
      %vm3396 = vcmp.eq.s32.totalorder %v2776, 2
      %vm3397 = vcmp.eq.s32.totalorder %v2777, 2
      %vm3398 = vcmp.eq.s32.totalorder %v2778, 2
      %vm3399 = vcmp.eq.s32.totalorder %v2779, 2
      %vm3400 = vcmp.eq.s32.totalorder %v2780, 2
      %vm3401 = vcmp.eq.s32.totalorder %v2781, 2
      %vm3402 = vcmp.eq.s32.totalorder %v2782, 2
      %vm3403 = vcmp.eq.s32.totalorder %v2783, 2
      %vm3404 = vcmp.eq.s32.totalorder %v2784, 2
      %vm3405 = vcmp.eq.s32.totalorder %v2785, 2
      %vm3406 = vcmp.eq.s32.totalorder %v2786, 2
      %v3407 = vsel %vm3395, 1, 0
      %v3408 = vsel %vm3396, 1, 0
      %v3409 = vsel %vm3397, 1, 0
      %v3410 = vsel %vm3398, 1, 0
      %v3411 = vsel %vm3399, 1, 0
      %v3412 = vsel %vm3400, 1, 0
      %v3413 = vsel %vm3401, 1, 0
      %v3414 = vsel %vm3402, 1, 0
      %v3415 = vsel %vm3403, 1, 0
      %v3416 = vsel %vm3404, 1, 0
      %v3417 = vsel %vm3405, 1, 0
      %v3418 = vsel %vm3406, 1, 0
      %vm3419 = vcmp.eq.s32.totalorder %v3407, 1
      %vm3420 = vcmp.eq.s32.totalorder %v3408, 1
      %vm3421 = vcmp.eq.s32.totalorder %v3409, 1
      %vm3422 = vcmp.eq.s32.totalorder %v3410, 1
      %vm3423 = vcmp.eq.s32.totalorder %v3411, 1
      %vm3424 = vcmp.eq.s32.totalorder %v3412, 1
      %vm3425 = vcmp.eq.s32.totalorder %v3413, 1
      %vm3426 = vcmp.eq.s32.totalorder %v3414, 1
      %vm3427 = vcmp.eq.s32.totalorder %v3415, 1
      %vm3428 = vcmp.eq.s32.totalorder %v3416, 1
      %vm3429 = vcmp.eq.s32.totalorder %v3417, 1
      %vm3430 = vcmp.eq.s32.totalorder %v3418, 1
      %vm3431 = vmand %vm2915, %vm3419
      %vm3432 = vmand %vm2916, %vm3420
      %vm3433 = vmand %vm2917, %vm3421
      %vm3434 = vmand %vm2918, %vm3422
      %vm3435 = vmand %vm2919, %vm3423
      %vm3436 = vmand %vm2920, %vm3424
      %vm3437 = vmand %vm2921, %vm3425
      %vm3438 = vmand %vm2922, %vm3426
      %vm3439 = vmand %vm2923, %vm3427
      %vm3440 = vmand %vm2924, %vm3428
      %vm3441 = vmand %vm2925, %vm3429
      %vm3442 = vmand %vm2926, %vm3430
      %vm3443 = vcmp.eq.s32.totalorder %v3364, %v1466
      %vm3444 = vcmp.eq.s32.totalorder %v3364, %v1467
      %vm3445 = vcmp.eq.s32.totalorder %v3364, %v1468
      %vm3446 = vcmp.eq.s32.totalorder %v3364, %v1469
      %vm3447 = vcmp.eq.s32.totalorder %v3379, %v1466
      %vm3448 = vcmp.eq.s32.totalorder %v3379, %v1467
      %vm3449 = vcmp.eq.s32.totalorder %v3379, %v1468
      %vm3450 = vcmp.eq.s32.totalorder %v3379, %v1469
      %vm3451 = vcmp.eq.s32.totalorder %v3394, %v1466
      %vm3452 = vcmp.eq.s32.totalorder %v3394, %v1467
      %vm3453 = vcmp.eq.s32.totalorder %v3394, %v1468
      %vm3454 = vcmp.eq.s32.totalorder %v3394, %v1469
      %vm3455 = vmand %vm3431, %vm3443
      %vm3456 = vmand %vm3432, %vm3444
      %vm3457 = vmand %vm3433, %vm3445
      %vm3458 = vmand %vm3434, %vm3446
      %vm3459 = vmand %vm3435, %vm3447
      %vm3460 = vmand %vm3436, %vm3448
      %vm3461 = vmand %vm3437, %vm3449
      %vm3462 = vmand %vm3438, %vm3450
      %vm3463 = vmand %vm3439, %vm3451
      %vm3464 = vmand %vm3440, %vm3452
      %vm3465 = vmand %vm3441, %vm3453
      %vm3466 = vmand %vm3442, %vm3454
      %v3467 = vsel %vm3455, 1, 0
      %v3468 = vsel %vm3456, 1, 0
      %v3469 = vsel %vm3457, 1, 0
      %v3470 = vsel %vm3458, 1, 0
      %v3471 = vsel %vm3459, 1, 0
      %v3472 = vsel %vm3460, 1, 0
      %v3473 = vsel %vm3461, 1, 0
      %v3474 = vsel %vm3462, 1, 0
      %v3475 = vsel %vm3463, 1, 0
      %v3476 = vsel %vm3464, 1, 0
      %v3477 = vsel %vm3465, 1, 0
      %v3478 = vsel %vm3466, 1, 0
      %v3479 = vcvt.s32.f32 %v3467
      %v3480 = vcvt.s32.f32 %v3468
      %v3481 = vcvt.s32.f32 %v3469
      %v3482 = vcvt.s32.f32 %v3470
      %v3483 = vcvt.s32.f32 %v3471
      %v3484 = vcvt.s32.f32 %v3472
      %v3485 = vcvt.s32.f32 %v3473
      %v3486 = vcvt.s32.f32 %v3474
      %v3487 = vcvt.s32.f32 %v3475
      %v3488 = vcvt.s32.f32 %v3476
      %v3489 = vcvt.s32.f32 %v3477
      %v3490 = vcvt.s32.f32 %v3478
      %3491 = vadd.xlane.f32.xlu0 %v3479
      %v3492 = vpop.xlane.xlu0 %3491
      %3493 = vadd.xlane.f32.xlu0 %v3480
      %v3494 = vpop.xlane.xlu0 %3493
      %3495 = vadd.xlane.f32.xlu0 %v3481
      %v3496 = vpop.xlane.xlu0 %3495
      %3497 = vadd.xlane.f32.xlu0 %v3482
      %v3498 = vpop.xlane.xlu0 %3497
      %3499 = vadd.xlane.f32.xlu0 %v3483
      %v3500 = vpop.xlane.xlu0 %3499
      %3501 = vadd.xlane.f32.xlu0 %v3484
      %v3502 = vpop.xlane.xlu0 %3501
      %3503 = vadd.xlane.f32.xlu0 %v3485
      %v3504 = vpop.xlane.xlu0 %3503
      %3505 = vadd.xlane.f32.xlu0 %v3486
      %v3506 = vpop.xlane.xlu0 %3505
      %3507 = vadd.xlane.f32.xlu0 %v3487
      %v3508 = vpop.xlane.xlu0 %3507
      %3509 = vadd.xlane.f32.xlu0 %v3488
      %v3510 = vpop.xlane.xlu0 %3509
      %3511 = vadd.xlane.f32.xlu0 %v3489
      %v3512 = vpop.xlane.xlu0 %3511
      %3513 = vadd.xlane.f32.xlu0 %v3490
      %v3514 = vpop.xlane.xlu0 %3513
      %v3515 = vadd.f32 %v3275, %v3492
      %v3516 = vadd.f32 %v3276, %v3494
      %v3517 = vadd.f32 %v3277, %v3496
      %v3518 = vadd.f32 %v3278, %v3498
      %v3519 = vadd.f32 %v3279, %v3500
      %v3520 = vadd.f32 %v3280, %v3502
      %v3521 = vadd.f32 %v3281, %v3504
      %v3522 = vadd.f32 %v3282, %v3506
      %v3523 = vadd.f32 %v3283, %v3508
      %v3524 = vadd.f32 %v3284, %v3510
      %v3525 = vadd.f32 %v3285, %v3512
      %v3526 = vadd.f32 %v3286, %v3514
      %v3527 = vsel %vm2803, %v1326, -1e+30
      %v3528 = vsel %vm2804, %v1330, -1e+30
      %v3529 = vsel %vm2805, %v1336, -1e+30
      %v3530 = vsel %vm2806, %v1340, -1e+30
      %v3531 = vsel %vm2803, %v1346, -1e+30
      %v3532 = vsel %vm2804, %v1350, -1e+30
      %v3533 = vsel %vm2805, %v1356, -1e+30
      %v3534 = vsel %vm2806, %v1360, -1e+30
      %v3535 = vsel %vm2803, %v1366, -1e+30
      %v3536 = vsel %vm2804, %v1370, -1e+30
      %v3537 = vsel %vm2805, %v1376, -1e+30
      %v3538 = vsel %vm2806, %v1380, -1e+30
      %v3539 = vmax.f32 %v3527, %v3529
      %v3540 = vmax.f32 %v3528, %v3530
      %v3541 = vmax.f32 %v3539, %v3540
      %v3542 = vrot.slane %v3541, 4
      %v3543 = vmax.f32 %v3541, %v3542
      %v3544 = vrot.slane %v3543, 2
      %v3545 = vmax.f32 %v3543, %v3544
      %v3546 = vrot.slane %v3545, 1
      %v3547 = vmax.f32 %v3545, %v3546
      %v3548 = vmax.f32 %v3531, %v3533
      %v3549 = vmax.f32 %v3532, %v3534
      %v3550 = vmax.f32 %v3548, %v3549
      %v3551 = vrot.slane %v3550, 4
      %v3552 = vmax.f32 %v3550, %v3551
      %v3553 = vrot.slane %v3552, 2
      %v3554 = vmax.f32 %v3552, %v3553
      %v3555 = vrot.slane %v3554, 1
      %v3556 = vmax.f32 %v3554, %v3555
      %v3557 = vmax.f32 %v3535, %v3537
      %v3558 = vmax.f32 %v3536, %v3538
      %v3559 = vmax.f32 %v3557, %v3558
      %v3560 = vrot.slane %v3559, 4
      %v3561 = vmax.f32 %v3559, %v3560
      %v3562 = vrot.slane %v3561, 2
      %v3563 = vmax.f32 %v3561, %v3562
      %v3564 = vrot.slane %v3563, 1
      %v3565 = vmax.f32 %v3563, %v3564
      %vm3566 = vcmp.eq.f32.partialorder %v3527, %v3547
      %vm3567 = vcmp.eq.f32.partialorder %v3528, %v3547
      %vm3568 = vcmp.eq.f32.partialorder %v3529, %v3547
      %vm3569 = vcmp.eq.f32.partialorder %v3530, %v3547
      %vm3570 = vcmp.eq.f32.partialorder %v3531, %v3556
      %vm3571 = vcmp.eq.f32.partialorder %v3532, %v3556
      %vm3572 = vcmp.eq.f32.partialorder %v3533, %v3556
      %vm3573 = vcmp.eq.f32.partialorder %v3534, %v3556
      %vm3574 = vcmp.eq.f32.partialorder %v3535, %v3565
      %vm3575 = vcmp.eq.f32.partialorder %v3536, %v3565
      %vm3576 = vcmp.eq.f32.partialorder %v3537, %v3565
      %vm3577 = vcmp.eq.f32.partialorder %v3538, %v3565
      %v3578 = vsel %vm3566, %v1466, 39
      %v3579 = vsel %vm3567, %v1467, 39
      %v3580 = vsel %vm3568, %v1468, 39
      %v3581 = vsel %vm3569, %v1469, 39
      %v3582 = vsel %vm3570, %v1466, 39
      %v3583 = vsel %vm3571, %v1467, 39
      %v3584 = vsel %vm3572, %v1468, 39
      %v3585 = vsel %vm3573, %v1469, 39
      %v3586 = vsel %vm3574, %v1466, 39
      %v3587 = vsel %vm3575, %v1467, 39
      %v3588 = vsel %vm3576, %v1468, 39
      %v3589 = vsel %vm3577, %v1469, 39
      %vm3590 = vcmp.lt.s32.totalorder %v3578, %v3580
      %v3591 = vsel %vm3590, %v3578, %v3580
      %vm3592 = vcmp.lt.s32.totalorder %v3579, %v3581
      %v3593 = vsel %vm3592, %v3579, %v3581
      %vm3594 = vcmp.lt.s32.totalorder %v3591, %v3593
      %v3595 = vsel %vm3594, %v3591, %v3593
      %v3596 = vrot.slane %v3595, 4
      %vm3597 = vcmp.lt.s32.totalorder %v3595, %v3596
      %v3598 = vsel %vm3597, %v3595, %v3596
      %v3599 = vrot.slane %v3598, 2
      %vm3600 = vcmp.lt.s32.totalorder %v3598, %v3599
      %v3601 = vsel %vm3600, %v3598, %v3599
      %v3602 = vrot.slane %v3601, 1
      %vm3603 = vcmp.lt.s32.totalorder %v3601, %v3602
      %v3604 = vsel %vm3603, %v3601, %v3602
      %vm3605 = vcmp.lt.s32.totalorder %v3582, %v3584
      %v3606 = vsel %vm3605, %v3582, %v3584
      %vm3607 = vcmp.lt.s32.totalorder %v3583, %v3585
      %v3608 = vsel %vm3607, %v3583, %v3585
      %vm3609 = vcmp.lt.s32.totalorder %v3606, %v3608
      %v3610 = vsel %vm3609, %v3606, %v3608
      %v3611 = vrot.slane %v3610, 4
      %vm3612 = vcmp.lt.s32.totalorder %v3610, %v3611
      %v3613 = vsel %vm3612, %v3610, %v3611
      %v3614 = vrot.slane %v3613, 2
      %vm3615 = vcmp.lt.s32.totalorder %v3613, %v3614
      %v3616 = vsel %vm3615, %v3613, %v3614
      %v3617 = vrot.slane %v3616, 1
      %vm3618 = vcmp.lt.s32.totalorder %v3616, %v3617
      %v3619 = vsel %vm3618, %v3616, %v3617
      %vm3620 = vcmp.lt.s32.totalorder %v3586, %v3588
      %v3621 = vsel %vm3620, %v3586, %v3588
      %vm3622 = vcmp.lt.s32.totalorder %v3587, %v3589
      %v3623 = vsel %vm3622, %v3587, %v3589
      %vm3624 = vcmp.lt.s32.totalorder %v3621, %v3623
      %v3625 = vsel %vm3624, %v3621, %v3623
      %v3626 = vrot.slane %v3625, 4
      %vm3627 = vcmp.lt.s32.totalorder %v3625, %v3626
      %v3628 = vsel %vm3627, %v3625, %v3626
      %v3629 = vrot.slane %v3628, 2
      %vm3630 = vcmp.lt.s32.totalorder %v3628, %v3629
      %v3631 = vsel %vm3630, %v3628, %v3629
      %v3632 = vrot.slane %v3631, 1
      %vm3633 = vcmp.lt.s32.totalorder %v3631, %v3632
      %v3634 = vsel %vm3633, %v3631, %v3632
      %vm3635 = vcmp.eq.s32.totalorder %v2775, 3
      %vm3636 = vcmp.eq.s32.totalorder %v2776, 3
      %vm3637 = vcmp.eq.s32.totalorder %v2777, 3
      %vm3638 = vcmp.eq.s32.totalorder %v2778, 3
      %vm3639 = vcmp.eq.s32.totalorder %v2779, 3
      %vm3640 = vcmp.eq.s32.totalorder %v2780, 3
      %vm3641 = vcmp.eq.s32.totalorder %v2781, 3
      %vm3642 = vcmp.eq.s32.totalorder %v2782, 3
      %vm3643 = vcmp.eq.s32.totalorder %v2783, 3
      %vm3644 = vcmp.eq.s32.totalorder %v2784, 3
      %vm3645 = vcmp.eq.s32.totalorder %v2785, 3
      %vm3646 = vcmp.eq.s32.totalorder %v2786, 3
      %v3647 = vsel %vm3635, 1, 0
      %v3648 = vsel %vm3636, 1, 0
      %v3649 = vsel %vm3637, 1, 0
      %v3650 = vsel %vm3638, 1, 0
      %v3651 = vsel %vm3639, 1, 0
      %v3652 = vsel %vm3640, 1, 0
      %v3653 = vsel %vm3641, 1, 0
      %v3654 = vsel %vm3642, 1, 0
      %v3655 = vsel %vm3643, 1, 0
      %v3656 = vsel %vm3644, 1, 0
      %v3657 = vsel %vm3645, 1, 0
      %v3658 = vsel %vm3646, 1, 0
      %vm3659 = vcmp.eq.s32.totalorder %v3647, 1
      %vm3660 = vcmp.eq.s32.totalorder %v3648, 1
      %vm3661 = vcmp.eq.s32.totalorder %v3649, 1
      %vm3662 = vcmp.eq.s32.totalorder %v3650, 1
      %vm3663 = vcmp.eq.s32.totalorder %v3651, 1
      %vm3664 = vcmp.eq.s32.totalorder %v3652, 1
      %vm3665 = vcmp.eq.s32.totalorder %v3653, 1
      %vm3666 = vcmp.eq.s32.totalorder %v3654, 1
      %vm3667 = vcmp.eq.s32.totalorder %v3655, 1
      %vm3668 = vcmp.eq.s32.totalorder %v3656, 1
      %vm3669 = vcmp.eq.s32.totalorder %v3657, 1
      %vm3670 = vcmp.eq.s32.totalorder %v3658, 1
      %vm3671 = vmand %vm2915, %vm3659
      %vm3672 = vmand %vm2916, %vm3660
      %vm3673 = vmand %vm2917, %vm3661
      %vm3674 = vmand %vm2918, %vm3662
      %vm3675 = vmand %vm2919, %vm3663
      %vm3676 = vmand %vm2920, %vm3664
      %vm3677 = vmand %vm2921, %vm3665
      %vm3678 = vmand %vm2922, %vm3666
      %vm3679 = vmand %vm2923, %vm3667
      %vm3680 = vmand %vm2924, %vm3668
      %vm3681 = vmand %vm2925, %vm3669
      %vm3682 = vmand %vm2926, %vm3670
      %vm3683 = vcmp.eq.s32.totalorder %v3604, %v1466
      %vm3684 = vcmp.eq.s32.totalorder %v3604, %v1467
      %vm3685 = vcmp.eq.s32.totalorder %v3604, %v1468
      %vm3686 = vcmp.eq.s32.totalorder %v3604, %v1469
      %vm3687 = vcmp.eq.s32.totalorder %v3619, %v1466
      %vm3688 = vcmp.eq.s32.totalorder %v3619, %v1467
      %vm3689 = vcmp.eq.s32.totalorder %v3619, %v1468
      %vm3690 = vcmp.eq.s32.totalorder %v3619, %v1469
      %vm3691 = vcmp.eq.s32.totalorder %v3634, %v1466
      %vm3692 = vcmp.eq.s32.totalorder %v3634, %v1467
      %vm3693 = vcmp.eq.s32.totalorder %v3634, %v1468
      %vm3694 = vcmp.eq.s32.totalorder %v3634, %v1469
      %vm3695 = vmand %vm3671, %vm3683
      %vm3696 = vmand %vm3672, %vm3684
      %vm3697 = vmand %vm3673, %vm3685
      %vm3698 = vmand %vm3674, %vm3686
      %vm3699 = vmand %vm3675, %vm3687
      %vm3700 = vmand %vm3676, %vm3688
      %vm3701 = vmand %vm3677, %vm3689
      %vm3702 = vmand %vm3678, %vm3690
      %vm3703 = vmand %vm3679, %vm3691
      %vm3704 = vmand %vm3680, %vm3692
      %vm3705 = vmand %vm3681, %vm3693
      %vm3706 = vmand %vm3682, %vm3694
      %v3707 = vsel %vm3695, 1, 0
      %v3708 = vsel %vm3696, 1, 0
      %v3709 = vsel %vm3697, 1, 0
      %v3710 = vsel %vm3698, 1, 0
      %v3711 = vsel %vm3699, 1, 0
      %v3712 = vsel %vm3700, 1, 0
      %v3713 = vsel %vm3701, 1, 0
      %v3714 = vsel %vm3702, 1, 0
      %v3715 = vsel %vm3703, 1, 0
      %v3716 = vsel %vm3704, 1, 0
      %v3717 = vsel %vm3705, 1, 0
      %v3718 = vsel %vm3706, 1, 0
      %v3719 = vcvt.s32.f32 %v3707
      %v3720 = vcvt.s32.f32 %v3708
      %v3721 = vcvt.s32.f32 %v3709
      %v3722 = vcvt.s32.f32 %v3710
      %v3723 = vcvt.s32.f32 %v3711
      %v3724 = vcvt.s32.f32 %v3712
      %v3725 = vcvt.s32.f32 %v3713
      %v3726 = vcvt.s32.f32 %v3714
      %v3727 = vcvt.s32.f32 %v3715
      %v3728 = vcvt.s32.f32 %v3716
      %v3729 = vcvt.s32.f32 %v3717
      %v3730 = vcvt.s32.f32 %v3718
      %3731 = vadd.xlane.f32.xlu0 %v3719
      %v3732 = vpop.xlane.xlu0 %3731
      %3733 = vadd.xlane.f32.xlu0 %v3720
      %v3734 = vpop.xlane.xlu0 %3733
      %3735 = vadd.xlane.f32.xlu0 %v3721
      %v3736 = vpop.xlane.xlu0 %3735
      %3737 = vadd.xlane.f32.xlu0 %v3722
      %v3738 = vpop.xlane.xlu0 %3737
      %3739 = vadd.xlane.f32.xlu0 %v3723
      %v3740 = vpop.xlane.xlu0 %3739
      %3741 = vadd.xlane.f32.xlu0 %v3724
      %v3742 = vpop.xlane.xlu0 %3741
      %3743 = vadd.xlane.f32.xlu0 %v3725
      %v3744 = vpop.xlane.xlu0 %3743
      %3745 = vadd.xlane.f32.xlu0 %v3726
      %v3746 = vpop.xlane.xlu0 %3745
      %3747 = vadd.xlane.f32.xlu0 %v3727
      %v3748 = vpop.xlane.xlu0 %3747
      %3749 = vadd.xlane.f32.xlu0 %v3728
      %v3750 = vpop.xlane.xlu0 %3749
      %3751 = vadd.xlane.f32.xlu0 %v3729
      %v3752 = vpop.xlane.xlu0 %3751
      %3753 = vadd.xlane.f32.xlu0 %v3730
      %v3754 = vpop.xlane.xlu0 %3753
      %v3755 = vadd.f32 %v3515, %v3732
      %v3756 = vadd.f32 %v3516, %v3734
      %v3757 = vadd.f32 %v3517, %v3736
      %v3758 = vadd.f32 %v3518, %v3738
      %v3759 = vadd.f32 %v3519, %v3740
      %v3760 = vadd.f32 %v3520, %v3742
      %v3761 = vadd.f32 %v3521, %v3744
      %v3762 = vadd.f32 %v3522, %v3746
      %v3763 = vadd.f32 %v3523, %v3748
      %v3764 = vadd.f32 %v3524, %v3750
      %v3765 = vadd.f32 %v3525, %v3752
      %v3766 = vadd.f32 %v3526, %v3754
      %v3767 = vsel %vm2803, %v1417, -1e+30
      %v3768 = vsel %vm2804, %v1420, -1e+30
      %v3769 = vsel %vm2805, %v1425, -1e+30
      %v3770 = vsel %vm2806, %v1428, -1e+30
      %v3771 = vsel %vm2803, %v1433, -1e+30
      %v3772 = vsel %vm2804, %v1436, -1e+30
      %v3773 = vsel %vm2805, %v1441, -1e+30
      %v3774 = vsel %vm2806, %v1444, -1e+30
      %v3775 = vsel %vm2803, %v1449, -1e+30
      %v3776 = vsel %vm2804, %v1452, -1e+30
      %v3777 = vsel %vm2805, %v1457, -1e+30
      %v3778 = vsel %vm2806, %v1460, -1e+30
      %v3779 = vmax.f32 %v3767, %v3769
      %v3780 = vmax.f32 %v3768, %v3770
      %v3781 = vmax.f32 %v3779, %v3780
      %v3782 = vrot.slane %v3781, 4
      %v3783 = vmax.f32 %v3781, %v3782
      %v3784 = vrot.slane %v3783, 2
      %v3785 = vmax.f32 %v3783, %v3784
      %v3786 = vrot.slane %v3785, 1
      %v3787 = vmax.f32 %v3785, %v3786
      %v3788 = vmax.f32 %v3771, %v3773
      %v3789 = vmax.f32 %v3772, %v3774
      %v3790 = vmax.f32 %v3788, %v3789
      %v3791 = vrot.slane %v3790, 4
      %v3792 = vmax.f32 %v3790, %v3791
      %v3793 = vrot.slane %v3792, 2
      %v3794 = vmax.f32 %v3792, %v3793
      %v3795 = vrot.slane %v3794, 1
      %v3796 = vmax.f32 %v3794, %v3795
      %v3797 = vmax.f32 %v3775, %v3777
      %v3798 = vmax.f32 %v3776, %v3778
      %v3799 = vmax.f32 %v3797, %v3798
      %v3800 = vrot.slane %v3799, 4
      %v3801 = vmax.f32 %v3799, %v3800
      %v3802 = vrot.slane %v3801, 2
      %v3803 = vmax.f32 %v3801, %v3802
      %v3804 = vrot.slane %v3803, 1
      %v3805 = vmax.f32 %v3803, %v3804
      %vm3806 = vcmp.eq.f32.partialorder %v3767, %v3787
      %vm3807 = vcmp.eq.f32.partialorder %v3768, %v3787
      %vm3808 = vcmp.eq.f32.partialorder %v3769, %v3787
      %vm3809 = vcmp.eq.f32.partialorder %v3770, %v3787
      %vm3810 = vcmp.eq.f32.partialorder %v3771, %v3796
      %vm3811 = vcmp.eq.f32.partialorder %v3772, %v3796
      %vm3812 = vcmp.eq.f32.partialorder %v3773, %v3796
      %vm3813 = vcmp.eq.f32.partialorder %v3774, %v3796
      %vm3814 = vcmp.eq.f32.partialorder %v3775, %v3805
      %vm3815 = vcmp.eq.f32.partialorder %v3776, %v3805
      %vm3816 = vcmp.eq.f32.partialorder %v3777, %v3805
      %vm3817 = vcmp.eq.f32.partialorder %v3778, %v3805
      %v3818 = vsel %vm3806, %v1466, 39
      %v3819 = vsel %vm3807, %v1467, 39
      %v3820 = vsel %vm3808, %v1468, 39
      %v3821 = vsel %vm3809, %v1469, 39
      %v3822 = vsel %vm3810, %v1466, 39
      %v3823 = vsel %vm3811, %v1467, 39
      %v3824 = vsel %vm3812, %v1468, 39
      %v3825 = vsel %vm3813, %v1469, 39
      %v3826 = vsel %vm3814, %v1466, 39
      %v3827 = vsel %vm3815, %v1467, 39
      %v3828 = vsel %vm3816, %v1468, 39
      %v3829 = vsel %vm3817, %v1469, 39
      %vm3830 = vcmp.lt.s32.totalorder %v3818, %v3820
      %v3831 = vsel %vm3830, %v3818, %v3820
      %vm3832 = vcmp.lt.s32.totalorder %v3819, %v3821
      %v3833 = vsel %vm3832, %v3819, %v3821
      %vm3834 = vcmp.lt.s32.totalorder %v3831, %v3833
      %v3835 = vsel %vm3834, %v3831, %v3833
      %v3836 = vrot.slane %v3835, 4
      %vm3837 = vcmp.lt.s32.totalorder %v3835, %v3836
      %v3838 = vsel %vm3837, %v3835, %v3836
      %v3839 = vrot.slane %v3838, 2
      %vm3840 = vcmp.lt.s32.totalorder %v3838, %v3839
      %v3841 = vsel %vm3840, %v3838, %v3839
      %v3842 = vrot.slane %v3841, 1
      %vm3843 = vcmp.lt.s32.totalorder %v3841, %v3842
      %v3844 = vsel %vm3843, %v3841, %v3842
      %vm3845 = vcmp.lt.s32.totalorder %v3822, %v3824
      %v3846 = vsel %vm3845, %v3822, %v3824
      %vm3847 = vcmp.lt.s32.totalorder %v3823, %v3825
      %v3848 = vsel %vm3847, %v3823, %v3825
      %vm3849 = vcmp.lt.s32.totalorder %v3846, %v3848
      %v3850 = vsel %vm3849, %v3846, %v3848
      %v3851 = vrot.slane %v3850, 4
      %vm3852 = vcmp.lt.s32.totalorder %v3850, %v3851
      %v3853 = vsel %vm3852, %v3850, %v3851
      %v3854 = vrot.slane %v3853, 2
      %vm3855 = vcmp.lt.s32.totalorder %v3853, %v3854
      %v3856 = vsel %vm3855, %v3853, %v3854
      %v3857 = vrot.slane %v3856, 1
      %vm3858 = vcmp.lt.s32.totalorder %v3856, %v3857
      %v3859 = vsel %vm3858, %v3856, %v3857
      %vm3860 = vcmp.lt.s32.totalorder %v3826, %v3828
      %v3861 = vsel %vm3860, %v3826, %v3828
      %vm3862 = vcmp.lt.s32.totalorder %v3827, %v3829
      %v3863 = vsel %vm3862, %v3827, %v3829
      %vm3864 = vcmp.lt.s32.totalorder %v3861, %v3863
      %v3865 = vsel %vm3864, %v3861, %v3863
      %v3866 = vrot.slane %v3865, 4
      %vm3867 = vcmp.lt.s32.totalorder %v3865, %v3866
      %v3868 = vsel %vm3867, %v3865, %v3866
      %v3869 = vrot.slane %v3868, 2
      %vm3870 = vcmp.lt.s32.totalorder %v3868, %v3869
      %v3871 = vsel %vm3870, %v3868, %v3869
      %v3872 = vrot.slane %v3871, 1
      %vm3873 = vcmp.lt.s32.totalorder %v3871, %v3872
      %v3874 = vsel %vm3873, %v3871, %v3872
      %vm3875 = vcmp.eq.s32.totalorder %v2775, 4
      %vm3876 = vcmp.eq.s32.totalorder %v2776, 4
      %vm3877 = vcmp.eq.s32.totalorder %v2777, 4
      %vm3878 = vcmp.eq.s32.totalorder %v2778, 4
      %vm3879 = vcmp.eq.s32.totalorder %v2779, 4
      %vm3880 = vcmp.eq.s32.totalorder %v2780, 4
      %vm3881 = vcmp.eq.s32.totalorder %v2781, 4
      %vm3882 = vcmp.eq.s32.totalorder %v2782, 4
      %vm3883 = vcmp.eq.s32.totalorder %v2783, 4
      %vm3884 = vcmp.eq.s32.totalorder %v2784, 4
      %vm3885 = vcmp.eq.s32.totalorder %v2785, 4
      %vm3886 = vcmp.eq.s32.totalorder %v2786, 4
      %v3887 = vsel %vm3875, 1, 0
      %v3888 = vsel %vm3876, 1, 0
      %v3889 = vsel %vm3877, 1, 0
      %v3890 = vsel %vm3878, 1, 0
      %v3891 = vsel %vm3879, 1, 0
      %v3892 = vsel %vm3880, 1, 0
      %v3893 = vsel %vm3881, 1, 0
      %v3894 = vsel %vm3882, 1, 0
      %v3895 = vsel %vm3883, 1, 0
      %v3896 = vsel %vm3884, 1, 0
      %v3897 = vsel %vm3885, 1, 0
      %v3898 = vsel %vm3886, 1, 0
      %vm3899 = vcmp.eq.s32.totalorder %v3887, 1
      %vm3900 = vcmp.eq.s32.totalorder %v3888, 1
      %vm3901 = vcmp.eq.s32.totalorder %v3889, 1
      %vm3902 = vcmp.eq.s32.totalorder %v3890, 1
      %vm3903 = vcmp.eq.s32.totalorder %v3891, 1
      %vm3904 = vcmp.eq.s32.totalorder %v3892, 1
      %vm3905 = vcmp.eq.s32.totalorder %v3893, 1
      %vm3906 = vcmp.eq.s32.totalorder %v3894, 1
      %vm3907 = vcmp.eq.s32.totalorder %v3895, 1
      %vm3908 = vcmp.eq.s32.totalorder %v3896, 1
      %vm3909 = vcmp.eq.s32.totalorder %v3897, 1
      %vm3910 = vcmp.eq.s32.totalorder %v3898, 1
      %vm3911 = vmand %vm2915, %vm3899
      %vm3912 = vmand %vm2916, %vm3900
      %vm3913 = vmand %vm2917, %vm3901
      %vm3914 = vmand %vm2918, %vm3902
      %vm3915 = vmand %vm2919, %vm3903
      %vm3916 = vmand %vm2920, %vm3904
      %vm3917 = vmand %vm2921, %vm3905
      %vm3918 = vmand %vm2922, %vm3906
      %vm3919 = vmand %vm2923, %vm3907
      %vm3920 = vmand %vm2924, %vm3908
      %vm3921 = vmand %vm2925, %vm3909
      %vm3922 = vmand %vm2926, %vm3910
      %vm3923 = vcmp.eq.s32.totalorder %v3844, %v1466
      %vm3924 = vcmp.eq.s32.totalorder %v3844, %v1467
      %vm3925 = vcmp.eq.s32.totalorder %v3844, %v1468
      %vm3926 = vcmp.eq.s32.totalorder %v3844, %v1469
      %vm3927 = vcmp.eq.s32.totalorder %v3859, %v1466
      %vm3928 = vcmp.eq.s32.totalorder %v3859, %v1467
      %vm3929 = vcmp.eq.s32.totalorder %v3859, %v1468
      %vm3930 = vcmp.eq.s32.totalorder %v3859, %v1469
      %vm3931 = vcmp.eq.s32.totalorder %v3874, %v1466
      %vm3932 = vcmp.eq.s32.totalorder %v3874, %v1467
      %vm3933 = vcmp.eq.s32.totalorder %v3874, %v1468
      %vm3934 = vcmp.eq.s32.totalorder %v3874, %v1469
      %vm3935 = vmand %vm3911, %vm3923
      %vm3936 = vmand %vm3912, %vm3924
      %vm3937 = vmand %vm3913, %vm3925
      %vm3938 = vmand %vm3914, %vm3926
      %vm3939 = vmand %vm3915, %vm3927
      %vm3940 = vmand %vm3916, %vm3928
      %vm3941 = vmand %vm3917, %vm3929
      %vm3942 = vmand %vm3918, %vm3930
      %vm3943 = vmand %vm3919, %vm3931
      %vm3944 = vmand %vm3920, %vm3932
      %vm3945 = vmand %vm3921, %vm3933
      %vm3946 = vmand %vm3922, %vm3934
      %v3947 = vsel %vm3935, 1, 0
      %v3948 = vsel %vm3936, 1, 0
      %v3949 = vsel %vm3937, 1, 0
      %v3950 = vsel %vm3938, 1, 0
      %v3951 = vsel %vm3939, 1, 0
      %v3952 = vsel %vm3940, 1, 0
      %v3953 = vsel %vm3941, 1, 0
      %v3954 = vsel %vm3942, 1, 0
      %v3955 = vsel %vm3943, 1, 0
      %v3956 = vsel %vm3944, 1, 0
      %v3957 = vsel %vm3945, 1, 0
      %v3958 = vsel %vm3946, 1, 0
      %v3959 = vcvt.s32.f32 %v3947
      %v3960 = vcvt.s32.f32 %v3948
      %v3961 = vcvt.s32.f32 %v3949
      %v3962 = vcvt.s32.f32 %v3950
      %v3963 = vcvt.s32.f32 %v3951
      %v3964 = vcvt.s32.f32 %v3952
      %v3965 = vcvt.s32.f32 %v3953
      %v3966 = vcvt.s32.f32 %v3954
      %v3967 = vcvt.s32.f32 %v3955
      %v3968 = vcvt.s32.f32 %v3956
      %v3969 = vcvt.s32.f32 %v3957
      %v3970 = vcvt.s32.f32 %v3958
      %3971 = vadd.xlane.f32.xlu0 %v3959
      %v3972 = vpop.xlane.xlu0 %3971
      %3973 = vadd.xlane.f32.xlu0 %v3960
      %v3974 = vpop.xlane.xlu0 %3973
      %3975 = vadd.xlane.f32.xlu0 %v3961
      %v3976 = vpop.xlane.xlu0 %3975
      %3977 = vadd.xlane.f32.xlu0 %v3962
      %v3978 = vpop.xlane.xlu0 %3977
      %3979 = vadd.xlane.f32.xlu0 %v3963
      %v3980 = vpop.xlane.xlu0 %3979
      %3981 = vadd.xlane.f32.xlu0 %v3964
      %v3982 = vpop.xlane.xlu0 %3981
      %3983 = vadd.xlane.f32.xlu0 %v3965
      %v3984 = vpop.xlane.xlu0 %3983
      %3985 = vadd.xlane.f32.xlu0 %v3966
      %v3986 = vpop.xlane.xlu0 %3985
      %3987 = vadd.xlane.f32.xlu0 %v3967
      %v3988 = vpop.xlane.xlu0 %3987
      %3989 = vadd.xlane.f32.xlu0 %v3968
      %v3990 = vpop.xlane.xlu0 %3989
      %3991 = vadd.xlane.f32.xlu0 %v3969
      %v3992 = vpop.xlane.xlu0 %3991
      %3993 = vadd.xlane.f32.xlu0 %v3970
      %v3994 = vpop.xlane.xlu0 %3993
      %v3995 = vadd.f32 %v3755, %v3972
      %v3996 = vadd.f32 %v3756, %v3974
      %v3997 = vadd.f32 %v3757, %v3976
      %v3998 = vadd.f32 %v3758, %v3978
      %v3999 = vadd.f32 %v3759, %v3980
      %v4000 = vadd.f32 %v3760, %v3982
      %v4001 = vadd.f32 %v3761, %v3984
      %v4002 = vadd.f32 %v3762, %v3986
      %v4003 = vadd.f32 %v3763, %v3988
      %v4004 = vadd.f32 %v3764, %v3990
      %v4005 = vadd.f32 %v3765, %v3992
      %v4006 = vadd.f32 %v3766, %v3994
      %v4007 = vmul.f32 %v548, %v548
      %v4008 = vmul.f32 %v551, %v551
      %v4009 = vmul.f32 %v556, %v556
      %v4010 = vmul.f32 %v559, %v559
      %v4011 = vmul.f32 %v564, %v564
      %v4012 = vmul.f32 %v567, %v567
      %v4013 = vmul.f32 %v572, %v572
      %v4014 = vmul.f32 %v575, %v575
      %v4015 = vmul.f32 %v580, %v580
      %v4016 = vmul.f32 %v583, %v583
      %v4017 = vmul.f32 %v588, %v588
      %v4018 = vmul.f32 %v591, %v591
      %v4019 = vsel %vm357, %v4007, 0.0
      %4020 = vadd.xlane.f32.xlu0 %v4019
      %v4021 = vpop.xlane.xlu0 %4020
      %v4022 = vsel %vm357, %v4008, 0.0
      %4023 = vadd.xlane.f32.xlu0 %v4022
      %v4024 = vpop.xlane.xlu0 %4023
      %v4025 = vsel %vm357, %v4009, 0.0
      %4026 = vadd.xlane.f32.xlu0 %v4025
      %v4027 = vpop.xlane.xlu0 %4026
      %v4028 = vsel %vm357, %v4010, 0.0
      %4029 = vadd.xlane.f32.xlu0 %v4028
      %v4030 = vpop.xlane.xlu0 %4029
      %v4031 = vsel %vm357, %v4011, 0.0
      %4032 = vadd.xlane.f32.xlu0 %v4031
      %v4033 = vpop.xlane.xlu0 %4032
      %v4034 = vsel %vm357, %v4012, 0.0
      %4035 = vadd.xlane.f32.xlu0 %v4034
      %v4036 = vpop.xlane.xlu0 %4035
      %v4037 = vsel %vm357, %v4013, 0.0
      %4038 = vadd.xlane.f32.xlu0 %v4037
      %v4039 = vpop.xlane.xlu0 %4038
      %v4040 = vsel %vm357, %v4014, 0.0
      %4041 = vadd.xlane.f32.xlu0 %v4040
      %v4042 = vpop.xlane.xlu0 %4041
      %v4043 = vsel %vm357, %v4015, 0.0
      %4044 = vadd.xlane.f32.xlu0 %v4043
      %v4045 = vpop.xlane.xlu0 %4044
      %v4046 = vsel %vm357, %v4016, 0.0
      %4047 = vadd.xlane.f32.xlu0 %v4046
      %v4048 = vpop.xlane.xlu0 %4047
      %v4049 = vsel %vm357, %v4017, 0.0
      %4050 = vadd.xlane.f32.xlu0 %v4049
      %v4051 = vpop.xlane.xlu0 %4050
      %v4052 = vsel %vm357, %v4018, 0.0
      %4053 = vadd.xlane.f32.xlu0 %v4052
      %v4054 = vpop.xlane.xlu0 %4053
      %v4055 = vmax.f32 %v4021, 1e-24
      %v4056 = vmax.f32 %v4024, 1e-24
      %v4057 = vmax.f32 %v4027, 1e-24
      %v4058 = vmax.f32 %v4030, 1e-24
      %v4059 = vmax.f32 %v4033, 1e-24
      %v4060 = vmax.f32 %v4036, 1e-24
      %v4061 = vmax.f32 %v4039, 1e-24
      %v4062 = vmax.f32 %v4042, 1e-24
      %v4063 = vmax.f32 %v4045, 1e-24
      %v4064 = vmax.f32 %v4048, 1e-24
      %v4065 = vmax.f32 %v4051, 1e-24
      %v4066 = vmax.f32 %v4054, 1e-24
      %v4067 = vrsqrt.pop %v4055
      %v4068 = vrsqrt.pop %v4056
      %v4069 = vrsqrt.pop %v4057
      %v4070 = vrsqrt.pop %v4058
      %v4071 = vrsqrt.pop %v4059
      %v4072 = vrsqrt.pop %v4060
      %v4073 = vrsqrt.pop %v4061
      %v4074 = vrsqrt.pop %v4062
      %v4075 = vrsqrt.pop %v4063
      %v4076 = vrsqrt.pop %v4064
      %v4077 = vrsqrt.pop %v4065
      %v4078 = vrsqrt.pop %v4066
      %v4079 = vmul.f32 %v548, %v4067
      %v4080 = vmul.f32 %v551, %v4068
      %v4081 = vmul.f32 %v556, %v4069
      %v4082 = vmul.f32 %v559, %v4070
      %v4083 = vmul.f32 %v564, %v4071
      %v4084 = vmul.f32 %v567, %v4072
      %v4085 = vmul.f32 %v572, %v4073
      %v4086 = vmul.f32 %v575, %v4074
      %v4087 = vmul.f32 %v580, %v4075
      %v4088 = vmul.f32 %v583, %v4076
      %v4089 = vmul.f32 %v588, %v4077
      %v4090 = vmul.f32 %v591, %v4078
      %v4091 = vpack.c.bf16 %v4080, %v4079
      %v4092 = vpack.c.bf16 %v4082, %v4081
      %v4093 = vpack.c.bf16 %v4084, %v4083
      %v4094 = vpack.c.bf16 %v4086, %v4085
      %v4095 = vpack.c.bf16 %v4088, %v4087
      %v4096 = vpack.c.bf16 %v4090, %v4089
      %v4097 = vmul.f32 %v1231, %v3995
      %v4098 = vmul.f32 %v1235, %v3996
      %v4099 = vmul.f32 %v1241, %v3997
      %v4100 = vmul.f32 %v1245, %v3998
      %v4101 = vmul.f32 %v1251, %v3999
      %v4102 = vmul.f32 %v1255, %v4000
      %v4103 = vmul.f32 %v1261, %v4001
      %v4104 = vmul.f32 %v1265, %v4002
      %v4105 = vmul.f32 %v1271, %v4003
      %v4106 = vmul.f32 %v1275, %v4004
      %v4107 = vmul.f32 %v1281, %v4005
      %v4108 = vmul.f32 %v1285, %v4006
      %v4109 = vsel %vm1478, %v4097, -1e+30
      %v4110 = vsel %vm1478, %v4098, -1e+30
      %v4111 = vsel %vm1478, %v4099, -1e+30
      %v4112 = vsel %vm1478, %v4100, -1e+30
      %v4113 = vsel %vm1478, %v4101, -1e+30
      %v4114 = vsel %vm1478, %v4102, -1e+30
      %v4115 = vsel %vm1478, %v4103, -1e+30
      %v4116 = vsel %vm1478, %v4104, -1e+30
      %v4117 = vsel %vm1478, %v4105, -1e+30
      %v4118 = vsel %vm1478, %v4106, -1e+30
      %v4119 = vsel %vm1478, %v4107, -1e+30
      %v4120 = vsel %vm1478, %v4108, -1e+30
      %4121 = vmax.xlane.f32.xlu0 %v4109
      %v4122 = vpop.xlane.xlu0 %4121
      %4123 = vmax.xlane.f32.xlu0 %v4110
      %v4124 = vpop.xlane.xlu0 %4123
      %4125 = vmax.xlane.f32.xlu0 %v4111
      %v4126 = vpop.xlane.xlu0 %4125
      %4127 = vmax.xlane.f32.xlu0 %v4112
      %v4128 = vpop.xlane.xlu0 %4127
      %4129 = vmax.xlane.f32.xlu0 %v4113
      %v4130 = vpop.xlane.xlu0 %4129
      %4131 = vmax.xlane.f32.xlu0 %v4114
      %v4132 = vpop.xlane.xlu0 %4131
      %4133 = vmax.xlane.f32.xlu0 %v4115
      %v4134 = vpop.xlane.xlu0 %4133
      %4135 = vmax.xlane.f32.xlu0 %v4116
      %v4136 = vpop.xlane.xlu0 %4135
      %4137 = vmax.xlane.f32.xlu0 %v4117
      %v4138 = vpop.xlane.xlu0 %4137
      %4139 = vmax.xlane.f32.xlu0 %v4118
      %v4140 = vpop.xlane.xlu0 %4139
      %4141 = vmax.xlane.f32.xlu0 %v4119
      %v4142 = vpop.xlane.xlu0 %4141
      %4143 = vmax.xlane.f32.xlu0 %v4120
      %v4144 = vpop.xlane.xlu0 %4143
      %v4145 = vsub.f32 %v4109, %v4122
      %v4146 = vsub.f32 %v4110, %v4124
      %v4147 = vsub.f32 %v4111, %v4126
      %v4148 = vsub.f32 %v4112, %v4128
      %v4149 = vsub.f32 %v4113, %v4130
      %v4150 = vsub.f32 %v4114, %v4132
      %v4151 = vsub.f32 %v4115, %v4134
      %v4152 = vsub.f32 %v4116, %v4136
      %v4153 = vsub.f32 %v4117, %v4138
      %v4154 = vsub.f32 %v4118, %v4140
      %v4155 = vsub.f32 %v4119, %v4142
      %v4156 = vsub.f32 %v4120, %v4144
      %v4157 = vmul.f32 %v4145, 1.442695
      %v4158 = vpow.pop %v4157
      %v4159 = vmul.f32 %v4146, 1.442695
      %v4160 = vpow.pop %v4159
      %v4161 = vmul.f32 %v4147, 1.442695
      %v4162 = vpow.pop %v4161
      %v4163 = vmul.f32 %v4148, 1.442695
      %v4164 = vpow.pop %v4163
      %v4165 = vmul.f32 %v4149, 1.442695
      %v4166 = vpow.pop %v4165
      %v4167 = vmul.f32 %v4150, 1.442695
      %v4168 = vpow.pop %v4167
      %v4169 = vmul.f32 %v4151, 1.442695
      %v4170 = vpow.pop %v4169
      %v4171 = vmul.f32 %v4152, 1.442695
      %v4172 = vpow.pop %v4171
      %v4173 = vmul.f32 %v4153, 1.442695
      %v4174 = vpow.pop %v4173
      %v4175 = vmul.f32 %v4154, 1.442695
      %v4176 = vpow.pop %v4175
      %v4177 = vmul.f32 %v4155, 1.442695
      %v4178 = vpow.pop %v4177
      %v4179 = vmul.f32 %v4156, 1.442695
      %v4180 = vpow.pop %v4179
      %4181 = vadd.xlane.f32.xlu0 %v4158
      %v4182 = vpop.xlane.xlu0 %4181
      %4183 = vadd.xlane.f32.xlu0 %v4160
      %v4184 = vpop.xlane.xlu0 %4183
      %4185 = vadd.xlane.f32.xlu0 %v4162
      %v4186 = vpop.xlane.xlu0 %4185
      %4187 = vadd.xlane.f32.xlu0 %v4164
      %v4188 = vpop.xlane.xlu0 %4187
      %4189 = vadd.xlane.f32.xlu0 %v4166
      %v4190 = vpop.xlane.xlu0 %4189
      %4191 = vadd.xlane.f32.xlu0 %v4168
      %v4192 = vpop.xlane.xlu0 %4191
      %4193 = vadd.xlane.f32.xlu0 %v4170
      %v4194 = vpop.xlane.xlu0 %4193
      %4195 = vadd.xlane.f32.xlu0 %v4172
      %v4196 = vpop.xlane.xlu0 %4195
      %4197 = vadd.xlane.f32.xlu0 %v4174
      %v4198 = vpop.xlane.xlu0 %4197
      %4199 = vadd.xlane.f32.xlu0 %v4176
      %v4200 = vpop.xlane.xlu0 %4199
      %4201 = vadd.xlane.f32.xlu0 %v4178
      %v4202 = vpop.xlane.xlu0 %4201
      %4203 = vadd.xlane.f32.xlu0 %v4180
      %v4204 = vpop.xlane.xlu0 %4203
      %v4205 = vrcp.pop %v4182
      %v4206 = vrcp.pop %v4184
      %v4207 = vrcp.pop %v4186
      %v4208 = vrcp.pop %v4188
      %v4209 = vrcp.pop %v4190
      %v4210 = vrcp.pop %v4192
      %v4211 = vrcp.pop %v4194
      %v4212 = vrcp.pop %v4196
      %v4213 = vrcp.pop %v4198
      %v4214 = vrcp.pop %v4200
      %v4215 = vrcp.pop %v4202
      %v4216 = vrcp.pop %v4204
      %v4217 = vmul.f32 %v4158, %v4205
      %v4218 = vmul.f32 %v4160, %v4206
      %v4219 = vmul.f32 %v4162, %v4207
      %v4220 = vmul.f32 %v4164, %v4208
      %v4221 = vmul.f32 %v4166, %v4209
      %v4222 = vmul.f32 %v4168, %v4210
      %v4223 = vmul.f32 %v4170, %v4211
      %v4224 = vmul.f32 %v4172, %v4212
      %v4225 = vmul.f32 %v4174, %v4213
      %v4226 = vmul.f32 %v4176, %v4214
      %v4227 = vmul.f32 %v4178, %v4215
      %v4228 = vmul.f32 %v4180, %v4216
      %v4229 = vpack.c.bf16 %v4218, %v4217
      %v4230 = vpack.c.bf16 %v4220, %v4219
      %v4231 = vpack.c.bf16 %v4222, %v4221
      %v4232 = vpack.c.bf16 %v4224, %v4223
      %v4233 = vpack.c.bf16 %v4226, %v4225
      %v4234 = vpack.c.bf16 %v4228, %v4227
      %v4235 = vpack.c.bf16 %v980, %v976
      %v4236 = vpack.c.bf16 %v990, %v986
      %v4237 = vpack.c.bf16 %v1000, %v996
      %v4238 = vpack.c.bf16 %v1010, %v1006
      %4239 = vmatprep.subr.bf16.mxu0 0
      %4240 = vmatpush1.bf16.xpose.msra.mxu0 %v4235
      %4241 = vmatprep.subr.bf16.mxu0 0
      %4242 = vmatpush1.bf16.xpose.msra.mxu0 %v4236
      %4243 = vmatprep.subr.bf16.mxu0 0
      %4244 = vmatpush1.bf16.xpose.msra.mxu0 %v4237
      %4245 = vmatprep.subr.bf16.mxu0 0
      %4246 = vmatpush1.bf16.xpose.msra.mxu0 %v4238
      %4247 = vmatprep.subr.bf16.mxu0 0
      %4248 = vmatpush1.bf16.xpose.msra.mxu0 0
      %4249 = vmatprep.subr.bf16.mxu0 0
      %4250 = vmatpush1.bf16.xpose.msra.mxu0 0
      %4251 = vmatprep.subr.bf16.mxu0 0
      %4252 = vmatpush1.bf16.xpose.msra.mxu0 0
      %4253 = vmatprep.subr.bf16.mxu0 0
      %4254 = vmatpush1.bf16.xpose.msra.mxu0 0
      %4255 = vmatprep.subr.bf16.mxu0 0
      %4256 = vmatpush1.bf16.xpose.msra.mxu0 0
      %4257 = vmatprep.subr.bf16.mxu0 0
      %4258 = vmatpush1.bf16.xpose.msra.mxu0 0
      %4259 = vmatprep.subr.bf16.mxu0 0
      %4260 = vmatpush1.bf16.xpose.msra.mxu0 0
      %4261 = vmatprep.subr.bf16.mxu0 0
      %4262 = vmatpush1.bf16.xpose.msra.mxu0 0
      %4263 = vmatprep.subr.bf16.mxu0 0
      %4264 = vmatpush1.bf16.xpose.msra.mxu0 0
      %4265 = vmatprep.subr.bf16.mxu0 0
      %4266 = vmatpush1.bf16.xpose.msra.mxu0 0
      %4267 = vmatprep.subr.bf16.mxu0 0
      %4268 = vmatpush1.bf16.xpose.msra.mxu0 0
      %4269 = vmatprep.subr.bf16.mxu0 0
      %4270 = vmatpush1.bf16.xpose.msra.mxu0 0
      %4271 = vmatprep.mubr.bf16.mxu0 0
      %4272 = vmatmul.mubr.bf16.gmra.mrb[0].mxu0 %v4229
      %v4273 = vpop.f32.mrb[0].mxu0
      %v4274 = vadd.f32 0.0, %v4273
      %v4275 = vpop.f32.mrb[0].mxu0
      %v4276 = vpop.f32.mrb[0].mxu0
      %v4277 = vadd.f32 0.0, %v4276
      %v4278 = vpop.f32.mrb[0].mxu0
      %4279 = vmatprep.mubr.bf16.mxu0 0
      %4280 = vmatmul.mubr.bf16.gmra.mrb[0].mxu0 %v4230
      %v4281 = vpop.f32.mrb[0].mxu0
      %v4282 = vadd.f32 0.0, %v4281
      %v4283 = vpop.f32.mrb[0].mxu0
      %v4284 = vpop.f32.mrb[0].mxu0
      %v4285 = vadd.f32 0.0, %v4284
      %v4286 = vpop.f32.mrb[0].mxu0
      %4287 = vmatprep.mubr.bf16.mxu0 0
      %4288 = vmatmul.mubr.bf16.gmra.mrb[0].mxu0 %v4231
      %v4289 = vpop.f32.mrb[0].mxu0
      %v4290 = vadd.f32 0.0, %v4289
      %v4291 = vpop.f32.mrb[0].mxu0
      %v4292 = vpop.f32.mrb[0].mxu0
      %v4293 = vadd.f32 0.0, %v4292
      %v4294 = vpop.f32.mrb[0].mxu0
      %4295 = vmatprep.mubr.bf16.mxu0 0
      %4296 = vmatmul.mubr.bf16.gmra.mrb[0].mxu0 %v4232
      %v4297 = vpop.f32.mrb[0].mxu0
      %v4298 = vadd.f32 0.0, %v4297
      %v4299 = vpop.f32.mrb[0].mxu0
      %v4300 = vpop.f32.mrb[0].mxu0
      %v4301 = vadd.f32 0.0, %v4300
      %v4302 = vpop.f32.mrb[0].mxu0
      %4303 = vmatprep.mubr.bf16.mxu0 0
      %4304 = vmatmul.mubr.bf16.gmra.mrb[0].mxu0 %v4233
      %v4305 = vpop.f32.mrb[0].mxu0
      %v4306 = vadd.f32 0.0, %v4305
      %v4307 = vpop.f32.mrb[0].mxu0
      %v4308 = vpop.f32.mrb[0].mxu0
      %v4309 = vadd.f32 0.0, %v4308
      %v4310 = vpop.f32.mrb[0].mxu0
      %4311 = vmatprep.mubr.bf16.mxu0 0
      %4312 = vmatmul.mubr.bf16.gmra.mrb[0].mxu0 %v4234
      %v4313 = vpop.f32.mrb[0].mxu0
      %v4314 = vadd.f32 0.0, %v4313
      %v4315 = vpop.f32.mrb[0].mxu0
      %v4316 = vpop.f32.mrb[0].mxu0
      %v4317 = vadd.f32 0.0, %v4316
      %v4318 = vpop.f32.mrb[0].mxu0
      %4319 = vdwg.mxu0
      %v4320 = vmul.f32 %v4274, %v4274
      %v4321 = vmul.f32 %v4277, %v4277
      %v4322 = vmul.f32 %v4282, %v4282
      %v4323 = vmul.f32 %v4285, %v4285
      %v4324 = vmul.f32 %v4290, %v4290
      %v4325 = vmul.f32 %v4293, %v4293
      %v4326 = vmul.f32 %v4298, %v4298
      %v4327 = vmul.f32 %v4301, %v4301
      %v4328 = vmul.f32 %v4306, %v4306
      %v4329 = vmul.f32 %v4309, %v4309
      %v4330 = vmul.f32 %v4314, %v4314
      %v4331 = vmul.f32 %v4317, %v4317
      %v4332 = vsel %vm357, %v4320, 0.0
      %4333 = vadd.xlane.f32.xlu0 %v4332
      %v4334 = vpop.xlane.xlu0 %4333
      %v4335 = vsel %vm357, %v4321, 0.0
      %4336 = vadd.xlane.f32.xlu0 %v4335
      %v4337 = vpop.xlane.xlu0 %4336
      %v4338 = vsel %vm357, %v4322, 0.0
      %4339 = vadd.xlane.f32.xlu0 %v4338
      %v4340 = vpop.xlane.xlu0 %4339
      %v4341 = vsel %vm357, %v4323, 0.0
      %4342 = vadd.xlane.f32.xlu0 %v4341
      %v4343 = vpop.xlane.xlu0 %4342
      %v4344 = vsel %vm357, %v4324, 0.0
      %4345 = vadd.xlane.f32.xlu0 %v4344
      %v4346 = vpop.xlane.xlu0 %4345
      %v4347 = vsel %vm357, %v4325, 0.0
      %4348 = vadd.xlane.f32.xlu0 %v4347
      %v4349 = vpop.xlane.xlu0 %4348
      %v4350 = vsel %vm357, %v4326, 0.0
      %4351 = vadd.xlane.f32.xlu0 %v4350
      %v4352 = vpop.xlane.xlu0 %4351
      %v4353 = vsel %vm357, %v4327, 0.0
      %4354 = vadd.xlane.f32.xlu0 %v4353
      %v4355 = vpop.xlane.xlu0 %4354
      %v4356 = vsel %vm357, %v4328, 0.0
      %4357 = vadd.xlane.f32.xlu0 %v4356
      %v4358 = vpop.xlane.xlu0 %4357
      %v4359 = vsel %vm357, %v4329, 0.0
      %4360 = vadd.xlane.f32.xlu0 %v4359
      %v4361 = vpop.xlane.xlu0 %4360
      %v4362 = vsel %vm357, %v4330, 0.0
      %4363 = vadd.xlane.f32.xlu0 %v4362
      %v4364 = vpop.xlane.xlu0 %4363
      %v4365 = vsel %vm357, %v4331, 0.0
      %4366 = vadd.xlane.f32.xlu0 %v4365
      %v4367 = vpop.xlane.xlu0 %4366
      %v4368 = vmax.f32 %v4334, 1e-24
      %v4369 = vmax.f32 %v4337, 1e-24
      %v4370 = vmax.f32 %v4340, 1e-24
      %v4371 = vmax.f32 %v4343, 1e-24
      %v4372 = vmax.f32 %v4346, 1e-24
      %v4373 = vmax.f32 %v4349, 1e-24
      %v4374 = vmax.f32 %v4352, 1e-24
      %v4375 = vmax.f32 %v4355, 1e-24
      %v4376 = vmax.f32 %v4358, 1e-24
      %v4377 = vmax.f32 %v4361, 1e-24
      %v4378 = vmax.f32 %v4364, 1e-24
      %v4379 = vmax.f32 %v4367, 1e-24
      %v4380 = vrsqrt.pop %v4368
      %v4381 = vrsqrt.pop %v4369
      %v4382 = vrsqrt.pop %v4370
      %v4383 = vrsqrt.pop %v4371
      %v4384 = vrsqrt.pop %v4372
      %v4385 = vrsqrt.pop %v4373
      %v4386 = vrsqrt.pop %v4374
      %v4387 = vrsqrt.pop %v4375
      %v4388 = vrsqrt.pop %v4376
      %v4389 = vrsqrt.pop %v4377
      %v4390 = vrsqrt.pop %v4378
      %v4391 = vrsqrt.pop %v4379
      %v4392 = vmul.f32 %v4274, %v4380
      %v4393 = vmul.f32 %v4277, %v4381
      %v4394 = vmul.f32 %v4282, %v4382
      %v4395 = vmul.f32 %v4285, %v4383
      %v4396 = vmul.f32 %v4290, %v4384
      %v4397 = vmul.f32 %v4293, %v4385
      %v4398 = vmul.f32 %v4298, %v4386
      %v4399 = vmul.f32 %v4301, %v4387
      %v4400 = vmul.f32 %v4306, %v4388
      %v4401 = vmul.f32 %v4309, %v4389
      %v4402 = vmul.f32 %v4314, %v4390
      %v4403 = vmul.f32 %v4317, %v4391
      %v4404 = vpack.c.bf16 %v4393, %v4392
      %v4405 = vpack.c.bf16 %v4395, %v4394
      %v4406 = vpack.c.bf16 %v4397, %v4396
      %v4407 = vpack.c.bf16 %v4399, %v4398
      %v4408 = vpack.c.bf16 %v4401, %v4400
      %v4409 = vpack.c.bf16 %v4403, %v4402
      %v4411 = vsel %vm357, %v4404, 0
      %v4414 = vsel %vm357, %v4405, 0
      %v4417 = vsel %vm357, %v4091, 0
      %v4420 = vsel %vm357, %v4092, 0
      %4422 = vmatprep.subr.bf16.mxu0 0
      %4423 = vmatpush1.bf16.xpose.msra.mxu0 %v4417
      %4424 = vmatprep.subr.bf16.mxu0 0
      %4425 = vmatpush1.bf16.xpose.msra.mxu0 %v4420
      %4426 = vmatprep.subr.bf16.mxu0 0
      %4427 = vmatpush1.bf16.xpose.msra.mxu0 0
      %4428 = vmatprep.subr.bf16.mxu0 0
      %4429 = vmatpush1.bf16.xpose.msra.mxu0 0
      %4430 = vmatprep.subr.bf16.mxu0 0
      %4431 = vmatpush1.bf16.xpose.msra.mxu0 0
      %4432 = vmatprep.subr.bf16.mxu0 0
      %4433 = vmatpush1.bf16.xpose.msra.mxu0 0
      %4434 = vmatprep.subr.bf16.mxu0 0
      %4435 = vmatpush1.bf16.xpose.msra.mxu0 0
      %4436 = vmatprep.subr.bf16.mxu0 0
      %4437 = vmatpush1.bf16.xpose.msra.mxu0 0
      %4438 = vmatprep.subr.bf16.mxu0 0
      %4439 = vmatpush1.bf16.xpose.msra.mxu0 0
      %4440 = vmatprep.subr.bf16.mxu0 0
      %4441 = vmatpush1.bf16.xpose.msra.mxu0 0
      %4442 = vmatprep.subr.bf16.mxu0 0
      %4443 = vmatpush1.bf16.xpose.msra.mxu0 0
      %4444 = vmatprep.subr.bf16.mxu0 0
      %4445 = vmatpush1.bf16.xpose.msra.mxu0 0
      %4446 = vmatprep.subr.bf16.mxu0 0
      %4447 = vmatpush1.bf16.xpose.msra.mxu0 0
      %4448 = vmatprep.subr.bf16.mxu0 0
      %4449 = vmatpush1.bf16.xpose.msra.mxu0 0
      %4450 = vmatprep.subr.bf16.mxu0 0
      %4451 = vmatpush1.bf16.xpose.msra.mxu0 0
      %4452 = vmatprep.subr.bf16.mxu0 0
      %4453 = vmatpush1.bf16.xpose.msra.mxu0 0
      %4454 = vmatprep.mubr.bf16.mxu0 0
      %4455 = vmatmul.mubr.bf16.gmra.mrb[0].mxu0 %v4411
      %v4456 = vpop.f32.mrb[0].mxu0
      %v4457 = vadd.f32 1.0, %v4456
      %v4458 = vpop.f32.mrb[0].mxu0
      %v4459 = vpop.f32.mrb[0].mxu0
      %v4460 = vadd.f32 1.0, %v4459
      %v4461 = vpop.f32.mrb[0].mxu0
      %4462 = vmatprep.mubr.bf16.mxu0 0
      %4463 = vmatmul.mubr.bf16.gmra.mrb[0].mxu0 %v4414
      %v4464 = vpop.f32.mrb[0].mxu0
      %v4465 = vadd.f32 1.0, %v4464
      %v4466 = vpop.f32.mrb[0].mxu0
      %v4467 = vpop.f32.mrb[0].mxu0
      %v4468 = vadd.f32 1.0, %v4467
      %v4469 = vpop.f32.mrb[0].mxu0
      %4470 = vdwg.mxu0
      %v4472 = vsel %vm357, %v4406, 0
      %v4475 = vsel %vm357, %v4407, 0
      %v4478 = vsel %vm357, %v4093, 0
      %v4481 = vsel %vm357, %v4094, 0
      %4483 = vmatprep.subr.bf16.mxu0 0
      %4484 = vmatpush1.bf16.xpose.msra.mxu0 %v4478
      %4485 = vmatprep.subr.bf16.mxu0 0
      %4486 = vmatpush1.bf16.xpose.msra.mxu0 %v4481
      %4487 = vmatprep.subr.bf16.mxu0 0
      %4488 = vmatpush1.bf16.xpose.msra.mxu0 0
      %4489 = vmatprep.subr.bf16.mxu0 0
      %4490 = vmatpush1.bf16.xpose.msra.mxu0 0
      %4491 = vmatprep.subr.bf16.mxu0 0
      %4492 = vmatpush1.bf16.xpose.msra.mxu0 0
      %4493 = vmatprep.subr.bf16.mxu0 0
      %4494 = vmatpush1.bf16.xpose.msra.mxu0 0
      %4495 = vmatprep.subr.bf16.mxu0 0
      %4496 = vmatpush1.bf16.xpose.msra.mxu0 0
      %4497 = vmatprep.subr.bf16.mxu0 0
      %4498 = vmatpush1.bf16.xpose.msra.mxu0 0
      %4499 = vmatprep.subr.bf16.mxu0 0
      %4500 = vmatpush1.bf16.xpose.msra.mxu0 0
      %4501 = vmatprep.subr.bf16.mxu0 0
      %4502 = vmatpush1.bf16.xpose.msra.mxu0 0
      %4503 = vmatprep.subr.bf16.mxu0 0
      %4504 = vmatpush1.bf16.xpose.msra.mxu0 0
      %4505 = vmatprep.subr.bf16.mxu0 0
      %4506 = vmatpush1.bf16.xpose.msra.mxu0 0
      %4507 = vmatprep.subr.bf16.mxu0 0
      %4508 = vmatpush1.bf16.xpose.msra.mxu0 0
      %4509 = vmatprep.subr.bf16.mxu0 0
      %4510 = vmatpush1.bf16.xpose.msra.mxu0 0
      %4511 = vmatprep.subr.bf16.mxu0 0
      %4512 = vmatpush1.bf16.xpose.msra.mxu0 0
      %4513 = vmatprep.subr.bf16.mxu0 0
      %4514 = vmatpush1.bf16.xpose.msra.mxu0 0
      %4515 = vmatprep.mubr.bf16.mxu0 0
      %4516 = vmatmul.mubr.bf16.gmra.mrb[0].mxu0 %v4472
      %v4517 = vpop.f32.mrb[0].mxu0
      %v4518 = vadd.f32 1.0, %v4517
      %v4519 = vpop.f32.mrb[0].mxu0
      %v4520 = vpop.f32.mrb[0].mxu0
      %v4521 = vadd.f32 1.0, %v4520
      %v4522 = vpop.f32.mrb[0].mxu0
      %4523 = vmatprep.mubr.bf16.mxu0 0
      %4524 = vmatmul.mubr.bf16.gmra.mrb[0].mxu0 %v4475
      %v4525 = vpop.f32.mrb[0].mxu0
      %v4526 = vadd.f32 1.0, %v4525
      %v4527 = vpop.f32.mrb[0].mxu0
      %v4528 = vpop.f32.mrb[0].mxu0
      %v4529 = vadd.f32 1.0, %v4528
      %v4530 = vpop.f32.mrb[0].mxu0
      %4531 = vdwg.mxu0
      %v4533 = vsel %vm357, %v4408, 0
      %v4536 = vsel %vm357, %v4409, 0
      %v4539 = vsel %vm357, %v4095, 0
      %v4542 = vsel %vm357, %v4096, 0
      %4544 = vmatprep.subr.bf16.mxu0 0
      %4545 = vmatpush1.bf16.xpose.msra.mxu0 %v4539
      %4546 = vmatprep.subr.bf16.mxu0 0
      %4547 = vmatpush1.bf16.xpose.msra.mxu0 %v4542
      %4548 = vmatprep.subr.bf16.mxu0 0
      %4549 = vmatpush1.bf16.xpose.msra.mxu0 0
      %4550 = vmatprep.subr.bf16.mxu0 0
      %4551 = vmatpush1.bf16.xpose.msra.mxu0 0
      %4552 = vmatprep.subr.bf16.mxu0 0
      %4553 = vmatpush1.bf16.xpose.msra.mxu0 0
      %4554 = vmatprep.subr.bf16.mxu0 0
      %4555 = vmatpush1.bf16.xpose.msra.mxu0 0
      %4556 = vmatprep.subr.bf16.mxu0 0
      %4557 = vmatpush1.bf16.xpose.msra.mxu0 0
      %4558 = vmatprep.subr.bf16.mxu0 0
      %4559 = vmatpush1.bf16.xpose.msra.mxu0 0
      %4560 = vmatprep.subr.bf16.mxu0 0
      %4561 = vmatpush1.bf16.xpose.msra.mxu0 0
      %4562 = vmatprep.subr.bf16.mxu0 0
      %4563 = vmatpush1.bf16.xpose.msra.mxu0 0
      %4564 = vmatprep.subr.bf16.mxu0 0
      %4565 = vmatpush1.bf16.xpose.msra.mxu0 0
      %4566 = vmatprep.subr.bf16.mxu0 0
      %4567 = vmatpush1.bf16.xpose.msra.mxu0 0
      %4568 = vmatprep.subr.bf16.mxu0 0
      %4569 = vmatpush1.bf16.xpose.msra.mxu0 0
      %4570 = vmatprep.subr.bf16.mxu0 0
      %4571 = vmatpush1.bf16.xpose.msra.mxu0 0
      %4572 = vmatprep.subr.bf16.mxu0 0
      %4573 = vmatpush1.bf16.xpose.msra.mxu0 0
      %4574 = vmatprep.subr.bf16.mxu0 0
      %4575 = vmatpush1.bf16.xpose.msra.mxu0 0
      %4576 = vmatprep.mubr.bf16.mxu0 0
      %4577 = vmatmul.mubr.bf16.gmra.mrb[0].mxu0 %v4533
      %v4578 = vpop.f32.mrb[0].mxu0
      %v4579 = vadd.f32 1.0, %v4578
      %v4580 = vpop.f32.mrb[0].mxu0
      %v4581 = vpop.f32.mrb[0].mxu0
      %v4582 = vadd.f32 1.0, %v4581
      %v4583 = vpop.f32.mrb[0].mxu0
      %4584 = vmatprep.mubr.bf16.mxu0 0
      %4585 = vmatmul.mubr.bf16.gmra.mrb[0].mxu0 %v4536
      %v4586 = vpop.f32.mrb[0].mxu0
      %v4587 = vadd.f32 1.0, %v4586
      %v4588 = vpop.f32.mrb[0].mxu0
      %v4589 = vpop.f32.mrb[0].mxu0
      %v4590 = vadd.f32 1.0, %v4589
      %v4591 = vpop.f32.mrb[0].mxu0
      %4592 = vdwg.mxu0
      %v4593 = vmul.f32 %v4457, 0.5
      %v4594 = vmul.f32 %v4460, 0.5
      %v4595 = vmul.f32 %v4465, 0.5
      %v4596 = vmul.f32 %v4468, 0.5
      %v4597 = vmul.f32 %v4518, 0.5
      %v4598 = vmul.f32 %v4521, 0.5
      %v4599 = vmul.f32 %v4526, 0.5
      %v4600 = vmul.f32 %v4529, 0.5
      %v4601 = vmul.f32 %v4579, 0.5
      %v4602 = vmul.f32 %v4582, 0.5
      %v4603 = vmul.f32 %v4587, 0.5
      %v4604 = vmul.f32 %v4590, 0.5
      %v4605 = vsel %vm2803, %v4593, -1e+30
      %v4606 = vsel %vm2804, %v4594, -1e+30
      %v4607 = vsel %vm2805, %v4595, -1e+30
      %v4608 = vsel %vm2806, %v4596, -1e+30
      %v4609 = vsel %vm2803, %v4597, -1e+30
      %v4610 = vsel %vm2804, %v4598, -1e+30
      %v4611 = vsel %vm2805, %v4599, -1e+30
      %v4612 = vsel %vm2806, %v4600, -1e+30
      %v4613 = vsel %vm2803, %v4601, -1e+30
      %v4614 = vsel %vm2804, %v4602, -1e+30
      %v4615 = vsel %vm2805, %v4603, -1e+30
      %v4616 = vsel %vm2806, %v4604, -1e+30
      %vm4617 = vcmask 261120
      %v4618 = vsel %vm4617, %v4605, -inf
      %v4619 = vsel %vm4617, %v4606, -inf
      %v4620 = vsel %vm4617, %v4607, -inf
      %v4621 = vmax.f32 %v4618, %v4620
      %v4622 = vsel %vm4617, %v4608, -inf
      %v4623 = vmax.f32 %v4619, %v4622
      %v4624 = vmax.f32 %v4621, %v4623
      %v4625 = vrot.slane %v4624, 4
      %v4626 = vmax.f32 %v4624, %v4625
      %v4627 = vrot.slane %v4626, 2
      %v4628 = vmax.f32 %v4626, %v4627
      %v4629 = vrot.slane %v4628, 1
      %v4630 = vmax.f32 %v4628, %v4629
      %v4631 = vsel %vm4617, %v4609, -inf
      %v4632 = vsel %vm4617, %v4610, -inf
      %v4633 = vsel %vm4617, %v4611, -inf
      %v4634 = vmax.f32 %v4631, %v4633
      %v4635 = vsel %vm4617, %v4612, -inf
      %v4636 = vmax.f32 %v4632, %v4635
      %v4637 = vmax.f32 %v4634, %v4636
      %v4638 = vrot.slane %v4637, 4
      %v4639 = vmax.f32 %v4637, %v4638
      %v4640 = vrot.slane %v4639, 2
      %v4641 = vmax.f32 %v4639, %v4640
      %v4642 = vrot.slane %v4641, 1
      %v4643 = vmax.f32 %v4641, %v4642
      %v4644 = vsel %vm4617, %v4613, -inf
      %v4645 = vsel %vm4617, %v4614, -inf
      %v4646 = vsel %vm4617, %v4615, -inf
      %v4647 = vmax.f32 %v4644, %v4646
      %v4648 = vsel %vm4617, %v4616, -inf
      %v4649 = vmax.f32 %v4645, %v4648
      %v4650 = vmax.f32 %v4647, %v4649
      %v4651 = vrot.slane %v4650, 4
      %v4652 = vmax.f32 %v4650, %v4651
      %v4653 = vrot.slane %v4652, 2
      %v4654 = vmax.f32 %v4652, %v4653
      %v4655 = vrot.slane %v4654, 1
      %v4656 = vmax.f32 %v4654, %v4655
      %v4657 = vsel %vm1476, 1, 0
      %vm4658 = vcmp.eq.s32.totalorder %v4657, 1
      %v4659 = vsel %vm4658, %v4630, 0.0
      %v4660 = vsel %vm4658, %v4643, 0.0
      %v4661 = vsel %vm4658, %v4656, 0.0
      %v4662 = vsel %vm4617, %v4659, 0.0
      %4663 = vadd.xlane.f32.xlu0 %v4662
      %v4664 = vpop.xlane.xlu0 %4663
      %v4665 = vsel %vm4617, %v4660, 0.0
      %4666 = vadd.xlane.f32.xlu0 %v4665
      %v4667 = vpop.xlane.xlu0 %4666
      %v4668 = vsel %vm4617, %v4661, 0.0
      %4669 = vadd.xlane.f32.xlu0 %v4668
      %v4670 = vpop.xlane.xlu0 %4669
      %v4671 = vmul.f32 %v1233, %v3995
      %v4672 = vmul.f32 %v1237, %v3996
      %v4673 = vmul.f32 %v1243, %v3997
      %v4674 = vmul.f32 %v1247, %v3998
      %v4675 = vmul.f32 %v1253, %v3999
      %v4676 = vmul.f32 %v1257, %v4000
      %v4677 = vmul.f32 %v1263, %v4001
      %v4678 = vmul.f32 %v1267, %v4002
      %v4679 = vmul.f32 %v1273, %v4003
      %v4680 = vmul.f32 %v1277, %v4004
      %v4681 = vmul.f32 %v1283, %v4005
      %v4682 = vmul.f32 %v1287, %v4006
      %v4683 = vsel %vm1478, %v4671, -1e+30
      %v4684 = vsel %vm1478, %v4672, -1e+30
      %v4685 = vsel %vm1478, %v4673, -1e+30
      %v4686 = vsel %vm1478, %v4674, -1e+30
      %v4687 = vsel %vm1478, %v4675, -1e+30
      %v4688 = vsel %vm1478, %v4676, -1e+30
      %v4689 = vsel %vm1478, %v4677, -1e+30
      %v4690 = vsel %vm1478, %v4678, -1e+30
      %v4691 = vsel %vm1478, %v4679, -1e+30
      %v4692 = vsel %vm1478, %v4680, -1e+30
      %v4693 = vsel %vm1478, %v4681, -1e+30
      %v4694 = vsel %vm1478, %v4682, -1e+30
      %4695 = vmax.xlane.f32.xlu0 %v4683
      %v4696 = vpop.xlane.xlu0 %4695
      %4697 = vmax.xlane.f32.xlu0 %v4684
      %v4698 = vpop.xlane.xlu0 %4697
      %4699 = vmax.xlane.f32.xlu0 %v4685
      %v4700 = vpop.xlane.xlu0 %4699
      %4701 = vmax.xlane.f32.xlu0 %v4686
      %v4702 = vpop.xlane.xlu0 %4701
      %4703 = vmax.xlane.f32.xlu0 %v4687
      %v4704 = vpop.xlane.xlu0 %4703
      %4705 = vmax.xlane.f32.xlu0 %v4688
      %v4706 = vpop.xlane.xlu0 %4705
      %4707 = vmax.xlane.f32.xlu0 %v4689
      %v4708 = vpop.xlane.xlu0 %4707
      %4709 = vmax.xlane.f32.xlu0 %v4690
      %v4710 = vpop.xlane.xlu0 %4709
      %4711 = vmax.xlane.f32.xlu0 %v4691
      %v4712 = vpop.xlane.xlu0 %4711
      %4713 = vmax.xlane.f32.xlu0 %v4692
      %v4714 = vpop.xlane.xlu0 %4713
      %4715 = vmax.xlane.f32.xlu0 %v4693
      %v4716 = vpop.xlane.xlu0 %4715
      %4717 = vmax.xlane.f32.xlu0 %v4694
      %v4718 = vpop.xlane.xlu0 %4717
      %v4719 = vsub.f32 %v4683, %v4696
      %v4720 = vsub.f32 %v4684, %v4698
      %v4721 = vsub.f32 %v4685, %v4700
      %v4722 = vsub.f32 %v4686, %v4702
      %v4723 = vsub.f32 %v4687, %v4704
      %v4724 = vsub.f32 %v4688, %v4706
      %v4725 = vsub.f32 %v4689, %v4708
      %v4726 = vsub.f32 %v4690, %v4710
      %v4727 = vsub.f32 %v4691, %v4712
      %v4728 = vsub.f32 %v4692, %v4714
      %v4729 = vsub.f32 %v4693, %v4716
      %v4730 = vsub.f32 %v4694, %v4718
      %v4731 = vmul.f32 %v4719, 1.442695
      %v4732 = vpow.pop %v4731
      %v4733 = vmul.f32 %v4720, 1.442695
      %v4734 = vpow.pop %v4733
      %v4735 = vmul.f32 %v4721, 1.442695
      %v4736 = vpow.pop %v4735
      %v4737 = vmul.f32 %v4722, 1.442695
      %v4738 = vpow.pop %v4737
      %v4739 = vmul.f32 %v4723, 1.442695
      %v4740 = vpow.pop %v4739
      %v4741 = vmul.f32 %v4724, 1.442695
      %v4742 = vpow.pop %v4741
      %v4743 = vmul.f32 %v4725, 1.442695
      %v4744 = vpow.pop %v4743
      %v4745 = vmul.f32 %v4726, 1.442695
      %v4746 = vpow.pop %v4745
      %v4747 = vmul.f32 %v4727, 1.442695
      %v4748 = vpow.pop %v4747
      %v4749 = vmul.f32 %v4728, 1.442695
      %v4750 = vpow.pop %v4749
      %v4751 = vmul.f32 %v4729, 1.442695
      %v4752 = vpow.pop %v4751
      %v4753 = vmul.f32 %v4730, 1.442695
      %v4754 = vpow.pop %v4753
      %4755 = vadd.xlane.f32.xlu0 %v4732
      %v4756 = vpop.xlane.xlu0 %4755
      %4757 = vadd.xlane.f32.xlu0 %v4734
      %v4758 = vpop.xlane.xlu0 %4757
      %4759 = vadd.xlane.f32.xlu0 %v4736
      %v4760 = vpop.xlane.xlu0 %4759
      %4761 = vadd.xlane.f32.xlu0 %v4738
      %v4762 = vpop.xlane.xlu0 %4761
      %4763 = vadd.xlane.f32.xlu0 %v4740
      %v4764 = vpop.xlane.xlu0 %4763
      %4765 = vadd.xlane.f32.xlu0 %v4742
      %v4766 = vpop.xlane.xlu0 %4765
      %4767 = vadd.xlane.f32.xlu0 %v4744
      %v4768 = vpop.xlane.xlu0 %4767
      %4769 = vadd.xlane.f32.xlu0 %v4746
      %v4770 = vpop.xlane.xlu0 %4769
      %4771 = vadd.xlane.f32.xlu0 %v4748
      %v4772 = vpop.xlane.xlu0 %4771
      %4773 = vadd.xlane.f32.xlu0 %v4750
      %v4774 = vpop.xlane.xlu0 %4773
      %4775 = vadd.xlane.f32.xlu0 %v4752
      %v4776 = vpop.xlane.xlu0 %4775
      %4777 = vadd.xlane.f32.xlu0 %v4754
      %v4778 = vpop.xlane.xlu0 %4777
      %v4779 = vrcp.pop %v4756
      %v4780 = vrcp.pop %v4758
      %v4781 = vrcp.pop %v4760
      %v4782 = vrcp.pop %v4762
      %v4783 = vrcp.pop %v4764
      %v4784 = vrcp.pop %v4766
      %v4785 = vrcp.pop %v4768
      %v4786 = vrcp.pop %v4770
      %v4787 = vrcp.pop %v4772
      %v4788 = vrcp.pop %v4774
      %v4789 = vrcp.pop %v4776
      %v4790 = vrcp.pop %v4778
      %v4791 = vmul.f32 %v4732, %v4779
      %v4792 = vmul.f32 %v4734, %v4780
      %v4793 = vmul.f32 %v4736, %v4781
      %v4794 = vmul.f32 %v4738, %v4782
      %v4795 = vmul.f32 %v4740, %v4783
      %v4796 = vmul.f32 %v4742, %v4784
      %v4797 = vmul.f32 %v4744, %v4785
      %v4798 = vmul.f32 %v4746, %v4786
      %v4799 = vmul.f32 %v4748, %v4787
      %v4800 = vmul.f32 %v4750, %v4788
      %v4801 = vmul.f32 %v4752, %v4789
      %v4802 = vmul.f32 %v4754, %v4790
      %v4803 = vpack.c.bf16 %v4792, %v4791
      %v4804 = vpack.c.bf16 %v4794, %v4793
      %v4805 = vpack.c.bf16 %v4796, %v4795
      %v4806 = vpack.c.bf16 %v4798, %v4797
      %v4807 = vpack.c.bf16 %v4800, %v4799
      %v4808 = vpack.c.bf16 %v4802, %v4801
      %v4809 = vpack.c.bf16 %v982, %v978
      %v4810 = vpack.c.bf16 %v992, %v988
      %v4811 = vpack.c.bf16 %v1002, %v998
      %v4812 = vpack.c.bf16 %v1012, %v1008
      %4813 = vmatprep.subr.bf16.mxu0 0
      %4814 = vmatpush1.bf16.xpose.msra.mxu0 %v4809
      %4815 = vmatprep.subr.bf16.mxu0 0
      %4816 = vmatpush1.bf16.xpose.msra.mxu0 %v4810
      %4817 = vmatprep.subr.bf16.mxu0 0
      %4818 = vmatpush1.bf16.xpose.msra.mxu0 %v4811
      %4819 = vmatprep.subr.bf16.mxu0 0
      %4820 = vmatpush1.bf16.xpose.msra.mxu0 %v4812
      %4821 = vmatprep.subr.bf16.mxu0 0
      %4822 = vmatpush1.bf16.xpose.msra.mxu0 0
      %4823 = vmatprep.subr.bf16.mxu0 0
      %4824 = vmatpush1.bf16.xpose.msra.mxu0 0
      %4825 = vmatprep.subr.bf16.mxu0 0
      %4826 = vmatpush1.bf16.xpose.msra.mxu0 0
      %4827 = vmatprep.subr.bf16.mxu0 0
      %4828 = vmatpush1.bf16.xpose.msra.mxu0 0
      %4829 = vmatprep.subr.bf16.mxu0 0
      %4830 = vmatpush1.bf16.xpose.msra.mxu0 0
      %4831 = vmatprep.subr.bf16.mxu0 0
      %4832 = vmatpush1.bf16.xpose.msra.mxu0 0
      %4833 = vmatprep.subr.bf16.mxu0 0
      %4834 = vmatpush1.bf16.xpose.msra.mxu0 0
      %4835 = vmatprep.subr.bf16.mxu0 0
      %4836 = vmatpush1.bf16.xpose.msra.mxu0 0
      %4837 = vmatprep.subr.bf16.mxu0 0
      %4838 = vmatpush1.bf16.xpose.msra.mxu0 0
      %4839 = vmatprep.subr.bf16.mxu0 0
      %4840 = vmatpush1.bf16.xpose.msra.mxu0 0
      %4841 = vmatprep.subr.bf16.mxu0 0
      %4842 = vmatpush1.bf16.xpose.msra.mxu0 0
      %4843 = vmatprep.subr.bf16.mxu0 0
      %4844 = vmatpush1.bf16.xpose.msra.mxu0 0
      %4845 = vmatprep.mubr.bf16.mxu0 0
      %4846 = vmatmul.mubr.bf16.gmra.mrb[0].mxu0 %v4803
      %v4847 = vpop.f32.mrb[0].mxu0
      %v4848 = vadd.f32 0.0, %v4847
      %v4849 = vpop.f32.mrb[0].mxu0
      %v4850 = vpop.f32.mrb[0].mxu0
      %v4851 = vadd.f32 0.0, %v4850
      %v4852 = vpop.f32.mrb[0].mxu0
      %4853 = vmatprep.mubr.bf16.mxu0 0
      %4854 = vmatmul.mubr.bf16.gmra.mrb[0].mxu0 %v4804
      %v4855 = vpop.f32.mrb[0].mxu0
      %v4856 = vadd.f32 0.0, %v4855
      %v4857 = vpop.f32.mrb[0].mxu0
      %v4858 = vpop.f32.mrb[0].mxu0
      %v4859 = vadd.f32 0.0, %v4858
      %v4860 = vpop.f32.mrb[0].mxu0
      %4861 = vmatprep.mubr.bf16.mxu0 0
      %4862 = vmatmul.mubr.bf16.gmra.mrb[0].mxu0 %v4805
      %v4863 = vpop.f32.mrb[0].mxu0
      %v4864 = vadd.f32 0.0, %v4863
      %v4865 = vpop.f32.mrb[0].mxu0
      %v4866 = vpop.f32.mrb[0].mxu0
      %v4867 = vadd.f32 0.0, %v4866
      %v4868 = vpop.f32.mrb[0].mxu0
      %4869 = vmatprep.mubr.bf16.mxu0 0
      %4870 = vmatmul.mubr.bf16.gmra.mrb[0].mxu0 %v4806
      %v4871 = vpop.f32.mrb[0].mxu0
      %v4872 = vadd.f32 0.0, %v4871
      %v4873 = vpop.f32.mrb[0].mxu0
      %v4874 = vpop.f32.mrb[0].mxu0
      %v4875 = vadd.f32 0.0, %v4874
      %v4876 = vpop.f32.mrb[0].mxu0
      %4877 = vmatprep.mubr.bf16.mxu0 0
      %4878 = vmatmul.mubr.bf16.gmra.mrb[0].mxu0 %v4807
      %v4879 = vpop.f32.mrb[0].mxu0
      %v4880 = vadd.f32 0.0, %v4879
      %v4881 = vpop.f32.mrb[0].mxu0
      %v4882 = vpop.f32.mrb[0].mxu0
      %v4883 = vadd.f32 0.0, %v4882
      %v4884 = vpop.f32.mrb[0].mxu0
      %4885 = vmatprep.mubr.bf16.mxu0 0
      %4886 = vmatmul.mubr.bf16.gmra.mrb[0].mxu0 %v4808
      %v4887 = vpop.f32.mrb[0].mxu0
      %v4888 = vadd.f32 0.0, %v4887
      %v4889 = vpop.f32.mrb[0].mxu0
      %v4890 = vpop.f32.mrb[0].mxu0
      %v4891 = vadd.f32 0.0, %v4890
      %v4892 = vpop.f32.mrb[0].mxu0
      %4893 = vdwg.mxu0
      %v4894 = vmul.f32 %v4848, %v4848
      %v4895 = vmul.f32 %v4851, %v4851
      %v4896 = vmul.f32 %v4856, %v4856
      %v4897 = vmul.f32 %v4859, %v4859
      %v4898 = vmul.f32 %v4864, %v4864
      %v4899 = vmul.f32 %v4867, %v4867
      %v4900 = vmul.f32 %v4872, %v4872
      %v4901 = vmul.f32 %v4875, %v4875
      %v4902 = vmul.f32 %v4880, %v4880
      %v4903 = vmul.f32 %v4883, %v4883
      %v4904 = vmul.f32 %v4888, %v4888
      %v4905 = vmul.f32 %v4891, %v4891
      %v4906 = vsel %vm357, %v4894, 0.0
      %4907 = vadd.xlane.f32.xlu0 %v4906
      %v4908 = vpop.xlane.xlu0 %4907
      %v4909 = vsel %vm357, %v4895, 0.0
      %4910 = vadd.xlane.f32.xlu0 %v4909
      %v4911 = vpop.xlane.xlu0 %4910
      %v4912 = vsel %vm357, %v4896, 0.0
      %4913 = vadd.xlane.f32.xlu0 %v4912
      %v4914 = vpop.xlane.xlu0 %4913
      %v4915 = vsel %vm357, %v4897, 0.0
      %4916 = vadd.xlane.f32.xlu0 %v4915
      %v4917 = vpop.xlane.xlu0 %4916
      %v4918 = vsel %vm357, %v4898, 0.0
      %4919 = vadd.xlane.f32.xlu0 %v4918
      %v4920 = vpop.xlane.xlu0 %4919
      %v4921 = vsel %vm357, %v4899, 0.0
      %4922 = vadd.xlane.f32.xlu0 %v4921
      %v4923 = vpop.xlane.xlu0 %4922
      %v4924 = vsel %vm357, %v4900, 0.0
      %4925 = vadd.xlane.f32.xlu0 %v4924
      %v4926 = vpop.xlane.xlu0 %4925
      %v4927 = vsel %vm357, %v4901, 0.0
      %4928 = vadd.xlane.f32.xlu0 %v4927
      %v4929 = vpop.xlane.xlu0 %4928
      %v4930 = vsel %vm357, %v4902, 0.0
      %4931 = vadd.xlane.f32.xlu0 %v4930
      %v4932 = vpop.xlane.xlu0 %4931
      %v4933 = vsel %vm357, %v4903, 0.0
      %4934 = vadd.xlane.f32.xlu0 %v4933
      %v4935 = vpop.xlane.xlu0 %4934
      %v4936 = vsel %vm357, %v4904, 0.0
      %4937 = vadd.xlane.f32.xlu0 %v4936
      %v4938 = vpop.xlane.xlu0 %4937
      %v4939 = vsel %vm357, %v4905, 0.0
      %4940 = vadd.xlane.f32.xlu0 %v4939
      %v4941 = vpop.xlane.xlu0 %4940
      %v4942 = vmax.f32 %v4908, 1e-24
      %v4943 = vmax.f32 %v4911, 1e-24
      %v4944 = vmax.f32 %v4914, 1e-24
      %v4945 = vmax.f32 %v4917, 1e-24
      %v4946 = vmax.f32 %v4920, 1e-24
      %v4947 = vmax.f32 %v4923, 1e-24
      %v4948 = vmax.f32 %v4926, 1e-24
      %v4949 = vmax.f32 %v4929, 1e-24
      %v4950 = vmax.f32 %v4932, 1e-24
      %v4951 = vmax.f32 %v4935, 1e-24
      %v4952 = vmax.f32 %v4938, 1e-24
      %v4953 = vmax.f32 %v4941, 1e-24
      %v4954 = vrsqrt.pop %v4942
      %v4955 = vrsqrt.pop %v4943
      %v4956 = vrsqrt.pop %v4944
      %v4957 = vrsqrt.pop %v4945
      %v4958 = vrsqrt.pop %v4946
      %v4959 = vrsqrt.pop %v4947
      %v4960 = vrsqrt.pop %v4948
      %v4961 = vrsqrt.pop %v4949
      %v4962 = vrsqrt.pop %v4950
      %v4963 = vrsqrt.pop %v4951
      %v4964 = vrsqrt.pop %v4952
      %v4965 = vrsqrt.pop %v4953
      %v4966 = vmul.f32 %v4848, %v4954
      %v4967 = vmul.f32 %v4851, %v4955
      %v4968 = vmul.f32 %v4856, %v4956
      %v4969 = vmul.f32 %v4859, %v4957
      %v4970 = vmul.f32 %v4864, %v4958
      %v4971 = vmul.f32 %v4867, %v4959
      %v4972 = vmul.f32 %v4872, %v4960
      %v4973 = vmul.f32 %v4875, %v4961
      %v4974 = vmul.f32 %v4880, %v4962
      %v4975 = vmul.f32 %v4883, %v4963
      %v4976 = vmul.f32 %v4888, %v4964
      %v4977 = vmul.f32 %v4891, %v4965
      %v4978 = vpack.c.bf16 %v4967, %v4966
      %v4979 = vpack.c.bf16 %v4969, %v4968
      %v4980 = vpack.c.bf16 %v4971, %v4970
      %v4981 = vpack.c.bf16 %v4973, %v4972
      %v4982 = vpack.c.bf16 %v4975, %v4974
      %v4983 = vpack.c.bf16 %v4977, %v4976
      %v4985 = vsel %vm357, %v4978, 0
      %v4988 = vsel %vm357, %v4979, 0
      %4990 = vmatprep.subr.bf16.mxu0 0
      %4991 = vmatpush1.bf16.xpose.msra.mxu0 %v4417
      %4992 = vmatprep.subr.bf16.mxu0 0
      %4993 = vmatpush1.bf16.xpose.msra.mxu0 %v4420
      %4994 = vmatprep.subr.bf16.mxu0 0
      %4995 = vmatpush1.bf16.xpose.msra.mxu0 0
      %4996 = vmatprep.subr.bf16.mxu0 0
      %4997 = vmatpush1.bf16.xpose.msra.mxu0 0
      %4998 = vmatprep.subr.bf16.mxu0 0
      %4999 = vmatpush1.bf16.xpose.msra.mxu0 0
      %5000 = vmatprep.subr.bf16.mxu0 0
      %5001 = vmatpush1.bf16.xpose.msra.mxu0 0
      %5002 = vmatprep.subr.bf16.mxu0 0
      %5003 = vmatpush1.bf16.xpose.msra.mxu0 0
      %5004 = vmatprep.subr.bf16.mxu0 0
      %5005 = vmatpush1.bf16.xpose.msra.mxu0 0
      %5006 = vmatprep.subr.bf16.mxu0 0
      %5007 = vmatpush1.bf16.xpose.msra.mxu0 0
      %5008 = vmatprep.subr.bf16.mxu0 0
      %5009 = vmatpush1.bf16.xpose.msra.mxu0 0
      %5010 = vmatprep.subr.bf16.mxu0 0
      %5011 = vmatpush1.bf16.xpose.msra.mxu0 0
      %5012 = vmatprep.subr.bf16.mxu0 0
      %5013 = vmatpush1.bf16.xpose.msra.mxu0 0
      %5014 = vmatprep.subr.bf16.mxu0 0
      %5015 = vmatpush1.bf16.xpose.msra.mxu0 0
      %5016 = vmatprep.subr.bf16.mxu0 0
      %5017 = vmatpush1.bf16.xpose.msra.mxu0 0
      %5018 = vmatprep.subr.bf16.mxu0 0
      %5019 = vmatpush1.bf16.xpose.msra.mxu0 0
      %5020 = vmatprep.subr.bf16.mxu0 0
      %5021 = vmatpush1.bf16.xpose.msra.mxu0 0
      %5022 = vmatprep.mubr.bf16.mxu0 0
      %5023 = vmatmul.mubr.bf16.gmra.mrb[0].mxu0 %v4985
      %v5024 = vpop.f32.mrb[0].mxu0
      %v5025 = vadd.f32 1.0, %v5024
      %v5026 = vpop.f32.mrb[0].mxu0
      %v5027 = vpop.f32.mrb[0].mxu0
      %v5028 = vadd.f32 1.0, %v5027
      %v5029 = vpop.f32.mrb[0].mxu0
      %5030 = vmatprep.mubr.bf16.mxu0 0
      %5031 = vmatmul.mubr.bf16.gmra.mrb[0].mxu0 %v4988
      %v5032 = vpop.f32.mrb[0].mxu0
      %v5033 = vadd.f32 1.0, %v5032
      %v5034 = vpop.f32.mrb[0].mxu0
      %v5035 = vpop.f32.mrb[0].mxu0
      %v5036 = vadd.f32 1.0, %v5035
      %v5037 = vpop.f32.mrb[0].mxu0
      %5038 = vdwg.mxu0
      %v5040 = vsel %vm357, %v4980, 0
      %v5043 = vsel %vm357, %v4981, 0
      %5045 = vmatprep.subr.bf16.mxu0 0
      %5046 = vmatpush1.bf16.xpose.msra.mxu0 %v4478
      %5047 = vmatprep.subr.bf16.mxu0 0
      %5048 = vmatpush1.bf16.xpose.msra.mxu0 %v4481
      %5049 = vmatprep.subr.bf16.mxu0 0
      %5050 = vmatpush1.bf16.xpose.msra.mxu0 0
      %5051 = vmatprep.subr.bf16.mxu0 0
      %5052 = vmatpush1.bf16.xpose.msra.mxu0 0
      %5053 = vmatprep.subr.bf16.mxu0 0
      %5054 = vmatpush1.bf16.xpose.msra.mxu0 0
      %5055 = vmatprep.subr.bf16.mxu0 0
      %5056 = vmatpush1.bf16.xpose.msra.mxu0 0
      %5057 = vmatprep.subr.bf16.mxu0 0
      %5058 = vmatpush1.bf16.xpose.msra.mxu0 0
      %5059 = vmatprep.subr.bf16.mxu0 0
      %5060 = vmatpush1.bf16.xpose.msra.mxu0 0
      %5061 = vmatprep.subr.bf16.mxu0 0
      %5062 = vmatpush1.bf16.xpose.msra.mxu0 0
      %5063 = vmatprep.subr.bf16.mxu0 0
      %5064 = vmatpush1.bf16.xpose.msra.mxu0 0
      %5065 = vmatprep.subr.bf16.mxu0 0
      %5066 = vmatpush1.bf16.xpose.msra.mxu0 0
      %5067 = vmatprep.subr.bf16.mxu0 0
      %5068 = vmatpush1.bf16.xpose.msra.mxu0 0
      %5069 = vmatprep.subr.bf16.mxu0 0
      %5070 = vmatpush1.bf16.xpose.msra.mxu0 0
      %5071 = vmatprep.subr.bf16.mxu0 0
      %5072 = vmatpush1.bf16.xpose.msra.mxu0 0
      %5073 = vmatprep.subr.bf16.mxu0 0
      %5074 = vmatpush1.bf16.xpose.msra.mxu0 0
      %5075 = vmatprep.subr.bf16.mxu0 0
      %5076 = vmatpush1.bf16.xpose.msra.mxu0 0
      %5077 = vmatprep.mubr.bf16.mxu0 0
      %5078 = vmatmul.mubr.bf16.gmra.mrb[0].mxu0 %v5040
      %v5079 = vpop.f32.mrb[0].mxu0
      %v5080 = vadd.f32 1.0, %v5079
      %v5081 = vpop.f32.mrb[0].mxu0
      %v5082 = vpop.f32.mrb[0].mxu0
      %v5083 = vadd.f32 1.0, %v5082
      %v5084 = vpop.f32.mrb[0].mxu0
      %5085 = vmatprep.mubr.bf16.mxu0 0
      %5086 = vmatmul.mubr.bf16.gmra.mrb[0].mxu0 %v5043
      %v5087 = vpop.f32.mrb[0].mxu0
      %v5088 = vadd.f32 1.0, %v5087
      %v5089 = vpop.f32.mrb[0].mxu0
      %v5090 = vpop.f32.mrb[0].mxu0
      %v5091 = vadd.f32 1.0, %v5090
      %v5092 = vpop.f32.mrb[0].mxu0
      %5093 = vdwg.mxu0
      %v5095 = vsel %vm357, %v4982, 0
      %v5098 = vsel %vm357, %v4983, 0
      %5100 = vmatprep.subr.bf16.mxu0 0
      %5101 = vmatpush1.bf16.xpose.msra.mxu0 %v4539
      %5102 = vmatprep.subr.bf16.mxu0 0
      %5103 = vmatpush1.bf16.xpose.msra.mxu0 %v4542
      %5104 = vmatprep.subr.bf16.mxu0 0
      %5105 = vmatpush1.bf16.xpose.msra.mxu0 0
      %5106 = vmatprep.subr.bf16.mxu0 0
      %5107 = vmatpush1.bf16.xpose.msra.mxu0 0
      %5108 = vmatprep.subr.bf16.mxu0 0
      %5109 = vmatpush1.bf16.xpose.msra.mxu0 0
      %5110 = vmatprep.subr.bf16.mxu0 0
      %5111 = vmatpush1.bf16.xpose.msra.mxu0 0
      %5112 = vmatprep.subr.bf16.mxu0 0
      %5113 = vmatpush1.bf16.xpose.msra.mxu0 0
      %5114 = vmatprep.subr.bf16.mxu0 0
      %5115 = vmatpush1.bf16.xpose.msra.mxu0 0
      %5116 = vmatprep.subr.bf16.mxu0 0
      %5117 = vmatpush1.bf16.xpose.msra.mxu0 0
      %5118 = vmatprep.subr.bf16.mxu0 0
      %5119 = vmatpush1.bf16.xpose.msra.mxu0 0
      %5120 = vmatprep.subr.bf16.mxu0 0
      %5121 = vmatpush1.bf16.xpose.msra.mxu0 0
      %5122 = vmatprep.subr.bf16.mxu0 0
      %5123 = vmatpush1.bf16.xpose.msra.mxu0 0
      %5124 = vmatprep.subr.bf16.mxu0 0
      %5125 = vmatpush1.bf16.xpose.msra.mxu0 0
      %5126 = vmatprep.subr.bf16.mxu0 0
      %5127 = vmatpush1.bf16.xpose.msra.mxu0 0
      %5128 = vmatprep.subr.bf16.mxu0 0
      %5129 = vmatpush1.bf16.xpose.msra.mxu0 0
      %5130 = vmatprep.subr.bf16.mxu0 0
      %5131 = vmatpush1.bf16.xpose.msra.mxu0 0
      %5132 = vmatprep.mubr.bf16.mxu0 0
      %5133 = vmatmul.mubr.bf16.gmra.mrb[0].mxu0 %v5095
      %v5134 = vpop.f32.mrb[0].mxu0
      %v5135 = vadd.f32 1.0, %v5134
      %v5136 = vpop.f32.mrb[0].mxu0
      %v5137 = vpop.f32.mrb[0].mxu0
      %v5138 = vadd.f32 1.0, %v5137
      %v5139 = vpop.f32.mrb[0].mxu0
      %5140 = vmatprep.mubr.bf16.mxu0 0
      %5141 = vmatmul.mubr.bf16.gmra.mrb[0].mxu0 %v5098
      %v5142 = vpop.f32.mrb[0].mxu0
      %v5143 = vadd.f32 1.0, %v5142
      %v5144 = vpop.f32.mrb[0].mxu0
      %v5145 = vpop.f32.mrb[0].mxu0
      %v5146 = vadd.f32 1.0, %v5145
      %v5147 = vpop.f32.mrb[0].mxu0
      %5148 = vdwg.mxu0
      %v5149 = vmul.f32 %v5025, 0.5
      %v5150 = vmul.f32 %v5028, 0.5
      %v5151 = vmul.f32 %v5033, 0.5
      %v5152 = vmul.f32 %v5036, 0.5
      %v5153 = vmul.f32 %v5080, 0.5
      %v5154 = vmul.f32 %v5083, 0.5
      %v5155 = vmul.f32 %v5088, 0.5
      %v5156 = vmul.f32 %v5091, 0.5
      %v5157 = vmul.f32 %v5135, 0.5
      %v5158 = vmul.f32 %v5138, 0.5
      %v5159 = vmul.f32 %v5143, 0.5
      %v5160 = vmul.f32 %v5146, 0.5
      %v5161 = vsel %vm2803, %v5149, -1e+30
      %v5162 = vsel %vm2804, %v5150, -1e+30
      %v5163 = vsel %vm2805, %v5151, -1e+30
      %v5164 = vsel %vm2806, %v5152, -1e+30
      %v5165 = vsel %vm2803, %v5153, -1e+30
      %v5166 = vsel %vm2804, %v5154, -1e+30
      %v5167 = vsel %vm2805, %v5155, -1e+30
      %v5168 = vsel %vm2806, %v5156, -1e+30
      %v5169 = vsel %vm2803, %v5157, -1e+30
      %v5170 = vsel %vm2804, %v5158, -1e+30
      %v5171 = vsel %vm2805, %v5159, -1e+30
      %v5172 = vsel %vm2806, %v5160, -1e+30
      %v5173 = vsel %vm4617, %v5161, -inf
      %v5174 = vsel %vm4617, %v5162, -inf
      %v5175 = vsel %vm4617, %v5163, -inf
      %v5176 = vmax.f32 %v5173, %v5175
      %v5177 = vsel %vm4617, %v5164, -inf
      %v5178 = vmax.f32 %v5174, %v5177
      %v5179 = vmax.f32 %v5176, %v5178
      %v5180 = vrot.slane %v5179, 4
      %v5181 = vmax.f32 %v5179, %v5180
      %v5182 = vrot.slane %v5181, 2
      %v5183 = vmax.f32 %v5181, %v5182
      %v5184 = vrot.slane %v5183, 1
      %v5185 = vmax.f32 %v5183, %v5184
      %v5186 = vsel %vm4617, %v5165, -inf
      %v5187 = vsel %vm4617, %v5166, -inf
      %v5188 = vsel %vm4617, %v5167, -inf
      %v5189 = vmax.f32 %v5186, %v5188
      %v5190 = vsel %vm4617, %v5168, -inf
      %v5191 = vmax.f32 %v5187, %v5190
      %v5192 = vmax.f32 %v5189, %v5191
      %v5193 = vrot.slane %v5192, 4
      %v5194 = vmax.f32 %v5192, %v5193
      %v5195 = vrot.slane %v5194, 2
      %v5196 = vmax.f32 %v5194, %v5195
      %v5197 = vrot.slane %v5196, 1
      %v5198 = vmax.f32 %v5196, %v5197
      %v5199 = vsel %vm4617, %v5169, -inf
      %v5200 = vsel %vm4617, %v5170, -inf
      %v5201 = vsel %vm4617, %v5171, -inf
      %v5202 = vmax.f32 %v5199, %v5201
      %v5203 = vsel %vm4617, %v5172, -inf
      %v5204 = vmax.f32 %v5200, %v5203
      %v5205 = vmax.f32 %v5202, %v5204
      %v5206 = vrot.slane %v5205, 4
      %v5207 = vmax.f32 %v5205, %v5206
      %v5208 = vrot.slane %v5207, 2
      %v5209 = vmax.f32 %v5207, %v5208
      %v5210 = vrot.slane %v5209, 1
      %v5211 = vmax.f32 %v5209, %v5210
      %v5212 = vsel %vm4658, %v5185, 0.0
      %v5213 = vsel %vm4658, %v5198, 0.0
      %v5214 = vsel %vm4658, %v5211, 0.0
      %v5215 = vsel %vm4617, %v5212, 0.0
      %5216 = vadd.xlane.f32.xlu0 %v5215
      %v5217 = vpop.xlane.xlu0 %5216
      %v5218 = vsel %vm4617, %v5213, 0.0
      %5219 = vadd.xlane.f32.xlu0 %v5218
      %v5220 = vpop.xlane.xlu0 %5219
      %v5221 = vsel %vm4617, %v5214, 0.0
      %5222 = vadd.xlane.f32.xlu0 %v5221
      %v5223 = vpop.xlane.xlu0 %5222
      %v5224 = vmul.f32 %v1324, %v3995
      %v5225 = vmul.f32 %v1328, %v3996
      %v5226 = vmul.f32 %v1334, %v3997
      %v5227 = vmul.f32 %v1338, %v3998
      %v5228 = vmul.f32 %v1344, %v3999
      %v5229 = vmul.f32 %v1348, %v4000
      %v5230 = vmul.f32 %v1354, %v4001
      %v5231 = vmul.f32 %v1358, %v4002
      %v5232 = vmul.f32 %v1364, %v4003
      %v5233 = vmul.f32 %v1368, %v4004
      %v5234 = vmul.f32 %v1374, %v4005
      %v5235 = vmul.f32 %v1378, %v4006
      %v5236 = vsel %vm1478, %v5224, -1e+30
      %v5237 = vsel %vm1478, %v5225, -1e+30
      %v5238 = vsel %vm1478, %v5226, -1e+30
      %v5239 = vsel %vm1478, %v5227, -1e+30
      %v5240 = vsel %vm1478, %v5228, -1e+30
      %v5241 = vsel %vm1478, %v5229, -1e+30
      %v5242 = vsel %vm1478, %v5230, -1e+30
      %v5243 = vsel %vm1478, %v5231, -1e+30
      %v5244 = vsel %vm1478, %v5232, -1e+30
      %v5245 = vsel %vm1478, %v5233, -1e+30
      %v5246 = vsel %vm1478, %v5234, -1e+30
      %v5247 = vsel %vm1478, %v5235, -1e+30
      %5248 = vmax.xlane.f32.xlu0 %v5236
      %v5249 = vpop.xlane.xlu0 %5248
      %5250 = vmax.xlane.f32.xlu0 %v5237
      %v5251 = vpop.xlane.xlu0 %5250
      %5252 = vmax.xlane.f32.xlu0 %v5238
      %v5253 = vpop.xlane.xlu0 %5252
      %5254 = vmax.xlane.f32.xlu0 %v5239
      %v5255 = vpop.xlane.xlu0 %5254
      %5256 = vmax.xlane.f32.xlu0 %v5240
      %v5257 = vpop.xlane.xlu0 %5256
      %5258 = vmax.xlane.f32.xlu0 %v5241
      %v5259 = vpop.xlane.xlu0 %5258
      %5260 = vmax.xlane.f32.xlu0 %v5242
      %v5261 = vpop.xlane.xlu0 %5260
      %5262 = vmax.xlane.f32.xlu0 %v5243
      %v5263 = vpop.xlane.xlu0 %5262
      %5264 = vmax.xlane.f32.xlu0 %v5244
      %v5265 = vpop.xlane.xlu0 %5264
      %5266 = vmax.xlane.f32.xlu0 %v5245
      %v5267 = vpop.xlane.xlu0 %5266
      %5268 = vmax.xlane.f32.xlu0 %v5246
      %v5269 = vpop.xlane.xlu0 %5268
      %5270 = vmax.xlane.f32.xlu0 %v5247
      %v5271 = vpop.xlane.xlu0 %5270
      %v5272 = vsub.f32 %v5236, %v5249
      %v5273 = vsub.f32 %v5237, %v5251
      %v5274 = vsub.f32 %v5238, %v5253
      %v5275 = vsub.f32 %v5239, %v5255
      %v5276 = vsub.f32 %v5240, %v5257
      %v5277 = vsub.f32 %v5241, %v5259
      %v5278 = vsub.f32 %v5242, %v5261
      %v5279 = vsub.f32 %v5243, %v5263
      %v5280 = vsub.f32 %v5244, %v5265
      %v5281 = vsub.f32 %v5245, %v5267
      %v5282 = vsub.f32 %v5246, %v5269
      %v5283 = vsub.f32 %v5247, %v5271
      %v5284 = vmul.f32 %v5272, 1.442695
      %v5285 = vpow.pop %v5284
      %v5286 = vmul.f32 %v5273, 1.442695
      %v5287 = vpow.pop %v5286
      %v5288 = vmul.f32 %v5274, 1.442695
      %v5289 = vpow.pop %v5288
      %v5290 = vmul.f32 %v5275, 1.442695
      %v5291 = vpow.pop %v5290
      %v5292 = vmul.f32 %v5276, 1.442695
      %v5293 = vpow.pop %v5292
      %v5294 = vmul.f32 %v5277, 1.442695
      %v5295 = vpow.pop %v5294
      %v5296 = vmul.f32 %v5278, 1.442695
      %v5297 = vpow.pop %v5296
      %v5298 = vmul.f32 %v5279, 1.442695
      %v5299 = vpow.pop %v5298
      %v5300 = vmul.f32 %v5280, 1.442695
      %v5301 = vpow.pop %v5300
      %v5302 = vmul.f32 %v5281, 1.442695
      %v5303 = vpow.pop %v5302
      %v5304 = vmul.f32 %v5282, 1.442695
      %v5305 = vpow.pop %v5304
      %v5306 = vmul.f32 %v5283, 1.442695
      %v5307 = vpow.pop %v5306
      %5308 = vadd.xlane.f32.xlu0 %v5285
      %v5309 = vpop.xlane.xlu0 %5308
      %5310 = vadd.xlane.f32.xlu0 %v5287
      %v5311 = vpop.xlane.xlu0 %5310
      %5312 = vadd.xlane.f32.xlu0 %v5289
      %v5313 = vpop.xlane.xlu0 %5312
      %5314 = vadd.xlane.f32.xlu0 %v5291
      %v5315 = vpop.xlane.xlu0 %5314
      %5316 = vadd.xlane.f32.xlu0 %v5293
      %v5317 = vpop.xlane.xlu0 %5316
      %5318 = vadd.xlane.f32.xlu0 %v5295
      %v5319 = vpop.xlane.xlu0 %5318
      %5320 = vadd.xlane.f32.xlu0 %v5297
      %v5321 = vpop.xlane.xlu0 %5320
      %5322 = vadd.xlane.f32.xlu0 %v5299
      %v5323 = vpop.xlane.xlu0 %5322
      %5324 = vadd.xlane.f32.xlu0 %v5301
      %v5325 = vpop.xlane.xlu0 %5324
      %5326 = vadd.xlane.f32.xlu0 %v5303
      %v5327 = vpop.xlane.xlu0 %5326
      %5328 = vadd.xlane.f32.xlu0 %v5305
      %v5329 = vpop.xlane.xlu0 %5328
      %5330 = vadd.xlane.f32.xlu0 %v5307
      %v5331 = vpop.xlane.xlu0 %5330
      %v5332 = vrcp.pop %v5309
      %v5333 = vrcp.pop %v5311
      %v5334 = vrcp.pop %v5313
      %v5335 = vrcp.pop %v5315
      %v5336 = vrcp.pop %v5317
      %v5337 = vrcp.pop %v5319
      %v5338 = vrcp.pop %v5321
      %v5339 = vrcp.pop %v5323
      %v5340 = vrcp.pop %v5325
      %v5341 = vrcp.pop %v5327
      %v5342 = vrcp.pop %v5329
      %v5343 = vrcp.pop %v5331
      %v5344 = vmul.f32 %v5285, %v5332
      %v5345 = vmul.f32 %v5287, %v5333
      %v5346 = vmul.f32 %v5289, %v5334
      %v5347 = vmul.f32 %v5291, %v5335
      %v5348 = vmul.f32 %v5293, %v5336
      %v5349 = vmul.f32 %v5295, %v5337
      %v5350 = vmul.f32 %v5297, %v5338
      %v5351 = vmul.f32 %v5299, %v5339
      %v5352 = vmul.f32 %v5301, %v5340
      %v5353 = vmul.f32 %v5303, %v5341
      %v5354 = vmul.f32 %v5305, %v5342
      %v5355 = vmul.f32 %v5307, %v5343
      %v5356 = vpack.c.bf16 %v5345, %v5344
      %v5357 = vpack.c.bf16 %v5347, %v5346
      %v5358 = vpack.c.bf16 %v5349, %v5348
      %v5359 = vpack.c.bf16 %v5351, %v5350
      %v5360 = vpack.c.bf16 %v5353, %v5352
      %v5361 = vpack.c.bf16 %v5355, %v5354
      %v5362 = vpack.c.bf16 %v1053, %v1049
      %v5363 = vpack.c.bf16 %v1063, %v1059
      %v5364 = vpack.c.bf16 %v1073, %v1069
      %v5365 = vpack.c.bf16 %v1083, %v1079
      %5366 = vmatprep.subr.bf16.mxu0 0
      %5367 = vmatpush1.bf16.xpose.msra.mxu0 %v5362
      %5368 = vmatprep.subr.bf16.mxu0 0
      %5369 = vmatpush1.bf16.xpose.msra.mxu0 %v5363
      %5370 = vmatprep.subr.bf16.mxu0 0
      %5371 = vmatpush1.bf16.xpose.msra.mxu0 %v5364
      %5372 = vmatprep.subr.bf16.mxu0 0
      %5373 = vmatpush1.bf16.xpose.msra.mxu0 %v5365
      %5374 = vmatprep.subr.bf16.mxu0 0
      %5375 = vmatpush1.bf16.xpose.msra.mxu0 0
      %5376 = vmatprep.subr.bf16.mxu0 0
      %5377 = vmatpush1.bf16.xpose.msra.mxu0 0
      %5378 = vmatprep.subr.bf16.mxu0 0
      %5379 = vmatpush1.bf16.xpose.msra.mxu0 0
      %5380 = vmatprep.subr.bf16.mxu0 0
      %5381 = vmatpush1.bf16.xpose.msra.mxu0 0
      %5382 = vmatprep.subr.bf16.mxu0 0
      %5383 = vmatpush1.bf16.xpose.msra.mxu0 0
      %5384 = vmatprep.subr.bf16.mxu0 0
      %5385 = vmatpush1.bf16.xpose.msra.mxu0 0
      %5386 = vmatprep.subr.bf16.mxu0 0
      %5387 = vmatpush1.bf16.xpose.msra.mxu0 0
      %5388 = vmatprep.subr.bf16.mxu0 0
      %5389 = vmatpush1.bf16.xpose.msra.mxu0 0
      %5390 = vmatprep.subr.bf16.mxu0 0
      %5391 = vmatpush1.bf16.xpose.msra.mxu0 0
      %5392 = vmatprep.subr.bf16.mxu0 0
      %5393 = vmatpush1.bf16.xpose.msra.mxu0 0
      %5394 = vmatprep.subr.bf16.mxu0 0
      %5395 = vmatpush1.bf16.xpose.msra.mxu0 0
      %5396 = vmatprep.subr.bf16.mxu0 0
      %5397 = vmatpush1.bf16.xpose.msra.mxu0 0
      %5398 = vmatprep.mubr.bf16.mxu0 0
      %5399 = vmatmul.mubr.bf16.gmra.mrb[0].mxu0 %v5356
      %v5400 = vpop.f32.mrb[0].mxu0
      %v5401 = vadd.f32 0.0, %v5400
      %v5402 = vpop.f32.mrb[0].mxu0
      %v5403 = vpop.f32.mrb[0].mxu0
      %v5404 = vadd.f32 0.0, %v5403
      %v5405 = vpop.f32.mrb[0].mxu0
      %5406 = vmatprep.mubr.bf16.mxu0 0
      %5407 = vmatmul.mubr.bf16.gmra.mrb[0].mxu0 %v5357
      %v5408 = vpop.f32.mrb[0].mxu0
      %v5409 = vadd.f32 0.0, %v5408
      %v5410 = vpop.f32.mrb[0].mxu0
      %v5411 = vpop.f32.mrb[0].mxu0
      %v5412 = vadd.f32 0.0, %v5411
      %v5413 = vpop.f32.mrb[0].mxu0
      %5414 = vmatprep.mubr.bf16.mxu0 0
      %5415 = vmatmul.mubr.bf16.gmra.mrb[0].mxu0 %v5358
      %v5416 = vpop.f32.mrb[0].mxu0
      %v5417 = vadd.f32 0.0, %v5416
      %v5418 = vpop.f32.mrb[0].mxu0
      %v5419 = vpop.f32.mrb[0].mxu0
      %v5420 = vadd.f32 0.0, %v5419
      %v5421 = vpop.f32.mrb[0].mxu0
      %5422 = vmatprep.mubr.bf16.mxu0 0
      %5423 = vmatmul.mubr.bf16.gmra.mrb[0].mxu0 %v5359
      %v5424 = vpop.f32.mrb[0].mxu0
      %v5425 = vadd.f32 0.0, %v5424
      %v5426 = vpop.f32.mrb[0].mxu0
      %v5427 = vpop.f32.mrb[0].mxu0
      %v5428 = vadd.f32 0.0, %v5427
      %v5429 = vpop.f32.mrb[0].mxu0
      %5430 = vmatprep.mubr.bf16.mxu0 0
      %5431 = vmatmul.mubr.bf16.gmra.mrb[0].mxu0 %v5360
      %v5432 = vpop.f32.mrb[0].mxu0
      %v5433 = vadd.f32 0.0, %v5432
      %v5434 = vpop.f32.mrb[0].mxu0
      %v5435 = vpop.f32.mrb[0].mxu0
      %v5436 = vadd.f32 0.0, %v5435
      %v5437 = vpop.f32.mrb[0].mxu0
      %5438 = vmatprep.mubr.bf16.mxu0 0
      %5439 = vmatmul.mubr.bf16.gmra.mrb[0].mxu0 %v5361
      %v5440 = vpop.f32.mrb[0].mxu0
      %v5441 = vadd.f32 0.0, %v5440
      %v5442 = vpop.f32.mrb[0].mxu0
      %v5443 = vpop.f32.mrb[0].mxu0
      %v5444 = vadd.f32 0.0, %v5443
      %v5445 = vpop.f32.mrb[0].mxu0
      %5446 = vdwg.mxu0
      %v5447 = vmul.f32 %v5401, %v5401
      %v5448 = vmul.f32 %v5404, %v5404
      %v5449 = vmul.f32 %v5409, %v5409
      %v5450 = vmul.f32 %v5412, %v5412
      %v5451 = vmul.f32 %v5417, %v5417
      %v5452 = vmul.f32 %v5420, %v5420
      %v5453 = vmul.f32 %v5425, %v5425
      %v5454 = vmul.f32 %v5428, %v5428
      %v5455 = vmul.f32 %v5433, %v5433
      %v5456 = vmul.f32 %v5436, %v5436
      %v5457 = vmul.f32 %v5441, %v5441
      %v5458 = vmul.f32 %v5444, %v5444
      %v5459 = vsel %vm357, %v5447, 0.0
      %5460 = vadd.xlane.f32.xlu0 %v5459
      %v5461 = vpop.xlane.xlu0 %5460
      %v5462 = vsel %vm357, %v5448, 0.0
      %5463 = vadd.xlane.f32.xlu0 %v5462
      %v5464 = vpop.xlane.xlu0 %5463
      %v5465 = vsel %vm357, %v5449, 0.0
      %5466 = vadd.xlane.f32.xlu0 %v5465
      %v5467 = vpop.xlane.xlu0 %5466
      %v5468 = vsel %vm357, %v5450, 0.0
      %5469 = vadd.xlane.f32.xlu0 %v5468
      %v5470 = vpop.xlane.xlu0 %5469
      %v5471 = vsel %vm357, %v5451, 0.0
      %5472 = vadd.xlane.f32.xlu0 %v5471
      %v5473 = vpop.xlane.xlu0 %5472
      %v5474 = vsel %vm357, %v5452, 0.0
      %5475 = vadd.xlane.f32.xlu0 %v5474
      %v5476 = vpop.xlane.xlu0 %5475
      %v5477 = vsel %vm357, %v5453, 0.0
      %5478 = vadd.xlane.f32.xlu0 %v5477
      %v5479 = vpop.xlane.xlu0 %5478
      %v5480 = vsel %vm357, %v5454, 0.0
      %5481 = vadd.xlane.f32.xlu0 %v5480
      %v5482 = vpop.xlane.xlu0 %5481
      %v5483 = vsel %vm357, %v5455, 0.0
      %5484 = vadd.xlane.f32.xlu0 %v5483
      %v5485 = vpop.xlane.xlu0 %5484
      %v5486 = vsel %vm357, %v5456, 0.0
      %5487 = vadd.xlane.f32.xlu0 %v5486
      %v5488 = vpop.xlane.xlu0 %5487
      %v5489 = vsel %vm357, %v5457, 0.0
      %5490 = vadd.xlane.f32.xlu0 %v5489
      %v5491 = vpop.xlane.xlu0 %5490
      %v5492 = vsel %vm357, %v5458, 0.0
      %5493 = vadd.xlane.f32.xlu0 %v5492
      %v5494 = vpop.xlane.xlu0 %5493
      %v5495 = vmax.f32 %v5461, 1e-24
      %v5496 = vmax.f32 %v5464, 1e-24
      %v5497 = vmax.f32 %v5467, 1e-24
      %v5498 = vmax.f32 %v5470, 1e-24
      %v5499 = vmax.f32 %v5473, 1e-24
      %v5500 = vmax.f32 %v5476, 1e-24
      %v5501 = vmax.f32 %v5479, 1e-24
      %v5502 = vmax.f32 %v5482, 1e-24
      %v5503 = vmax.f32 %v5485, 1e-24
      %v5504 = vmax.f32 %v5488, 1e-24
      %v5505 = vmax.f32 %v5491, 1e-24
      %v5506 = vmax.f32 %v5494, 1e-24
      %v5507 = vrsqrt.pop %v5495
      %v5508 = vrsqrt.pop %v5496
      %v5509 = vrsqrt.pop %v5497
      %v5510 = vrsqrt.pop %v5498
      %v5511 = vrsqrt.pop %v5499
      %v5512 = vrsqrt.pop %v5500
      %v5513 = vrsqrt.pop %v5501
      %v5514 = vrsqrt.pop %v5502
      %v5515 = vrsqrt.pop %v5503
      %v5516 = vrsqrt.pop %v5504
      %v5517 = vrsqrt.pop %v5505
      %v5518 = vrsqrt.pop %v5506
      %v5519 = vmul.f32 %v5401, %v5507
      %v5520 = vmul.f32 %v5404, %v5508
      %v5521 = vmul.f32 %v5409, %v5509
      %v5522 = vmul.f32 %v5412, %v5510
      %v5523 = vmul.f32 %v5417, %v5511
      %v5524 = vmul.f32 %v5420, %v5512
      %v5525 = vmul.f32 %v5425, %v5513
      %v5526 = vmul.f32 %v5428, %v5514
      %v5527 = vmul.f32 %v5433, %v5515
      %v5528 = vmul.f32 %v5436, %v5516
      %v5529 = vmul.f32 %v5441, %v5517
      %v5530 = vmul.f32 %v5444, %v5518
      %v5531 = vpack.c.bf16 %v5520, %v5519
      %v5532 = vpack.c.bf16 %v5522, %v5521
      %v5533 = vpack.c.bf16 %v5524, %v5523
      %v5534 = vpack.c.bf16 %v5526, %v5525
      %v5535 = vpack.c.bf16 %v5528, %v5527
      %v5536 = vpack.c.bf16 %v5530, %v5529
      %v5538 = vsel %vm357, %v5531, 0
      %v5541 = vsel %vm357, %v5532, 0
      %5543 = vmatprep.subr.bf16.mxu0 0
      %5544 = vmatpush1.bf16.xpose.msra.mxu0 %v4417
      %5545 = vmatprep.subr.bf16.mxu0 0
      %5546 = vmatpush1.bf16.xpose.msra.mxu0 %v4420
      %5547 = vmatprep.subr.bf16.mxu0 0
      %5548 = vmatpush1.bf16.xpose.msra.mxu0 0
      %5549 = vmatprep.subr.bf16.mxu0 0
      %5550 = vmatpush1.bf16.xpose.msra.mxu0 0
      %5551 = vmatprep.subr.bf16.mxu0 0
      %5552 = vmatpush1.bf16.xpose.msra.mxu0 0
      %5553 = vmatprep.subr.bf16.mxu0 0
      %5554 = vmatpush1.bf16.xpose.msra.mxu0 0
      %5555 = vmatprep.subr.bf16.mxu0 0
      %5556 = vmatpush1.bf16.xpose.msra.mxu0 0
      %5557 = vmatprep.subr.bf16.mxu0 0
      %5558 = vmatpush1.bf16.xpose.msra.mxu0 0
      %5559 = vmatprep.subr.bf16.mxu0 0
      %5560 = vmatpush1.bf16.xpose.msra.mxu0 0
      %5561 = vmatprep.subr.bf16.mxu0 0
      %5562 = vmatpush1.bf16.xpose.msra.mxu0 0
      %5563 = vmatprep.subr.bf16.mxu0 0
      %5564 = vmatpush1.bf16.xpose.msra.mxu0 0
      %5565 = vmatprep.subr.bf16.mxu0 0
      %5566 = vmatpush1.bf16.xpose.msra.mxu0 0
      %5567 = vmatprep.subr.bf16.mxu0 0
      %5568 = vmatpush1.bf16.xpose.msra.mxu0 0
      %5569 = vmatprep.subr.bf16.mxu0 0
      %5570 = vmatpush1.bf16.xpose.msra.mxu0 0
      %5571 = vmatprep.subr.bf16.mxu0 0
      %5572 = vmatpush1.bf16.xpose.msra.mxu0 0
      %5573 = vmatprep.subr.bf16.mxu0 0
      %5574 = vmatpush1.bf16.xpose.msra.mxu0 0
      %5575 = vmatprep.mubr.bf16.mxu0 0
      %5576 = vmatmul.mubr.bf16.gmra.mrb[0].mxu0 %v5538
      %v5577 = vpop.f32.mrb[0].mxu0
      %v5578 = vadd.f32 1.0, %v5577
      %v5579 = vpop.f32.mrb[0].mxu0
      %v5580 = vpop.f32.mrb[0].mxu0
      %v5581 = vadd.f32 1.0, %v5580
      %v5582 = vpop.f32.mrb[0].mxu0
      %5583 = vmatprep.mubr.bf16.mxu0 0
      %5584 = vmatmul.mubr.bf16.gmra.mrb[0].mxu0 %v5541
      %v5585 = vpop.f32.mrb[0].mxu0
      %v5586 = vadd.f32 1.0, %v5585
      %v5587 = vpop.f32.mrb[0].mxu0
      %v5588 = vpop.f32.mrb[0].mxu0
      %v5589 = vadd.f32 1.0, %v5588
      %v5590 = vpop.f32.mrb[0].mxu0
      %5591 = vdwg.mxu0
      %v5593 = vsel %vm357, %v5533, 0
      %v5596 = vsel %vm357, %v5534, 0
      %5598 = vmatprep.subr.bf16.mxu0 0
      %5599 = vmatpush1.bf16.xpose.msra.mxu0 %v4478
      %5600 = vmatprep.subr.bf16.mxu0 0
      %5601 = vmatpush1.bf16.xpose.msra.mxu0 %v4481
      %5602 = vmatprep.subr.bf16.mxu0 0
      %5603 = vmatpush1.bf16.xpose.msra.mxu0 0
      %5604 = vmatprep.subr.bf16.mxu0 0
      %5605 = vmatpush1.bf16.xpose.msra.mxu0 0
      %5606 = vmatprep.subr.bf16.mxu0 0
      %5607 = vmatpush1.bf16.xpose.msra.mxu0 0
      %5608 = vmatprep.subr.bf16.mxu0 0
      %5609 = vmatpush1.bf16.xpose.msra.mxu0 0
      %5610 = vmatprep.subr.bf16.mxu0 0
      %5611 = vmatpush1.bf16.xpose.msra.mxu0 0
      %5612 = vmatprep.subr.bf16.mxu0 0
      %5613 = vmatpush1.bf16.xpose.msra.mxu0 0
      %5614 = vmatprep.subr.bf16.mxu0 0
      %5615 = vmatpush1.bf16.xpose.msra.mxu0 0
      %5616 = vmatprep.subr.bf16.mxu0 0
      %5617 = vmatpush1.bf16.xpose.msra.mxu0 0
      %5618 = vmatprep.subr.bf16.mxu0 0
      %5619 = vmatpush1.bf16.xpose.msra.mxu0 0
      %5620 = vmatprep.subr.bf16.mxu0 0
      %5621 = vmatpush1.bf16.xpose.msra.mxu0 0
      %5622 = vmatprep.subr.bf16.mxu0 0
      %5623 = vmatpush1.bf16.xpose.msra.mxu0 0
      %5624 = vmatprep.subr.bf16.mxu0 0
      %5625 = vmatpush1.bf16.xpose.msra.mxu0 0
      %5626 = vmatprep.subr.bf16.mxu0 0
      %5627 = vmatpush1.bf16.xpose.msra.mxu0 0
      %5628 = vmatprep.subr.bf16.mxu0 0
      %5629 = vmatpush1.bf16.xpose.msra.mxu0 0
      %5630 = vmatprep.mubr.bf16.mxu0 0
      %5631 = vmatmul.mubr.bf16.gmra.mrb[0].mxu0 %v5593
      %v5632 = vpop.f32.mrb[0].mxu0
      %v5633 = vadd.f32 1.0, %v5632
      %v5634 = vpop.f32.mrb[0].mxu0
      %v5635 = vpop.f32.mrb[0].mxu0
      %v5636 = vadd.f32 1.0, %v5635
      %v5637 = vpop.f32.mrb[0].mxu0
      %5638 = vmatprep.mubr.bf16.mxu0 0
      %5639 = vmatmul.mubr.bf16.gmra.mrb[0].mxu0 %v5596
      %v5640 = vpop.f32.mrb[0].mxu0
      %v5641 = vadd.f32 1.0, %v5640
      %v5642 = vpop.f32.mrb[0].mxu0
      %v5643 = vpop.f32.mrb[0].mxu0
      %v5644 = vadd.f32 1.0, %v5643
      %v5645 = vpop.f32.mrb[0].mxu0
      %5646 = vdwg.mxu0
      %v5648 = vsel %vm357, %v5535, 0
      %v5651 = vsel %vm357, %v5536, 0
      %5653 = vmatprep.subr.bf16.mxu0 0
      %5654 = vmatpush1.bf16.xpose.msra.mxu0 %v4539
      %5655 = vmatprep.subr.bf16.mxu0 0
      %5656 = vmatpush1.bf16.xpose.msra.mxu0 %v4542
      %5657 = vmatprep.subr.bf16.mxu0 0
      %5658 = vmatpush1.bf16.xpose.msra.mxu0 0
      %5659 = vmatprep.subr.bf16.mxu0 0
      %5660 = vmatpush1.bf16.xpose.msra.mxu0 0
      %5661 = vmatprep.subr.bf16.mxu0 0
      %5662 = vmatpush1.bf16.xpose.msra.mxu0 0
      %5663 = vmatprep.subr.bf16.mxu0 0
      %5664 = vmatpush1.bf16.xpose.msra.mxu0 0
      %5665 = vmatprep.subr.bf16.mxu0 0
      %5666 = vmatpush1.bf16.xpose.msra.mxu0 0
      %5667 = vmatprep.subr.bf16.mxu0 0
      %5668 = vmatpush1.bf16.xpose.msra.mxu0 0
      %5669 = vmatprep.subr.bf16.mxu0 0
      %5670 = vmatpush1.bf16.xpose.msra.mxu0 0
      %5671 = vmatprep.subr.bf16.mxu0 0
      %5672 = vmatpush1.bf16.xpose.msra.mxu0 0
      %5673 = vmatprep.subr.bf16.mxu0 0
      %5674 = vmatpush1.bf16.xpose.msra.mxu0 0
      %5675 = vmatprep.subr.bf16.mxu0 0
      %5676 = vmatpush1.bf16.xpose.msra.mxu0 0
      %5677 = vmatprep.subr.bf16.mxu0 0
      %5678 = vmatpush1.bf16.xpose.msra.mxu0 0
      %5679 = vmatprep.subr.bf16.mxu0 0
      %5680 = vmatpush1.bf16.xpose.msra.mxu0 0
      %5681 = vmatprep.subr.bf16.mxu0 0
      %5682 = vmatpush1.bf16.xpose.msra.mxu0 0
      %5683 = vmatprep.subr.bf16.mxu0 0
      %5684 = vmatpush1.bf16.xpose.msra.mxu0 0
      %5685 = vmatprep.mubr.bf16.mxu0 0
      %5686 = vmatmul.mubr.bf16.gmra.mrb[0].mxu0 %v5648
      %v5687 = vpop.f32.mrb[0].mxu0
      %v5688 = vadd.f32 1.0, %v5687
      %v5689 = vpop.f32.mrb[0].mxu0
      %v5690 = vpop.f32.mrb[0].mxu0
      %v5691 = vadd.f32 1.0, %v5690
      %v5692 = vpop.f32.mrb[0].mxu0
      %5693 = vmatprep.mubr.bf16.mxu0 0
      %5694 = vmatmul.mubr.bf16.gmra.mrb[0].mxu0 %v5651
      %v5695 = vpop.f32.mrb[0].mxu0
      %v5696 = vadd.f32 1.0, %v5695
      %v5697 = vpop.f32.mrb[0].mxu0
      %v5698 = vpop.f32.mrb[0].mxu0
      %v5699 = vadd.f32 1.0, %v5698
      %v5700 = vpop.f32.mrb[0].mxu0
      %5701 = vdwg.mxu0
      %v5702 = vmul.f32 %v5578, 0.5
      %v5703 = vmul.f32 %v5581, 0.5
      %v5704 = vmul.f32 %v5586, 0.5
      %v5705 = vmul.f32 %v5589, 0.5
      %v5706 = vmul.f32 %v5633, 0.5
      %v5707 = vmul.f32 %v5636, 0.5
      %v5708 = vmul.f32 %v5641, 0.5
      %v5709 = vmul.f32 %v5644, 0.5
      %v5710 = vmul.f32 %v5688, 0.5
      %v5711 = vmul.f32 %v5691, 0.5
      %v5712 = vmul.f32 %v5696, 0.5
      %v5713 = vmul.f32 %v5699, 0.5
      %v5714 = vsel %vm2803, %v5702, -1e+30
      %v5715 = vsel %vm2804, %v5703, -1e+30
      %v5716 = vsel %vm2805, %v5704, -1e+30
      %v5717 = vsel %vm2806, %v5705, -1e+30
      %v5718 = vsel %vm2803, %v5706, -1e+30
      %v5719 = vsel %vm2804, %v5707, -1e+30
      %v5720 = vsel %vm2805, %v5708, -1e+30
      %v5721 = vsel %vm2806, %v5709, -1e+30
      %v5722 = vsel %vm2803, %v5710, -1e+30
      %v5723 = vsel %vm2804, %v5711, -1e+30
      %v5724 = vsel %vm2805, %v5712, -1e+30
      %v5725 = vsel %vm2806, %v5713, -1e+30
      %v5726 = vsel %vm4617, %v5714, -inf
      %v5727 = vsel %vm4617, %v5715, -inf
      %v5728 = vsel %vm4617, %v5716, -inf
      %v5729 = vmax.f32 %v5726, %v5728
      %v5730 = vsel %vm4617, %v5717, -inf
      %v5731 = vmax.f32 %v5727, %v5730
      %v5732 = vmax.f32 %v5729, %v5731
      %v5733 = vrot.slane %v5732, 4
      %v5734 = vmax.f32 %v5732, %v5733
      %v5735 = vrot.slane %v5734, 2
      %v5736 = vmax.f32 %v5734, %v5735
      %v5737 = vrot.slane %v5736, 1
      %v5738 = vmax.f32 %v5736, %v5737
      %v5739 = vsel %vm4617, %v5718, -inf
      %v5740 = vsel %vm4617, %v5719, -inf
      %v5741 = vsel %vm4617, %v5720, -inf
      %v5742 = vmax.f32 %v5739, %v5741
      %v5743 = vsel %vm4617, %v5721, -inf
      %v5744 = vmax.f32 %v5740, %v5743
      %v5745 = vmax.f32 %v5742, %v5744
      %v5746 = vrot.slane %v5745, 4
      %v5747 = vmax.f32 %v5745, %v5746
      %v5748 = vrot.slane %v5747, 2
      %v5749 = vmax.f32 %v5747, %v5748
      %v5750 = vrot.slane %v5749, 1
      %v5751 = vmax.f32 %v5749, %v5750
      %v5752 = vsel %vm4617, %v5722, -inf
      %v5753 = vsel %vm4617, %v5723, -inf
      %v5754 = vsel %vm4617, %v5724, -inf
      %v5755 = vmax.f32 %v5752, %v5754
      %v5756 = vsel %vm4617, %v5725, -inf
      %v5757 = vmax.f32 %v5753, %v5756
      %v5758 = vmax.f32 %v5755, %v5757
      %v5759 = vrot.slane %v5758, 4
      %v5760 = vmax.f32 %v5758, %v5759
      %v5761 = vrot.slane %v5760, 2
      %v5762 = vmax.f32 %v5760, %v5761
      %v5763 = vrot.slane %v5762, 1
      %v5764 = vmax.f32 %v5762, %v5763
      %v5765 = vsel %vm4658, %v5738, 0.0
      %v5766 = vsel %vm4658, %v5751, 0.0
      %v5767 = vsel %vm4658, %v5764, 0.0
      %v5768 = vsel %vm4617, %v5765, 0.0
      %5769 = vadd.xlane.f32.xlu0 %v5768
      %v5770 = vpop.xlane.xlu0 %5769
      %v5771 = vsel %vm4617, %v5766, 0.0
      %5772 = vadd.xlane.f32.xlu0 %v5771
      %v5773 = vpop.xlane.xlu0 %5772
      %v5774 = vsel %vm4617, %v5767, 0.0
      %5775 = vadd.xlane.f32.xlu0 %v5774
      %v5776 = vpop.xlane.xlu0 %5775
      %v5777 = vmul.f32 %v1326, %v3995
      %v5778 = vmul.f32 %v1330, %v3996
      %v5779 = vmul.f32 %v1336, %v3997
      %v5780 = vmul.f32 %v1340, %v3998
      %v5781 = vmul.f32 %v1346, %v3999
      %v5782 = vmul.f32 %v1350, %v4000
      %v5783 = vmul.f32 %v1356, %v4001
      %v5784 = vmul.f32 %v1360, %v4002
      %v5785 = vmul.f32 %v1366, %v4003
      %v5786 = vmul.f32 %v1370, %v4004
      %v5787 = vmul.f32 %v1376, %v4005
      %v5788 = vmul.f32 %v1380, %v4006
      %v5789 = vsel %vm1478, %v5777, -1e+30
      %v5790 = vsel %vm1478, %v5778, -1e+30
      %v5791 = vsel %vm1478, %v5779, -1e+30
      %v5792 = vsel %vm1478, %v5780, -1e+30
      %v5793 = vsel %vm1478, %v5781, -1e+30
      %v5794 = vsel %vm1478, %v5782, -1e+30
      %v5795 = vsel %vm1478, %v5783, -1e+30
      %v5796 = vsel %vm1478, %v5784, -1e+30
      %v5797 = vsel %vm1478, %v5785, -1e+30
      %v5798 = vsel %vm1478, %v5786, -1e+30
      %v5799 = vsel %vm1478, %v5787, -1e+30
      %v5800 = vsel %vm1478, %v5788, -1e+30
      %5801 = vmax.xlane.f32.xlu0 %v5789
      %v5802 = vpop.xlane.xlu0 %5801
      %5803 = vmax.xlane.f32.xlu0 %v5790
      %v5804 = vpop.xlane.xlu0 %5803
      %5805 = vmax.xlane.f32.xlu0 %v5791
      %v5806 = vpop.xlane.xlu0 %5805
      %5807 = vmax.xlane.f32.xlu0 %v5792
      %v5808 = vpop.xlane.xlu0 %5807
      %5809 = vmax.xlane.f32.xlu0 %v5793
      %v5810 = vpop.xlane.xlu0 %5809
      %5811 = vmax.xlane.f32.xlu0 %v5794
      %v5812 = vpop.xlane.xlu0 %5811
      %5813 = vmax.xlane.f32.xlu0 %v5795
      %v5814 = vpop.xlane.xlu0 %5813
      %5815 = vmax.xlane.f32.xlu0 %v5796
      %v5816 = vpop.xlane.xlu0 %5815
      %5817 = vmax.xlane.f32.xlu0 %v5797
      %v5818 = vpop.xlane.xlu0 %5817
      %5819 = vmax.xlane.f32.xlu0 %v5798
      %v5820 = vpop.xlane.xlu0 %5819
      %5821 = vmax.xlane.f32.xlu0 %v5799
      %v5822 = vpop.xlane.xlu0 %5821
      %5823 = vmax.xlane.f32.xlu0 %v5800
      %v5824 = vpop.xlane.xlu0 %5823
      %v5825 = vsub.f32 %v5789, %v5802
      %v5826 = vsub.f32 %v5790, %v5804
      %v5827 = vsub.f32 %v5791, %v5806
      %v5828 = vsub.f32 %v5792, %v5808
      %v5829 = vsub.f32 %v5793, %v5810
      %v5830 = vsub.f32 %v5794, %v5812
      %v5831 = vsub.f32 %v5795, %v5814
      %v5832 = vsub.f32 %v5796, %v5816
      %v5833 = vsub.f32 %v5797, %v5818
      %v5834 = vsub.f32 %v5798, %v5820
      %v5835 = vsub.f32 %v5799, %v5822
      %v5836 = vsub.f32 %v5800, %v5824
      %v5837 = vmul.f32 %v5825, 1.442695
      %v5838 = vpow.pop %v5837
      %v5839 = vmul.f32 %v5826, 1.442695
      %v5840 = vpow.pop %v5839
      %v5841 = vmul.f32 %v5827, 1.442695
      %v5842 = vpow.pop %v5841
      %v5843 = vmul.f32 %v5828, 1.442695
      %v5844 = vpow.pop %v5843
      %v5845 = vmul.f32 %v5829, 1.442695
      %v5846 = vpow.pop %v5845
      %v5847 = vmul.f32 %v5830, 1.442695
      %v5848 = vpow.pop %v5847
      %v5849 = vmul.f32 %v5831, 1.442695
      %v5850 = vpow.pop %v5849
      %v5851 = vmul.f32 %v5832, 1.442695
      %v5852 = vpow.pop %v5851
      %v5853 = vmul.f32 %v5833, 1.442695
      %v5854 = vpow.pop %v5853
      %v5855 = vmul.f32 %v5834, 1.442695
      %v5856 = vpow.pop %v5855
      %v5857 = vmul.f32 %v5835, 1.442695
      %v5858 = vpow.pop %v5857
      %v5859 = vmul.f32 %v5836, 1.442695
      %v5860 = vpow.pop %v5859
      %5861 = vadd.xlane.f32.xlu0 %v5838
      %v5862 = vpop.xlane.xlu0 %5861
      %5863 = vadd.xlane.f32.xlu0 %v5840
      %v5864 = vpop.xlane.xlu0 %5863
      %5865 = vadd.xlane.f32.xlu0 %v5842
      %v5866 = vpop.xlane.xlu0 %5865
      %5867 = vadd.xlane.f32.xlu0 %v5844
      %v5868 = vpop.xlane.xlu0 %5867
      %5869 = vadd.xlane.f32.xlu0 %v5846
      %v5870 = vpop.xlane.xlu0 %5869
      %5871 = vadd.xlane.f32.xlu0 %v5848
      %v5872 = vpop.xlane.xlu0 %5871
      %5873 = vadd.xlane.f32.xlu0 %v5850
      %v5874 = vpop.xlane.xlu0 %5873
      %5875 = vadd.xlane.f32.xlu0 %v5852
      %v5876 = vpop.xlane.xlu0 %5875
      %5877 = vadd.xlane.f32.xlu0 %v5854
      %v5878 = vpop.xlane.xlu0 %5877
      %5879 = vadd.xlane.f32.xlu0 %v5856
      %v5880 = vpop.xlane.xlu0 %5879
      %5881 = vadd.xlane.f32.xlu0 %v5858
      %v5882 = vpop.xlane.xlu0 %5881
      %5883 = vadd.xlane.f32.xlu0 %v5860
      %v5884 = vpop.xlane.xlu0 %5883
      %v5885 = vrcp.pop %v5862
      %v5886 = vrcp.pop %v5864
      %v5887 = vrcp.pop %v5866
      %v5888 = vrcp.pop %v5868
      %v5889 = vrcp.pop %v5870
      %v5890 = vrcp.pop %v5872
      %v5891 = vrcp.pop %v5874
      %v5892 = vrcp.pop %v5876
      %v5893 = vrcp.pop %v5878
      %v5894 = vrcp.pop %v5880
      %v5895 = vrcp.pop %v5882
      %v5896 = vrcp.pop %v5884
      %v5897 = vmul.f32 %v5838, %v5885
      %v5898 = vmul.f32 %v5840, %v5886
      %v5899 = vmul.f32 %v5842, %v5887
      %v5900 = vmul.f32 %v5844, %v5888
      %v5901 = vmul.f32 %v5846, %v5889
      %v5902 = vmul.f32 %v5848, %v5890
      %v5903 = vmul.f32 %v5850, %v5891
      %v5904 = vmul.f32 %v5852, %v5892
      %v5905 = vmul.f32 %v5854, %v5893
      %v5906 = vmul.f32 %v5856, %v5894
      %v5907 = vmul.f32 %v5858, %v5895
      %v5908 = vmul.f32 %v5860, %v5896
      %v5909 = vpack.c.bf16 %v5898, %v5897
      %v5910 = vpack.c.bf16 %v5900, %v5899
      %v5911 = vpack.c.bf16 %v5902, %v5901
      %v5912 = vpack.c.bf16 %v5904, %v5903
      %v5913 = vpack.c.bf16 %v5906, %v5905
      %v5914 = vpack.c.bf16 %v5908, %v5907
      %v5915 = vpack.c.bf16 %v1055, %v1051
      %v5916 = vpack.c.bf16 %v1065, %v1061
      %v5917 = vpack.c.bf16 %v1075, %v1071
      %v5918 = vpack.c.bf16 %v1085, %v1081
      %5919 = vmatprep.subr.bf16.mxu0 0
      %5920 = vmatpush1.bf16.xpose.msra.mxu0 %v5915
      %5921 = vmatprep.subr.bf16.mxu0 0
      %5922 = vmatpush1.bf16.xpose.msra.mxu0 %v5916
      %5923 = vmatprep.subr.bf16.mxu0 0
      %5924 = vmatpush1.bf16.xpose.msra.mxu0 %v5917
      %5925 = vmatprep.subr.bf16.mxu0 0
      %5926 = vmatpush1.bf16.xpose.msra.mxu0 %v5918
      %5927 = vmatprep.subr.bf16.mxu0 0
      %5928 = vmatpush1.bf16.xpose.msra.mxu0 0
      %5929 = vmatprep.subr.bf16.mxu0 0
      %5930 = vmatpush1.bf16.xpose.msra.mxu0 0
      %5931 = vmatprep.subr.bf16.mxu0 0
      %5932 = vmatpush1.bf16.xpose.msra.mxu0 0
      %5933 = vmatprep.subr.bf16.mxu0 0
      %5934 = vmatpush1.bf16.xpose.msra.mxu0 0
      %5935 = vmatprep.subr.bf16.mxu0 0
      %5936 = vmatpush1.bf16.xpose.msra.mxu0 0
      %5937 = vmatprep.subr.bf16.mxu0 0
      %5938 = vmatpush1.bf16.xpose.msra.mxu0 0
      %5939 = vmatprep.subr.bf16.mxu0 0
      %5940 = vmatpush1.bf16.xpose.msra.mxu0 0
      %5941 = vmatprep.subr.bf16.mxu0 0
      %5942 = vmatpush1.bf16.xpose.msra.mxu0 0
      %5943 = vmatprep.subr.bf16.mxu0 0
      %5944 = vmatpush1.bf16.xpose.msra.mxu0 0
      %5945 = vmatprep.subr.bf16.mxu0 0
      %5946 = vmatpush1.bf16.xpose.msra.mxu0 0
      %5947 = vmatprep.subr.bf16.mxu0 0
      %5948 = vmatpush1.bf16.xpose.msra.mxu0 0
      %5949 = vmatprep.subr.bf16.mxu0 0
      %5950 = vmatpush1.bf16.xpose.msra.mxu0 0
      %5951 = vmatprep.mubr.bf16.mxu0 0
      %5952 = vmatmul.mubr.bf16.gmra.mrb[0].mxu0 %v5909
      %v5953 = vpop.f32.mrb[0].mxu0
      %v5954 = vadd.f32 0.0, %v5953
      %v5955 = vpop.f32.mrb[0].mxu0
      %v5956 = vpop.f32.mrb[0].mxu0
      %v5957 = vadd.f32 0.0, %v5956
      %v5958 = vpop.f32.mrb[0].mxu0
      %5959 = vmatprep.mubr.bf16.mxu0 0
      %5960 = vmatmul.mubr.bf16.gmra.mrb[0].mxu0 %v5910
      %v5961 = vpop.f32.mrb[0].mxu0
      %v5962 = vadd.f32 0.0, %v5961
      %v5963 = vpop.f32.mrb[0].mxu0
      %v5964 = vpop.f32.mrb[0].mxu0
      %v5965 = vadd.f32 0.0, %v5964
      %v5966 = vpop.f32.mrb[0].mxu0
      %5967 = vmatprep.mubr.bf16.mxu0 0
      %5968 = vmatmul.mubr.bf16.gmra.mrb[0].mxu0 %v5911
      %v5969 = vpop.f32.mrb[0].mxu0
      %v5970 = vadd.f32 0.0, %v5969
      %v5971 = vpop.f32.mrb[0].mxu0
      %v5972 = vpop.f32.mrb[0].mxu0
      %v5973 = vadd.f32 0.0, %v5972
      %v5974 = vpop.f32.mrb[0].mxu0
      %5975 = vmatprep.mubr.bf16.mxu0 0
      %5976 = vmatmul.mubr.bf16.gmra.mrb[0].mxu0 %v5912
      %v5977 = vpop.f32.mrb[0].mxu0
      %v5978 = vadd.f32 0.0, %v5977
      %v5979 = vpop.f32.mrb[0].mxu0
      %v5980 = vpop.f32.mrb[0].mxu0
      %v5981 = vadd.f32 0.0, %v5980
      %v5982 = vpop.f32.mrb[0].mxu0
      %5983 = vmatprep.mubr.bf16.mxu0 0
      %5984 = vmatmul.mubr.bf16.gmra.mrb[0].mxu0 %v5913
      %v5985 = vpop.f32.mrb[0].mxu0
      %v5986 = vadd.f32 0.0, %v5985
      %v5987 = vpop.f32.mrb[0].mxu0
      %v5988 = vpop.f32.mrb[0].mxu0
      %v5989 = vadd.f32 0.0, %v5988
      %v5990 = vpop.f32.mrb[0].mxu0
      %5991 = vmatprep.mubr.bf16.mxu0 0
      %5992 = vmatmul.mubr.bf16.gmra.mrb[0].mxu0 %v5914
      %v5993 = vpop.f32.mrb[0].mxu0
      %v5994 = vadd.f32 0.0, %v5993
      %v5995 = vpop.f32.mrb[0].mxu0
      %v5996 = vpop.f32.mrb[0].mxu0
      %v5997 = vadd.f32 0.0, %v5996
      %v5998 = vpop.f32.mrb[0].mxu0
      %5999 = vdwg.mxu0
      %v6000 = vmul.f32 %v5954, %v5954
      %v6001 = vmul.f32 %v5957, %v5957
      %v6002 = vmul.f32 %v5962, %v5962
      %v6003 = vmul.f32 %v5965, %v5965
      %v6004 = vmul.f32 %v5970, %v5970
      %v6005 = vmul.f32 %v5973, %v5973
      %v6006 = vmul.f32 %v5978, %v5978
      %v6007 = vmul.f32 %v5981, %v5981
      %v6008 = vmul.f32 %v5986, %v5986
      %v6009 = vmul.f32 %v5989, %v5989
      %v6010 = vmul.f32 %v5994, %v5994
      %v6011 = vmul.f32 %v5997, %v5997
      %v6012 = vsel %vm357, %v6000, 0.0
      %6013 = vadd.xlane.f32.xlu0 %v6012
      %v6014 = vpop.xlane.xlu0 %6013
      %v6015 = vsel %vm357, %v6001, 0.0
      %6016 = vadd.xlane.f32.xlu0 %v6015
      %v6017 = vpop.xlane.xlu0 %6016
      %v6018 = vsel %vm357, %v6002, 0.0
      %6019 = vadd.xlane.f32.xlu0 %v6018
      %v6020 = vpop.xlane.xlu0 %6019
      %v6021 = vsel %vm357, %v6003, 0.0
      %6022 = vadd.xlane.f32.xlu0 %v6021
      %v6023 = vpop.xlane.xlu0 %6022
      %v6024 = vsel %vm357, %v6004, 0.0
      %6025 = vadd.xlane.f32.xlu0 %v6024
      %v6026 = vpop.xlane.xlu0 %6025
      %v6027 = vsel %vm357, %v6005, 0.0
      %6028 = vadd.xlane.f32.xlu0 %v6027
      %v6029 = vpop.xlane.xlu0 %6028
      %v6030 = vsel %vm357, %v6006, 0.0
      %6031 = vadd.xlane.f32.xlu0 %v6030
      %v6032 = vpop.xlane.xlu0 %6031
      %v6033 = vsel %vm357, %v6007, 0.0
      %6034 = vadd.xlane.f32.xlu0 %v6033
      %v6035 = vpop.xlane.xlu0 %6034
      %v6036 = vsel %vm357, %v6008, 0.0
      %6037 = vadd.xlane.f32.xlu0 %v6036
      %v6038 = vpop.xlane.xlu0 %6037
      %v6039 = vsel %vm357, %v6009, 0.0
      %6040 = vadd.xlane.f32.xlu0 %v6039
      %v6041 = vpop.xlane.xlu0 %6040
      %v6042 = vsel %vm357, %v6010, 0.0
      %6043 = vadd.xlane.f32.xlu0 %v6042
      %v6044 = vpop.xlane.xlu0 %6043
      %v6045 = vsel %vm357, %v6011, 0.0
      %6046 = vadd.xlane.f32.xlu0 %v6045
      %v6047 = vpop.xlane.xlu0 %6046
      %v6048 = vmax.f32 %v6014, 1e-24
      %v6049 = vmax.f32 %v6017, 1e-24
      %v6050 = vmax.f32 %v6020, 1e-24
      %v6051 = vmax.f32 %v6023, 1e-24
      %v6052 = vmax.f32 %v6026, 1e-24
      %v6053 = vmax.f32 %v6029, 1e-24
      %v6054 = vmax.f32 %v6032, 1e-24
      %v6055 = vmax.f32 %v6035, 1e-24
      %v6056 = vmax.f32 %v6038, 1e-24
      %v6057 = vmax.f32 %v6041, 1e-24
      %v6058 = vmax.f32 %v6044, 1e-24
      %v6059 = vmax.f32 %v6047, 1e-24
      %v6060 = vrsqrt.pop %v6048
      %v6061 = vrsqrt.pop %v6049
      %v6062 = vrsqrt.pop %v6050
      %v6063 = vrsqrt.pop %v6051
      %v6064 = vrsqrt.pop %v6052
      %v6065 = vrsqrt.pop %v6053
      %v6066 = vrsqrt.pop %v6054
      %v6067 = vrsqrt.pop %v6055
      %v6068 = vrsqrt.pop %v6056
      %v6069 = vrsqrt.pop %v6057
      %v6070 = vrsqrt.pop %v6058
      %v6071 = vrsqrt.pop %v6059
      %v6072 = vmul.f32 %v5954, %v6060
      %v6073 = vmul.f32 %v5957, %v6061
      %v6074 = vmul.f32 %v5962, %v6062
      %v6075 = vmul.f32 %v5965, %v6063
      %v6076 = vmul.f32 %v5970, %v6064
      %v6077 = vmul.f32 %v5973, %v6065
      %v6078 = vmul.f32 %v5978, %v6066
      %v6079 = vmul.f32 %v5981, %v6067
      %v6080 = vmul.f32 %v5986, %v6068
      %v6081 = vmul.f32 %v5989, %v6069
      %v6082 = vmul.f32 %v5994, %v6070
      %v6083 = vmul.f32 %v5997, %v6071
      %v6084 = vpack.c.bf16 %v6073, %v6072
      %v6085 = vpack.c.bf16 %v6075, %v6074
      %v6086 = vpack.c.bf16 %v6077, %v6076
      %v6087 = vpack.c.bf16 %v6079, %v6078
      %v6088 = vpack.c.bf16 %v6081, %v6080
      %v6089 = vpack.c.bf16 %v6083, %v6082
      %v6091 = vsel %vm357, %v6084, 0
      %v6094 = vsel %vm357, %v6085, 0
      %6096 = vmatprep.subr.bf16.mxu0 0
      %6097 = vmatpush1.bf16.xpose.msra.mxu0 %v4417
      %6098 = vmatprep.subr.bf16.mxu0 0
      %6099 = vmatpush1.bf16.xpose.msra.mxu0 %v4420
      %6100 = vmatprep.subr.bf16.mxu0 0
      %6101 = vmatpush1.bf16.xpose.msra.mxu0 0
      %6102 = vmatprep.subr.bf16.mxu0 0
      %6103 = vmatpush1.bf16.xpose.msra.mxu0 0
      %6104 = vmatprep.subr.bf16.mxu0 0
      %6105 = vmatpush1.bf16.xpose.msra.mxu0 0
      %6106 = vmatprep.subr.bf16.mxu0 0
      %6107 = vmatpush1.bf16.xpose.msra.mxu0 0
      %6108 = vmatprep.subr.bf16.mxu0 0
      %6109 = vmatpush1.bf16.xpose.msra.mxu0 0
      %6110 = vmatprep.subr.bf16.mxu0 0
      %6111 = vmatpush1.bf16.xpose.msra.mxu0 0
      %6112 = vmatprep.subr.bf16.mxu0 0
      %6113 = vmatpush1.bf16.xpose.msra.mxu0 0
      %6114 = vmatprep.subr.bf16.mxu0 0
      %6115 = vmatpush1.bf16.xpose.msra.mxu0 0
      %6116 = vmatprep.subr.bf16.mxu0 0
      %6117 = vmatpush1.bf16.xpose.msra.mxu0 0
      %6118 = vmatprep.subr.bf16.mxu0 0
      %6119 = vmatpush1.bf16.xpose.msra.mxu0 0
      %6120 = vmatprep.subr.bf16.mxu0 0
      %6121 = vmatpush1.bf16.xpose.msra.mxu0 0
      %6122 = vmatprep.subr.bf16.mxu0 0
      %6123 = vmatpush1.bf16.xpose.msra.mxu0 0
      %6124 = vmatprep.subr.bf16.mxu0 0
      %6125 = vmatpush1.bf16.xpose.msra.mxu0 0
      %6126 = vmatprep.subr.bf16.mxu0 0
      %6127 = vmatpush1.bf16.xpose.msra.mxu0 0
      %6128 = vmatprep.mubr.bf16.mxu0 0
      %6129 = vmatmul.mubr.bf16.gmra.mrb[0].mxu0 %v6091
      %v6130 = vpop.f32.mrb[0].mxu0
      %v6131 = vadd.f32 1.0, %v6130
      %v6132 = vpop.f32.mrb[0].mxu0
      %v6133 = vpop.f32.mrb[0].mxu0
      %v6134 = vadd.f32 1.0, %v6133
      %v6135 = vpop.f32.mrb[0].mxu0
      %6136 = vmatprep.mubr.bf16.mxu0 0
      %6137 = vmatmul.mubr.bf16.gmra.mrb[0].mxu0 %v6094
      %v6138 = vpop.f32.mrb[0].mxu0
      %v6139 = vadd.f32 1.0, %v6138
      %v6140 = vpop.f32.mrb[0].mxu0
      %v6141 = vpop.f32.mrb[0].mxu0
      %v6142 = vadd.f32 1.0, %v6141
      %v6143 = vpop.f32.mrb[0].mxu0
      %6144 = vdwg.mxu0
      %v6146 = vsel %vm357, %v6086, 0
      %v6149 = vsel %vm357, %v6087, 0
      %6151 = vmatprep.subr.bf16.mxu0 0
      %6152 = vmatpush1.bf16.xpose.msra.mxu0 %v4478
      %6153 = vmatprep.subr.bf16.mxu0 0
      %6154 = vmatpush1.bf16.xpose.msra.mxu0 %v4481
      %6155 = vmatprep.subr.bf16.mxu0 0
      %6156 = vmatpush1.bf16.xpose.msra.mxu0 0
      %6157 = vmatprep.subr.bf16.mxu0 0
      %6158 = vmatpush1.bf16.xpose.msra.mxu0 0
      %6159 = vmatprep.subr.bf16.mxu0 0
      %6160 = vmatpush1.bf16.xpose.msra.mxu0 0
      %6161 = vmatprep.subr.bf16.mxu0 0
      %6162 = vmatpush1.bf16.xpose.msra.mxu0 0
      %6163 = vmatprep.subr.bf16.mxu0 0
      %6164 = vmatpush1.bf16.xpose.msra.mxu0 0
      %6165 = vmatprep.subr.bf16.mxu0 0
      %6166 = vmatpush1.bf16.xpose.msra.mxu0 0
      %6167 = vmatprep.subr.bf16.mxu0 0
      %6168 = vmatpush1.bf16.xpose.msra.mxu0 0
      %6169 = vmatprep.subr.bf16.mxu0 0
      %6170 = vmatpush1.bf16.xpose.msra.mxu0 0
      %6171 = vmatprep.subr.bf16.mxu0 0
      %6172 = vmatpush1.bf16.xpose.msra.mxu0 0
      %6173 = vmatprep.subr.bf16.mxu0 0
      %6174 = vmatpush1.bf16.xpose.msra.mxu0 0
      %6175 = vmatprep.subr.bf16.mxu0 0
      %6176 = vmatpush1.bf16.xpose.msra.mxu0 0
      %6177 = vmatprep.subr.bf16.mxu0 0
      %6178 = vmatpush1.bf16.xpose.msra.mxu0 0
      %6179 = vmatprep.subr.bf16.mxu0 0
      %6180 = vmatpush1.bf16.xpose.msra.mxu0 0
      %6181 = vmatprep.subr.bf16.mxu0 0
      %6182 = vmatpush1.bf16.xpose.msra.mxu0 0
      %6183 = vmatprep.mubr.bf16.mxu0 0
      %6184 = vmatmul.mubr.bf16.gmra.mrb[0].mxu0 %v6146
      %v6185 = vpop.f32.mrb[0].mxu0
      %v6186 = vadd.f32 1.0, %v6185
      %v6187 = vpop.f32.mrb[0].mxu0
      %v6188 = vpop.f32.mrb[0].mxu0
      %v6189 = vadd.f32 1.0, %v6188
      %v6190 = vpop.f32.mrb[0].mxu0
      %6191 = vmatprep.mubr.bf16.mxu0 0
      %6192 = vmatmul.mubr.bf16.gmra.mrb[0].mxu0 %v6149
      %v6193 = vpop.f32.mrb[0].mxu0
      %v6194 = vadd.f32 1.0, %v6193
      %v6195 = vpop.f32.mrb[0].mxu0
      %v6196 = vpop.f32.mrb[0].mxu0
      %v6197 = vadd.f32 1.0, %v6196
      %v6198 = vpop.f32.mrb[0].mxu0
      %6199 = vdwg.mxu0
      %v6201 = vsel %vm357, %v6088, 0
      %v6204 = vsel %vm357, %v6089, 0
      %6206 = vmatprep.subr.bf16.mxu0 0
      %6207 = vmatpush1.bf16.xpose.msra.mxu0 %v4539
      %6208 = vmatprep.subr.bf16.mxu0 0
      %6209 = vmatpush1.bf16.xpose.msra.mxu0 %v4542
      %6210 = vmatprep.subr.bf16.mxu0 0
      %6211 = vmatpush1.bf16.xpose.msra.mxu0 0
      %6212 = vmatprep.subr.bf16.mxu0 0
      %6213 = vmatpush1.bf16.xpose.msra.mxu0 0
      %6214 = vmatprep.subr.bf16.mxu0 0
      %6215 = vmatpush1.bf16.xpose.msra.mxu0 0
      %6216 = vmatprep.subr.bf16.mxu0 0
      %6217 = vmatpush1.bf16.xpose.msra.mxu0 0
      %6218 = vmatprep.subr.bf16.mxu0 0
      %6219 = vmatpush1.bf16.xpose.msra.mxu0 0
      %6220 = vmatprep.subr.bf16.mxu0 0
      %6221 = vmatpush1.bf16.xpose.msra.mxu0 0
      %6222 = vmatprep.subr.bf16.mxu0 0
      %6223 = vmatpush1.bf16.xpose.msra.mxu0 0
      %6224 = vmatprep.subr.bf16.mxu0 0
      %6225 = vmatpush1.bf16.xpose.msra.mxu0 0
      %6226 = vmatprep.subr.bf16.mxu0 0
      %6227 = vmatpush1.bf16.xpose.msra.mxu0 0
      %6228 = vmatprep.subr.bf16.mxu0 0
      %6229 = vmatpush1.bf16.xpose.msra.mxu0 0
      %6230 = vmatprep.subr.bf16.mxu0 0
      %6231 = vmatpush1.bf16.xpose.msra.mxu0 0
      %6232 = vmatprep.subr.bf16.mxu0 0
      %6233 = vmatpush1.bf16.xpose.msra.mxu0 0
      %6234 = vmatprep.subr.bf16.mxu0 0
      %6235 = vmatpush1.bf16.xpose.msra.mxu0 0
      %6236 = vmatprep.subr.bf16.mxu0 0
      %6237 = vmatpush1.bf16.xpose.msra.mxu0 0
      %6238 = vmatprep.mubr.bf16.mxu0 0
      %6239 = vmatmul.mubr.bf16.gmra.mrb[0].mxu0 %v6201
      %v6240 = vpop.f32.mrb[0].mxu0
      %v6241 = vadd.f32 1.0, %v6240
      %v6242 = vpop.f32.mrb[0].mxu0
      %v6243 = vpop.f32.mrb[0].mxu0
      %v6244 = vadd.f32 1.0, %v6243
      %v6245 = vpop.f32.mrb[0].mxu0
      %6246 = vmatprep.mubr.bf16.mxu0 0
      %6247 = vmatmul.mubr.bf16.gmra.mrb[0].mxu0 %v6204
      %v6248 = vpop.f32.mrb[0].mxu0
      %v6249 = vadd.f32 1.0, %v6248
      %v6250 = vpop.f32.mrb[0].mxu0
      %v6251 = vpop.f32.mrb[0].mxu0
      %v6252 = vadd.f32 1.0, %v6251
      %v6253 = vpop.f32.mrb[0].mxu0
      %6254 = vdwg.mxu0
      %v6255 = vmul.f32 %v6131, 0.5
      %v6256 = vmul.f32 %v6134, 0.5
      %v6257 = vmul.f32 %v6139, 0.5
      %v6258 = vmul.f32 %v6142, 0.5
      %v6259 = vmul.f32 %v6186, 0.5
      %v6260 = vmul.f32 %v6189, 0.5
      %v6261 = vmul.f32 %v6194, 0.5
      %v6262 = vmul.f32 %v6197, 0.5
      %v6263 = vmul.f32 %v6241, 0.5
      %v6264 = vmul.f32 %v6244, 0.5
      %v6265 = vmul.f32 %v6249, 0.5
      %v6266 = vmul.f32 %v6252, 0.5
      %v6267 = vsel %vm2803, %v6255, -1e+30
      %v6268 = vsel %vm2804, %v6256, -1e+30
      %v6269 = vsel %vm2805, %v6257, -1e+30
      %v6270 = vsel %vm2806, %v6258, -1e+30
      %v6271 = vsel %vm2803, %v6259, -1e+30
      %v6272 = vsel %vm2804, %v6260, -1e+30
      %v6273 = vsel %vm2805, %v6261, -1e+30
      %v6274 = vsel %vm2806, %v6262, -1e+30
      %v6275 = vsel %vm2803, %v6263, -1e+30
      %v6276 = vsel %vm2804, %v6264, -1e+30
      %v6277 = vsel %vm2805, %v6265, -1e+30
      %v6278 = vsel %vm2806, %v6266, -1e+30
      %v6279 = vsel %vm4617, %v6267, -inf
      %v6280 = vsel %vm4617, %v6268, -inf
      %v6281 = vsel %vm4617, %v6269, -inf
      %v6282 = vmax.f32 %v6279, %v6281
      %v6283 = vsel %vm4617, %v6270, -inf
      %v6284 = vmax.f32 %v6280, %v6283
      %v6285 = vmax.f32 %v6282, %v6284
      %v6286 = vrot.slane %v6285, 4
      %v6287 = vmax.f32 %v6285, %v6286
      %v6288 = vrot.slane %v6287, 2
      %v6289 = vmax.f32 %v6287, %v6288
      %v6290 = vrot.slane %v6289, 1
      %v6291 = vmax.f32 %v6289, %v6290
      %v6292 = vsel %vm4617, %v6271, -inf
      %v6293 = vsel %vm4617, %v6272, -inf
      %v6294 = vsel %vm4617, %v6273, -inf
      %v6295 = vmax.f32 %v6292, %v6294
      %v6296 = vsel %vm4617, %v6274, -inf
      %v6297 = vmax.f32 %v6293, %v6296
      %v6298 = vmax.f32 %v6295, %v6297
      %v6299 = vrot.slane %v6298, 4
      %v6300 = vmax.f32 %v6298, %v6299
      %v6301 = vrot.slane %v6300, 2
      %v6302 = vmax.f32 %v6300, %v6301
      %v6303 = vrot.slane %v6302, 1
      %v6304 = vmax.f32 %v6302, %v6303
      %v6305 = vsel %vm4617, %v6275, -inf
      %v6306 = vsel %vm4617, %v6276, -inf
      %v6307 = vsel %vm4617, %v6277, -inf
      %v6308 = vmax.f32 %v6305, %v6307
      %v6309 = vsel %vm4617, %v6278, -inf
      %v6310 = vmax.f32 %v6306, %v6309
      %v6311 = vmax.f32 %v6308, %v6310
      %v6312 = vrot.slane %v6311, 4
      %v6313 = vmax.f32 %v6311, %v6312
      %v6314 = vrot.slane %v6313, 2
      %v6315 = vmax.f32 %v6313, %v6314
      %v6316 = vrot.slane %v6315, 1
      %v6317 = vmax.f32 %v6315, %v6316
      %v6318 = vsel %vm4658, %v6291, 0.0
      %v6319 = vsel %vm4658, %v6304, 0.0
      %v6320 = vsel %vm4658, %v6317, 0.0
      %v6321 = vsel %vm4617, %v6318, 0.0
      %6322 = vadd.xlane.f32.xlu0 %v6321
      %v6323 = vpop.xlane.xlu0 %6322
      %v6324 = vsel %vm4617, %v6319, 0.0
      %6325 = vadd.xlane.f32.xlu0 %v6324
      %v6326 = vpop.xlane.xlu0 %6325
      %v6327 = vsel %vm4617, %v6320, 0.0
      %6328 = vadd.xlane.f32.xlu0 %v6327
      %v6329 = vpop.xlane.xlu0 %6328
      %v6330 = vmul.f32 %v1417, %v3995
      %v6331 = vmul.f32 %v1420, %v3996
      %v6332 = vmul.f32 %v1425, %v3997
      %v6333 = vmul.f32 %v1428, %v3998
      %v6334 = vmul.f32 %v1433, %v3999
      %v6335 = vmul.f32 %v1436, %v4000
      %v6336 = vmul.f32 %v1441, %v4001
      %v6337 = vmul.f32 %v1444, %v4002
      %v6338 = vmul.f32 %v1449, %v4003
      %v6339 = vmul.f32 %v1452, %v4004
      %v6340 = vmul.f32 %v1457, %v4005
      %v6341 = vmul.f32 %v1460, %v4006
      %v6342 = vsel %vm1478, %v6330, -1e+30
      %v6343 = vsel %vm1478, %v6331, -1e+30
      %v6344 = vsel %vm1478, %v6332, -1e+30
      %v6345 = vsel %vm1478, %v6333, -1e+30
      %v6346 = vsel %vm1478, %v6334, -1e+30
      %v6347 = vsel %vm1478, %v6335, -1e+30
      %v6348 = vsel %vm1478, %v6336, -1e+30
      %v6349 = vsel %vm1478, %v6337, -1e+30
      %v6350 = vsel %vm1478, %v6338, -1e+30
      %v6351 = vsel %vm1478, %v6339, -1e+30
      %v6352 = vsel %vm1478, %v6340, -1e+30
      %v6353 = vsel %vm1478, %v6341, -1e+30
      %6354 = vmax.xlane.f32.xlu0 %v6342
      %v6355 = vpop.xlane.xlu0 %6354
      %6356 = vmax.xlane.f32.xlu0 %v6343
      %v6357 = vpop.xlane.xlu0 %6356
      %6358 = vmax.xlane.f32.xlu0 %v6344
      %v6359 = vpop.xlane.xlu0 %6358
      %6360 = vmax.xlane.f32.xlu0 %v6345
      %v6361 = vpop.xlane.xlu0 %6360
      %6362 = vmax.xlane.f32.xlu0 %v6346
      %v6363 = vpop.xlane.xlu0 %6362
      %6364 = vmax.xlane.f32.xlu0 %v6347
      %v6365 = vpop.xlane.xlu0 %6364
      %6366 = vmax.xlane.f32.xlu0 %v6348
      %v6367 = vpop.xlane.xlu0 %6366
      %6368 = vmax.xlane.f32.xlu0 %v6349
      %v6369 = vpop.xlane.xlu0 %6368
      %6370 = vmax.xlane.f32.xlu0 %v6350
      %v6371 = vpop.xlane.xlu0 %6370
      %6372 = vmax.xlane.f32.xlu0 %v6351
      %v6373 = vpop.xlane.xlu0 %6372
      %6374 = vmax.xlane.f32.xlu0 %v6352
      %v6375 = vpop.xlane.xlu0 %6374
      %6376 = vmax.xlane.f32.xlu0 %v6353
      %v6377 = vpop.xlane.xlu0 %6376
      %v6378 = vsub.f32 %v6342, %v6355
      %v6379 = vsub.f32 %v6343, %v6357
      %v6380 = vsub.f32 %v6344, %v6359
      %v6381 = vsub.f32 %v6345, %v6361
      %v6382 = vsub.f32 %v6346, %v6363
      %v6383 = vsub.f32 %v6347, %v6365
      %v6384 = vsub.f32 %v6348, %v6367
      %v6385 = vsub.f32 %v6349, %v6369
      %v6386 = vsub.f32 %v6350, %v6371
      %v6387 = vsub.f32 %v6351, %v6373
      %v6388 = vsub.f32 %v6352, %v6375
      %v6389 = vsub.f32 %v6353, %v6377
      %v6390 = vmul.f32 %v6378, 1.442695
      %v6391 = vpow.pop %v6390
      %v6392 = vmul.f32 %v6379, 1.442695
      %v6393 = vpow.pop %v6392
      %v6394 = vmul.f32 %v6380, 1.442695
      %v6395 = vpow.pop %v6394
      %v6396 = vmul.f32 %v6381, 1.442695
      %v6397 = vpow.pop %v6396
      %v6398 = vmul.f32 %v6382, 1.442695
      %v6399 = vpow.pop %v6398
      %v6400 = vmul.f32 %v6383, 1.442695
      %v6401 = vpow.pop %v6400
      %v6402 = vmul.f32 %v6384, 1.442695
      %v6403 = vpow.pop %v6402
      %v6404 = vmul.f32 %v6385, 1.442695
      %v6405 = vpow.pop %v6404
      %v6406 = vmul.f32 %v6386, 1.442695
      %v6407 = vpow.pop %v6406
      %v6408 = vmul.f32 %v6387, 1.442695
      %v6409 = vpow.pop %v6408
      %v6410 = vmul.f32 %v6388, 1.442695
      %v6411 = vpow.pop %v6410
      %v6412 = vmul.f32 %v6389, 1.442695
      %v6413 = vpow.pop %v6412
      %6414 = vadd.xlane.f32.xlu0 %v6391
      %v6415 = vpop.xlane.xlu0 %6414
      %6416 = vadd.xlane.f32.xlu0 %v6393
      %v6417 = vpop.xlane.xlu0 %6416
      %6418 = vadd.xlane.f32.xlu0 %v6395
      %v6419 = vpop.xlane.xlu0 %6418
      %6420 = vadd.xlane.f32.xlu0 %v6397
      %v6421 = vpop.xlane.xlu0 %6420
      %6422 = vadd.xlane.f32.xlu0 %v6399
      %v6423 = vpop.xlane.xlu0 %6422
      %6424 = vadd.xlane.f32.xlu0 %v6401
      %v6425 = vpop.xlane.xlu0 %6424
      %6426 = vadd.xlane.f32.xlu0 %v6403
      %v6427 = vpop.xlane.xlu0 %6426
      %6428 = vadd.xlane.f32.xlu0 %v6405
      %v6429 = vpop.xlane.xlu0 %6428
      %6430 = vadd.xlane.f32.xlu0 %v6407
      %v6431 = vpop.xlane.xlu0 %6430
      %6432 = vadd.xlane.f32.xlu0 %v6409
      %v6433 = vpop.xlane.xlu0 %6432
      %6434 = vadd.xlane.f32.xlu0 %v6411
      %v6435 = vpop.xlane.xlu0 %6434
      %6436 = vadd.xlane.f32.xlu0 %v6413
      %v6437 = vpop.xlane.xlu0 %6436
      %v6438 = vrcp.pop %v6415
      %v6439 = vrcp.pop %v6417
      %v6440 = vrcp.pop %v6419
      %v6441 = vrcp.pop %v6421
      %v6442 = vrcp.pop %v6423
      %v6443 = vrcp.pop %v6425
      %v6444 = vrcp.pop %v6427
      %v6445 = vrcp.pop %v6429
      %v6446 = vrcp.pop %v6431
      %v6447 = vrcp.pop %v6433
      %v6448 = vrcp.pop %v6435
      %v6449 = vrcp.pop %v6437
      %v6450 = vmul.f32 %v6391, %v6438
      %v6451 = vmul.f32 %v6393, %v6439
      %v6452 = vmul.f32 %v6395, %v6440
      %v6453 = vmul.f32 %v6397, %v6441
      %v6454 = vmul.f32 %v6399, %v6442
      %v6455 = vmul.f32 %v6401, %v6443
      %v6456 = vmul.f32 %v6403, %v6444
      %v6457 = vmul.f32 %v6405, %v6445
      %v6458 = vmul.f32 %v6407, %v6446
      %v6459 = vmul.f32 %v6409, %v6447
      %v6460 = vmul.f32 %v6411, %v6448
      %v6461 = vmul.f32 %v6413, %v6449
      %v6462 = vpack.c.bf16 %v6451, %v6450
      %v6463 = vpack.c.bf16 %v6453, %v6452
      %v6464 = vpack.c.bf16 %v6455, %v6454
      %v6465 = vpack.c.bf16 %v6457, %v6456
      %v6466 = vpack.c.bf16 %v6459, %v6458
      %v6467 = vpack.c.bf16 %v6461, %v6460
      %v6468 = vpack.c.bf16 %v1125, %v1122
      %v6469 = vpack.c.bf16 %v1133, %v1130
      %v6470 = vpack.c.bf16 %v1141, %v1138
      %v6471 = vpack.c.bf16 %v1149, %v1146
      %6472 = vmatprep.subr.bf16.mxu0 0
      %6473 = vmatpush1.bf16.xpose.msra.mxu0 %v6468
      %6474 = vmatprep.subr.bf16.mxu0 0
      %6475 = vmatpush1.bf16.xpose.msra.mxu0 %v6469
      %6476 = vmatprep.subr.bf16.mxu0 0
      %6477 = vmatpush1.bf16.xpose.msra.mxu0 %v6470
      %6478 = vmatprep.subr.bf16.mxu0 0
      %6479 = vmatpush1.bf16.xpose.msra.mxu0 %v6471
      %6480 = vmatprep.subr.bf16.mxu0 0
      %6481 = vmatpush1.bf16.xpose.msra.mxu0 0
      %6482 = vmatprep.subr.bf16.mxu0 0
      %6483 = vmatpush1.bf16.xpose.msra.mxu0 0
      %6484 = vmatprep.subr.bf16.mxu0 0
      %6485 = vmatpush1.bf16.xpose.msra.mxu0 0
      %6486 = vmatprep.subr.bf16.mxu0 0
      %6487 = vmatpush1.bf16.xpose.msra.mxu0 0
      %6488 = vmatprep.subr.bf16.mxu0 0
      %6489 = vmatpush1.bf16.xpose.msra.mxu0 0
      %6490 = vmatprep.subr.bf16.mxu0 0
      %6491 = vmatpush1.bf16.xpose.msra.mxu0 0
      %6492 = vmatprep.subr.bf16.mxu0 0
      %6493 = vmatpush1.bf16.xpose.msra.mxu0 0
      %6494 = vmatprep.subr.bf16.mxu0 0
      %6495 = vmatpush1.bf16.xpose.msra.mxu0 0
      %6496 = vmatprep.subr.bf16.mxu0 0
      %6497 = vmatpush1.bf16.xpose.msra.mxu0 0
      %6498 = vmatprep.subr.bf16.mxu0 0
      %6499 = vmatpush1.bf16.xpose.msra.mxu0 0
      %6500 = vmatprep.subr.bf16.mxu0 0
      %6501 = vmatpush1.bf16.xpose.msra.mxu0 0
      %6502 = vmatprep.subr.bf16.mxu0 0
      %6503 = vmatpush1.bf16.xpose.msra.mxu0 0
      %6504 = vmatprep.mubr.bf16.mxu0 0
      %6505 = vmatmul.mubr.bf16.gmra.mrb[0].mxu0 %v6462
      %v6506 = vpop.f32.mrb[0].mxu0
      %v6507 = vadd.f32 0.0, %v6506
      %v6508 = vpop.f32.mrb[0].mxu0
      %v6509 = vpop.f32.mrb[0].mxu0
      %v6510 = vadd.f32 0.0, %v6509
      %v6511 = vpop.f32.mrb[0].mxu0
      %6512 = vmatprep.mubr.bf16.mxu0 0
      %6513 = vmatmul.mubr.bf16.gmra.mrb[0].mxu0 %v6463
      %v6514 = vpop.f32.mrb[0].mxu0
      %v6515 = vadd.f32 0.0, %v6514
      %v6516 = vpop.f32.mrb[0].mxu0
      %v6517 = vpop.f32.mrb[0].mxu0
      %v6518 = vadd.f32 0.0, %v6517
      %v6519 = vpop.f32.mrb[0].mxu0
      %6520 = vmatprep.mubr.bf16.mxu0 0
      %6521 = vmatmul.mubr.bf16.gmra.mrb[0].mxu0 %v6464
      %v6522 = vpop.f32.mrb[0].mxu0
      %v6523 = vadd.f32 0.0, %v6522
      %v6524 = vpop.f32.mrb[0].mxu0
      %v6525 = vpop.f32.mrb[0].mxu0
      %v6526 = vadd.f32 0.0, %v6525
      %v6527 = vpop.f32.mrb[0].mxu0
      %6528 = vmatprep.mubr.bf16.mxu0 0
      %6529 = vmatmul.mubr.bf16.gmra.mrb[0].mxu0 %v6465
      %v6530 = vpop.f32.mrb[0].mxu0
      %v6531 = vadd.f32 0.0, %v6530
      %v6532 = vpop.f32.mrb[0].mxu0
      %v6533 = vpop.f32.mrb[0].mxu0
      %v6534 = vadd.f32 0.0, %v6533
      %v6535 = vpop.f32.mrb[0].mxu0
      %6536 = vmatprep.mubr.bf16.mxu0 0
      %6537 = vmatmul.mubr.bf16.gmra.mrb[0].mxu0 %v6466
      %v6538 = vpop.f32.mrb[0].mxu0
      %v6539 = vadd.f32 0.0, %v6538
      %v6540 = vpop.f32.mrb[0].mxu0
      %v6541 = vpop.f32.mrb[0].mxu0
      %v6542 = vadd.f32 0.0, %v6541
      %v6543 = vpop.f32.mrb[0].mxu0
      %6544 = vmatprep.mubr.bf16.mxu0 0
      %6545 = vmatmul.mubr.bf16.gmra.mrb[0].mxu0 %v6467
      %v6546 = vpop.f32.mrb[0].mxu0
      %v6547 = vadd.f32 0.0, %v6546
      %v6548 = vpop.f32.mrb[0].mxu0
      %v6549 = vpop.f32.mrb[0].mxu0
      %v6550 = vadd.f32 0.0, %v6549
      %v6551 = vpop.f32.mrb[0].mxu0
      %6552 = vdwg.mxu0
      %v6553 = vmul.f32 %v6507, %v6507
      %v6554 = vmul.f32 %v6510, %v6510
      %v6555 = vmul.f32 %v6515, %v6515
      %v6556 = vmul.f32 %v6518, %v6518
      %v6557 = vmul.f32 %v6523, %v6523
      %v6558 = vmul.f32 %v6526, %v6526
      %v6559 = vmul.f32 %v6531, %v6531
      %v6560 = vmul.f32 %v6534, %v6534
      %v6561 = vmul.f32 %v6539, %v6539
      %v6562 = vmul.f32 %v6542, %v6542
      %v6563 = vmul.f32 %v6547, %v6547
      %v6564 = vmul.f32 %v6550, %v6550
      %v6565 = vsel %vm357, %v6553, 0.0
      %6566 = vadd.xlane.f32.xlu0 %v6565
      %v6567 = vpop.xlane.xlu0 %6566
      %v6568 = vsel %vm357, %v6554, 0.0
      %6569 = vadd.xlane.f32.xlu0 %v6568
      %v6570 = vpop.xlane.xlu0 %6569
      %v6571 = vsel %vm357, %v6555, 0.0
      %6572 = vadd.xlane.f32.xlu0 %v6571
      %v6573 = vpop.xlane.xlu0 %6572
      %v6574 = vsel %vm357, %v6556, 0.0
      %6575 = vadd.xlane.f32.xlu0 %v6574
      %v6576 = vpop.xlane.xlu0 %6575
      %v6577 = vsel %vm357, %v6557, 0.0
      %6578 = vadd.xlane.f32.xlu0 %v6577
      %v6579 = vpop.xlane.xlu0 %6578
      %v6580 = vsel %vm357, %v6558, 0.0
      %6581 = vadd.xlane.f32.xlu0 %v6580
      %v6582 = vpop.xlane.xlu0 %6581
      %v6583 = vsel %vm357, %v6559, 0.0
      %6584 = vadd.xlane.f32.xlu0 %v6583
      %v6585 = vpop.xlane.xlu0 %6584
      %v6586 = vsel %vm357, %v6560, 0.0
      %6587 = vadd.xlane.f32.xlu0 %v6586
      %v6588 = vpop.xlane.xlu0 %6587
      %v6589 = vsel %vm357, %v6561, 0.0
      %6590 = vadd.xlane.f32.xlu0 %v6589
      %v6591 = vpop.xlane.xlu0 %6590
      %v6592 = vsel %vm357, %v6562, 0.0
      %6593 = vadd.xlane.f32.xlu0 %v6592
      %v6594 = vpop.xlane.xlu0 %6593
      %v6595 = vsel %vm357, %v6563, 0.0
      %6596 = vadd.xlane.f32.xlu0 %v6595
      %v6597 = vpop.xlane.xlu0 %6596
      %v6598 = vsel %vm357, %v6564, 0.0
      %6599 = vadd.xlane.f32.xlu0 %v6598
      %v6600 = vpop.xlane.xlu0 %6599
      %v6601 = vmax.f32 %v6567, 1e-24
      %v6602 = vmax.f32 %v6570, 1e-24
      %v6603 = vmax.f32 %v6573, 1e-24
      %v6604 = vmax.f32 %v6576, 1e-24
      %v6605 = vmax.f32 %v6579, 1e-24
      %v6606 = vmax.f32 %v6582, 1e-24
      %v6607 = vmax.f32 %v6585, 1e-24
      %v6608 = vmax.f32 %v6588, 1e-24
      %v6609 = vmax.f32 %v6591, 1e-24
      %v6610 = vmax.f32 %v6594, 1e-24
      %v6611 = vmax.f32 %v6597, 1e-24
      %v6612 = vmax.f32 %v6600, 1e-24
      %v6613 = vrsqrt.pop %v6601
      %v6614 = vrsqrt.pop %v6602
      %v6615 = vrsqrt.pop %v6603
      %v6616 = vrsqrt.pop %v6604
      %v6617 = vrsqrt.pop %v6605
      %v6618 = vrsqrt.pop %v6606
      %v6619 = vrsqrt.pop %v6607
      %v6620 = vrsqrt.pop %v6608
      %v6621 = vrsqrt.pop %v6609
      %v6622 = vrsqrt.pop %v6610
      %v6623 = vrsqrt.pop %v6611
      %v6624 = vrsqrt.pop %v6612
      %v6625 = vmul.f32 %v6507, %v6613
      %v6626 = vmul.f32 %v6510, %v6614
      %v6627 = vmul.f32 %v6515, %v6615
      %v6628 = vmul.f32 %v6518, %v6616
      %v6629 = vmul.f32 %v6523, %v6617
      %v6630 = vmul.f32 %v6526, %v6618
      %v6631 = vmul.f32 %v6531, %v6619
      %v6632 = vmul.f32 %v6534, %v6620
      %v6633 = vmul.f32 %v6539, %v6621
      %v6634 = vmul.f32 %v6542, %v6622
      %v6635 = vmul.f32 %v6547, %v6623
      %v6636 = vmul.f32 %v6550, %v6624
      %v6637 = vpack.c.bf16 %v6626, %v6625
      %v6638 = vpack.c.bf16 %v6628, %v6627
      %v6639 = vpack.c.bf16 %v6630, %v6629
      %v6640 = vpack.c.bf16 %v6632, %v6631
      %v6641 = vpack.c.bf16 %v6634, %v6633
      %v6642 = vpack.c.bf16 %v6636, %v6635
      %v6644 = vsel %vm357, %v6637, 0
      %v6647 = vsel %vm357, %v6638, 0
      %6649 = vmatprep.subr.bf16.mxu0 0
      %6650 = vmatpush1.bf16.xpose.msra.mxu0 %v4417
      %6651 = vmatprep.subr.bf16.mxu0 0
      %6652 = vmatpush1.bf16.xpose.msra.mxu0 %v4420
      %6653 = vmatprep.subr.bf16.mxu0 0
      %6654 = vmatpush1.bf16.xpose.msra.mxu0 0
      %6655 = vmatprep.subr.bf16.mxu0 0
      %6656 = vmatpush1.bf16.xpose.msra.mxu0 0
      %6657 = vmatprep.subr.bf16.mxu0 0
      %6658 = vmatpush1.bf16.xpose.msra.mxu0 0
      %6659 = vmatprep.subr.bf16.mxu0 0
      %6660 = vmatpush1.bf16.xpose.msra.mxu0 0
      %6661 = vmatprep.subr.bf16.mxu0 0
      %6662 = vmatpush1.bf16.xpose.msra.mxu0 0
      %6663 = vmatprep.subr.bf16.mxu0 0
      %6664 = vmatpush1.bf16.xpose.msra.mxu0 0
      %6665 = vmatprep.subr.bf16.mxu0 0
      %6666 = vmatpush1.bf16.xpose.msra.mxu0 0
      %6667 = vmatprep.subr.bf16.mxu0 0
      %6668 = vmatpush1.bf16.xpose.msra.mxu0 0
      %6669 = vmatprep.subr.bf16.mxu0 0
      %6670 = vmatpush1.bf16.xpose.msra.mxu0 0
      %6671 = vmatprep.subr.bf16.mxu0 0
      %6672 = vmatpush1.bf16.xpose.msra.mxu0 0
      %6673 = vmatprep.subr.bf16.mxu0 0
      %6674 = vmatpush1.bf16.xpose.msra.mxu0 0
      %6675 = vmatprep.subr.bf16.mxu0 0
      %6676 = vmatpush1.bf16.xpose.msra.mxu0 0
      %6677 = vmatprep.subr.bf16.mxu0 0
      %6678 = vmatpush1.bf16.xpose.msra.mxu0 0
      %6679 = vmatprep.subr.bf16.mxu0 0
      %6680 = vmatpush1.bf16.xpose.msra.mxu0 0
      %6681 = vmatprep.mubr.bf16.mxu0 0
      %6682 = vmatmul.mubr.bf16.gmra.mrb[0].mxu0 %v6644
      %v6683 = vpop.f32.mrb[0].mxu0
      %v6684 = vadd.f32 1.0, %v6683
      %v6685 = vpop.f32.mrb[0].mxu0
      %v6686 = vpop.f32.mrb[0].mxu0
      %v6687 = vadd.f32 1.0, %v6686
      %v6688 = vpop.f32.mrb[0].mxu0
      %6689 = vmatprep.mubr.bf16.mxu0 0
      %6690 = vmatmul.mubr.bf16.gmra.mrb[0].mxu0 %v6647
      %v6691 = vpop.f32.mrb[0].mxu0
      %v6692 = vadd.f32 1.0, %v6691
      %v6693 = vpop.f32.mrb[0].mxu0
      %v6694 = vpop.f32.mrb[0].mxu0
      %v6695 = vadd.f32 1.0, %v6694
      %v6696 = vpop.f32.mrb[0].mxu0
      %6697 = vdwg.mxu0
      %v6699 = vsel %vm357, %v6639, 0
      %v6702 = vsel %vm357, %v6640, 0
      %6704 = vmatprep.subr.bf16.mxu0 0
      %6705 = vmatpush1.bf16.xpose.msra.mxu0 %v4478
      %6706 = vmatprep.subr.bf16.mxu0 0
      %6707 = vmatpush1.bf16.xpose.msra.mxu0 %v4481
      %6708 = vmatprep.subr.bf16.mxu0 0
      %6709 = vmatpush1.bf16.xpose.msra.mxu0 0
      %6710 = vmatprep.subr.bf16.mxu0 0
      %6711 = vmatpush1.bf16.xpose.msra.mxu0 0
      %6712 = vmatprep.subr.bf16.mxu0 0
      %6713 = vmatpush1.bf16.xpose.msra.mxu0 0
      %6714 = vmatprep.subr.bf16.mxu0 0
      %6715 = vmatpush1.bf16.xpose.msra.mxu0 0
      %6716 = vmatprep.subr.bf16.mxu0 0
      %6717 = vmatpush1.bf16.xpose.msra.mxu0 0
      %6718 = vmatprep.subr.bf16.mxu0 0
      %6719 = vmatpush1.bf16.xpose.msra.mxu0 0
      %6720 = vmatprep.subr.bf16.mxu0 0
      %6721 = vmatpush1.bf16.xpose.msra.mxu0 0
      %6722 = vmatprep.subr.bf16.mxu0 0
      %6723 = vmatpush1.bf16.xpose.msra.mxu0 0
      %6724 = vmatprep.subr.bf16.mxu0 0
      %6725 = vmatpush1.bf16.xpose.msra.mxu0 0
      %6726 = vmatprep.subr.bf16.mxu0 0
      %6727 = vmatpush1.bf16.xpose.msra.mxu0 0
      %6728 = vmatprep.subr.bf16.mxu0 0
      %6729 = vmatpush1.bf16.xpose.msra.mxu0 0
      %6730 = vmatprep.subr.bf16.mxu0 0
      %6731 = vmatpush1.bf16.xpose.msra.mxu0 0
      %6732 = vmatprep.subr.bf16.mxu0 0
      %6733 = vmatpush1.bf16.xpose.msra.mxu0 0
      %6734 = vmatprep.subr.bf16.mxu0 0
      %6735 = vmatpush1.bf16.xpose.msra.mxu0 0
      %6736 = vmatprep.mubr.bf16.mxu0 0
      %6737 = vmatmul.mubr.bf16.gmra.mrb[0].mxu0 %v6699
      %v6738 = vpop.f32.mrb[0].mxu0
      %v6739 = vadd.f32 1.0, %v6738
      %v6740 = vpop.f32.mrb[0].mxu0
      %v6741 = vpop.f32.mrb[0].mxu0
      %v6742 = vadd.f32 1.0, %v6741
      %v6743 = vpop.f32.mrb[0].mxu0
      %6744 = vmatprep.mubr.bf16.mxu0 0
      %6745 = vmatmul.mubr.bf16.gmra.mrb[0].mxu0 %v6702
      %v6746 = vpop.f32.mrb[0].mxu0
      %v6747 = vadd.f32 1.0, %v6746
      %v6748 = vpop.f32.mrb[0].mxu0
      %v6749 = vpop.f32.mrb[0].mxu0
      %v6750 = vadd.f32 1.0, %v6749
      %v6751 = vpop.f32.mrb[0].mxu0
      %6752 = vdwg.mxu0
      %v6754 = vsel %vm357, %v6641, 0
      %v6757 = vsel %vm357, %v6642, 0
      %6759 = vmatprep.subr.bf16.mxu0 0
      %6760 = vmatpush1.bf16.xpose.msra.mxu0 %v4539
      %6761 = vmatprep.subr.bf16.mxu0 0
      %6762 = vmatpush1.bf16.xpose.msra.mxu0 %v4542
      %6763 = vmatprep.subr.bf16.mxu0 0
      %6764 = vmatpush1.bf16.xpose.msra.mxu0 0
      %6765 = vmatprep.subr.bf16.mxu0 0
      %6766 = vmatpush1.bf16.xpose.msra.mxu0 0
      %6767 = vmatprep.subr.bf16.mxu0 0
      %6768 = vmatpush1.bf16.xpose.msra.mxu0 0
      %6769 = vmatprep.subr.bf16.mxu0 0
      %6770 = vmatpush1.bf16.xpose.msra.mxu0 0
      %6771 = vmatprep.subr.bf16.mxu0 0
      %6772 = vmatpush1.bf16.xpose.msra.mxu0 0
      %6773 = vmatprep.subr.bf16.mxu0 0
      %6774 = vmatpush1.bf16.xpose.msra.mxu0 0
      %6775 = vmatprep.subr.bf16.mxu0 0
      %6776 = vmatpush1.bf16.xpose.msra.mxu0 0
      %6777 = vmatprep.subr.bf16.mxu0 0
      %6778 = vmatpush1.bf16.xpose.msra.mxu0 0
      %6779 = vmatprep.subr.bf16.mxu0 0
      %6780 = vmatpush1.bf16.xpose.msra.mxu0 0
      %6781 = vmatprep.subr.bf16.mxu0 0
      %6782 = vmatpush1.bf16.xpose.msra.mxu0 0
      %6783 = vmatprep.subr.bf16.mxu0 0
      %6784 = vmatpush1.bf16.xpose.msra.mxu0 0
      %6785 = vmatprep.subr.bf16.mxu0 0
      %6786 = vmatpush1.bf16.xpose.msra.mxu0 0
      %6787 = vmatprep.subr.bf16.mxu0 0
      %6788 = vmatpush1.bf16.xpose.msra.mxu0 0
      %6789 = vmatprep.subr.bf16.mxu0 0
      %6790 = vmatpush1.bf16.xpose.msra.mxu0 0
      %6791 = vmatprep.mubr.bf16.mxu0 0
      %6792 = vmatmul.mubr.bf16.gmra.mrb[0].mxu0 %v6754
      %v6793 = vpop.f32.mrb[0].mxu0
      %v6794 = vadd.f32 1.0, %v6793
      %v6795 = vpop.f32.mrb[0].mxu0
      %v6796 = vpop.f32.mrb[0].mxu0
      %v6797 = vadd.f32 1.0, %v6796
      %v6798 = vpop.f32.mrb[0].mxu0
      %6799 = vmatprep.mubr.bf16.mxu0 0
      %6800 = vmatmul.mubr.bf16.gmra.mrb[0].mxu0 %v6757
      %v6801 = vpop.f32.mrb[0].mxu0
      %v6802 = vadd.f32 1.0, %v6801
      %v6803 = vpop.f32.mrb[0].mxu0
      %v6804 = vpop.f32.mrb[0].mxu0
      %v6805 = vadd.f32 1.0, %v6804
      %v6806 = vpop.f32.mrb[0].mxu0
      %6807 = vdwg.mxu0
      %v6808 = vmul.f32 %v6684, 0.5
      %v6809 = vmul.f32 %v6687, 0.5
      %v6810 = vmul.f32 %v6692, 0.5
      %v6811 = vmul.f32 %v6695, 0.5
      %v6812 = vmul.f32 %v6739, 0.5
      %v6813 = vmul.f32 %v6742, 0.5
      %v6814 = vmul.f32 %v6747, 0.5
      %v6815 = vmul.f32 %v6750, 0.5
      %v6816 = vmul.f32 %v6794, 0.5
      %v6817 = vmul.f32 %v6797, 0.5
      %v6818 = vmul.f32 %v6802, 0.5
      %v6819 = vmul.f32 %v6805, 0.5
      %v6820 = vsel %vm2803, %v6808, -1e+30
      %v6821 = vsel %vm2804, %v6809, -1e+30
      %v6822 = vsel %vm2805, %v6810, -1e+30
      %v6823 = vsel %vm2806, %v6811, -1e+30
      %v6824 = vsel %vm2803, %v6812, -1e+30
      %v6825 = vsel %vm2804, %v6813, -1e+30
      %v6826 = vsel %vm2805, %v6814, -1e+30
      %v6827 = vsel %vm2806, %v6815, -1e+30
      %v6828 = vsel %vm2803, %v6816, -1e+30
      %v6829 = vsel %vm2804, %v6817, -1e+30
      %v6830 = vsel %vm2805, %v6818, -1e+30
      %v6831 = vsel %vm2806, %v6819, -1e+30
      %v6832 = vsel %vm4617, %v6820, -inf
      %v6833 = vsel %vm4617, %v6821, -inf
      %v6834 = vsel %vm4617, %v6822, -inf
      %v6835 = vmax.f32 %v6832, %v6834
      %v6836 = vsel %vm4617, %v6823, -inf
      %v6837 = vmax.f32 %v6833, %v6836
      %v6838 = vmax.f32 %v6835, %v6837
      %v6839 = vrot.slane %v6838, 4
      %v6840 = vmax.f32 %v6838, %v6839
      %v6841 = vrot.slane %v6840, 2
      %v6842 = vmax.f32 %v6840, %v6841
      %v6843 = vrot.slane %v6842, 1
      %v6844 = vmax.f32 %v6842, %v6843
      %v6845 = vsel %vm4617, %v6824, -inf
      %v6846 = vsel %vm4617, %v6825, -inf
      %v6847 = vsel %vm4617, %v6826, -inf
      %v6848 = vmax.f32 %v6845, %v6847
      %v6849 = vsel %vm4617, %v6827, -inf
      %v6850 = vmax.f32 %v6846, %v6849
      %v6851 = vmax.f32 %v6848, %v6850
      %v6852 = vrot.slane %v6851, 4
      %v6853 = vmax.f32 %v6851, %v6852
      %v6854 = vrot.slane %v6853, 2
      %v6855 = vmax.f32 %v6853, %v6854
      %v6856 = vrot.slane %v6855, 1
      %v6857 = vmax.f32 %v6855, %v6856
      %v6858 = vsel %vm4617, %v6828, -inf
      %v6859 = vsel %vm4617, %v6829, -inf
      %v6860 = vsel %vm4617, %v6830, -inf
      %v6861 = vmax.f32 %v6858, %v6860
      %v6862 = vsel %vm4617, %v6831, -inf
      %v6863 = vmax.f32 %v6859, %v6862
      %v6864 = vmax.f32 %v6861, %v6863
      %v6865 = vrot.slane %v6864, 4
      %v6866 = vmax.f32 %v6864, %v6865
      %v6867 = vrot.slane %v6866, 2
      %v6868 = vmax.f32 %v6866, %v6867
      %v6869 = vrot.slane %v6868, 1
      %v6870 = vmax.f32 %v6868, %v6869
      %v6871 = vsel %vm4658, %v6844, 0.0
      %v6872 = vsel %vm4658, %v6857, 0.0
      %v6873 = vsel %vm4658, %v6870, 0.0
      %v6874 = vsel %vm4617, %v6871, 0.0
      %6875 = vadd.xlane.f32.xlu0 %v6874
      %v6876 = vpop.xlane.xlu0 %6875
      %v6877 = vsel %vm4617, %v6872, 0.0
      %6878 = vadd.xlane.f32.xlu0 %v6877
      %v6879 = vpop.xlane.xlu0 %6878
      %v6880 = vsel %vm4617, %v6873, 0.0
      %6881 = vadd.xlane.f32.xlu0 %v6880
      %v6882 = vpop.xlane.xlu0 %6881
      %vm6886 = vcmask 1041409
      %v6887 = vsel %vm6886, %v4667, %v4664
      %vm6888 = vcmask 1042434
      %v6889 = vsel %vm6888, %v4670, %v6887
      %v6894 = vsel %vm6886, %v5220, %v5217
      %v6895 = vsel %vm6888, %v5223, %v6894
      %v6900 = vsel %vm6886, %v5773, %v5770
      %v6901 = vsel %vm6888, %v5776, %v6900
      %v6906 = vsel %vm6886, %v6326, %v6323
      %v6907 = vsel %vm6888, %v6329, %v6906
      %v6912 = vsel %vm6886, %v6879, %v6876
      %v6913 = vsel %vm6888, %v6882, %v6912
      %vm6915 = vcmask 7168
      %v6916 = vsel %vm6915, %v6889, %v6895
      %vm6917 = vcmask 15360
      %v6918 = vsel %vm6917, %v6916, %v6901
      %vm6919 = vcmask 23552
      %v6920 = vsel %vm6919, %v6918, %v6907
      %vm6921 = vcmask 31744
      %v6922 = vsel %vm6921, %v6920, %v6913
      %vm6923 = vcmask 34816
      %6924 = vst.msk [vmem:[%s244] sm:$0x7] %vm6923, %v6922
      %p6925 = scmp.lt.s32.totalorder %s18, 1
      %s6926 = scalar_select %p6925, %s18, 1
      %s6927 = smul.addr %s6926, 4
      %s6928 = scalar_lea.vmem %s6, %s6927
      // Predicated region
      $region41: #{st_forward.3} parent=39 // pred_check
        %p6929 = pneg %p151
      $region42: #{st_forward.3} parent=39 // pred_check_branch
        %6931 = sbr.rel (%p6929) target = $region44
      $region43: #{st_forward.3} parent=39 // pred_region
        _
      $region44: #{st_forward.3} parent=39 // pred_fallthru
        _
    $region40: #{st_forward.3} parent=5 // pred_fallthru
      _
    %p6932 = scmp.le.s32.totalorder 2, %s13
    // Predicated region
    $region45: #{st_forward.3} parent=5 // pred_check
      %p6933 = pneg %p6932
    $region46: #{st_forward.3} parent=5 // pred_check_branch
      %6935 = sbr.rel (%p6933) target = $region48
    $region47: #{st_forward.3} parent=5 // pred_region
      %s6936 = ssub.s32 %s13, 2
      // Predicated region
      $region49: #{st_forward.3} parent=47 // pred_check
        %p6937 = pneg %p157
      $region50: #{st_forward.3} parent=47 // pred_check_branch
        %6939 = sbr.rel (%p6937) target = $region52
      $region51: #{st_forward.3} parent=47 // pred_region
        %p6940 = scmp.lt.s32.totalorder %s19, 1
        %s6941 = scalar_select %p6940, %s19, 1
        %s6942 = smul.addr %s6941, 4
        %s6943 = scalar_lea.vmem %s6, %s6942
      $region52: #{st_forward.3} parent=47 // pred_fallthru
        _
    $region48: #{st_forward.3} parent=5 // pred_fallthru
      _
  $region6: #{st_forward.3} parent=0 // loop_footer
    %s17 = sadd.s32 1, %s13
  $region7: #{st_forward.3} parent=0 // loop_footer_branch
    %12 = sbr.rel target = $region3
  $region8: #{st_forward.3} parent=0 // loop_exit
    _

</llo_original>
